<compile_context>
chip_gen: v5e
topology: v5e:2x2
jax: 0.10.0
libtpu: 0.0.40
codegen_flags: <defaults>
</compile_context>

<pallas_src>
import jax
import jax.numpy as jnp
from jax.experimental import pallas as pl
from jax.experimental.pallas import tpu as pltpu

AGE_FEATS = 1400
AGE_PAD = 1408              # 11 * 128
N_AGE_GROUPS = 31
N_GENDER = 2
N_EMOTIONS = 7
ENC_PAD = 1536              # 12 * 128
HEAD_PAD = 128              # age_group_head N padded 31 -> 128
OUT_W = 128                 # packed lane-dense output width

# packed output layout (also the column layout of the last 128-lane block of w_enc)
GROUP_OFF = 0               # [0:31)   grouped_age logits
REG_OFF = 31                # [31:32)  regression_age
GEN_OFF = 32                # [32:34)  gender
EMO_OFF = 34                # [34:41)  emotions

K_TILE_CAP = 2048           # feature (K) tile when streaming w_enc
B_TILE_CAP = 512            # batch tile cap
NEG_BIG = -1e30             # baked softmax mask for padded head lanes


def _round_up(x, m):
    return (x + m - 1) // m * m


def _k_tiling(in_features):
    """Return (F_pad, K_TILE) with F_pad % K_TILE == 0, both 128-aligned."""
    f128 = _round_up(in_features, 128)
    k_tile = min(f128, K_TILE_CAP)
    return _round_up(f128, k_tile), k_tile


def _batch_tiling(batch):
    """Return (pB, B_TILE); guarantees >=2 grid steps once pB >= 16 (v7x megacore)."""
    pB = _round_up(max(batch, 1), 8)
    if pB >= 16:
        b_tile = min(B_TILE_CAP, _round_up((pB + 1) // 2, 8))
    else:
        b_tile = pB
    return _round_up(pB, b_tile), b_tile


def _vmem_limit_bytes(b_tile, k_tile, nk):
    x_t = b_tile * k_tile * 2 * 2                       # bf16, double-buffered
    w_enc = k_tile * ENC_PAD * 2 * (1 if nk == 1 else 2)
    w_head = AGE_PAD * HEAD_PAD * 2
    biases = (ENC_PAD + HEAD_PAD) * 4
    acc = b_tile * ENC_PAD * 4
    out_t = b_tile * OUT_W * 4 * 2
    need = x_t + w_enc + w_head + biases + acc + out_t
    # generous headroom for compiler scratch; stay under v7x's 64 MiB physical VMEM
    return int(min(60 << 20, max(32 << 20, need + need // 2 + (4 << 20))))


def _mtl_fused_kernel(x_ref, wenc_ref, benc_ref, whead_ref, bhead_ref,
                      out_ref, acc_ref):
    # x: (B_TILE, K_TILE) bf16 ; w_enc: (K_TILE, 1536) bf16 ; acc: (B_TILE, 1536) f32
    k = pl.program_id(1)

    @pl.when(k == 0)
    def _():
        acc_ref[...] = jnp.zeros_like(acc_ref)

    # streamed K-slab of the fused encoder matmul (age | gender | emotions)
    acc_ref[...] += jnp.dot(x_ref[...], wenc_ref[...],
                            preferred_element_type=jnp.float32)

    @pl.when(k == pl.num_programs(1) - 1)
    def _():
        enc = acc_ref[...] + benc_ref[...]               # (B_TILE, 1536) f32
        age_relu = jnp.maximum(enc[:, :AGE_PAD], 0.0)    # padded cols are exactly 0
        # gender/emotions were packed at lanes GEN_OFF/EMO_OFF of the last 128-lane
        # block, so this aligned slice already matches the packed output layout.
        tail = enc[:, AGE_PAD:AGE_PAD + OUT_W]           # (B_TILE, 128)

        # grouped_age = age_group_head(relu(age)), (1408 x 128) aligned matmul
        logits = (jnp.dot(age_relu.astype(jnp.bfloat16), whead_ref[...],
                          preferred_element_type=jnp.float32)
                  + bhead_ref[...])                      # (B_TILE, 128) f32

        # b_head lanes >= 31 carry -1e30, so exp underflows to exactly 0 there:
        # the 128-lane softmax equals the 31-lane softmax, no extra masking needed.
        lane = jax.lax.broadcasted_iota(jnp.int32, logits.shape, 1)
        m = jnp.max(logits, axis=1, keepdims=True)
        e = jnp.exp(logits - m)
        num = jnp.sum(e * (lane.astype(jnp.float32) * 3.0), axis=1, keepdims=True)
        den = jnp.sum(e, axis=1, keepdims=True)
        reg = num / den                                  # exact divide (tiny epilogue)

        # packed lane-dense output: [logits 0:31 | reg 31 | gender 32:34 | emo 34:41 | 0]
        packed = jnp.where(lane < N_AGE_GROUPS, logits, tail)
        packed = jnp.where(lane == REG_OFF, reg, packed)
        out_ref[...] = packed


def mtl_grouped_age_forward(x_nchw, packed_params):
    """x_nchw: (B, C, H, W). Returns [gender, (grouped_age, regression_age), emotions]."""
    B = x_nchw.shape[0]
    F = 1
    for d in x_nchw.shape[1:]:
        F *= d
    F_pad = packed_params["w_enc"].shape[0]
    _, K_TILE = _k_tiling(F)
    assert F_pad % K_TILE == 0, "packed params do not match input feature dim"

    pB, B_TILE = _batch_tiling(B)
    nb = pB // B_TILE
    nk = F_pad // K_TILE

    # cast to bf16 BEFORE padding -> halves the bytes the wrapper pad/convert moves
    x_flat = x_nchw.reshape(B, F).astype(jnp.bfloat16)
    if pB > B or F_pad > F:
        x_flat = jnp.pad(x_flat, ((0, pB - B), (0, F_pad - F)))

    def call(use_buffered):
        def spec(shape, imap, resident=False):
            if use_buffered and resident:
                return pl.BlockSpec(shape, imap, pipeline_mode=pl.Buffered(1))
            return pl.BlockSpec(shape, imap)

        return pl.pallas_call(
            _mtl_fused_kernel,
            out_shape=jax.ShapeDtypeStruct((pB, OUT_W), jnp.float32),
            grid_spec=pltpu.PrefetchScalarGridSpec(
                num_scalar_prefetch=0,
                grid=(nb, nk),
                in_specs=[
                    spec((B_TILE, K_TILE), lambda i, k: (i, k)),               # x (streamed)
                    spec((K_TILE, ENC_PAD), lambda i, k: (k, 0),
                         resident=(nk == 1)),                                  # fused encoder W
                    spec((1, ENC_PAD), lambda i, k: (0, 0), resident=True),    # encoder bias
                    spec((AGE_PAD, HEAD_PAD), lambda i, k: (0, 0),
                         resident=True),                                       # head W
                    spec((1, HEAD_PAD), lambda i, k: (0, 0), resident=True),   # head bias
                ],
                out_specs=pl.BlockSpec((B_TILE, OUT_W), lambda i, k: (i, 0)),
                scratch_shapes=[pltpu.VMEM((B_TILE, ENC_PAD), jnp.float32)],
            ),
            compiler_params=pltpu.CompilerParams(
                dimension_semantics=("parallel", "arbitrary"),
                vmem_limit_bytes=_vmem_limit_bytes(B_TILE, K_TILE, nk),
            ),
        )(
            x_flat,
            packed_params["w_enc"],
            packed_params["b_enc"],
            packed_params["w_head"],
            packed_params["b_head"],
        )

    try:
        packed = call(use_buffered=True)
    except Exception:
        # Fallback for environments where pipeline_mode=pl.Buffered(1) is unsupported.
        packed = call(use_buffered=False)

    packed = packed[:B]
    grouped_age = packed[:, GROUP_OFF:GROUP_OFF + N_AGE_GROUPS]
    regression_age = packed[:, REG_OFF]
    gender = packed[:, GEN_OFF:GEN_OFF + N_GENDER]
    emotions = packed[:, EMO_OFF:EMO_OFF + N_EMOTIONS]
    return [gender, (grouped_age, regression_age), emotions]


# ----------------------------------------------------------------------------
# Parameter construction (mirrors PyTorch Linear init shapes) and packing.
# ----------------------------------------------------------------------------
def init_raw_params(key, in_features):
    ks = jax.random.split(key, 8)

    def linear(kw, kb, fan_in, fan_out):
        bound = 1.0 / jnp.sqrt(jnp.float32(fan_in))
        w = jax.random.uniform(kw, (fan_in, fan_out), jnp.float32, -bound, bound)
        b = jax.random.uniform(kb, (1, fan_out), jnp.float32, -bound, bound)
        return w, b

    w_age, b_age = linear(ks[0], ks[1], in_features, AGE_FEATS)
    w_gender, b_gender = linear(ks[2], ks[3], in_features, N_GENDER)
    w_emotions, b_emotions = linear(ks[4], ks[5], in_features, N_EMOTIONS)
    w_head, b_head = linear(ks[6], ks[7], AGE_FEATS, N_AGE_GROUPS)
    return {
        "w_age": w_age, "b_age": b_age,
        "w_gender": w_gender, "b_gender": b_gender,
        "w_emotions": w_emotions, "b_emotions": b_emotions,
        "w_head": w_head, "b_head": b_head,
    }


def pack_params(raw, in_features):
    """Fuse + pad weights for the kernel; big weights cast to bf16, biases stay f32."""
    F_pad, _ = _k_tiling(in_features)

    gen_col = AGE_PAD + GEN_OFF
    emo_col = AGE_PAD + EMO_OFF

    w_enc = jnp.zeros((F_pad, ENC_PAD), jnp.float32)
    w_enc = w_enc.at[:in_features, 0:AGE_FEATS].set(raw["w_age"])
    w_enc = w_enc.at[:in_features, gen_col:gen_col + N_GENDER].set(raw["w_gender"])
    w_enc = w_enc.at[:in_features, emo_col:emo_col + N_EMOTIONS].set(raw["w_emotions"])

    b_enc = jnp.zeros((1, ENC_PAD), jnp.float32)
    b_enc = b_enc.at[:, 0:AGE_FEATS].set(raw["b_age"])
    b_enc = b_enc.at[:, gen_col:gen_col + N_GENDER].set(raw["b_gender"])
    b_enc = b_enc.at[:, emo_col:emo_col + N_EMOTIONS].set(raw["b_emotions"])

    w_head = jnp.zeros((AGE_PAD, HEAD_PAD), jnp.float32)
    w_head = w_head.at[:AGE_FEATS, :N_AGE_GROUPS].set(raw["w_head"])
    # bake the padded-lane softmax mask into the bias: lanes >= 31 -> -1e30
    b_head = jnp.full((1, HEAD_PAD), NEG_BIG, jnp.float32)
    b_head = b_head.at[:, :N_AGE_GROUPS].set(raw["b_head"])

    return {
        "w_enc": w_enc.astype(jnp.bfloat16),
        "b_enc": b_enc,
        "w_head": w_head.astype(jnp.bfloat16),
        "b_head": b_head,
    }


def reference_forward(x_nchw, raw):
    """Pure-JAX f32 reference matching the PyTorch module semantics."""
    B = x_nchw.shape[0]
    x = x_nchw.reshape(B, -1).astype(jnp.float32)
    age = x @ raw["w_age"] + raw["b_age"]
    gender = x @ raw["w_gender"] + raw["b_gender"]
    emotions = x @ raw["w_emotions"] + raw["b_emotions"]
    logits = jnp.maximum(age, 0.0) @ raw["w_head"] + raw["b_head"]
    p = jax.nn.softmax(logits, axis=1)
    reg = jnp.sum(p * jnp.arange(N_AGE_GROUPS, dtype=jnp.float32), axis=1) * 3.0
    return gender, logits, reg, emotions


if __name__ == "__main__":
    def run_case(seed, B, C, H, W):
        k_x, k_p = jax.random.split(jax.random.PRNGKey(seed))
        x = jax.random.normal(k_x, (B, C, H, W), dtype=jnp.float32)
        raw = init_raw_params(k_p, C * H * W)
        params = pack_params(raw, C * H * W)

        out = jax.block_until_ready(mtl_grouped_age_forward(x, params))
        gender, (grouped_age, regression_age), emotions = out
        assert gender.shape == (B, N_GENDER)
        assert grouped_age.shape == (B, N_AGE_GROUPS)
        assert regression_age.shape == (B,)
        assert emotions.shape == (B, N_EMOTIONS)

        # numeric sanity vs f32 reference (generous tolerance for bf16 weights/inputs)
        g_ref, l_ref, r_ref, e_ref = reference_forward(x, raw)
        assert bool(jnp.all(jnp.isfinite(grouped_age)))
        assert bool(jnp.allclose(gender, g_ref, rtol=1e-1, atol=1e-1))
        assert bool(jnp.allclose(grouped_age, l_ref, rtol=1e-1, atol=1e-1))
        assert bool(jnp.allclose(emotions, e_ref, rtol=1e-1, atol=1e-1))
        assert bool(jnp.allclose(regression_age, r_ref, rtol=1e-1, atol=1.0))

    # primary small case (NCHW input consistent with a conv encoder): grid (1, 1)
    run_case(0, 2, 4, 16, 16)
    # exercises the multi-step grid: batch split (nb=2) and K-streamed w_enc (nk=2)
    run_case(1, 18, 4, 24, 24)

    print("KERNEL_OK")
</pallas_src>

<mosaic_0001>
module attributes {stable_mosaic.version = 11 : i64} {
  func.func @_mtl_fused_kernel(%arg0: i32, %arg1: i32, %arg2: memref<8x1024xbf16, #tpu.memory_space<vmem>>, %arg3: memref<1024x1536xbf16, #tpu.memory_space<vmem>>, %arg4: memref<1x1536xf32, #tpu.memory_space<vmem>>, %arg5: memref<1408x128xbf16, #tpu.memory_space<vmem>>, %arg6: memref<1x128xf32, #tpu.memory_space<vmem>>, %arg7: memref<8x128xf32, #tpu.memory_space<vmem>>, %arg8: memref<8x1536xf32, #tpu.memory_space<vmem>>) attributes {dimension_semantics = [#tpu.dimension_semantics<parallel>, #tpu.dimension_semantics<arbitrary>], iteration_bounds = array<i64: 1, 1>, scalar_prefetch = 0 : i64, scratch_operands = 1 : i64, tpu.core_type = #tpu.core_type<tc>, window_params = [{transform_indices = @transform_0, window_bounds = array<i64: 8, 1024>}, {pipeline_mode = #tpu.pipeline_mode<synchronous>, transform_indices = @transform_1, window_bounds = array<i64: 1024, 1536>}, {pipeline_mode = #tpu.pipeline_mode<synchronous>, transform_indices = @transform_2, window_bounds = array<i64: 1, 1536>}, {pipeline_mode = #tpu.pipeline_mode<synchronous>, transform_indices = @transform_3, window_bounds = array<i64: 1408, 128>}, {pipeline_mode = #tpu.pipeline_mode<synchronous>, transform_indices = @transform_4, window_bounds = array<i64: 1, 128>}, {transform_indices = @transform_5, window_bounds = array<i64: 8, 128>}]} {
    %c0_i32 = arith.constant 0 : i32
    %0 = arith.cmpi eq, %arg1, %c0_i32 : i32
    %1 = arith.extui %0 : i1 to i32
    %c0_i32_0 = arith.constant 0 : i32
    %2 = arith.cmpi ne, %1, %c0_i32_0 : i32
    scf.if %2 {
      %cst_10 = arith.constant 0.000000e+00 : f32
      %12 = vector.broadcast %cst_10 : f32 to vector<8x1536xf32>
      %c0_11 = arith.constant 0 : index
      %c0_12 = arith.constant 0 : index
      %13 = vector.load %arg8[%c0_11, %c0_12] : memref<8x1536xf32, #tpu.memory_space<vmem>>, vector<8x1536xf32>
      tpu.vector_store %arg8[%c0_11, %c0_12], %12 {strides = array<i32>} : memref<8x1536xf32, #tpu.memory_space<vmem>>, vector<8x1536xf32>,
    } else {
    }
    %c0 = arith.constant 0 : index
    %c0_1 = arith.constant 0 : index
    %3 = vector.load %arg8[%c0, %c0_1] : memref<8x1536xf32, #tpu.memory_space<vmem>>, vector<8x1536xf32>
    %c0_2 = arith.constant 0 : index
    %c0_3 = arith.constant 0 : index
    %4 = vector.load %arg2[%c0_2, %c0_3] : memref<8x1024xbf16, #tpu.memory_space<vmem>>, vector<8x1024xbf16>
    %c0_4 = arith.constant 0 : index
    %c0_5 = arith.constant 0 : index
    %5 = vector.load %arg3[%c0_4, %c0_5] : memref<1024x1536xbf16, #tpu.memory_space<vmem>>, vector<1024x1536xbf16>
    %cst = arith.constant dense<0.000000e+00> : vector<8x1536xf32>
    %6 = tpu.matmul %4, %5, %cst {dimension_numbers = #tpu.dot_dimension_numbers<[1], [0], [0], [1], [0, 0, 1, 1], [], []>} : vector<8x1024xbf16>, vector<1024x1536xbf16>, vector<8x1536xf32> -> vector<8x1536xf32>
    %7 = arith.addf %3, %6 : vector<8x1536xf32>
    %c0_6 = arith.constant 0 : index
    %c0_7 = arith.constant 0 : index
    %8 = vector.load %arg8[%c0_6, %c0_7] : memref<8x1536xf32, #tpu.memory_space<vmem>>, vector<8x1536xf32>
    tpu.vector_store %arg8[%c0_6, %c0_7], %7 {strides = array<i32>} : memref<8x1536xf32, #tpu.memory_space<vmem>>, vector<8x1536xf32>,
    %c0_i32_8 = arith.constant 0 : i32
    %9 = arith.cmpi eq, %arg1, %c0_i32_8 : i32
    %10 = arith.extui %9 : i1 to i32
    %c0_i32_9 = arith.constant 0 : i32
    %11 = arith.cmpi ne, %10, %c0_i32_9 : i32
    scf.if %11 {
      %c0_10 = arith.constant 0 : index
      %c0_11 = arith.constant 0 : index
      %12 = vector.load %arg8[%c0_10, %c0_11] : memref<8x1536xf32, #tpu.memory_space<vmem>>, vector<8x1536xf32>
      %c0_12 = arith.constant 0 : index
      %c0_13 = arith.constant 0 : index
      %13 = vector.load %arg4[%c0_12, %c0_13] : memref<1x1536xf32, #tpu.memory_space<vmem>>, vector<1x1536xf32>
      %14 = vector.broadcast %13 : vector<1x1536xf32> to vector<8x1536xf32>
      %15 = arith.addf %12, %14 : vector<8x1536xf32>
      %16 = vector.extract_strided_slice %15 {offsets = [0, 0], sizes = [8, 1408], strides = [1, 1]} : vector<8x1536xf32> to vector<8x1408xf32>
      %cst_14 = arith.constant 0.000000e+00 : f32
      %17 = vector.broadcast %cst_14 : f32 to vector<8x1408xf32>
      %18 = arith.maximumf %16, %17 : vector<8x1408xf32>
      %19 = vector.extract_strided_slice %15 {offsets = [0, 1408], sizes = [8, 128], strides = [1, 1]} : vector<8x1536xf32> to vector<8x128xf32>
      %20 = arith.truncf %18 : vector<8x1408xf32> to vector<8x1408xbf16>
      %c0_15 = arith.constant 0 : index
      %c0_16 = arith.constant 0 : index
      %21 = vector.load %arg5[%c0_15, %c0_16] : memref<1408x128xbf16, #tpu.memory_space<vmem>>, vector<1408x128xbf16>
      %cst_17 = arith.constant dense<0.000000e+00> : vector<8x128xf32>
      %22 = tpu.matmul %20, %21, %cst_17 {dimension_numbers = #tpu.dot_dimension_numbers<[1], [0], [0], [1], [0, 0, 1, 1], [], []>} : vector<8x1408xbf16>, vector<1408x128xbf16>, vector<8x128xf32> -> vector<8x128xf32>
      %c0_18 = arith.constant 0 : index
      %c0_19 = arith.constant 0 : index
      %23 = vector.load %arg6[%c0_18, %c0_19] : memref<1x128xf32, #tpu.memory_space<vmem>>, vector<1x128xf32>
      %24 = vector.broadcast %23 : vector<1x128xf32> to vector<8x128xf32>
      %25 = arith.addf %22, %24 : vector<8x128xf32>
      %26 = tpu.iota {dimensions = array<i32: 1>} : vector<8x128xi32>
      %cst_20 = arith.constant dense<0xFF800000> : vector<8xf32>
      %27 = vector.multi_reduction <maximumf>, %25, %cst_20 [1] : vector<8x128xf32> to vector<8xf32>
      %28 = vector.shape_cast %27 : vector<8xf32> to vector<8x1xf32>
      %29 = vector.broadcast %28 : vector<8x1xf32> to vector<8x128xf32>
      %30 = arith.subf %25, %29 : vector<8x128xf32>
      %31 = math.exp %30 : vector<8x128xf32>
      %32 = arith.sitofp %26 : vector<8x128xi32> to vector<8x128xf32>
      %cst_21 = arith.constant 3.000000e+00 : f32
      %33 = vector.broadcast %cst_21 : f32 to vector<8x128xf32>
      %34 = arith.mulf %32, %33 : vector<8x128xf32>
      %35 = arith.mulf %31, %34 : vector<8x128xf32>
      %cst_22 = arith.constant dense<0.000000e+00> : vector<8xf32>
      %36 = vector.multi_reduction <add>, %35, %cst_22 [1] : vector<8x128xf32> to vector<8xf32>
      %37 = vector.shape_cast %36 : vector<8xf32> to vector<8x1xf32>
      %cst_23 = arith.constant dense<0.000000e+00> : vector<8xf32>
      %38 = vector.multi_reduction <add>, %31, %cst_23 [1] : vector<8x128xf32> to vector<8xf32>
      %39 = vector.shape_cast %38 : vector<8xf32> to vector<8x1xf32>
      %40 = arith.divf %37, %39 : vector<8x1xf32>
      %c31_i32 = arith.constant 31 : i32
      %41 = vector.broadcast %c31_i32 : i32 to vector<8x128xi32>
      %42 = arith.cmpi slt, %26, %41 : vector<8x128xi32>
      %43 = arith.select %42, %25, %19 : vector<8x128xi1>, vector<8x128xf32>
      %c31_i32_24 = arith.constant 31 : i32
      %44 = vector.broadcast %c31_i32_24 : i32 to vector<8x128xi32>
      %45 = arith.cmpi eq, %26, %44 : vector<8x128xi32>
      %46 = vector.shape_cast %40 : vector<8x1xf32> to vector<8x1xf32>
      %47 = vector.broadcast %46 : vector<8x1xf32> to vector<8x128xf32>
      %48 = arith.select %45, %47, %43 : vector<8x128xi1>, vector<8x128xf32>
      %c0_25 = arith.constant 0 : index
      %c0_26 = arith.constant 0 : index
      %49 = vector.load %arg7[%c0_25, %c0_26] : memref<8x128xf32, #tpu.memory_space<vmem>>, vector<8x128xf32>
      tpu.vector_store %arg7[%c0_25, %c0_26], %48 {strides = array<i32>} : memref<8x128xf32, #tpu.memory_space<vmem>>, vector<8x128xf32>,
    } else {
    }
    return
  }
  func.func @transform_0(%arg0: i32, %arg1: i32) -> (i32, i32) {
    %c0_i32 = arith.constant 0 : i32
    return %arg0, %arg1 : i32, i32
  }
  func.func @transform_1(%arg0: i32, %arg1: i32) -> (i32, i32) {
    %c0_i32 = arith.constant 0 : i32
    %c0_i32_0 = arith.constant 0 : i32
    return %arg1, %c0_i32 : i32, i32
  }
  func.func @transform_2(%arg0: i32, %arg1: i32) -> (i32, i32) {
    %c0_i32 = arith.constant 0 : i32
    %c0_i32_0 = arith.constant 0 : i32
    %c0_i32_1 = arith.constant 0 : i32
    return %c0_i32, %c0_i32_0 : i32, i32
  }
  func.func @transform_3(%arg0: i32, %arg1: i32) -> (i32, i32) {
    %c0_i32 = arith.constant 0 : i32
    %c0_i32_0 = arith.constant 0 : i32
    %c0_i32_1 = arith.constant 0 : i32
    return %c0_i32, %c0_i32_0 : i32, i32
  }
  func.func @transform_4(%arg0: i32, %arg1: i32) -> (i32, i32) {
    %c0_i32 = arith.constant 0 : i32
    %c0_i32_0 = arith.constant 0 : i32
    %c0_i32_1 = arith.constant 0 : i32
    return %c0_i32, %c0_i32_0 : i32, i32
  }
  func.func @transform_5(%arg0: i32, %arg1: i32) -> (i32, i32) {
    %c0_i32 = arith.constant 0 : i32
    %c0_i32_0 = arith.constant 0 : i32
    return %arg0, %c0_i32 : i32, i32
  }
}

module attributes {stable_mosaic.version = 11 : i64} {
  func.func @_mtl_fused_kernel(%arg0: i32, %arg1: i32, %arg2: memref<8x1024xbf16, #tpu.memory_space<vmem>>, %arg3: memref<1024x1536xbf16, #tpu.memory_space<vmem>>, %arg4: memref<1x1536xf32, #tpu.memory_space<vmem>>, %arg5: memref<1408x128xbf16, #tpu.memory_space<vmem>>, %arg6: memref<1x128xf32, #tpu.memory_space<vmem>>, %arg7: memref<8x128xf32, #tpu.memory_space<vmem>>, %arg8: memref<8x1536xf32, #tpu.memory_space<vmem>>) attributes {dimension_semantics = [#tpu.dimension_semantics<parallel>, #tpu.dimension_semantics<arbitrary>], iteration_bounds = array<i64: 1, 1>, scalar_prefetch = 0 : i64, scratch_operands = 1 : i64, tpu.core_type = #tpu.core_type<tc>, window_params = [{transform_indices = @transform_0, window_bounds = array<i64: 8, 1024>}, {transform_indices = @transform_1, window_bounds = array<i64: 1024, 1536>}, {pipeline_mode = #tpu.pipeline_mode<synchronous>, transform_indices = @transform_2, window_bounds = array<i64: 1, 1536>}, {pipeline_mode = #tpu.pipeline_mode<synchronous>, transform_indices = @transform_3, window_bounds = array<i64: 1408, 128>}, {pipeline_mode = #tpu.pipeline_mode<synchronous>, transform_indices = @transform_4, window_bounds = array<i64: 1, 128>}, {transform_indices = @transform_5, window_bounds = array<i64: 8, 128>}]} {
    %c0_i32 = arith.constant 0 : i32
    %0 = arith.cmpi eq, %arg1, %c0_i32 : i32
    %1 = arith.extui %0 : i1 to i32
    %c0_i32_0 = arith.constant 0 : i32
    %2 = arith.cmpi ne, %1, %c0_i32_0 : i32
    scf.if %2 {
      %cst_10 = arith.constant 0.000000e+00 : f32
      %12 = vector.broadcast %cst_10 : f32 to vector<8x1536xf32>
      %c0_11 = arith.constant 0 : index
      %c0_12 = arith.constant 0 : index
      %13 = vector.load %arg8[%c0_11, %c0_12] : memref<8x1536xf32, #tpu.memory_space<vmem>>, vector<8x1536xf32>
      tpu.vector_store %arg8[%c0_11, %c0_12], %12 {strides = array<i32>} : memref<8x1536xf32, #tpu.memory_space<vmem>>, vector<8x1536xf32>,
    } else {
    }
    %c0 = arith.constant 0 : index
    %c0_1 = arith.constant 0 : index
    %3 = vector.load %arg8[%c0, %c0_1] : memref<8x1536xf32, #tpu.memory_space<vmem>>, vector<8x1536xf32>
    %c0_2 = arith.constant 0 : index
    %c0_3 = arith.constant 0 : index
    %4 = vector.load %arg2[%c0_2, %c0_3] : memref<8x1024xbf16, #tpu.memory_space<vmem>>, vector<8x1024xbf16>
    %c0_4 = arith.constant 0 : index
    %c0_5 = arith.constant 0 : index
    %5 = vector.load %arg3[%c0_4, %c0_5] : memref<1024x1536xbf16, #tpu.memory_space<vmem>>, vector<1024x1536xbf16>
    %cst = arith.constant dense<0.000000e+00> : vector<8x1536xf32>
    %6 = tpu.matmul %4, %5, %cst {dimension_numbers = #tpu.dot_dimension_numbers<[1], [0], [0], [1], [0, 0, 1, 1], [], []>} : vector<8x1024xbf16>, vector<1024x1536xbf16>, vector<8x1536xf32> -> vector<8x1536xf32>
    %7 = arith.addf %3, %6 : vector<8x1536xf32>
    %c0_6 = arith.constant 0 : index
    %c0_7 = arith.constant 0 : index
    %8 = vector.load %arg8[%c0_6, %c0_7] : memref<8x1536xf32, #tpu.memory_space<vmem>>, vector<8x1536xf32>
    tpu.vector_store %arg8[%c0_6, %c0_7], %7 {strides = array<i32>} : memref<8x1536xf32, #tpu.memory_space<vmem>>, vector<8x1536xf32>,
    %c0_i32_8 = arith.constant 0 : i32
    %9 = arith.cmpi eq, %arg1, %c0_i32_8 : i32
    %10 = arith.extui %9 : i1 to i32
    %c0_i32_9 = arith.constant 0 : i32
    %11 = arith.cmpi ne, %10, %c0_i32_9 : i32
    scf.if %11 {
      %c0_10 = arith.constant 0 : index
      %c0_11 = arith.constant 0 : index
      %12 = vector.load %arg8[%c0_10, %c0_11] : memref<8x1536xf32, #tpu.memory_space<vmem>>, vector<8x1536xf32>
      %c0_12 = arith.constant 0 : index
      %c0_13 = arith.constant 0 : index
      %13 = vector.load %arg4[%c0_12, %c0_13] : memref<1x1536xf32, #tpu.memory_space<vmem>>, vector<1x1536xf32>
      %14 = vector.broadcast %13 : vector<1x1536xf32> to vector<8x1536xf32>
      %15 = arith.addf %12, %14 : vector<8x1536xf32>
      %16 = vector.extract_strided_slice %15 {offsets = [0, 0], sizes = [8, 1408], strides = [1, 1]} : vector<8x1536xf32> to vector<8x1408xf32>
      %cst_14 = arith.constant 0.000000e+00 : f32
      %17 = vector.broadcast %cst_14 : f32 to vector<8x1408xf32>
      %18 = arith.maximumf %16, %17 : vector<8x1408xf32>
      %19 = vector.extract_strided_slice %15 {offsets = [0, 1408], sizes = [8, 128], strides = [1, 1]} : vector<8x1536xf32> to vector<8x128xf32>
      %20 = arith.truncf %18 : vector<8x1408xf32> to vector<8x1408xbf16>
      %c0_15 = arith.constant 0 : index
      %c0_16 = arith.constant 0 : index
      %21 = vector.load %arg5[%c0_15, %c0_16] : memref<1408x128xbf16, #tpu.memory_space<vmem>>, vector<1408x128xbf16>
      %cst_17 = arith.constant dense<0.000000e+00> : vector<8x128xf32>
      %22 = tpu.matmul %20, %21, %cst_17 {dimension_numbers = #tpu.dot_dimension_numbers<[1], [0], [0], [1], [0, 0, 1, 1], [], []>} : vector<8x1408xbf16>, vector<1408x128xbf16>, vector<8x128xf32> -> vector<8x128xf32>
      %c0_18 = arith.constant 0 : index
      %c0_19 = arith.constant 0 : index
      %23 = vector.load %arg6[%c0_18, %c0_19] : memref<1x128xf32, #tpu.memory_space<vmem>>, vector<1x128xf32>
      %24 = vector.broadcast %23 : vector<1x128xf32> to vector<8x128xf32>
      %25 = arith.addf %22, %24 : vector<8x128xf32>
      %26 = tpu.iota {dimensions = array<i32: 1>} : vector<8x128xi32>
      %cst_20 = arith.constant dense<0xFF800000> : vector<8xf32>
      %27 = vector.multi_reduction <maximumf>, %25, %cst_20 [1] : vector<8x128xf32> to vector<8xf32>
      %28 = vector.shape_cast %27 : vector<8xf32> to vector<8x1xf32>
      %29 = vector.broadcast %28 : vector<8x1xf32> to vector<8x128xf32>
      %30 = arith.subf %25, %29 : vector<8x128xf32>
      %31 = math.exp %30 : vector<8x128xf32>
      %32 = arith.sitofp %26 : vector<8x128xi32> to vector<8x128xf32>
      %cst_21 = arith.constant 3.000000e+00 : f32
      %33 = vector.broadcast %cst_21 : f32 to vector<8x128xf32>
      %34 = arith.mulf %32, %33 : vector<8x128xf32>
      %35 = arith.mulf %31, %34 : vector<8x128xf32>
      %cst_22 = arith.constant dense<0.000000e+00> : vector<8xf32>
      %36 = vector.multi_reduction <add>, %35, %cst_22 [1] : vector<8x128xf32> to vector<8xf32>
      %37 = vector.shape_cast %36 : vector<8xf32> to vector<8x1xf32>
      %cst_23 = arith.constant dense<0.000000e+00> : vector<8xf32>
      %38 = vector.multi_reduction <add>, %31, %cst_23 [1] : vector<8x128xf32> to vector<8xf32>
      %39 = vector.shape_cast %38 : vector<8xf32> to vector<8x1xf32>
      %40 = arith.divf %37, %39 : vector<8x1xf32>
      %c31_i32 = arith.constant 31 : i32
      %41 = vector.broadcast %c31_i32 : i32 to vector<8x128xi32>
      %42 = arith.cmpi slt, %26, %41 : vector<8x128xi32>
      %43 = arith.select %42, %25, %19 : vector<8x128xi1>, vector<8x128xf32>
      %c31_i32_24 = arith.constant 31 : i32
      %44 = vector.broadcast %c31_i32_24 : i32 to vector<8x128xi32>
      %45 = arith.cmpi eq, %26, %44 : vector<8x128xi32>
      %46 = vector.shape_cast %40 : vector<8x1xf32> to vector<8x1xf32>
      %47 = vector.broadcast %46 : vector<8x1xf32> to vector<8x128xf32>
      %48 = arith.select %45, %47, %43 : vector<8x128xi1>, vector<8x128xf32>
      %c0_25 = arith.constant 0 : index
      %c0_26 = arith.constant 0 : index
      %49 = vector.load %arg7[%c0_25, %c0_26] : memref<8x128xf32, #tpu.memory_space<vmem>>, vector<8x128xf32>
      tpu.vector_store %arg7[%c0_25, %c0_26], %48 {strides = array<i32>} : memref<8x128xf32, #tpu.memory_space<vmem>>, vector<8x128xf32>,
    } else {
    }
    return
  }
  func.func @transform_0(%arg0: i32, %arg1: i32) -> (i32, i32) {
    %c0_i32 = arith.constant 0 : i32
    return %arg0, %arg1 : i32, i32
  }
  func.func @transform_1(%arg0: i32, %arg1: i32) -> (i32, i32) {
    %c0_i32 = arith.constant 0 : i32
    %c0_i32_0 = arith.constant 0 : i32
    return %arg1, %c0_i32 : i32, i32
  }
  func.func @transform_2(%arg0: i32, %arg1: i32) -> (i32, i32) {
    %c0_i32 = arith.constant 0 : i32
    %c0_i32_0 = arith.constant 0 : i32
    %c0_i32_1 = arith.constant 0 : i32
    return %c0_i32, %c0_i32_0 : i32, i32
  }
  func.func @transform_3(%arg0: i32, %arg1: i32) -> (i32, i32) {
    %c0_i32 = arith.constant 0 : i32
    %c0_i32_0 = arith.constant 0 : i32
    %c0_i32_1 = arith.constant 0 : i32
    return %c0_i32, %c0_i32_0 : i32, i32
  }
  func.func @transform_4(%arg0: i32, %arg1: i32) -> (i32, i32) {
    %c0_i32 = arith.constant 0 : i32
    %c0_i32_0 = arith.constant 0 : i32
    %c0_i32_1 = arith.constant 0 : i32
    return %c0_i32, %c0_i32_0 : i32, i32
  }
  func.func @transform_5(%arg0: i32, %arg1: i32) -> (i32, i32) {
    %c0_i32 = arith.constant 0 : i32
    %c0_i32_0 = arith.constant 0 : i32
    return %arg0, %c0_i32 : i32, i32
  }
}

</mosaic_0001>

<llo_original>
// kernel: tpu_custom_call.1
$region0: #{tpu_custom_call.1}
  #allocation0 [shape = 'u32[]', space=smem, size = 0x4, offset = 0x4, fixed_abs, tag = 'smem constant byte address 0x4 - core index']
  #allocation1 [shape = 'u32[72,128]{1,0:T(1,128)}', space=vmem, size = 0x9000, scoped, tag = 'internal scratch']
  #allocation2 [shape = 'f32[8,1536]{1,0:T(8,128)}', space=vmem, size = 0xc000, scoped, tag = 'scratch operand']
  %s0 = inlined_call_operand.hbm [shape: bf16[8,1024], index: 0, kind: input, shape index: {}]
  %s1 = inlined_call_operand.hbm [shape: bf16[1024,1536], index: 1, kind: input, shape index: {}]
  %s2 = inlined_call_operand.hbm [shape: f32[1,1536], index: 2, kind: input, shape index: {}]
  %s3 = inlined_call_operand.hbm [shape: bf16[1408,128], index: 3, kind: input, shape index: {}]
  %s4 = inlined_call_operand.hbm [shape: f32[1,128], index: 4, kind: input, shape index: {}]
  %s5 = inlined_call_operand.hbm [shape: f32[8,128], index: 5, kind: output, shape index: {}]
  %s6 = sld [smem:[#allocation0]]
  $region58: #{tpu_custom_call.1} parent=0
    _
  %s8 = ssub.s32 1, %s6
  %s9 = scalar_select 0, %s8, %s6
  $region1: #{tpu_custom_call.1} parent=0
    #allocation3 [shape = 'u8[16384]{0}', space=vmem, size = 0x4000, scoped, tag = 'input window, operand 0, single buffered']
    #allocation4 [shape = 's32[1]{0}', space=sflag, size = 0x4, scoped, tag = 'scoped memory for tpu_custom_call.1']
    #allocation5 [shape = 's32[1]{0}', space=sflag, size = 0x4, scoped, tag = 'scoped memory for tpu_custom_call.1']
    #allocation6 [shape = 'u8[3145728]{0}', space=vmem, size = 0x300000, scoped, tag = 'input window, operand 1, single buffered']
    #allocation7 [shape = 's32[1]{0}', space=sflag, size = 0x4, scoped, tag = 'scoped memory for tpu_custom_call.1']
    #allocation8 [shape = 'u8[6144]{0}', space=vmem, size = 0x1800, scoped, tag = 'input window, operand 2, single buffered']
    #allocation9 [shape = 'u8[360448]{0}', space=vmem, size = 0x58000, scoped, tag = 'input window, operand 3, single buffered']
    #allocation10 [shape = 's32[1]{0}', space=sflag, size = 0x4, scoped, tag = 'scoped memory for tpu_custom_call.1']
    #allocation11 [shape = 'u8[512]{0}', space=vmem, size = 0x400, scoped, tag = 'input window, operand 4, single buffered']
    #allocation12 [shape = 'u8[4096]{0}', space=vmem, size = 0x1000, scoped, tag = 'output window, operand 0, single buffered']
    %10 = vsyncpa [#allocation4], 0
    %11 = vsyncpa [#allocation7], 0
    %12 = vsyncpa [#allocation10], 0
    %13 = vsyncpa [#allocation5], 0
    // Predicated region
    $region2: #{tpu_custom_call.1} parent=1 // pred_check
      _
    $region3: #{tpu_custom_call.1} parent=1 // pred_check_branch
      %15 = sbr.rel (0) target = $region5
    $region4: #{tpu_custom_call.1} parent=1 // pred_region
      %17 = vsyncadd [#allocation4], 0
      %s19 = sshll.u32 %s0, 4
      %s20 = int_to_ptr.hbm [resolvable:$true] %s19
      %s21 = sshll.u32 [#allocation3], 4
      %s22 = int_to_ptr.vmem [resolvable:$true] %s21
      %24 = dma.hbm_to_vmem [thread:$0]  %s20, 512, %s22, [#allocation4]
    $region5: #{tpu_custom_call.1} parent=1 // pred_fallthru
      _
    // Predicated region
    $region6: #{tpu_custom_call.1} parent=1 // pred_check
      _
    $region7: #{tpu_custom_call.1} parent=1 // pred_check_branch
      %26 = sbr.rel (0) target = $region9
    $region8: #{tpu_custom_call.1} parent=1 // pred_region
      %28 = vsyncadd [#allocation7], 0
      %s29 = sshll.u32 %s1, 4
      %s30 = int_to_ptr.hbm [resolvable:$true] %s29
      %s31 = sshll.u32 [#allocation6], 4
      %s32 = int_to_ptr.vmem [resolvable:$true] %s31
      %37 = dma.hbm_to_vmem [thread:$0]  %s30, 98304, %s32, [#allocation7], 768, 768, 48
    $region9: #{tpu_custom_call.1} parent=1 // pred_fallthru
      _
    // Predicated region
    $region10: #{tpu_custom_call.1} parent=1 // pred_check
      _
    $region11: #{tpu_custom_call.1} parent=1 // pred_check_branch
      %39 = sbr.rel (0) target = $region13
    $region12: #{tpu_custom_call.1} parent=1 // pred_region
      %41 = vsyncadd [#allocation7], 0
      %s43 = sshll.u32 %s2, 4
      %s44 = int_to_ptr.hbm [resolvable:$true] %s43
      %s45 = sshll.u32 [#allocation8], 4
      %s46 = int_to_ptr.vmem [resolvable:$true] %s45
      %48 = dma.hbm_to_vmem [thread:$0]  %s44, 192, %s46, [#allocation7]
    $region13: #{tpu_custom_call.1} parent=1 // pred_fallthru
      _
    // Predicated region
    $region14: #{tpu_custom_call.1} parent=1 // pred_check
      _
    $region15: #{tpu_custom_call.1} parent=1 // pred_check_branch
      %50 = sbr.rel (0) target = $region17
    $region16: #{tpu_custom_call.1} parent=1 // pred_region
      %52 = vsyncadd [#allocation10], 0
      %s53 = sshll.u32 %s3, 4
      %s54 = int_to_ptr.hbm [resolvable:$true] %s53
      %s55 = sshll.u32 [#allocation9], 4
      %s56 = int_to_ptr.vmem [resolvable:$true] %s55
      %61 = dma.hbm_to_vmem [thread:$0]  %s54, 11264, %s56, [#allocation10], 64, 64, 4
    $region17: #{tpu_custom_call.1} parent=1 // pred_fallthru
      _
    // Predicated region
    $region18: #{tpu_custom_call.1} parent=1 // pred_check
      _
    $region19: #{tpu_custom_call.1} parent=1 // pred_check_branch
      %63 = sbr.rel (0) target = $region21
    $region20: #{tpu_custom_call.1} parent=1 // pred_region
      %65 = vsyncadd [#allocation10], 0
      %s67 = sshll.u32 %s4, 4
      %s68 = int_to_ptr.hbm [resolvable:$true] %s67
      %s69 = sshll.u32 [#allocation11], 4
      %s70 = int_to_ptr.vmem [resolvable:$true] %s69
      %72 = dma.hbm_to_vmem [thread:$0]  %s68, 16, %s70, [#allocation10]
    $region21: #{tpu_custom_call.1} parent=1 // pred_fallthru
      _
    // Predicated region
    $region22: #{tpu_custom_call.1} parent=1 // pred_check
      _
    $region23: #{tpu_custom_call.1} parent=1 // pred_check_branch
      %74 = sbr.rel (0) target = $region25
    $region24: #{tpu_custom_call.1} parent=1 // pred_region
      %76 = dma.done [#allocation4], 512
    $region25: #{tpu_custom_call.1} parent=1 // pred_fallthru
      _
    // Predicated region
    $region26: #{tpu_custom_call.1} parent=1 // pred_check
      _
    $region27: #{tpu_custom_call.1} parent=1 // pred_check_branch
      %78 = sbr.rel (0) target = $region29
    $region28: #{tpu_custom_call.1} parent=1 // pred_region
      %80 = dma.done [#allocation7], 98304
    $region29: #{tpu_custom_call.1} parent=1 // pred_fallthru
      _
    // Predicated region
    $region30: #{tpu_custom_call.1} parent=1 // pred_check
      _
    $region31: #{tpu_custom_call.1} parent=1 // pred_check_branch
      %82 = sbr.rel (0) target = $region33
    $region32: #{tpu_custom_call.1} parent=1 // pred_region
      %84 = dma.done [#allocation7], 192
    $region33: #{tpu_custom_call.1} parent=1 // pred_fallthru
      _
    // Predicated region
    $region34: #{tpu_custom_call.1} parent=1 // pred_check
      _
    $region35: #{tpu_custom_call.1} parent=1 // pred_check_branch
      %86 = sbr.rel (0) target = $region37
    $region36: #{tpu_custom_call.1} parent=1 // pred_region
      %88 = dma.done [#allocation10], 11264
    $region37: #{tpu_custom_call.1} parent=1 // pred_fallthru
      _
    // Predicated region
    $region38: #{tpu_custom_call.1} parent=1 // pred_check
      _
    $region39: #{tpu_custom_call.1} parent=1 // pred_check_branch
      %90 = sbr.rel (0) target = $region41
    $region40: #{tpu_custom_call.1} parent=1 // pred_region
      %92 = dma.done [#allocation10], 16
    $region41: #{tpu_custom_call.1} parent=1 // pred_fallthru
      _
    %p93 = scmp.eq.s32.totalorder 0, 0
    // Predicated region
    $region42: #{tpu_custom_call.1} parent=1 // pred_check
      %p94 = pneg %p93
    $region43: #{tpu_custom_call.1} parent=1 // pred_check_branch
      %96 = sbr.rel (%p94) target = $region45
    $region44: #{tpu_custom_call.1} parent=1 // pred_region
      %97 = vst [vmem:[#allocation2] sm:$0xff] 0.0
      %98 = vst [vmem:[#allocation2 + $0x8] sm:$0xff] 0.0
      %99 = vst [vmem:[#allocation2 + $0x10] sm:$0xff] 0.0
      %100 = vst [vmem:[#allocation2 + $0x18] sm:$0xff] 0.0
      %101 = vst [vmem:[#allocation2 + $0x20] sm:$0xff] 0.0
      %102 = vst [vmem:[#allocation2 + $0x28] sm:$0xff] 0.0
      %103 = vst [vmem:[#allocation2 + $0x30] sm:$0xff] 0.0
      %104 = vst [vmem:[#allocation2 + $0x38] sm:$0xff] 0.0
      %105 = vst [vmem:[#allocation2 + $0x40] sm:$0xff] 0.0
      %106 = vst [vmem:[#allocation2 + $0x48] sm:$0xff] 0.0
      %107 = vst [vmem:[#allocation2 + $0x50] sm:$0xff] 0.0
      %108 = vst [vmem:[#allocation2 + $0x58] sm:$0xff] 0.0
    $region45: #{tpu_custom_call.1} parent=1 // pred_fallthru
      _
    %v109 = vld [vmem:[#allocation2] sm:$0xff]
    %v110 = vld [vmem:[#allocation2 + $0x8] sm:$0xff]
    %v111 = vld [vmem:[#allocation2 + $0x10] sm:$0xff]
    %v112 = vld [vmem:[#allocation2 + $0x18] sm:$0xff]
    %v113 = vld [vmem:[#allocation2 + $0x20] sm:$0xff]
    %v114 = vld [vmem:[#allocation2 + $0x28] sm:$0xff]
    %v115 = vld [vmem:[#allocation2 + $0x30] sm:$0xff]
    %v116 = vld [vmem:[#allocation2 + $0x38] sm:$0xff]
    %v117 = vld [vmem:[#allocation2 + $0x40] sm:$0xff]
    %v118 = vld [vmem:[#allocation2 + $0x48] sm:$0xff]
    %v119 = vld [vmem:[#allocation2 + $0x50] sm:$0xff]
    %v120 = vld [vmem:[#allocation2 + $0x58] sm:$0xff]
    %v121 = vld [vmem:[#allocation3] sm:$0xff]
    %v122 = vld [vmem:[#allocation3 + $0x8] sm:$0xff]
    %v123 = vld [vmem:[#allocation3 + $0x10] sm:$0xff]
    %v124 = vld [vmem:[#allocation3 + $0x18] sm:$0xff]
    %v125 = vld [vmem:[#allocation6] sm:$0xff]
    %v126 = vld [vmem:[#allocation6 + $0x8] sm:$0xff]
    %v127 = vld [vmem:[#allocation6 + $0x10] sm:$0xff]
    %v128 = vld [vmem:[#allocation6 + $0x18] sm:$0xff]
    %v129 = vld [vmem:[#allocation6 + $0x20] sm:$0xff]
    %v130 = vld [vmem:[#allocation6 + $0x28] sm:$0xff]
    %v131 = vld [vmem:[#allocation6 + $0x30] sm:$0xff]
    %v132 = vld [vmem:[#allocation6 + $0x38] sm:$0xff]
    %v133 = vld [vmem:[#allocation6 + $0x40] sm:$0xff]
    %v134 = vld [vmem:[#allocation6 + $0x48] sm:$0xff]
    %v135 = vld [vmem:[#allocation6 + $0x50] sm:$0xff]
    %v136 = vld [vmem:[#allocation6 + $0x58] sm:$0xff]
    %v137 = vld [vmem:[#allocation6 + $0x60] sm:$0xff]
    %v138 = vld [vmem:[#allocation6 + $0x68] sm:$0xff]
    %v139 = vld [vmem:[#allocation6 + $0x70] sm:$0xff]
    %v140 = vld [vmem:[#allocation6 + $0x78] sm:$0xff]
    %v141 = vld [vmem:[#allocation6 + $0x80] sm:$0xff]
    %v142 = vld [vmem:[#allocation6 + $0x88] sm:$0xff]
    %v143 = vld [vmem:[#allocation6 + $0x90] sm:$0xff]
    %v144 = vld [vmem:[#allocation6 + $0x98] sm:$0xff]
    %v145 = vld [vmem:[#allocation6 + $0xa0] sm:$0xff]
    %v146 = vld [vmem:[#allocation6 + $0xa8] sm:$0xff]
    %v147 = vld [vmem:[#allocation6 + $0xb0] sm:$0xff]
    %v148 = vld [vmem:[#allocation6 + $0xb8] sm:$0xff]
    %v149 = vld [vmem:[#allocation6 + $0xc0] sm:$0xff]
    %v150 = vld [vmem:[#allocation6 + $0xc8] sm:$0xff]
    %v151 = vld [vmem:[#allocation6 + $0xd0] sm:$0xff]
    %v152 = vld [vmem:[#allocation6 + $0xd8] sm:$0xff]
    %v153 = vld [vmem:[#allocation6 + $0xe0] sm:$0xff]
    %v154 = vld [vmem:[#allocation6 + $0xe8] sm:$0xff]
    %v155 = vld [vmem:[#allocation6 + $0xf0] sm:$0xff]
    %v156 = vld [vmem:[#allocation6 + $0xf8] sm:$0xff]
    %v157 = vld [vmem:[#allocation6 + $0x100] sm:$0xff]
    %v158 = vld [vmem:[#allocation6 + $0x108] sm:$0xff]
    %v159 = vld [vmem:[#allocation6 + $0x110] sm:$0xff]
    %v160 = vld [vmem:[#allocation6 + $0x118] sm:$0xff]
    %v161 = vld [vmem:[#allocation6 + $0x120] sm:$0xff]
    %v162 = vld [vmem:[#allocation6 + $0x128] sm:$0xff]
    %v163 = vld [vmem:[#allocation6 + $0x130] sm:$0xff]
    %v164 = vld [vmem:[#allocation6 + $0x138] sm:$0xff]
    %v165 = vld [vmem:[#allocation6 + $0x140] sm:$0xff]
    %v166 = vld [vmem:[#allocation6 + $0x148] sm:$0xff]
    %v167 = vld [vmem:[#allocation6 + $0x150] sm:$0xff]
    %v168 = vld [vmem:[#allocation6 + $0x158] sm:$0xff]
    %v169 = vld [vmem:[#allocation6 + $0x160] sm:$0xff]
    %v170 = vld [vmem:[#allocation6 + $0x168] sm:$0xff]
    %v171 = vld [vmem:[#allocation6 + $0x170] sm:$0xff]
    %v172 = vld [vmem:[#allocation6 + $0x178] sm:$0xff]
    %v173 = vld [vmem:[#allocation6 + $0x180] sm:$0xff]
    %v174 = vld [vmem:[#allocation6 + $0x188] sm:$0xff]
    %v175 = vld [vmem:[#allocation6 + $0x190] sm:$0xff]
    %v176 = vld [vmem:[#allocation6 + $0x198] sm:$0xff]
    %v177 = vld [vmem:[#allocation6 + $0x1a0] sm:$0xff]
    %v178 = vld [vmem:[#allocation6 + $0x1a8] sm:$0xff]
    %v179 = vld [vmem:[#allocation6 + $0x1b0] sm:$0xff]
    %v180 = vld [vmem:[#allocation6 + $0x1b8] sm:$0xff]
    %v181 = vld [vmem:[#allocation6 + $0x1c0] sm:$0xff]
    %v182 = vld [vmem:[#allocation6 + $0x1c8] sm:$0xff]
    %v183 = vld [vmem:[#allocation6 + $0x1d0] sm:$0xff]
    %v184 = vld [vmem:[#allocation6 + $0x1d8] sm:$0xff]
    %v185 = vld [vmem:[#allocation6 + $0x1e0] sm:$0xff]
    %v186 = vld [vmem:[#allocation6 + $0x1e8] sm:$0xff]
    %v187 = vld [vmem:[#allocation6 + $0x1f0] sm:$0xff]
    %v188 = vld [vmem:[#allocation6 + $0x1f8] sm:$0xff]
    %v189 = vld [vmem:[#allocation6 + $0x200] sm:$0xff]
    %v190 = vld [vmem:[#allocation6 + $0x208] sm:$0xff]
    %v191 = vld [vmem:[#allocation6 + $0x210] sm:$0xff]
    %v192 = vld [vmem:[#allocation6 + $0x218] sm:$0xff]
    %v193 = vld [vmem:[#allocation6 + $0x220] sm:$0xff]
    %v194 = vld [vmem:[#allocation6 + $0x228] sm:$0xff]
    %v195 = vld [vmem:[#allocation6 + $0x230] sm:$0xff]
    %v196 = vld [vmem:[#allocation6 + $0x238] sm:$0xff]
    %v197 = vld [vmem:[#allocation6 + $0x240] sm:$0xff]
    %v198 = vld [vmem:[#allocation6 + $0x248] sm:$0xff]
    %v199 = vld [vmem:[#allocation6 + $0x250] sm:$0xff]
    %v200 = vld [vmem:[#allocation6 + $0x258] sm:$0xff]
    %v201 = vld [vmem:[#allocation6 + $0x260] sm:$0xff]
    %v202 = vld [vmem:[#allocation6 + $0x268] sm:$0xff]
    %v203 = vld [vmem:[#allocation6 + $0x270] sm:$0xff]
    %v204 = vld [vmem:[#allocation6 + $0x278] sm:$0xff]
    %v205 = vld [vmem:[#allocation6 + $0x280] sm:$0xff]
    %v206 = vld [vmem:[#allocation6 + $0x288] sm:$0xff]
    %v207 = vld [vmem:[#allocation6 + $0x290] sm:$0xff]
    %v208 = vld [vmem:[#allocation6 + $0x298] sm:$0xff]
    %v209 = vld [vmem:[#allocation6 + $0x2a0] sm:$0xff]
    %v210 = vld [vmem:[#allocation6 + $0x2a8] sm:$0xff]
    %v211 = vld [vmem:[#allocation6 + $0x2b0] sm:$0xff]
    %v212 = vld [vmem:[#allocation6 + $0x2b8] sm:$0xff]
    %v213 = vld [vmem:[#allocation6 + $0x2c0] sm:$0xff]
    %v214 = vld [vmem:[#allocation6 + $0x2c8] sm:$0xff]
    %v215 = vld [vmem:[#allocation6 + $0x2d0] sm:$0xff]
    %v216 = vld [vmem:[#allocation6 + $0x2d8] sm:$0xff]
    %v217 = vld [vmem:[#allocation6 + $0x2e0] sm:$0xff]
    %v218 = vld [vmem:[#allocation6 + $0x2e8] sm:$0xff]
    %v219 = vld [vmem:[#allocation6 + $0x2f0] sm:$0xff]
    %v220 = vld [vmem:[#allocation6 + $0x2f8] sm:$0xff]
    %v221 = vld [vmem:[#allocation6 + $0x300] sm:$0xff]
    %v222 = vld [vmem:[#allocation6 + $0x308] sm:$0xff]
    %v223 = vld [vmem:[#allocation6 + $0x310] sm:$0xff]
    %v224 = vld [vmem:[#allocation6 + $0x318] sm:$0xff]
    %v225 = vld [vmem:[#allocation6 + $0x320] sm:$0xff]
    %v226 = vld [vmem:[#allocation6 + $0x328] sm:$0xff]
    %v227 = vld [vmem:[#allocation6 + $0x330] sm:$0xff]
    %v228 = vld [vmem:[#allocation6 + $0x338] sm:$0xff]
    %v229 = vld [vmem:[#allocation6 + $0x340] sm:$0xff]
    %v230 = vld [vmem:[#allocation6 + $0x348] sm:$0xff]
    %v231 = vld [vmem:[#allocation6 + $0x350] sm:$0xff]
    %v232 = vld [vmem:[#allocation6 + $0x358] sm:$0xff]
    %v233 = vld [vmem:[#allocation6 + $0x360] sm:$0xff]
    %v234 = vld [vmem:[#allocation6 + $0x368] sm:$0xff]
    %v235 = vld [vmem:[#allocation6 + $0x370] sm:$0xff]
    %v236 = vld [vmem:[#allocation6 + $0x378] sm:$0xff]
    %v237 = vld [vmem:[#allocation6 + $0x380] sm:$0xff]
    %v238 = vld [vmem:[#allocation6 + $0x388] sm:$0xff]
    %v239 = vld [vmem:[#allocation6 + $0x390] sm:$0xff]
    %v240 = vld [vmem:[#allocation6 + $0x398] sm:$0xff]
    %v241 = vld [vmem:[#allocation6 + $0x3a0] sm:$0xff]
    %v242 = vld [vmem:[#allocation6 + $0x3a8] sm:$0xff]
    %v243 = vld [vmem:[#allocation6 + $0x3b0] sm:$0xff]
    %v244 = vld [vmem:[#allocation6 + $0x3b8] sm:$0xff]
    %v245 = vld [vmem:[#allocation6 + $0x3c0] sm:$0xff]
    %v246 = vld [vmem:[#allocation6 + $0x3c8] sm:$0xff]
    %v247 = vld [vmem:[#allocation6 + $0x3d0] sm:$0xff]
    %v248 = vld [vmem:[#allocation6 + $0x3d8] sm:$0xff]
    %v249 = vld [vmem:[#allocation6 + $0x3e0] sm:$0xff]
    %v250 = vld [vmem:[#allocation6 + $0x3e8] sm:$0xff]
    %v251 = vld [vmem:[#allocation6 + $0x3f0] sm:$0xff]
    %v252 = vld [vmem:[#allocation6 + $0x3f8] sm:$0xff]
    %v253 = vld [vmem:[#allocation6 + $0x400] sm:$0xff]
    %v254 = vld [vmem:[#allocation6 + $0x408] sm:$0xff]
    %v255 = vld [vmem:[#allocation6 + $0x410] sm:$0xff]
    %v256 = vld [vmem:[#allocation6 + $0x418] sm:$0xff]
    %v257 = vld [vmem:[#allocation6 + $0x420] sm:$0xff]
    %v258 = vld [vmem:[#allocation6 + $0x428] sm:$0xff]
    %v259 = vld [vmem:[#allocation6 + $0x430] sm:$0xff]
    %v260 = vld [vmem:[#allocation6 + $0x438] sm:$0xff]
    %v261 = vld [vmem:[#allocation6 + $0x440] sm:$0xff]
    %v262 = vld [vmem:[#allocation6 + $0x448] sm:$0xff]
    %v263 = vld [vmem:[#allocation6 + $0x450] sm:$0xff]
    %v264 = vld [vmem:[#allocation6 + $0x458] sm:$0xff]
    %v265 = vld [vmem:[#allocation6 + $0x460] sm:$0xff]
    %v266 = vld [vmem:[#allocation6 + $0x468] sm:$0xff]
    %v267 = vld [vmem:[#allocation6 + $0x470] sm:$0xff]
    %v268 = vld [vmem:[#allocation6 + $0x478] sm:$0xff]
    %v269 = vld [vmem:[#allocation6 + $0x480] sm:$0xff]
    %v270 = vld [vmem:[#allocation6 + $0x488] sm:$0xff]
    %v271 = vld [vmem:[#allocation6 + $0x490] sm:$0xff]
    %v272 = vld [vmem:[#allocation6 + $0x498] sm:$0xff]
    %v273 = vld [vmem:[#allocation6 + $0x4a0] sm:$0xff]
    %v274 = vld [vmem:[#allocation6 + $0x4a8] sm:$0xff]
    %v275 = vld [vmem:[#allocation6 + $0x4b0] sm:$0xff]
    %v276 = vld [vmem:[#allocation6 + $0x4b8] sm:$0xff]
    %v277 = vld [vmem:[#allocation6 + $0x4c0] sm:$0xff]
    %v278 = vld [vmem:[#allocation6 + $0x4c8] sm:$0xff]
    %v279 = vld [vmem:[#allocation6 + $0x4d0] sm:$0xff]
    %v280 = vld [vmem:[#allocation6 + $0x4d8] sm:$0xff]
    %v281 = vld [vmem:[#allocation6 + $0x4e0] sm:$0xff]
    %v282 = vld [vmem:[#allocation6 + $0x4e8] sm:$0xff]
    %v283 = vld [vmem:[#allocation6 + $0x4f0] sm:$0xff]
    %v284 = vld [vmem:[#allocation6 + $0x4f8] sm:$0xff]
    %v285 = vld [vmem:[#allocation6 + $0x500] sm:$0xff]
    %v286 = vld [vmem:[#allocation6 + $0x508] sm:$0xff]
    %v287 = vld [vmem:[#allocation6 + $0x510] sm:$0xff]
    %v288 = vld [vmem:[#allocation6 + $0x518] sm:$0xff]
    %v289 = vld [vmem:[#allocation6 + $0x520] sm:$0xff]
    %v290 = vld [vmem:[#allocation6 + $0x528] sm:$0xff]
    %v291 = vld [vmem:[#allocation6 + $0x530] sm:$0xff]
    %v292 = vld [vmem:[#allocation6 + $0x538] sm:$0xff]
    %v293 = vld [vmem:[#allocation6 + $0x540] sm:$0xff]
    %v294 = vld [vmem:[#allocation6 + $0x548] sm:$0xff]
    %v295 = vld [vmem:[#allocation6 + $0x550] sm:$0xff]
    %v296 = vld [vmem:[#allocation6 + $0x558] sm:$0xff]
    %v297 = vld [vmem:[#allocation6 + $0x560] sm:$0xff]
    %v298 = vld [vmem:[#allocation6 + $0x568] sm:$0xff]
    %v299 = vld [vmem:[#allocation6 + $0x570] sm:$0xff]
    %v300 = vld [vmem:[#allocation6 + $0x578] sm:$0xff]
    %v301 = vld [vmem:[#allocation6 + $0x580] sm:$0xff]
    %v302 = vld [vmem:[#allocation6 + $0x588] sm:$0xff]
    %v303 = vld [vmem:[#allocation6 + $0x590] sm:$0xff]
    %v304 = vld [vmem:[#allocation6 + $0x598] sm:$0xff]
    %v305 = vld [vmem:[#allocation6 + $0x5a0] sm:$0xff]
    %v306 = vld [vmem:[#allocation6 + $0x5a8] sm:$0xff]
    %v307 = vld [vmem:[#allocation6 + $0x5b0] sm:$0xff]
    %v308 = vld [vmem:[#allocation6 + $0x5b8] sm:$0xff]
    %v309 = vld [vmem:[#allocation6 + $0x5c0] sm:$0xff]
    %v310 = vld [vmem:[#allocation6 + $0x5c8] sm:$0xff]
    %v311 = vld [vmem:[#allocation6 + $0x5d0] sm:$0xff]
    %v312 = vld [vmem:[#allocation6 + $0x5d8] sm:$0xff]
    %v313 = vld [vmem:[#allocation6 + $0x5e0] sm:$0xff]
    %v314 = vld [vmem:[#allocation6 + $0x5e8] sm:$0xff]
    %v315 = vld [vmem:[#allocation6 + $0x5f0] sm:$0xff]
    %v316 = vld [vmem:[#allocation6 + $0x5f8] sm:$0xff]
    %v317 = vld [vmem:[#allocation6 + $0x600] sm:$0xff]
    %v318 = vld [vmem:[#allocation6 + $0x608] sm:$0xff]
    %v319 = vld [vmem:[#allocation6 + $0x610] sm:$0xff]
    %v320 = vld [vmem:[#allocation6 + $0x618] sm:$0xff]
    %v321 = vld [vmem:[#allocation6 + $0x620] sm:$0xff]
    %v322 = vld [vmem:[#allocation6 + $0x628] sm:$0xff]
    %v323 = vld [vmem:[#allocation6 + $0x630] sm:$0xff]
    %v324 = vld [vmem:[#allocation6 + $0x638] sm:$0xff]
    %v325 = vld [vmem:[#allocation6 + $0x640] sm:$0xff]
    %v326 = vld [vmem:[#allocation6 + $0x648] sm:$0xff]
    %v327 = vld [vmem:[#allocation6 + $0x650] sm:$0xff]
    %v328 = vld [vmem:[#allocation6 + $0x658] sm:$0xff]
    %v329 = vld [vmem:[#allocation6 + $0x660] sm:$0xff]
    %v330 = vld [vmem:[#allocation6 + $0x668] sm:$0xff]
    %v331 = vld [vmem:[#allocation6 + $0x670] sm:$0xff]
    %v332 = vld [vmem:[#allocation6 + $0x678] sm:$0xff]
    %v333 = vld [vmem:[#allocation6 + $0x680] sm:$0xff]
    %v334 = vld [vmem:[#allocation6 + $0x688] sm:$0xff]
    %v335 = vld [vmem:[#allocation6 + $0x690] sm:$0xff]
    %v336 = vld [vmem:[#allocation6 + $0x698] sm:$0xff]
    %v337 = vld [vmem:[#allocation6 + $0x6a0] sm:$0xff]
    %v338 = vld [vmem:[#allocation6 + $0x6a8] sm:$0xff]
    %v339 = vld [vmem:[#allocation6 + $0x6b0] sm:$0xff]
    %v340 = vld [vmem:[#allocation6 + $0x6b8] sm:$0xff]
    %v341 = vld [vmem:[#allocation6 + $0x6c0] sm:$0xff]
    %v342 = vld [vmem:[#allocation6 + $0x6c8] sm:$0xff]
    %v343 = vld [vmem:[#allocation6 + $0x6d0] sm:$0xff]
    %v344 = vld [vmem:[#allocation6 + $0x6d8] sm:$0xff]
    %v345 = vld [vmem:[#allocation6 + $0x6e0] sm:$0xff]
    %v346 = vld [vmem:[#allocation6 + $0x6e8] sm:$0xff]
    %v347 = vld [vmem:[#allocation6 + $0x6f0] sm:$0xff]
    %v348 = vld [vmem:[#allocation6 + $0x6f8] sm:$0xff]
    %v349 = vld [vmem:[#allocation6 + $0x700] sm:$0xff]
    %v350 = vld [vmem:[#allocation6 + $0x708] sm:$0xff]
    %v351 = vld [vmem:[#allocation6 + $0x710] sm:$0xff]
    %v352 = vld [vmem:[#allocation6 + $0x718] sm:$0xff]
    %v353 = vld [vmem:[#allocation6 + $0x720] sm:$0xff]
    %v354 = vld [vmem:[#allocation6 + $0x728] sm:$0xff]
    %v355 = vld [vmem:[#allocation6 + $0x730] sm:$0xff]
    %v356 = vld [vmem:[#allocation6 + $0x738] sm:$0xff]
    %v357 = vld [vmem:[#allocation6 + $0x740] sm:$0xff]
    %v358 = vld [vmem:[#allocation6 + $0x748] sm:$0xff]
    %v359 = vld [vmem:[#allocation6 + $0x750] sm:$0xff]
    %v360 = vld [vmem:[#allocation6 + $0x758] sm:$0xff]
    %v361 = vld [vmem:[#allocation6 + $0x760] sm:$0xff]
    %v362 = vld [vmem:[#allocation6 + $0x768] sm:$0xff]
    %v363 = vld [vmem:[#allocation6 + $0x770] sm:$0xff]
    %v364 = vld [vmem:[#allocation6 + $0x778] sm:$0xff]
    %v365 = vld [vmem:[#allocation6 + $0x780] sm:$0xff]
    %v366 = vld [vmem:[#allocation6 + $0x788] sm:$0xff]
    %v367 = vld [vmem:[#allocation6 + $0x790] sm:$0xff]
    %v368 = vld [vmem:[#allocation6 + $0x798] sm:$0xff]
    %v369 = vld [vmem:[#allocation6 + $0x7a0] sm:$0xff]
    %v370 = vld [vmem:[#allocation6 + $0x7a8] sm:$0xff]
    %v371 = vld [vmem:[#allocation6 + $0x7b0] sm:$0xff]
    %v372 = vld [vmem:[#allocation6 + $0x7b8] sm:$0xff]
    %v373 = vld [vmem:[#allocation6 + $0x7c0] sm:$0xff]
    %v374 = vld [vmem:[#allocation6 + $0x7c8] sm:$0xff]
    %v375 = vld [vmem:[#allocation6 + $0x7d0] sm:$0xff]
    %v376 = vld [vmem:[#allocation6 + $0x7d8] sm:$0xff]
    %v377 = vld [vmem:[#allocation6 + $0x7e0] sm:$0xff]
    %v378 = vld [vmem:[#allocation6 + $0x7e8] sm:$0xff]
    %v379 = vld [vmem:[#allocation6 + $0x7f0] sm:$0xff]
    %v380 = vld [vmem:[#allocation6 + $0x7f8] sm:$0xff]
    %v381 = vld [vmem:[#allocation6 + $0x800] sm:$0xff]
    %v382 = vld [vmem:[#allocation6 + $0x808] sm:$0xff]
    %v383 = vld [vmem:[#allocation6 + $0x810] sm:$0xff]
    %v384 = vld [vmem:[#allocation6 + $0x818] sm:$0xff]
    %v385 = vld [vmem:[#allocation6 + $0x820] sm:$0xff]
    %v386 = vld [vmem:[#allocation6 + $0x828] sm:$0xff]
    %v387 = vld [vmem:[#allocation6 + $0x830] sm:$0xff]
    %v388 = vld [vmem:[#allocation6 + $0x838] sm:$0xff]
    %v389 = vld [vmem:[#allocation6 + $0x840] sm:$0xff]
    %v390 = vld [vmem:[#allocation6 + $0x848] sm:$0xff]
    %v391 = vld [vmem:[#allocation6 + $0x850] sm:$0xff]
    %v392 = vld [vmem:[#allocation6 + $0x858] sm:$0xff]
    %v393 = vld [vmem:[#allocation6 + $0x860] sm:$0xff]
    %v394 = vld [vmem:[#allocation6 + $0x868] sm:$0xff]
    %v395 = vld [vmem:[#allocation6 + $0x870] sm:$0xff]
    %v396 = vld [vmem:[#allocation6 + $0x878] sm:$0xff]
    %v397 = vld [vmem:[#allocation6 + $0x880] sm:$0xff]
    %v398 = vld [vmem:[#allocation6 + $0x888] sm:$0xff]
    %v399 = vld [vmem:[#allocation6 + $0x890] sm:$0xff]
    %v400 = vld [vmem:[#allocation6 + $0x898] sm:$0xff]
    %v401 = vld [vmem:[#allocation6 + $0x8a0] sm:$0xff]
    %v402 = vld [vmem:[#allocation6 + $0x8a8] sm:$0xff]
    %v403 = vld [vmem:[#allocation6 + $0x8b0] sm:$0xff]
    %v404 = vld [vmem:[#allocation6 + $0x8b8] sm:$0xff]
    %v405 = vld [vmem:[#allocation6 + $0x8c0] sm:$0xff]
    %v406 = vld [vmem:[#allocation6 + $0x8c8] sm:$0xff]
    %v407 = vld [vmem:[#allocation6 + $0x8d0] sm:$0xff]
    %v408 = vld [vmem:[#allocation6 + $0x8d8] sm:$0xff]
    %v409 = vld [vmem:[#allocation6 + $0x8e0] sm:$0xff]
    %v410 = vld [vmem:[#allocation6 + $0x8e8] sm:$0xff]
    %v411 = vld [vmem:[#allocation6 + $0x8f0] sm:$0xff]
    %v412 = vld [vmem:[#allocation6 + $0x8f8] sm:$0xff]
    %v413 = vld [vmem:[#allocation6 + $0x900] sm:$0xff]
    %v414 = vld [vmem:[#allocation6 + $0x908] sm:$0xff]
    %v415 = vld [vmem:[#allocation6 + $0x910] sm:$0xff]
    %v416 = vld [vmem:[#allocation6 + $0x918] sm:$0xff]
    %v417 = vld [vmem:[#allocation6 + $0x920] sm:$0xff]
    %v418 = vld [vmem:[#allocation6 + $0x928] sm:$0xff]
    %v419 = vld [vmem:[#allocation6 + $0x930] sm:$0xff]
    %v420 = vld [vmem:[#allocation6 + $0x938] sm:$0xff]
    %v421 = vld [vmem:[#allocation6 + $0x940] sm:$0xff]
    %v422 = vld [vmem:[#allocation6 + $0x948] sm:$0xff]
    %v423 = vld [vmem:[#allocation6 + $0x950] sm:$0xff]
    %v424 = vld [vmem:[#allocation6 + $0x958] sm:$0xff]
    %v425 = vld [vmem:[#allocation6 + $0x960] sm:$0xff]
    %v426 = vld [vmem:[#allocation6 + $0x968] sm:$0xff]
    %v427 = vld [vmem:[#allocation6 + $0x970] sm:$0xff]
    %v428 = vld [vmem:[#allocation6 + $0x978] sm:$0xff]
    %v429 = vld [vmem:[#allocation6 + $0x980] sm:$0xff]
    %v430 = vld [vmem:[#allocation6 + $0x988] sm:$0xff]
    %v431 = vld [vmem:[#allocation6 + $0x990] sm:$0xff]
    %v432 = vld [vmem:[#allocation6 + $0x998] sm:$0xff]
    %v433 = vld [vmem:[#allocation6 + $0x9a0] sm:$0xff]
    %v434 = vld [vmem:[#allocation6 + $0x9a8] sm:$0xff]
    %v435 = vld [vmem:[#allocation6 + $0x9b0] sm:$0xff]
    %v436 = vld [vmem:[#allocation6 + $0x9b8] sm:$0xff]
    %v437 = vld [vmem:[#allocation6 + $0x9c0] sm:$0xff]
    %v438 = vld [vmem:[#allocation6 + $0x9c8] sm:$0xff]
    %v439 = vld [vmem:[#allocation6 + $0x9d0] sm:$0xff]
    %v440 = vld [vmem:[#allocation6 + $0x9d8] sm:$0xff]
    %v441 = vld [vmem:[#allocation6 + $0x9e0] sm:$0xff]
    %v442 = vld [vmem:[#allocation6 + $0x9e8] sm:$0xff]
    %v443 = vld [vmem:[#allocation6 + $0x9f0] sm:$0xff]
    %v444 = vld [vmem:[#allocation6 + $0x9f8] sm:$0xff]
    %v445 = vld [vmem:[#allocation6 + $0xa00] sm:$0xff]
    %v446 = vld [vmem:[#allocation6 + $0xa08] sm:$0xff]
    %v447 = vld [vmem:[#allocation6 + $0xa10] sm:$0xff]
    %v448 = vld [vmem:[#allocation6 + $0xa18] sm:$0xff]
    %v449 = vld [vmem:[#allocation6 + $0xa20] sm:$0xff]
    %v450 = vld [vmem:[#allocation6 + $0xa28] sm:$0xff]
    %v451 = vld [vmem:[#allocation6 + $0xa30] sm:$0xff]
    %v452 = vld [vmem:[#allocation6 + $0xa38] sm:$0xff]
    %v453 = vld [vmem:[#allocation6 + $0xa40] sm:$0xff]
    %v454 = vld [vmem:[#allocation6 + $0xa48] sm:$0xff]
    %v455 = vld [vmem:[#allocation6 + $0xa50] sm:$0xff]
    %v456 = vld [vmem:[#allocation6 + $0xa58] sm:$0xff]
    %v457 = vld [vmem:[#allocation6 + $0xa60] sm:$0xff]
    %v458 = vld [vmem:[#allocation6 + $0xa68] sm:$0xff]
    %v459 = vld [vmem:[#allocation6 + $0xa70] sm:$0xff]
    %v460 = vld [vmem:[#allocation6 + $0xa78] sm:$0xff]
    %v461 = vld [vmem:[#allocation6 + $0xa80] sm:$0xff]
    %v462 = vld [vmem:[#allocation6 + $0xa88] sm:$0xff]
    %v463 = vld [vmem:[#allocation6 + $0xa90] sm:$0xff]
    %v464 = vld [vmem:[#allocation6 + $0xa98] sm:$0xff]
    %v465 = vld [vmem:[#allocation6 + $0xaa0] sm:$0xff]
    %v466 = vld [vmem:[#allocation6 + $0xaa8] sm:$0xff]
    %v467 = vld [vmem:[#allocation6 + $0xab0] sm:$0xff]
    %v468 = vld [vmem:[#allocation6 + $0xab8] sm:$0xff]
    %v469 = vld [vmem:[#allocation6 + $0xac0] sm:$0xff]
    %v470 = vld [vmem:[#allocation6 + $0xac8] sm:$0xff]
    %v471 = vld [vmem:[#allocation6 + $0xad0] sm:$0xff]
    %v472 = vld [vmem:[#allocation6 + $0xad8] sm:$0xff]
    %v473 = vld [vmem:[#allocation6 + $0xae0] sm:$0xff]
    %v474 = vld [vmem:[#allocation6 + $0xae8] sm:$0xff]
    %v475 = vld [vmem:[#allocation6 + $0xaf0] sm:$0xff]
    %v476 = vld [vmem:[#allocation6 + $0xaf8] sm:$0xff]
    %v477 = vld [vmem:[#allocation6 + $0xb00] sm:$0xff]
    %v478 = vld [vmem:[#allocation6 + $0xb08] sm:$0xff]
    %v479 = vld [vmem:[#allocation6 + $0xb10] sm:$0xff]
    %v480 = vld [vmem:[#allocation6 + $0xb18] sm:$0xff]
    %v481 = vld [vmem:[#allocation6 + $0xb20] sm:$0xff]
    %v482 = vld [vmem:[#allocation6 + $0xb28] sm:$0xff]
    %v483 = vld [vmem:[#allocation6 + $0xb30] sm:$0xff]
    %v484 = vld [vmem:[#allocation6 + $0xb38] sm:$0xff]
    %v485 = vld [vmem:[#allocation6 + $0xb40] sm:$0xff]
    %v486 = vld [vmem:[#allocation6 + $0xb48] sm:$0xff]
    %v487 = vld [vmem:[#allocation6 + $0xb50] sm:$0xff]
    %v488 = vld [vmem:[#allocation6 + $0xb58] sm:$0xff]
    %v489 = vld [vmem:[#allocation6 + $0xb60] sm:$0xff]
    %v490 = vld [vmem:[#allocation6 + $0xb68] sm:$0xff]
    %v491 = vld [vmem:[#allocation6 + $0xb70] sm:$0xff]
    %v492 = vld [vmem:[#allocation6 + $0xb78] sm:$0xff]
    %v493 = vld [vmem:[#allocation6 + $0xb80] sm:$0xff]
    %v494 = vld [vmem:[#allocation6 + $0xb88] sm:$0xff]
    %v495 = vld [vmem:[#allocation6 + $0xb90] sm:$0xff]
    %v496 = vld [vmem:[#allocation6 + $0xb98] sm:$0xff]
    %v497 = vld [vmem:[#allocation6 + $0xba0] sm:$0xff]
    %v498 = vld [vmem:[#allocation6 + $0xba8] sm:$0xff]
    %v499 = vld [vmem:[#allocation6 + $0xbb0] sm:$0xff]
    %v500 = vld [vmem:[#allocation6 + $0xbb8] sm:$0xff]
    %v501 = vld [vmem:[#allocation6 + $0xbc0] sm:$0xff]
    %v502 = vld [vmem:[#allocation6 + $0xbc8] sm:$0xff]
    %v503 = vld [vmem:[#allocation6 + $0xbd0] sm:$0xff]
    %v504 = vld [vmem:[#allocation6 + $0xbd8] sm:$0xff]
    %v505 = vld [vmem:[#allocation6 + $0xbe0] sm:$0xff]
    %v506 = vld [vmem:[#allocation6 + $0xbe8] sm:$0xff]
    %v507 = vld [vmem:[#allocation6 + $0xbf0] sm:$0xff]
    %v508 = vld [vmem:[#allocation6 + $0xbf8] sm:$0xff]
    %v509 = vld [vmem:[#allocation6 + $0xc00] sm:$0xff]
    %v510 = vld [vmem:[#allocation6 + $0xc08] sm:$0xff]
    %v511 = vld [vmem:[#allocation6 + $0xc10] sm:$0xff]
    %v512 = vld [vmem:[#allocation6 + $0xc18] sm:$0xff]
    %v513 = vld [vmem:[#allocation6 + $0xc20] sm:$0xff]
    %v514 = vld [vmem:[#allocation6 + $0xc28] sm:$0xff]
    %v515 = vld [vmem:[#allocation6 + $0xc30] sm:$0xff]
    %v516 = vld [vmem:[#allocation6 + $0xc38] sm:$0xff]
    %v517 = vld [vmem:[#allocation6 + $0xc40] sm:$0xff]
    %v518 = vld [vmem:[#allocation6 + $0xc48] sm:$0xff]
    %v519 = vld [vmem:[#allocation6 + $0xc50] sm:$0xff]
    %v520 = vld [vmem:[#allocation6 + $0xc58] sm:$0xff]
    %v521 = vld [vmem:[#allocation6 + $0xc60] sm:$0xff]
    %v522 = vld [vmem:[#allocation6 + $0xc68] sm:$0xff]
    %v523 = vld [vmem:[#allocation6 + $0xc70] sm:$0xff]
    %v524 = vld [vmem:[#allocation6 + $0xc78] sm:$0xff]
    %v525 = vld [vmem:[#allocation6 + $0xc80] sm:$0xff]
    %v526 = vld [vmem:[#allocation6 + $0xc88] sm:$0xff]
    %v527 = vld [vmem:[#allocation6 + $0xc90] sm:$0xff]
    %v528 = vld [vmem:[#allocation6 + $0xc98] sm:$0xff]
    %v529 = vld [vmem:[#allocation6 + $0xca0] sm:$0xff]
    %v530 = vld [vmem:[#allocation6 + $0xca8] sm:$0xff]
    %v531 = vld [vmem:[#allocation6 + $0xcb0] sm:$0xff]
    %v532 = vld [vmem:[#allocation6 + $0xcb8] sm:$0xff]
    %v533 = vld [vmem:[#allocation6 + $0xcc0] sm:$0xff]
    %v534 = vld [vmem:[#allocation6 + $0xcc8] sm:$0xff]
    %v535 = vld [vmem:[#allocation6 + $0xcd0] sm:$0xff]
    %v536 = vld [vmem:[#allocation6 + $0xcd8] sm:$0xff]
    %v537 = vld [vmem:[#allocation6 + $0xce0] sm:$0xff]
    %v538 = vld [vmem:[#allocation6 + $0xce8] sm:$0xff]
    %v539 = vld [vmem:[#allocation6 + $0xcf0] sm:$0xff]
    %v540 = vld [vmem:[#allocation6 + $0xcf8] sm:$0xff]
    %v541 = vld [vmem:[#allocation6 + $0xd00] sm:$0xff]
    %v542 = vld [vmem:[#allocation6 + $0xd08] sm:$0xff]
    %v543 = vld [vmem:[#allocation6 + $0xd10] sm:$0xff]
    %v544 = vld [vmem:[#allocation6 + $0xd18] sm:$0xff]
    %v545 = vld [vmem:[#allocation6 + $0xd20] sm:$0xff]
    %v546 = vld [vmem:[#allocation6 + $0xd28] sm:$0xff]
    %v547 = vld [vmem:[#allocation6 + $0xd30] sm:$0xff]
    %v548 = vld [vmem:[#allocation6 + $0xd38] sm:$0xff]
    %v549 = vld [vmem:[#allocation6 + $0xd40] sm:$0xff]
    %v550 = vld [vmem:[#allocation6 + $0xd48] sm:$0xff]
    %v551 = vld [vmem:[#allocation6 + $0xd50] sm:$0xff]
    %v552 = vld [vmem:[#allocation6 + $0xd58] sm:$0xff]
    %v553 = vld [vmem:[#allocation6 + $0xd60] sm:$0xff]
    %v554 = vld [vmem:[#allocation6 + $0xd68] sm:$0xff]
    %v555 = vld [vmem:[#allocation6 + $0xd70] sm:$0xff]
    %v556 = vld [vmem:[#allocation6 + $0xd78] sm:$0xff]
    %v557 = vld [vmem:[#allocation6 + $0xd80] sm:$0xff]
    %v558 = vld [vmem:[#allocation6 + $0xd88] sm:$0xff]
    %v559 = vld [vmem:[#allocation6 + $0xd90] sm:$0xff]
    %v560 = vld [vmem:[#allocation6 + $0xd98] sm:$0xff]
    %v561 = vld [vmem:[#allocation6 + $0xda0] sm:$0xff]
    %v562 = vld [vmem:[#allocation6 + $0xda8] sm:$0xff]
    %v563 = vld [vmem:[#allocation6 + $0xdb0] sm:$0xff]
    %v564 = vld [vmem:[#allocation6 + $0xdb8] sm:$0xff]
    %v565 = vld [vmem:[#allocation6 + $0xdc0] sm:$0xff]
    %v566 = vld [vmem:[#allocation6 + $0xdc8] sm:$0xff]
    %v567 = vld [vmem:[#allocation6 + $0xdd0] sm:$0xff]
    %v568 = vld [vmem:[#allocation6 + $0xdd8] sm:$0xff]
    %v569 = vld [vmem:[#allocation6 + $0xde0] sm:$0xff]
    %v570 = vld [vmem:[#allocation6 + $0xde8] sm:$0xff]
    %v571 = vld [vmem:[#allocation6 + $0xdf0] sm:$0xff]
    %v572 = vld [vmem:[#allocation6 + $0xdf8] sm:$0xff]
    %v573 = vld [vmem:[#allocation6 + $0xe00] sm:$0xff]
    %v574 = vld [vmem:[#allocation6 + $0xe08] sm:$0xff]
    %v575 = vld [vmem:[#allocation6 + $0xe10] sm:$0xff]
    %v576 = vld [vmem:[#allocation6 + $0xe18] sm:$0xff]
    %v577 = vld [vmem:[#allocation6 + $0xe20] sm:$0xff]
    %v578 = vld [vmem:[#allocation6 + $0xe28] sm:$0xff]
    %v579 = vld [vmem:[#allocation6 + $0xe30] sm:$0xff]
    %v580 = vld [vmem:[#allocation6 + $0xe38] sm:$0xff]
    %v581 = vld [vmem:[#allocation6 + $0xe40] sm:$0xff]
    %v582 = vld [vmem:[#allocation6 + $0xe48] sm:$0xff]
    %v583 = vld [vmem:[#allocation6 + $0xe50] sm:$0xff]
    %v584 = vld [vmem:[#allocation6 + $0xe58] sm:$0xff]
    %v585 = vld [vmem:[#allocation6 + $0xe60] sm:$0xff]
    %v586 = vld [vmem:[#allocation6 + $0xe68] sm:$0xff]
    %v587 = vld [vmem:[#allocation6 + $0xe70] sm:$0xff]
    %v588 = vld [vmem:[#allocation6 + $0xe78] sm:$0xff]
    %v589 = vld [vmem:[#allocation6 + $0xe80] sm:$0xff]
    %v590 = vld [vmem:[#allocation6 + $0xe88] sm:$0xff]
    %v591 = vld [vmem:[#allocation6 + $0xe90] sm:$0xff]
    %v592 = vld [vmem:[#allocation6 + $0xe98] sm:$0xff]
    %v593 = vld [vmem:[#allocation6 + $0xea0] sm:$0xff]
    %v594 = vld [vmem:[#allocation6 + $0xea8] sm:$0xff]
    %v595 = vld [vmem:[#allocation6 + $0xeb0] sm:$0xff]
    %v596 = vld [vmem:[#allocation6 + $0xeb8] sm:$0xff]
    %v597 = vld [vmem:[#allocation6 + $0xec0] sm:$0xff]
    %v598 = vld [vmem:[#allocation6 + $0xec8] sm:$0xff]
    %v599 = vld [vmem:[#allocation6 + $0xed0] sm:$0xff]
    %v600 = vld [vmem:[#allocation6 + $0xed8] sm:$0xff]
    %v601 = vld [vmem:[#allocation6 + $0xee0] sm:$0xff]
    %v602 = vld [vmem:[#allocation6 + $0xee8] sm:$0xff]
    %v603 = vld [vmem:[#allocation6 + $0xef0] sm:$0xff]
    %v604 = vld [vmem:[#allocation6 + $0xef8] sm:$0xff]
    %v605 = vld [vmem:[#allocation6 + $0xf00] sm:$0xff]
    %v606 = vld [vmem:[#allocation6 + $0xf08] sm:$0xff]
    %v607 = vld [vmem:[#allocation6 + $0xf10] sm:$0xff]
    %v608 = vld [vmem:[#allocation6 + $0xf18] sm:$0xff]
    %v609 = vld [vmem:[#allocation6 + $0xf20] sm:$0xff]
    %v610 = vld [vmem:[#allocation6 + $0xf28] sm:$0xff]
    %v611 = vld [vmem:[#allocation6 + $0xf30] sm:$0xff]
    %v612 = vld [vmem:[#allocation6 + $0xf38] sm:$0xff]
    %v613 = vld [vmem:[#allocation6 + $0xf40] sm:$0xff]
    %v614 = vld [vmem:[#allocation6 + $0xf48] sm:$0xff]
    %v615 = vld [vmem:[#allocation6 + $0xf50] sm:$0xff]
    %v616 = vld [vmem:[#allocation6 + $0xf58] sm:$0xff]
    %v617 = vld [vmem:[#allocation6 + $0xf60] sm:$0xff]
    %v618 = vld [vmem:[#allocation6 + $0xf68] sm:$0xff]
    %v619 = vld [vmem:[#allocation6 + $0xf70] sm:$0xff]
    %v620 = vld [vmem:[#allocation6 + $0xf78] sm:$0xff]
    %v621 = vld [vmem:[#allocation6 + $0xf80] sm:$0xff]
    %v622 = vld [vmem:[#allocation6 + $0xf88] sm:$0xff]
    %v623 = vld [vmem:[#allocation6 + $0xf90] sm:$0xff]
    %v624 = vld [vmem:[#allocation6 + $0xf98] sm:$0xff]
    %v625 = vld [vmem:[#allocation6 + $0xfa0] sm:$0xff]
    %v626 = vld [vmem:[#allocation6 + $0xfa8] sm:$0xff]
    %v627 = vld [vmem:[#allocation6 + $0xfb0] sm:$0xff]
    %v628 = vld [vmem:[#allocation6 + $0xfb8] sm:$0xff]
    %v629 = vld [vmem:[#allocation6 + $0xfc0] sm:$0xff]
    %v630 = vld [vmem:[#allocation6 + $0xfc8] sm:$0xff]
    %v631 = vld [vmem:[#allocation6 + $0xfd0] sm:$0xff]
    %v632 = vld [vmem:[#allocation6 + $0xfd8] sm:$0xff]
    %v633 = vld [vmem:[#allocation6 + $0xfe0] sm:$0xff]
    %v634 = vld [vmem:[#allocation6 + $0xfe8] sm:$0xff]
    %v635 = vld [vmem:[#allocation6 + $0xff0] sm:$0xff]
    %v636 = vld [vmem:[#allocation6 + $0xff8] sm:$0xff]
    %v637 = vld [vmem:[#allocation6 + $0x1000] sm:$0xff]
    %v638 = vld [vmem:[#allocation6 + $0x1008] sm:$0xff]
    %v639 = vld [vmem:[#allocation6 + $0x1010] sm:$0xff]
    %v640 = vld [vmem:[#allocation6 + $0x1018] sm:$0xff]
    %v641 = vld [vmem:[#allocation6 + $0x1020] sm:$0xff]
    %v642 = vld [vmem:[#allocation6 + $0x1028] sm:$0xff]
    %v643 = vld [vmem:[#allocation6 + $0x1030] sm:$0xff]
    %v644 = vld [vmem:[#allocation6 + $0x1038] sm:$0xff]
    %v645 = vld [vmem:[#allocation6 + $0x1040] sm:$0xff]
    %v646 = vld [vmem:[#allocation6 + $0x1048] sm:$0xff]
    %v647 = vld [vmem:[#allocation6 + $0x1050] sm:$0xff]
    %v648 = vld [vmem:[#allocation6 + $0x1058] sm:$0xff]
    %v649 = vld [vmem:[#allocation6 + $0x1060] sm:$0xff]
    %v650 = vld [vmem:[#allocation6 + $0x1068] sm:$0xff]
    %v651 = vld [vmem:[#allocation6 + $0x1070] sm:$0xff]
    %v652 = vld [vmem:[#allocation6 + $0x1078] sm:$0xff]
    %v653 = vld [vmem:[#allocation6 + $0x1080] sm:$0xff]
    %v654 = vld [vmem:[#allocation6 + $0x1088] sm:$0xff]
    %v655 = vld [vmem:[#allocation6 + $0x1090] sm:$0xff]
    %v656 = vld [vmem:[#allocation6 + $0x1098] sm:$0xff]
    %v657 = vld [vmem:[#allocation6 + $0x10a0] sm:$0xff]
    %v658 = vld [vmem:[#allocation6 + $0x10a8] sm:$0xff]
    %v659 = vld [vmem:[#allocation6 + $0x10b0] sm:$0xff]
    %v660 = vld [vmem:[#allocation6 + $0x10b8] sm:$0xff]
    %v661 = vld [vmem:[#allocation6 + $0x10c0] sm:$0xff]
    %v662 = vld [vmem:[#allocation6 + $0x10c8] sm:$0xff]
    %v663 = vld [vmem:[#allocation6 + $0x10d0] sm:$0xff]
    %v664 = vld [vmem:[#allocation6 + $0x10d8] sm:$0xff]
    %v665 = vld [vmem:[#allocation6 + $0x10e0] sm:$0xff]
    %v666 = vld [vmem:[#allocation6 + $0x10e8] sm:$0xff]
    %v667 = vld [vmem:[#allocation6 + $0x10f0] sm:$0xff]
    %v668 = vld [vmem:[#allocation6 + $0x10f8] sm:$0xff]
    %v669 = vld [vmem:[#allocation6 + $0x1100] sm:$0xff]
    %v670 = vld [vmem:[#allocation6 + $0x1108] sm:$0xff]
    %v671 = vld [vmem:[#allocation6 + $0x1110] sm:$0xff]
    %v672 = vld [vmem:[#allocation6 + $0x1118] sm:$0xff]
    %v673 = vld [vmem:[#allocation6 + $0x1120] sm:$0xff]
    %v674 = vld [vmem:[#allocation6 + $0x1128] sm:$0xff]
    %v675 = vld [vmem:[#allocation6 + $0x1130] sm:$0xff]
    %v676 = vld [vmem:[#allocation6 + $0x1138] sm:$0xff]
    %v677 = vld [vmem:[#allocation6 + $0x1140] sm:$0xff]
    %v678 = vld [vmem:[#allocation6 + $0x1148] sm:$0xff]
    %v679 = vld [vmem:[#allocation6 + $0x1150] sm:$0xff]
    %v680 = vld [vmem:[#allocation6 + $0x1158] sm:$0xff]
    %v681 = vld [vmem:[#allocation6 + $0x1160] sm:$0xff]
    %v682 = vld [vmem:[#allocation6 + $0x1168] sm:$0xff]
    %v683 = vld [vmem:[#allocation6 + $0x1170] sm:$0xff]
    %v684 = vld [vmem:[#allocation6 + $0x1178] sm:$0xff]
    %v685 = vld [vmem:[#allocation6 + $0x1180] sm:$0xff]
    %v686 = vld [vmem:[#allocation6 + $0x1188] sm:$0xff]
    %v687 = vld [vmem:[#allocation6 + $0x1190] sm:$0xff]
    %v688 = vld [vmem:[#allocation6 + $0x1198] sm:$0xff]
    %v689 = vld [vmem:[#allocation6 + $0x11a0] sm:$0xff]
    %v690 = vld [vmem:[#allocation6 + $0x11a8] sm:$0xff]
    %v691 = vld [vmem:[#allocation6 + $0x11b0] sm:$0xff]
    %v692 = vld [vmem:[#allocation6 + $0x11b8] sm:$0xff]
    %v693 = vld [vmem:[#allocation6 + $0x11c0] sm:$0xff]
    %v694 = vld [vmem:[#allocation6 + $0x11c8] sm:$0xff]
    %v695 = vld [vmem:[#allocation6 + $0x11d0] sm:$0xff]
    %v696 = vld [vmem:[#allocation6 + $0x11d8] sm:$0xff]
    %v697 = vld [vmem:[#allocation6 + $0x11e0] sm:$0xff]
    %v698 = vld [vmem:[#allocation6 + $0x11e8] sm:$0xff]
    %v699 = vld [vmem:[#allocation6 + $0x11f0] sm:$0xff]
    %v700 = vld [vmem:[#allocation6 + $0x11f8] sm:$0xff]
    %v701 = vld [vmem:[#allocation6 + $0x1200] sm:$0xff]
    %v702 = vld [vmem:[#allocation6 + $0x1208] sm:$0xff]
    %v703 = vld [vmem:[#allocation6 + $0x1210] sm:$0xff]
    %v704 = vld [vmem:[#allocation6 + $0x1218] sm:$0xff]
    %v705 = vld [vmem:[#allocation6 + $0x1220] sm:$0xff]
    %v706 = vld [vmem:[#allocation6 + $0x1228] sm:$0xff]
    %v707 = vld [vmem:[#allocation6 + $0x1230] sm:$0xff]
    %v708 = vld [vmem:[#allocation6 + $0x1238] sm:$0xff]
    %v709 = vld [vmem:[#allocation6 + $0x1240] sm:$0xff]
    %v710 = vld [vmem:[#allocation6 + $0x1248] sm:$0xff]
    %v711 = vld [vmem:[#allocation6 + $0x1250] sm:$0xff]
    %v712 = vld [vmem:[#allocation6 + $0x1258] sm:$0xff]
    %v713 = vld [vmem:[#allocation6 + $0x1260] sm:$0xff]
    %v714 = vld [vmem:[#allocation6 + $0x1268] sm:$0xff]
    %v715 = vld [vmem:[#allocation6 + $0x1270] sm:$0xff]
    %v716 = vld [vmem:[#allocation6 + $0x1278] sm:$0xff]
    %v717 = vld [vmem:[#allocation6 + $0x1280] sm:$0xff]
    %v718 = vld [vmem:[#allocation6 + $0x1288] sm:$0xff]
    %v719 = vld [vmem:[#allocation6 + $0x1290] sm:$0xff]
    %v720 = vld [vmem:[#allocation6 + $0x1298] sm:$0xff]
    %v721 = vld [vmem:[#allocation6 + $0x12a0] sm:$0xff]
    %v722 = vld [vmem:[#allocation6 + $0x12a8] sm:$0xff]
    %v723 = vld [vmem:[#allocation6 + $0x12b0] sm:$0xff]
    %v724 = vld [vmem:[#allocation6 + $0x12b8] sm:$0xff]
    %v725 = vld [vmem:[#allocation6 + $0x12c0] sm:$0xff]
    %v726 = vld [vmem:[#allocation6 + $0x12c8] sm:$0xff]
    %v727 = vld [vmem:[#allocation6 + $0x12d0] sm:$0xff]
    %v728 = vld [vmem:[#allocation6 + $0x12d8] sm:$0xff]
    %v729 = vld [vmem:[#allocation6 + $0x12e0] sm:$0xff]
    %v730 = vld [vmem:[#allocation6 + $0x12e8] sm:$0xff]
    %v731 = vld [vmem:[#allocation6 + $0x12f0] sm:$0xff]
    %v732 = vld [vmem:[#allocation6 + $0x12f8] sm:$0xff]
    %v733 = vld [vmem:[#allocation6 + $0x1300] sm:$0xff]
    %v734 = vld [vmem:[#allocation6 + $0x1308] sm:$0xff]
    %v735 = vld [vmem:[#allocation6 + $0x1310] sm:$0xff]
    %v736 = vld [vmem:[#allocation6 + $0x1318] sm:$0xff]
    %v737 = vld [vmem:[#allocation6 + $0x1320] sm:$0xff]
    %v738 = vld [vmem:[#allocation6 + $0x1328] sm:$0xff]
    %v739 = vld [vmem:[#allocation6 + $0x1330] sm:$0xff]
    %v740 = vld [vmem:[#allocation6 + $0x1338] sm:$0xff]
    %v741 = vld [vmem:[#allocation6 + $0x1340] sm:$0xff]
    %v742 = vld [vmem:[#allocation6 + $0x1348] sm:$0xff]
    %v743 = vld [vmem:[#allocation6 + $0x1350] sm:$0xff]
    %v744 = vld [vmem:[#allocation6 + $0x1358] sm:$0xff]
    %v745 = vld [vmem:[#allocation6 + $0x1360] sm:$0xff]
    %v746 = vld [vmem:[#allocation6 + $0x1368] sm:$0xff]
    %v747 = vld [vmem:[#allocation6 + $0x1370] sm:$0xff]
    %v748 = vld [vmem:[#allocation6 + $0x1378] sm:$0xff]
    %v749 = vld [vmem:[#allocation6 + $0x1380] sm:$0xff]
    %v750 = vld [vmem:[#allocation6 + $0x1388] sm:$0xff]
    %v751 = vld [vmem:[#allocation6 + $0x1390] sm:$0xff]
    %v752 = vld [vmem:[#allocation6 + $0x1398] sm:$0xff]
    %v753 = vld [vmem:[#allocation6 + $0x13a0] sm:$0xff]
    %v754 = vld [vmem:[#allocation6 + $0x13a8] sm:$0xff]
    %v755 = vld [vmem:[#allocation6 + $0x13b0] sm:$0xff]
    %v756 = vld [vmem:[#allocation6 + $0x13b8] sm:$0xff]
    %v757 = vld [vmem:[#allocation6 + $0x13c0] sm:$0xff]
    %v758 = vld [vmem:[#allocation6 + $0x13c8] sm:$0xff]
    %v759 = vld [vmem:[#allocation6 + $0x13d0] sm:$0xff]
    %v760 = vld [vmem:[#allocation6 + $0x13d8] sm:$0xff]
    %v761 = vld [vmem:[#allocation6 + $0x13e0] sm:$0xff]
    %v762 = vld [vmem:[#allocation6 + $0x13e8] sm:$0xff]
    %v763 = vld [vmem:[#allocation6 + $0x13f0] sm:$0xff]
    %v764 = vld [vmem:[#allocation6 + $0x13f8] sm:$0xff]
    %v765 = vld [vmem:[#allocation6 + $0x1400] sm:$0xff]
    %v766 = vld [vmem:[#allocation6 + $0x1408] sm:$0xff]
    %v767 = vld [vmem:[#allocation6 + $0x1410] sm:$0xff]
    %v768 = vld [vmem:[#allocation6 + $0x1418] sm:$0xff]
    %v769 = vld [vmem:[#allocation6 + $0x1420] sm:$0xff]
    %v770 = vld [vmem:[#allocation6 + $0x1428] sm:$0xff]
    %v771 = vld [vmem:[#allocation6 + $0x1430] sm:$0xff]
    %v772 = vld [vmem:[#allocation6 + $0x1438] sm:$0xff]
    %v773 = vld [vmem:[#allocation6 + $0x1440] sm:$0xff]
    %v774 = vld [vmem:[#allocation6 + $0x1448] sm:$0xff]
    %v775 = vld [vmem:[#allocation6 + $0x1450] sm:$0xff]
    %v776 = vld [vmem:[#allocation6 + $0x1458] sm:$0xff]
    %v777 = vld [vmem:[#allocation6 + $0x1460] sm:$0xff]
    %v778 = vld [vmem:[#allocation6 + $0x1468] sm:$0xff]
    %v779 = vld [vmem:[#allocation6 + $0x1470] sm:$0xff]
    %v780 = vld [vmem:[#allocation6 + $0x1478] sm:$0xff]
    %v781 = vld [vmem:[#allocation6 + $0x1480] sm:$0xff]
    %v782 = vld [vmem:[#allocation6 + $0x1488] sm:$0xff]
    %v783 = vld [vmem:[#allocation6 + $0x1490] sm:$0xff]
    %v784 = vld [vmem:[#allocation6 + $0x1498] sm:$0xff]
    %v785 = vld [vmem:[#allocation6 + $0x14a0] sm:$0xff]
    %v786 = vld [vmem:[#allocation6 + $0x14a8] sm:$0xff]
    %v787 = vld [vmem:[#allocation6 + $0x14b0] sm:$0xff]
    %v788 = vld [vmem:[#allocation6 + $0x14b8] sm:$0xff]
    %v789 = vld [vmem:[#allocation6 + $0x14c0] sm:$0xff]
    %v790 = vld [vmem:[#allocation6 + $0x14c8] sm:$0xff]
    %v791 = vld [vmem:[#allocation6 + $0x14d0] sm:$0xff]
    %v792 = vld [vmem:[#allocation6 + $0x14d8] sm:$0xff]
    %v793 = vld [vmem:[#allocation6 + $0x14e0] sm:$0xff]
    %v794 = vld [vmem:[#allocation6 + $0x14e8] sm:$0xff]
    %v795 = vld [vmem:[#allocation6 + $0x14f0] sm:$0xff]
    %v796 = vld [vmem:[#allocation6 + $0x14f8] sm:$0xff]
    %v797 = vld [vmem:[#allocation6 + $0x1500] sm:$0xff]
    %v798 = vld [vmem:[#allocation6 + $0x1508] sm:$0xff]
    %v799 = vld [vmem:[#allocation6 + $0x1510] sm:$0xff]
    %v800 = vld [vmem:[#allocation6 + $0x1518] sm:$0xff]
    %v801 = vld [vmem:[#allocation6 + $0x1520] sm:$0xff]
    %v802 = vld [vmem:[#allocation6 + $0x1528] sm:$0xff]
    %v803 = vld [vmem:[#allocation6 + $0x1530] sm:$0xff]
    %v804 = vld [vmem:[#allocation6 + $0x1538] sm:$0xff]
    %v805 = vld [vmem:[#allocation6 + $0x1540] sm:$0xff]
    %v806 = vld [vmem:[#allocation6 + $0x1548] sm:$0xff]
    %v807 = vld [vmem:[#allocation6 + $0x1550] sm:$0xff]
    %v808 = vld [vmem:[#allocation6 + $0x1558] sm:$0xff]
    %v809 = vld [vmem:[#allocation6 + $0x1560] sm:$0xff]
    %v810 = vld [vmem:[#allocation6 + $0x1568] sm:$0xff]
    %v811 = vld [vmem:[#allocation6 + $0x1570] sm:$0xff]
    %v812 = vld [vmem:[#allocation6 + $0x1578] sm:$0xff]
    %v813 = vld [vmem:[#allocation6 + $0x1580] sm:$0xff]
    %v814 = vld [vmem:[#allocation6 + $0x1588] sm:$0xff]
    %v815 = vld [vmem:[#allocation6 + $0x1590] sm:$0xff]
    %v816 = vld [vmem:[#allocation6 + $0x1598] sm:$0xff]
    %v817 = vld [vmem:[#allocation6 + $0x15a0] sm:$0xff]
    %v818 = vld [vmem:[#allocation6 + $0x15a8] sm:$0xff]
    %v819 = vld [vmem:[#allocation6 + $0x15b0] sm:$0xff]
    %v820 = vld [vmem:[#allocation6 + $0x15b8] sm:$0xff]
    %v821 = vld [vmem:[#allocation6 + $0x15c0] sm:$0xff]
    %v822 = vld [vmem:[#allocation6 + $0x15c8] sm:$0xff]
    %v823 = vld [vmem:[#allocation6 + $0x15d0] sm:$0xff]
    %v824 = vld [vmem:[#allocation6 + $0x15d8] sm:$0xff]
    %v825 = vld [vmem:[#allocation6 + $0x15e0] sm:$0xff]
    %v826 = vld [vmem:[#allocation6 + $0x15e8] sm:$0xff]
    %v827 = vld [vmem:[#allocation6 + $0x15f0] sm:$0xff]
    %v828 = vld [vmem:[#allocation6 + $0x15f8] sm:$0xff]
    %v829 = vld [vmem:[#allocation6 + $0x1600] sm:$0xff]
    %v830 = vld [vmem:[#allocation6 + $0x1608] sm:$0xff]
    %v831 = vld [vmem:[#allocation6 + $0x1610] sm:$0xff]
    %v832 = vld [vmem:[#allocation6 + $0x1618] sm:$0xff]
    %v833 = vld [vmem:[#allocation6 + $0x1620] sm:$0xff]
    %v834 = vld [vmem:[#allocation6 + $0x1628] sm:$0xff]
    %v835 = vld [vmem:[#allocation6 + $0x1630] sm:$0xff]
    %v836 = vld [vmem:[#allocation6 + $0x1638] sm:$0xff]
    %v837 = vld [vmem:[#allocation6 + $0x1640] sm:$0xff]
    %v838 = vld [vmem:[#allocation6 + $0x1648] sm:$0xff]
    %v839 = vld [vmem:[#allocation6 + $0x1650] sm:$0xff]
    %v840 = vld [vmem:[#allocation6 + $0x1658] sm:$0xff]
    %v841 = vld [vmem:[#allocation6 + $0x1660] sm:$0xff]
    %v842 = vld [vmem:[#allocation6 + $0x1668] sm:$0xff]
    %v843 = vld [vmem:[#allocation6 + $0x1670] sm:$0xff]
    %v844 = vld [vmem:[#allocation6 + $0x1678] sm:$0xff]
    %v845 = vld [vmem:[#allocation6 + $0x1680] sm:$0xff]
    %v846 = vld [vmem:[#allocation6 + $0x1688] sm:$0xff]
    %v847 = vld [vmem:[#allocation6 + $0x1690] sm:$0xff]
    %v848 = vld [vmem:[#allocation6 + $0x1698] sm:$0xff]
    %v849 = vld [vmem:[#allocation6 + $0x16a0] sm:$0xff]
    %v850 = vld [vmem:[#allocation6 + $0x16a8] sm:$0xff]
    %v851 = vld [vmem:[#allocation6 + $0x16b0] sm:$0xff]
    %v852 = vld [vmem:[#allocation6 + $0x16b8] sm:$0xff]
    %v853 = vld [vmem:[#allocation6 + $0x16c0] sm:$0xff]
    %v854 = vld [vmem:[#allocation6 + $0x16c8] sm:$0xff]
    %v855 = vld [vmem:[#allocation6 + $0x16d0] sm:$0xff]
    %v856 = vld [vmem:[#allocation6 + $0x16d8] sm:$0xff]
    %v857 = vld [vmem:[#allocation6 + $0x16e0] sm:$0xff]
    %v858 = vld [vmem:[#allocation6 + $0x16e8] sm:$0xff]
    %v859 = vld [vmem:[#allocation6 + $0x16f0] sm:$0xff]
    %v860 = vld [vmem:[#allocation6 + $0x16f8] sm:$0xff]
    %v861 = vld [vmem:[#allocation6 + $0x1700] sm:$0xff]
    %v862 = vld [vmem:[#allocation6 + $0x1708] sm:$0xff]
    %v863 = vld [vmem:[#allocation6 + $0x1710] sm:$0xff]
    %v864 = vld [vmem:[#allocation6 + $0x1718] sm:$0xff]
    %v865 = vld [vmem:[#allocation6 + $0x1720] sm:$0xff]
    %v866 = vld [vmem:[#allocation6 + $0x1728] sm:$0xff]
    %v867 = vld [vmem:[#allocation6 + $0x1730] sm:$0xff]
    %v868 = vld [vmem:[#allocation6 + $0x1738] sm:$0xff]
    %v869 = vld [vmem:[#allocation6 + $0x1740] sm:$0xff]
    %v870 = vld [vmem:[#allocation6 + $0x1748] sm:$0xff]
    %v871 = vld [vmem:[#allocation6 + $0x1750] sm:$0xff]
    %v872 = vld [vmem:[#allocation6 + $0x1758] sm:$0xff]
    %v873 = vld [vmem:[#allocation6 + $0x1760] sm:$0xff]
    %v874 = vld [vmem:[#allocation6 + $0x1768] sm:$0xff]
    %v875 = vld [vmem:[#allocation6 + $0x1770] sm:$0xff]
    %v876 = vld [vmem:[#allocation6 + $0x1778] sm:$0xff]
    %v877 = vld [vmem:[#allocation6 + $0x1780] sm:$0xff]
    %v878 = vld [vmem:[#allocation6 + $0x1788] sm:$0xff]
    %v879 = vld [vmem:[#allocation6 + $0x1790] sm:$0xff]
    %v880 = vld [vmem:[#allocation6 + $0x1798] sm:$0xff]
    %v881 = vld [vmem:[#allocation6 + $0x17a0] sm:$0xff]
    %v882 = vld [vmem:[#allocation6 + $0x17a8] sm:$0xff]
    %v883 = vld [vmem:[#allocation6 + $0x17b0] sm:$0xff]
    %v884 = vld [vmem:[#allocation6 + $0x17b8] sm:$0xff]
    %v885 = vld [vmem:[#allocation6 + $0x17c0] sm:$0xff]
    %v886 = vld [vmem:[#allocation6 + $0x17c8] sm:$0xff]
    %v887 = vld [vmem:[#allocation6 + $0x17d0] sm:$0xff]
    %v888 = vld [vmem:[#allocation6 + $0x17d8] sm:$0xff]
    %v889 = vld [vmem:[#allocation6 + $0x17e0] sm:$0xff]
    %v890 = vld [vmem:[#allocation6 + $0x17e8] sm:$0xff]
    %v891 = vld [vmem:[#allocation6 + $0x17f0] sm:$0xff]
    %v892 = vld [vmem:[#allocation6 + $0x17f8] sm:$0xff]
    %v897 = vunpack.c.l.b16 %v121
    %v898 = vunpack.c.h.b16 %v121
    %v899 = vunpack.c.l.b16 %v122
    %v900 = vunpack.c.h.b16 %v122
    %v901 = vunpack.c.l.b16 %v123
    %v902 = vunpack.c.h.b16 %v123
    %v903 = vunpack.c.l.b16 %v124
    %v904 = vunpack.c.h.b16 %v124
    %v905 = vpack.c.b16 %v897, %v897
    %v906 = vpack.c.b16 %v898, %v898
    %v907 = vpack.c.b16 %v899, %v899
    %v908 = vpack.c.b16 %v900, %v900
    %v909 = vpack.c.b16 %v901, %v901
    %v910 = vpack.c.b16 %v902, %v902
    %v911 = vpack.c.b16 %v903, %v903
    %v912 = vpack.c.b16 %v904, %v904
    %v1689 = vunpack.c.l.b16 %v125
    %v1690 = vunpack.c.h.b16 %v125
    %v1691 = vunpack.c.l.b16 %v126
    %v1692 = vunpack.c.h.b16 %v126
    %v1693 = vunpack.c.l.b16 %v127
    %v1694 = vunpack.c.h.b16 %v127
    %v1695 = vunpack.c.l.b16 %v128
    %v1696 = vunpack.c.h.b16 %v128
    %v1697 = vunpack.c.l.b16 %v129
    %v1698 = vunpack.c.h.b16 %v129
    %v1699 = vunpack.c.l.b16 %v130
    %v1700 = vunpack.c.h.b16 %v130
    %v1701 = vunpack.c.l.b16 %v131
    %v1702 = vunpack.c.h.b16 %v131
    %v1703 = vunpack.c.l.b16 %v132
    %v1704 = vunpack.c.h.b16 %v132
    %v1705 = vunpack.c.l.b16 %v133
    %v1706 = vunpack.c.h.b16 %v133
    %v1707 = vunpack.c.l.b16 %v134
    %v1708 = vunpack.c.h.b16 %v134
    %v1709 = vunpack.c.l.b16 %v135
    %v1710 = vunpack.c.h.b16 %v135
    %v1711 = vunpack.c.l.b16 %v136
    %v1712 = vunpack.c.h.b16 %v136
    %v1713 = vunpack.c.l.b16 %v137
    %v1714 = vunpack.c.h.b16 %v137
    %v1715 = vunpack.c.l.b16 %v138
    %v1716 = vunpack.c.h.b16 %v138
    %v1717 = vunpack.c.l.b16 %v139
    %v1718 = vunpack.c.h.b16 %v139
    %v1719 = vunpack.c.l.b16 %v140
    %v1720 = vunpack.c.h.b16 %v140
    %v1721 = vunpack.c.l.b16 %v141
    %v1722 = vunpack.c.h.b16 %v141
    %v1723 = vunpack.c.l.b16 %v142
    %v1724 = vunpack.c.h.b16 %v142
    %v1725 = vunpack.c.l.b16 %v143
    %v1726 = vunpack.c.h.b16 %v143
    %v1727 = vunpack.c.l.b16 %v144
    %v1728 = vunpack.c.h.b16 %v144
    %v1729 = vunpack.c.l.b16 %v145
    %v1730 = vunpack.c.h.b16 %v145
    %v1731 = vunpack.c.l.b16 %v146
    %v1732 = vunpack.c.h.b16 %v146
    %v1733 = vunpack.c.l.b16 %v147
    %v1734 = vunpack.c.h.b16 %v147
    %v1735 = vunpack.c.l.b16 %v148
    %v1736 = vunpack.c.h.b16 %v148
    %v1737 = vunpack.c.l.b16 %v149
    %v1738 = vunpack.c.h.b16 %v149
    %v1739 = vunpack.c.l.b16 %v150
    %v1740 = vunpack.c.h.b16 %v150
    %v1741 = vunpack.c.l.b16 %v151
    %v1742 = vunpack.c.h.b16 %v151
    %v1743 = vunpack.c.l.b16 %v152
    %v1744 = vunpack.c.h.b16 %v152
    %v1745 = vunpack.c.l.b16 %v153
    %v1746 = vunpack.c.h.b16 %v153
    %v1747 = vunpack.c.l.b16 %v154
    %v1748 = vunpack.c.h.b16 %v154
    %v1749 = vunpack.c.l.b16 %v155
    %v1750 = vunpack.c.h.b16 %v155
    %v1751 = vunpack.c.l.b16 %v156
    %v1752 = vunpack.c.h.b16 %v156
    %v1753 = vunpack.c.l.b16 %v157
    %v1754 = vunpack.c.h.b16 %v157
    %v1755 = vunpack.c.l.b16 %v158
    %v1756 = vunpack.c.h.b16 %v158
    %v1757 = vunpack.c.l.b16 %v159
    %v1758 = vunpack.c.h.b16 %v159
    %v1759 = vunpack.c.l.b16 %v160
    %v1760 = vunpack.c.h.b16 %v160
    %v1761 = vunpack.c.l.b16 %v161
    %v1762 = vunpack.c.h.b16 %v161
    %v1763 = vunpack.c.l.b16 %v162
    %v1764 = vunpack.c.h.b16 %v162
    %v1765 = vunpack.c.l.b16 %v163
    %v1766 = vunpack.c.h.b16 %v163
    %v1767 = vunpack.c.l.b16 %v164
    %v1768 = vunpack.c.h.b16 %v164
    %v1769 = vunpack.c.l.b16 %v165
    %v1770 = vunpack.c.h.b16 %v165
    %v1771 = vunpack.c.l.b16 %v166
    %v1772 = vunpack.c.h.b16 %v166
    %v1773 = vunpack.c.l.b16 %v167
    %v1774 = vunpack.c.h.b16 %v167
    %v1775 = vunpack.c.l.b16 %v168
    %v1776 = vunpack.c.h.b16 %v168
    %v1777 = vunpack.c.l.b16 %v169
    %v1778 = vunpack.c.h.b16 %v169
    %v1779 = vunpack.c.l.b16 %v170
    %v1780 = vunpack.c.h.b16 %v170
    %v1781 = vunpack.c.l.b16 %v171
    %v1782 = vunpack.c.h.b16 %v171
    %v1783 = vunpack.c.l.b16 %v172
    %v1784 = vunpack.c.h.b16 %v172
    %v1785 = vunpack.c.l.b16 %v173
    %v1786 = vunpack.c.h.b16 %v173
    %v1787 = vunpack.c.l.b16 %v174
    %v1788 = vunpack.c.h.b16 %v174
    %v1789 = vunpack.c.l.b16 %v175
    %v1790 = vunpack.c.h.b16 %v175
    %v1791 = vunpack.c.l.b16 %v176
    %v1792 = vunpack.c.h.b16 %v176
    %v1793 = vunpack.c.l.b16 %v177
    %v1794 = vunpack.c.h.b16 %v177
    %v1795 = vunpack.c.l.b16 %v178
    %v1796 = vunpack.c.h.b16 %v178
    %v1797 = vunpack.c.l.b16 %v179
    %v1798 = vunpack.c.h.b16 %v179
    %v1799 = vunpack.c.l.b16 %v180
    %v1800 = vunpack.c.h.b16 %v180
    %v1801 = vunpack.c.l.b16 %v181
    %v1802 = vunpack.c.h.b16 %v181
    %v1803 = vunpack.c.l.b16 %v182
    %v1804 = vunpack.c.h.b16 %v182
    %v1805 = vunpack.c.l.b16 %v183
    %v1806 = vunpack.c.h.b16 %v183
    %v1807 = vunpack.c.l.b16 %v184
    %v1808 = vunpack.c.h.b16 %v184
    %v1809 = vunpack.c.l.b16 %v185
    %v1810 = vunpack.c.h.b16 %v185
    %v1811 = vunpack.c.l.b16 %v186
    %v1812 = vunpack.c.h.b16 %v186
    %v1813 = vunpack.c.l.b16 %v187
    %v1814 = vunpack.c.h.b16 %v187
    %v1815 = vunpack.c.l.b16 %v188
    %v1816 = vunpack.c.h.b16 %v188
    %v1817 = vunpack.c.l.b16 %v189
    %v1818 = vunpack.c.h.b16 %v189
    %v1819 = vunpack.c.l.b16 %v190
    %v1820 = vunpack.c.h.b16 %v190
    %v1821 = vunpack.c.l.b16 %v191
    %v1822 = vunpack.c.h.b16 %v191
    %v1823 = vunpack.c.l.b16 %v192
    %v1824 = vunpack.c.h.b16 %v192
    %v1825 = vunpack.c.l.b16 %v193
    %v1826 = vunpack.c.h.b16 %v193
    %v1827 = vunpack.c.l.b16 %v194
    %v1828 = vunpack.c.h.b16 %v194
    %v1829 = vunpack.c.l.b16 %v195
    %v1830 = vunpack.c.h.b16 %v195
    %v1831 = vunpack.c.l.b16 %v196
    %v1832 = vunpack.c.h.b16 %v196
    %v1833 = vunpack.c.l.b16 %v197
    %v1834 = vunpack.c.h.b16 %v197
    %v1835 = vunpack.c.l.b16 %v198
    %v1836 = vunpack.c.h.b16 %v198
    %v1837 = vunpack.c.l.b16 %v199
    %v1838 = vunpack.c.h.b16 %v199
    %v1839 = vunpack.c.l.b16 %v200
    %v1840 = vunpack.c.h.b16 %v200
    %v1841 = vunpack.c.l.b16 %v201
    %v1842 = vunpack.c.h.b16 %v201
    %v1843 = vunpack.c.l.b16 %v202
    %v1844 = vunpack.c.h.b16 %v202
    %v1845 = vunpack.c.l.b16 %v203
    %v1846 = vunpack.c.h.b16 %v203
    %v1847 = vunpack.c.l.b16 %v204
    %v1848 = vunpack.c.h.b16 %v204
    %v1849 = vunpack.c.l.b16 %v205
    %v1850 = vunpack.c.h.b16 %v205
    %v1851 = vunpack.c.l.b16 %v206
    %v1852 = vunpack.c.h.b16 %v206
    %v1853 = vunpack.c.l.b16 %v207
    %v1854 = vunpack.c.h.b16 %v207
    %v1855 = vunpack.c.l.b16 %v208
    %v1856 = vunpack.c.h.b16 %v208
    %v1857 = vunpack.c.l.b16 %v209
    %v1858 = vunpack.c.h.b16 %v209
    %v1859 = vunpack.c.l.b16 %v210
    %v1860 = vunpack.c.h.b16 %v210
    %v1861 = vunpack.c.l.b16 %v211
    %v1862 = vunpack.c.h.b16 %v211
    %v1863 = vunpack.c.l.b16 %v212
    %v1864 = vunpack.c.h.b16 %v212
    %v1865 = vunpack.c.l.b16 %v213
    %v1866 = vunpack.c.h.b16 %v213
    %v1867 = vunpack.c.l.b16 %v214
    %v1868 = vunpack.c.h.b16 %v214
    %v1869 = vunpack.c.l.b16 %v215
    %v1870 = vunpack.c.h.b16 %v215
    %v1871 = vunpack.c.l.b16 %v216
    %v1872 = vunpack.c.h.b16 %v216
    %v1873 = vunpack.c.l.b16 %v217
    %v1874 = vunpack.c.h.b16 %v217
    %v1875 = vunpack.c.l.b16 %v218
    %v1876 = vunpack.c.h.b16 %v218
    %v1877 = vunpack.c.l.b16 %v219
    %v1878 = vunpack.c.h.b16 %v219
    %v1879 = vunpack.c.l.b16 %v220
    %v1880 = vunpack.c.h.b16 %v220
    %v1881 = vunpack.c.l.b16 %v221
    %v1882 = vunpack.c.h.b16 %v221
    %v1883 = vunpack.c.l.b16 %v222
    %v1884 = vunpack.c.h.b16 %v222
    %v1885 = vunpack.c.l.b16 %v223
    %v1886 = vunpack.c.h.b16 %v223
    %v1887 = vunpack.c.l.b16 %v224
    %v1888 = vunpack.c.h.b16 %v224
    %v1889 = vunpack.c.l.b16 %v225
    %v1890 = vunpack.c.h.b16 %v225
    %v1891 = vunpack.c.l.b16 %v226
    %v1892 = vunpack.c.h.b16 %v226
    %v1893 = vunpack.c.l.b16 %v227
    %v1894 = vunpack.c.h.b16 %v227
    %v1895 = vunpack.c.l.b16 %v228
    %v1896 = vunpack.c.h.b16 %v228
    %v1897 = vunpack.c.l.b16 %v229
    %v1898 = vunpack.c.h.b16 %v229
    %v1899 = vunpack.c.l.b16 %v230
    %v1900 = vunpack.c.h.b16 %v230
    %v1901 = vunpack.c.l.b16 %v231
    %v1902 = vunpack.c.h.b16 %v231
    %v1903 = vunpack.c.l.b16 %v232
    %v1904 = vunpack.c.h.b16 %v232
    %v1905 = vunpack.c.l.b16 %v233
    %v1906 = vunpack.c.h.b16 %v233
    %v1907 = vunpack.c.l.b16 %v234
    %v1908 = vunpack.c.h.b16 %v234
    %v1909 = vunpack.c.l.b16 %v235
    %v1910 = vunpack.c.h.b16 %v235
    %v1911 = vunpack.c.l.b16 %v236
    %v1912 = vunpack.c.h.b16 %v236
    %v1913 = vunpack.c.l.b16 %v237
    %v1914 = vunpack.c.h.b16 %v237
    %v1915 = vunpack.c.l.b16 %v238
    %v1916 = vunpack.c.h.b16 %v238
    %v1917 = vunpack.c.l.b16 %v239
    %v1918 = vunpack.c.h.b16 %v239
    %v1919 = vunpack.c.l.b16 %v240
    %v1920 = vunpack.c.h.b16 %v240
    %v1921 = vunpack.c.l.b16 %v241
    %v1922 = vunpack.c.h.b16 %v241
    %v1923 = vunpack.c.l.b16 %v242
    %v1924 = vunpack.c.h.b16 %v242
    %v1925 = vunpack.c.l.b16 %v243
    %v1926 = vunpack.c.h.b16 %v243
    %v1927 = vunpack.c.l.b16 %v244
    %v1928 = vunpack.c.h.b16 %v244
    %v1929 = vunpack.c.l.b16 %v245
    %v1930 = vunpack.c.h.b16 %v245
    %v1931 = vunpack.c.l.b16 %v246
    %v1932 = vunpack.c.h.b16 %v246
    %v1933 = vunpack.c.l.b16 %v247
    %v1934 = vunpack.c.h.b16 %v247
    %v1935 = vunpack.c.l.b16 %v248
    %v1936 = vunpack.c.h.b16 %v248
    %v1937 = vunpack.c.l.b16 %v249
    %v1938 = vunpack.c.h.b16 %v249
    %v1939 = vunpack.c.l.b16 %v250
    %v1940 = vunpack.c.h.b16 %v250
    %v1941 = vunpack.c.l.b16 %v251
    %v1942 = vunpack.c.h.b16 %v251
    %v1943 = vunpack.c.l.b16 %v252
    %v1944 = vunpack.c.h.b16 %v252
    %v1945 = vunpack.c.l.b16 %v253
    %v1946 = vunpack.c.h.b16 %v253
    %v1947 = vunpack.c.l.b16 %v254
    %v1948 = vunpack.c.h.b16 %v254
    %v1949 = vunpack.c.l.b16 %v255
    %v1950 = vunpack.c.h.b16 %v255
    %v1951 = vunpack.c.l.b16 %v256
    %v1952 = vunpack.c.h.b16 %v256
    %v1953 = vunpack.c.l.b16 %v257
    %v1954 = vunpack.c.h.b16 %v257
    %v1955 = vunpack.c.l.b16 %v258
    %v1956 = vunpack.c.h.b16 %v258
    %v1957 = vunpack.c.l.b16 %v259
    %v1958 = vunpack.c.h.b16 %v259
    %v1959 = vunpack.c.l.b16 %v260
    %v1960 = vunpack.c.h.b16 %v260
    %v1961 = vunpack.c.l.b16 %v261
    %v1962 = vunpack.c.h.b16 %v261
    %v1963 = vunpack.c.l.b16 %v262
    %v1964 = vunpack.c.h.b16 %v262
    %v1965 = vunpack.c.l.b16 %v263
    %v1966 = vunpack.c.h.b16 %v263
    %v1967 = vunpack.c.l.b16 %v264
    %v1968 = vunpack.c.h.b16 %v264
    %v1969 = vunpack.c.l.b16 %v265
    %v1970 = vunpack.c.h.b16 %v265
    %v1971 = vunpack.c.l.b16 %v266
    %v1972 = vunpack.c.h.b16 %v266
    %v1973 = vunpack.c.l.b16 %v267
    %v1974 = vunpack.c.h.b16 %v267
    %v1975 = vunpack.c.l.b16 %v268
    %v1976 = vunpack.c.h.b16 %v268
    %v1977 = vunpack.c.l.b16 %v269
    %v1978 = vunpack.c.h.b16 %v269
    %v1979 = vunpack.c.l.b16 %v270
    %v1980 = vunpack.c.h.b16 %v270
    %v1981 = vunpack.c.l.b16 %v271
    %v1982 = vunpack.c.h.b16 %v271
    %v1983 = vunpack.c.l.b16 %v272
    %v1984 = vunpack.c.h.b16 %v272
    %v1985 = vunpack.c.l.b16 %v273
    %v1986 = vunpack.c.h.b16 %v273
    %v1987 = vunpack.c.l.b16 %v274
    %v1988 = vunpack.c.h.b16 %v274
    %v1989 = vunpack.c.l.b16 %v275
    %v1990 = vunpack.c.h.b16 %v275
    %v1991 = vunpack.c.l.b16 %v276
    %v1992 = vunpack.c.h.b16 %v276
    %v1993 = vunpack.c.l.b16 %v277
    %v1994 = vunpack.c.h.b16 %v277
    %v1995 = vunpack.c.l.b16 %v278
    %v1996 = vunpack.c.h.b16 %v278
    %v1997 = vunpack.c.l.b16 %v279
    %v1998 = vunpack.c.h.b16 %v279
    %v1999 = vunpack.c.l.b16 %v280
    %v2000 = vunpack.c.h.b16 %v280
    %v2001 = vunpack.c.l.b16 %v281
    %v2002 = vunpack.c.h.b16 %v281
    %v2003 = vunpack.c.l.b16 %v282
    %v2004 = vunpack.c.h.b16 %v282
    %v2005 = vunpack.c.l.b16 %v283
    %v2006 = vunpack.c.h.b16 %v283
    %v2007 = vunpack.c.l.b16 %v284
    %v2008 = vunpack.c.h.b16 %v284
    %v2009 = vunpack.c.l.b16 %v285
    %v2010 = vunpack.c.h.b16 %v285
    %v2011 = vunpack.c.l.b16 %v286
    %v2012 = vunpack.c.h.b16 %v286
    %v2013 = vunpack.c.l.b16 %v287
    %v2014 = vunpack.c.h.b16 %v287
    %v2015 = vunpack.c.l.b16 %v288
    %v2016 = vunpack.c.h.b16 %v288
    %v2017 = vunpack.c.l.b16 %v289
    %v2018 = vunpack.c.h.b16 %v289
    %v2019 = vunpack.c.l.b16 %v290
    %v2020 = vunpack.c.h.b16 %v290
    %v2021 = vunpack.c.l.b16 %v291
    %v2022 = vunpack.c.h.b16 %v291
    %v2023 = vunpack.c.l.b16 %v292
    %v2024 = vunpack.c.h.b16 %v292
    %v2025 = vunpack.c.l.b16 %v293
    %v2026 = vunpack.c.h.b16 %v293
    %v2027 = vunpack.c.l.b16 %v294
    %v2028 = vunpack.c.h.b16 %v294
    %v2029 = vunpack.c.l.b16 %v295
    %v2030 = vunpack.c.h.b16 %v295
    %v2031 = vunpack.c.l.b16 %v296
    %v2032 = vunpack.c.h.b16 %v296
    %v2033 = vunpack.c.l.b16 %v297
    %v2034 = vunpack.c.h.b16 %v297
    %v2035 = vunpack.c.l.b16 %v298
    %v2036 = vunpack.c.h.b16 %v298
    %v2037 = vunpack.c.l.b16 %v299
    %v2038 = vunpack.c.h.b16 %v299
    %v2039 = vunpack.c.l.b16 %v300
    %v2040 = vunpack.c.h.b16 %v300
    %v2041 = vunpack.c.l.b16 %v301
    %v2042 = vunpack.c.h.b16 %v301
    %v2043 = vunpack.c.l.b16 %v302
    %v2044 = vunpack.c.h.b16 %v302
    %v2045 = vunpack.c.l.b16 %v303
    %v2046 = vunpack.c.h.b16 %v303
    %v2047 = vunpack.c.l.b16 %v304
    %v2048 = vunpack.c.h.b16 %v304
    %v2049 = vunpack.c.l.b16 %v305
    %v2050 = vunpack.c.h.b16 %v305
    %v2051 = vunpack.c.l.b16 %v306
    %v2052 = vunpack.c.h.b16 %v306
    %v2053 = vunpack.c.l.b16 %v307
    %v2054 = vunpack.c.h.b16 %v307
    %v2055 = vunpack.c.l.b16 %v308
    %v2056 = vunpack.c.h.b16 %v308
    %v2057 = vunpack.c.l.b16 %v309
    %v2058 = vunpack.c.h.b16 %v309
    %v2059 = vunpack.c.l.b16 %v310
    %v2060 = vunpack.c.h.b16 %v310
    %v2061 = vunpack.c.l.b16 %v311
    %v2062 = vunpack.c.h.b16 %v311
    %v2063 = vunpack.c.l.b16 %v312
    %v2064 = vunpack.c.h.b16 %v312
    %v2065 = vunpack.c.l.b16 %v313
    %v2066 = vunpack.c.h.b16 %v313
    %v2067 = vunpack.c.l.b16 %v314
    %v2068 = vunpack.c.h.b16 %v314
    %v2069 = vunpack.c.l.b16 %v315
    %v2070 = vunpack.c.h.b16 %v315
    %v2071 = vunpack.c.l.b16 %v316
    %v2072 = vunpack.c.h.b16 %v316
    %v2073 = vunpack.c.l.b16 %v317
    %v2074 = vunpack.c.h.b16 %v317
    %v2075 = vunpack.c.l.b16 %v318
    %v2076 = vunpack.c.h.b16 %v318
    %v2077 = vunpack.c.l.b16 %v319
    %v2078 = vunpack.c.h.b16 %v319
    %v2079 = vunpack.c.l.b16 %v320
    %v2080 = vunpack.c.h.b16 %v320
    %v2081 = vunpack.c.l.b16 %v321
    %v2082 = vunpack.c.h.b16 %v321
    %v2083 = vunpack.c.l.b16 %v322
    %v2084 = vunpack.c.h.b16 %v322
    %v2085 = vunpack.c.l.b16 %v323
    %v2086 = vunpack.c.h.b16 %v323
    %v2087 = vunpack.c.l.b16 %v324
    %v2088 = vunpack.c.h.b16 %v324
    %v2089 = vunpack.c.l.b16 %v325
    %v2090 = vunpack.c.h.b16 %v325
    %v2091 = vunpack.c.l.b16 %v326
    %v2092 = vunpack.c.h.b16 %v326
    %v2093 = vunpack.c.l.b16 %v327
    %v2094 = vunpack.c.h.b16 %v327
    %v2095 = vunpack.c.l.b16 %v328
    %v2096 = vunpack.c.h.b16 %v328
    %v2097 = vunpack.c.l.b16 %v329
    %v2098 = vunpack.c.h.b16 %v329
    %v2099 = vunpack.c.l.b16 %v330
    %v2100 = vunpack.c.h.b16 %v330
    %v2101 = vunpack.c.l.b16 %v331
    %v2102 = vunpack.c.h.b16 %v331
    %v2103 = vunpack.c.l.b16 %v332
    %v2104 = vunpack.c.h.b16 %v332
    %v2105 = vunpack.c.l.b16 %v333
    %v2106 = vunpack.c.h.b16 %v333
    %v2107 = vunpack.c.l.b16 %v334
    %v2108 = vunpack.c.h.b16 %v334
    %v2109 = vunpack.c.l.b16 %v335
    %v2110 = vunpack.c.h.b16 %v335
    %v2111 = vunpack.c.l.b16 %v336
    %v2112 = vunpack.c.h.b16 %v336
    %v2113 = vunpack.c.l.b16 %v337
    %v2114 = vunpack.c.h.b16 %v337
    %v2115 = vunpack.c.l.b16 %v338
    %v2116 = vunpack.c.h.b16 %v338
    %v2117 = vunpack.c.l.b16 %v339
    %v2118 = vunpack.c.h.b16 %v339
    %v2119 = vunpack.c.l.b16 %v340
    %v2120 = vunpack.c.h.b16 %v340
    %v2121 = vunpack.c.l.b16 %v341
    %v2122 = vunpack.c.h.b16 %v341
    %v2123 = vunpack.c.l.b16 %v342
    %v2124 = vunpack.c.h.b16 %v342
    %v2125 = vunpack.c.l.b16 %v343
    %v2126 = vunpack.c.h.b16 %v343
    %v2127 = vunpack.c.l.b16 %v344
    %v2128 = vunpack.c.h.b16 %v344
    %v2129 = vunpack.c.l.b16 %v345
    %v2130 = vunpack.c.h.b16 %v345
    %v2131 = vunpack.c.l.b16 %v346
    %v2132 = vunpack.c.h.b16 %v346
    %v2133 = vunpack.c.l.b16 %v347
    %v2134 = vunpack.c.h.b16 %v347
    %v2135 = vunpack.c.l.b16 %v348
    %v2136 = vunpack.c.h.b16 %v348
    %v2137 = vunpack.c.l.b16 %v349
    %v2138 = vunpack.c.h.b16 %v349
    %v2139 = vunpack.c.l.b16 %v350
    %v2140 = vunpack.c.h.b16 %v350
    %v2141 = vunpack.c.l.b16 %v351
    %v2142 = vunpack.c.h.b16 %v351
    %v2143 = vunpack.c.l.b16 %v352
    %v2144 = vunpack.c.h.b16 %v352
    %v2145 = vunpack.c.l.b16 %v353
    %v2146 = vunpack.c.h.b16 %v353
    %v2147 = vunpack.c.l.b16 %v354
    %v2148 = vunpack.c.h.b16 %v354
    %v2149 = vunpack.c.l.b16 %v355
    %v2150 = vunpack.c.h.b16 %v355
    %v2151 = vunpack.c.l.b16 %v356
    %v2152 = vunpack.c.h.b16 %v356
    %v2153 = vunpack.c.l.b16 %v357
    %v2154 = vunpack.c.h.b16 %v357
    %v2155 = vunpack.c.l.b16 %v358
    %v2156 = vunpack.c.h.b16 %v358
    %v2157 = vunpack.c.l.b16 %v359
    %v2158 = vunpack.c.h.b16 %v359
    %v2159 = vunpack.c.l.b16 %v360
    %v2160 = vunpack.c.h.b16 %v360
    %v2161 = vunpack.c.l.b16 %v361
    %v2162 = vunpack.c.h.b16 %v361
    %v2163 = vunpack.c.l.b16 %v362
    %v2164 = vunpack.c.h.b16 %v362
    %v2165 = vunpack.c.l.b16 %v363
    %v2166 = vunpack.c.h.b16 %v363
    %v2167 = vunpack.c.l.b16 %v364
    %v2168 = vunpack.c.h.b16 %v364
    %v2169 = vunpack.c.l.b16 %v365
    %v2170 = vunpack.c.h.b16 %v365
    %v2171 = vunpack.c.l.b16 %v366
    %v2172 = vunpack.c.h.b16 %v366
    %v2173 = vunpack.c.l.b16 %v367
    %v2174 = vunpack.c.h.b16 %v367
    %v2175 = vunpack.c.l.b16 %v368
    %v2176 = vunpack.c.h.b16 %v368
    %v2177 = vunpack.c.l.b16 %v369
    %v2178 = vunpack.c.h.b16 %v369
    %v2179 = vunpack.c.l.b16 %v370
    %v2180 = vunpack.c.h.b16 %v370
    %v2181 = vunpack.c.l.b16 %v371
    %v2182 = vunpack.c.h.b16 %v371
    %v2183 = vunpack.c.l.b16 %v372
    %v2184 = vunpack.c.h.b16 %v372
    %v2185 = vunpack.c.l.b16 %v373
    %v2186 = vunpack.c.h.b16 %v373
    %v2187 = vunpack.c.l.b16 %v374
    %v2188 = vunpack.c.h.b16 %v374
    %v2189 = vunpack.c.l.b16 %v375
    %v2190 = vunpack.c.h.b16 %v375
    %v2191 = vunpack.c.l.b16 %v376
    %v2192 = vunpack.c.h.b16 %v376
    %v2193 = vunpack.c.l.b16 %v377
    %v2194 = vunpack.c.h.b16 %v377
    %v2195 = vunpack.c.l.b16 %v378
    %v2196 = vunpack.c.h.b16 %v378
    %v2197 = vunpack.c.l.b16 %v379
    %v2198 = vunpack.c.h.b16 %v379
    %v2199 = vunpack.c.l.b16 %v380
    %v2200 = vunpack.c.h.b16 %v380
    %v2201 = vunpack.c.l.b16 %v381
    %v2202 = vunpack.c.h.b16 %v381
    %v2203 = vunpack.c.l.b16 %v382
    %v2204 = vunpack.c.h.b16 %v382
    %v2205 = vunpack.c.l.b16 %v383
    %v2206 = vunpack.c.h.b16 %v383
    %v2207 = vunpack.c.l.b16 %v384
    %v2208 = vunpack.c.h.b16 %v384
    %v2209 = vunpack.c.l.b16 %v385
    %v2210 = vunpack.c.h.b16 %v385
    %v2211 = vunpack.c.l.b16 %v386
    %v2212 = vunpack.c.h.b16 %v386
    %v2213 = vunpack.c.l.b16 %v387
    %v2214 = vunpack.c.h.b16 %v387
    %v2215 = vunpack.c.l.b16 %v388
    %v2216 = vunpack.c.h.b16 %v388
    %v2217 = vunpack.c.l.b16 %v389
    %v2218 = vunpack.c.h.b16 %v389
    %v2219 = vunpack.c.l.b16 %v390
    %v2220 = vunpack.c.h.b16 %v390
    %v2221 = vunpack.c.l.b16 %v391
    %v2222 = vunpack.c.h.b16 %v391
    %v2223 = vunpack.c.l.b16 %v392
    %v2224 = vunpack.c.h.b16 %v392
    %v2225 = vunpack.c.l.b16 %v393
    %v2226 = vunpack.c.h.b16 %v393
    %v2227 = vunpack.c.l.b16 %v394
    %v2228 = vunpack.c.h.b16 %v394
    %v2229 = vunpack.c.l.b16 %v395
    %v2230 = vunpack.c.h.b16 %v395
    %v2231 = vunpack.c.l.b16 %v396
    %v2232 = vunpack.c.h.b16 %v396
    %v2233 = vunpack.c.l.b16 %v397
    %v2234 = vunpack.c.h.b16 %v397
    %v2235 = vunpack.c.l.b16 %v398
    %v2236 = vunpack.c.h.b16 %v398
    %v2237 = vunpack.c.l.b16 %v399
    %v2238 = vunpack.c.h.b16 %v399
    %v2239 = vunpack.c.l.b16 %v400
    %v2240 = vunpack.c.h.b16 %v400
    %v2241 = vunpack.c.l.b16 %v401
    %v2242 = vunpack.c.h.b16 %v401
    %v2243 = vunpack.c.l.b16 %v402
    %v2244 = vunpack.c.h.b16 %v402
    %v2245 = vunpack.c.l.b16 %v403
    %v2246 = vunpack.c.h.b16 %v403
    %v2247 = vunpack.c.l.b16 %v404
    %v2248 = vunpack.c.h.b16 %v404
    %v2249 = vunpack.c.l.b16 %v405
    %v2250 = vunpack.c.h.b16 %v405
    %v2251 = vunpack.c.l.b16 %v406
    %v2252 = vunpack.c.h.b16 %v406
    %v2253 = vunpack.c.l.b16 %v407
    %v2254 = vunpack.c.h.b16 %v407
    %v2255 = vunpack.c.l.b16 %v408
    %v2256 = vunpack.c.h.b16 %v408
    %v2257 = vunpack.c.l.b16 %v409
    %v2258 = vunpack.c.h.b16 %v409
    %v2259 = vunpack.c.l.b16 %v410
    %v2260 = vunpack.c.h.b16 %v410
    %v2261 = vunpack.c.l.b16 %v411
    %v2262 = vunpack.c.h.b16 %v411
    %v2263 = vunpack.c.l.b16 %v412
    %v2264 = vunpack.c.h.b16 %v412
    %v2265 = vunpack.c.l.b16 %v413
    %v2266 = vunpack.c.h.b16 %v413
    %v2267 = vunpack.c.l.b16 %v414
    %v2268 = vunpack.c.h.b16 %v414
    %v2269 = vunpack.c.l.b16 %v415
    %v2270 = vunpack.c.h.b16 %v415
    %v2271 = vunpack.c.l.b16 %v416
    %v2272 = vunpack.c.h.b16 %v416
    %v2273 = vunpack.c.l.b16 %v417
    %v2274 = vunpack.c.h.b16 %v417
    %v2275 = vunpack.c.l.b16 %v418
    %v2276 = vunpack.c.h.b16 %v418
    %v2277 = vunpack.c.l.b16 %v419
    %v2278 = vunpack.c.h.b16 %v419
    %v2279 = vunpack.c.l.b16 %v420
    %v2280 = vunpack.c.h.b16 %v420
    %v2281 = vunpack.c.l.b16 %v421
    %v2282 = vunpack.c.h.b16 %v421
    %v2283 = vunpack.c.l.b16 %v422
    %v2284 = vunpack.c.h.b16 %v422
    %v2285 = vunpack.c.l.b16 %v423
    %v2286 = vunpack.c.h.b16 %v423
    %v2287 = vunpack.c.l.b16 %v424
    %v2288 = vunpack.c.h.b16 %v424
    %v2289 = vunpack.c.l.b16 %v425
    %v2290 = vunpack.c.h.b16 %v425
    %v2291 = vunpack.c.l.b16 %v426
    %v2292 = vunpack.c.h.b16 %v426
    %v2293 = vunpack.c.l.b16 %v427
    %v2294 = vunpack.c.h.b16 %v427
    %v2295 = vunpack.c.l.b16 %v428
    %v2296 = vunpack.c.h.b16 %v428
    %v2297 = vunpack.c.l.b16 %v429
    %v2298 = vunpack.c.h.b16 %v429
    %v2299 = vunpack.c.l.b16 %v430
    %v2300 = vunpack.c.h.b16 %v430
    %v2301 = vunpack.c.l.b16 %v431
    %v2302 = vunpack.c.h.b16 %v431
    %v2303 = vunpack.c.l.b16 %v432
    %v2304 = vunpack.c.h.b16 %v432
    %v2305 = vunpack.c.l.b16 %v433
    %v2306 = vunpack.c.h.b16 %v433
    %v2307 = vunpack.c.l.b16 %v434
    %v2308 = vunpack.c.h.b16 %v434
    %v2309 = vunpack.c.l.b16 %v435
    %v2310 = vunpack.c.h.b16 %v435
    %v2311 = vunpack.c.l.b16 %v436
    %v2312 = vunpack.c.h.b16 %v436
    %v2313 = vunpack.c.l.b16 %v437
    %v2314 = vunpack.c.h.b16 %v437
    %v2315 = vunpack.c.l.b16 %v438
    %v2316 = vunpack.c.h.b16 %v438
    %v2317 = vunpack.c.l.b16 %v439
    %v2318 = vunpack.c.h.b16 %v439
    %v2319 = vunpack.c.l.b16 %v440
    %v2320 = vunpack.c.h.b16 %v440
    %v2321 = vunpack.c.l.b16 %v441
    %v2322 = vunpack.c.h.b16 %v441
    %v2323 = vunpack.c.l.b16 %v442
    %v2324 = vunpack.c.h.b16 %v442
    %v2325 = vunpack.c.l.b16 %v443
    %v2326 = vunpack.c.h.b16 %v443
    %v2327 = vunpack.c.l.b16 %v444
    %v2328 = vunpack.c.h.b16 %v444
    %v2329 = vunpack.c.l.b16 %v445
    %v2330 = vunpack.c.h.b16 %v445
    %v2331 = vunpack.c.l.b16 %v446
    %v2332 = vunpack.c.h.b16 %v446
    %v2333 = vunpack.c.l.b16 %v447
    %v2334 = vunpack.c.h.b16 %v447
    %v2335 = vunpack.c.l.b16 %v448
    %v2336 = vunpack.c.h.b16 %v448
    %v2337 = vunpack.c.l.b16 %v449
    %v2338 = vunpack.c.h.b16 %v449
    %v2339 = vunpack.c.l.b16 %v450
    %v2340 = vunpack.c.h.b16 %v450
    %v2341 = vunpack.c.l.b16 %v451
    %v2342 = vunpack.c.h.b16 %v451
    %v2343 = vunpack.c.l.b16 %v452
    %v2344 = vunpack.c.h.b16 %v452
    %v2345 = vunpack.c.l.b16 %v453
    %v2346 = vunpack.c.h.b16 %v453
    %v2347 = vunpack.c.l.b16 %v454
    %v2348 = vunpack.c.h.b16 %v454
    %v2349 = vunpack.c.l.b16 %v455
    %v2350 = vunpack.c.h.b16 %v455
    %v2351 = vunpack.c.l.b16 %v456
    %v2352 = vunpack.c.h.b16 %v456
    %v2353 = vunpack.c.l.b16 %v457
    %v2354 = vunpack.c.h.b16 %v457
    %v2355 = vunpack.c.l.b16 %v458
    %v2356 = vunpack.c.h.b16 %v458
    %v2357 = vunpack.c.l.b16 %v459
    %v2358 = vunpack.c.h.b16 %v459
    %v2359 = vunpack.c.l.b16 %v460
    %v2360 = vunpack.c.h.b16 %v460
    %v2361 = vunpack.c.l.b16 %v461
    %v2362 = vunpack.c.h.b16 %v461
    %v2363 = vunpack.c.l.b16 %v462
    %v2364 = vunpack.c.h.b16 %v462
    %v2365 = vunpack.c.l.b16 %v463
    %v2366 = vunpack.c.h.b16 %v463
    %v2367 = vunpack.c.l.b16 %v464
    %v2368 = vunpack.c.h.b16 %v464
    %v2369 = vunpack.c.l.b16 %v465
    %v2370 = vunpack.c.h.b16 %v465
    %v2371 = vunpack.c.l.b16 %v466
    %v2372 = vunpack.c.h.b16 %v466
    %v2373 = vunpack.c.l.b16 %v467
    %v2374 = vunpack.c.h.b16 %v467
    %v2375 = vunpack.c.l.b16 %v468
    %v2376 = vunpack.c.h.b16 %v468
    %v2377 = vunpack.c.l.b16 %v469
    %v2378 = vunpack.c.h.b16 %v469
    %v2379 = vunpack.c.l.b16 %v470
    %v2380 = vunpack.c.h.b16 %v470
    %v2381 = vunpack.c.l.b16 %v471
    %v2382 = vunpack.c.h.b16 %v471
    %v2383 = vunpack.c.l.b16 %v472
    %v2384 = vunpack.c.h.b16 %v472
    %v2385 = vunpack.c.l.b16 %v473
    %v2386 = vunpack.c.h.b16 %v473
    %v2387 = vunpack.c.l.b16 %v474
    %v2388 = vunpack.c.h.b16 %v474
    %v2389 = vunpack.c.l.b16 %v475
    %v2390 = vunpack.c.h.b16 %v475
    %v2391 = vunpack.c.l.b16 %v476
    %v2392 = vunpack.c.h.b16 %v476
    %v2393 = vunpack.c.l.b16 %v477
    %v2394 = vunpack.c.h.b16 %v477
    %v2395 = vunpack.c.l.b16 %v478
    %v2396 = vunpack.c.h.b16 %v478
    %v2397 = vunpack.c.l.b16 %v479
    %v2398 = vunpack.c.h.b16 %v479
    %v2399 = vunpack.c.l.b16 %v480
    %v2400 = vunpack.c.h.b16 %v480
    %v2401 = vunpack.c.l.b16 %v481
    %v2402 = vunpack.c.h.b16 %v481
    %v2403 = vunpack.c.l.b16 %v482
    %v2404 = vunpack.c.h.b16 %v482
    %v2405 = vunpack.c.l.b16 %v483
    %v2406 = vunpack.c.h.b16 %v483
    %v2407 = vunpack.c.l.b16 %v484
    %v2408 = vunpack.c.h.b16 %v484
    %v2409 = vunpack.c.l.b16 %v485
    %v2410 = vunpack.c.h.b16 %v485
    %v2411 = vunpack.c.l.b16 %v486
    %v2412 = vunpack.c.h.b16 %v486
    %v2413 = vunpack.c.l.b16 %v487
    %v2414 = vunpack.c.h.b16 %v487
    %v2415 = vunpack.c.l.b16 %v488
    %v2416 = vunpack.c.h.b16 %v488
    %v2417 = vunpack.c.l.b16 %v489
    %v2418 = vunpack.c.h.b16 %v489
    %v2419 = vunpack.c.l.b16 %v490
    %v2420 = vunpack.c.h.b16 %v490
    %v2421 = vunpack.c.l.b16 %v491
    %v2422 = vunpack.c.h.b16 %v491
    %v2423 = vunpack.c.l.b16 %v492
    %v2424 = vunpack.c.h.b16 %v492
    %v2425 = vunpack.c.l.b16 %v493
    %v2426 = vunpack.c.h.b16 %v493
    %v2427 = vunpack.c.l.b16 %v494
    %v2428 = vunpack.c.h.b16 %v494
    %v2429 = vunpack.c.l.b16 %v495
    %v2430 = vunpack.c.h.b16 %v495
    %v2431 = vunpack.c.l.b16 %v496
    %v2432 = vunpack.c.h.b16 %v496
    %v2433 = vunpack.c.l.b16 %v497
    %v2434 = vunpack.c.h.b16 %v497
    %v2435 = vunpack.c.l.b16 %v498
    %v2436 = vunpack.c.h.b16 %v498
    %v2437 = vunpack.c.l.b16 %v499
    %v2438 = vunpack.c.h.b16 %v499
    %v2439 = vunpack.c.l.b16 %v500
    %v2440 = vunpack.c.h.b16 %v500
    %v2441 = vunpack.c.l.b16 %v501
    %v2442 = vunpack.c.h.b16 %v501
    %v2443 = vunpack.c.l.b16 %v502
    %v2444 = vunpack.c.h.b16 %v502
    %v2445 = vunpack.c.l.b16 %v503
    %v2446 = vunpack.c.h.b16 %v503
    %v2447 = vunpack.c.l.b16 %v504
    %v2448 = vunpack.c.h.b16 %v504
    %v2449 = vunpack.c.l.b16 %v505
    %v2450 = vunpack.c.h.b16 %v505
    %v2451 = vunpack.c.l.b16 %v506
    %v2452 = vunpack.c.h.b16 %v506
    %v2453 = vunpack.c.l.b16 %v507
    %v2454 = vunpack.c.h.b16 %v507
    %v2455 = vunpack.c.l.b16 %v508
    %v2456 = vunpack.c.h.b16 %v508
    %v2457 = vunpack.c.l.b16 %v509
    %v2458 = vunpack.c.h.b16 %v509
    %v2459 = vunpack.c.l.b16 %v510
    %v2460 = vunpack.c.h.b16 %v510
    %v2461 = vunpack.c.l.b16 %v511
    %v2462 = vunpack.c.h.b16 %v511
    %v2463 = vunpack.c.l.b16 %v512
    %v2464 = vunpack.c.h.b16 %v512
    %v2465 = vunpack.c.l.b16 %v513
    %v2466 = vunpack.c.h.b16 %v513
    %v2467 = vunpack.c.l.b16 %v514
    %v2468 = vunpack.c.h.b16 %v514
    %v2469 = vunpack.c.l.b16 %v515
    %v2470 = vunpack.c.h.b16 %v515
    %v2471 = vunpack.c.l.b16 %v516
    %v2472 = vunpack.c.h.b16 %v516
    %v2473 = vunpack.c.l.b16 %v517
    %v2474 = vunpack.c.h.b16 %v517
    %v2475 = vunpack.c.l.b16 %v518
    %v2476 = vunpack.c.h.b16 %v518
    %v2477 = vunpack.c.l.b16 %v519
    %v2478 = vunpack.c.h.b16 %v519
    %v2479 = vunpack.c.l.b16 %v520
    %v2480 = vunpack.c.h.b16 %v520
    %v2481 = vunpack.c.l.b16 %v521
    %v2482 = vunpack.c.h.b16 %v521
    %v2483 = vunpack.c.l.b16 %v522
    %v2484 = vunpack.c.h.b16 %v522
    %v2485 = vunpack.c.l.b16 %v523
    %v2486 = vunpack.c.h.b16 %v523
    %v2487 = vunpack.c.l.b16 %v524
    %v2488 = vunpack.c.h.b16 %v524
    %v2489 = vunpack.c.l.b16 %v525
    %v2490 = vunpack.c.h.b16 %v525
    %v2491 = vunpack.c.l.b16 %v526
    %v2492 = vunpack.c.h.b16 %v526
    %v2493 = vunpack.c.l.b16 %v527
    %v2494 = vunpack.c.h.b16 %v527
    %v2495 = vunpack.c.l.b16 %v528
    %v2496 = vunpack.c.h.b16 %v528
    %v2497 = vunpack.c.l.b16 %v529
    %v2498 = vunpack.c.h.b16 %v529
    %v2499 = vunpack.c.l.b16 %v530
    %v2500 = vunpack.c.h.b16 %v530
    %v2501 = vunpack.c.l.b16 %v531
    %v2502 = vunpack.c.h.b16 %v531
    %v2503 = vunpack.c.l.b16 %v532
    %v2504 = vunpack.c.h.b16 %v532
    %v2505 = vunpack.c.l.b16 %v533
    %v2506 = vunpack.c.h.b16 %v533
    %v2507 = vunpack.c.l.b16 %v534
    %v2508 = vunpack.c.h.b16 %v534
    %v2509 = vunpack.c.l.b16 %v535
    %v2510 = vunpack.c.h.b16 %v535
    %v2511 = vunpack.c.l.b16 %v536
    %v2512 = vunpack.c.h.b16 %v536
    %v2513 = vunpack.c.l.b16 %v537
    %v2514 = vunpack.c.h.b16 %v537
    %v2515 = vunpack.c.l.b16 %v538
    %v2516 = vunpack.c.h.b16 %v538
    %v2517 = vunpack.c.l.b16 %v539
    %v2518 = vunpack.c.h.b16 %v539
    %v2519 = vunpack.c.l.b16 %v540
    %v2520 = vunpack.c.h.b16 %v540
    %v2521 = vunpack.c.l.b16 %v541
    %v2522 = vunpack.c.h.b16 %v541
    %v2523 = vunpack.c.l.b16 %v542
    %v2524 = vunpack.c.h.b16 %v542
    %v2525 = vunpack.c.l.b16 %v543
    %v2526 = vunpack.c.h.b16 %v543
    %v2527 = vunpack.c.l.b16 %v544
    %v2528 = vunpack.c.h.b16 %v544
    %v2529 = vunpack.c.l.b16 %v545
    %v2530 = vunpack.c.h.b16 %v545
    %v2531 = vunpack.c.l.b16 %v546
    %v2532 = vunpack.c.h.b16 %v546
    %v2533 = vunpack.c.l.b16 %v547
    %v2534 = vunpack.c.h.b16 %v547
    %v2535 = vunpack.c.l.b16 %v548
    %v2536 = vunpack.c.h.b16 %v548
    %v2537 = vunpack.c.l.b16 %v549
    %v2538 = vunpack.c.h.b16 %v549
    %v2539 = vunpack.c.l.b16 %v550
    %v2540 = vunpack.c.h.b16 %v550
    %v2541 = vunpack.c.l.b16 %v551
    %v2542 = vunpack.c.h.b16 %v551
    %v2543 = vunpack.c.l.b16 %v552
    %v2544 = vunpack.c.h.b16 %v552
    %v2545 = vunpack.c.l.b16 %v553
    %v2546 = vunpack.c.h.b16 %v553
    %v2547 = vunpack.c.l.b16 %v554
    %v2548 = vunpack.c.h.b16 %v554
    %v2549 = vunpack.c.l.b16 %v555
    %v2550 = vunpack.c.h.b16 %v555
    %v2551 = vunpack.c.l.b16 %v556
    %v2552 = vunpack.c.h.b16 %v556
    %v2553 = vunpack.c.l.b16 %v557
    %v2554 = vunpack.c.h.b16 %v557
    %v2555 = vunpack.c.l.b16 %v558
    %v2556 = vunpack.c.h.b16 %v558
    %v2557 = vunpack.c.l.b16 %v559
    %v2558 = vunpack.c.h.b16 %v559
    %v2559 = vunpack.c.l.b16 %v560
    %v2560 = vunpack.c.h.b16 %v560
    %v2561 = vunpack.c.l.b16 %v561
    %v2562 = vunpack.c.h.b16 %v561
    %v2563 = vunpack.c.l.b16 %v562
    %v2564 = vunpack.c.h.b16 %v562
    %v2565 = vunpack.c.l.b16 %v563
    %v2566 = vunpack.c.h.b16 %v563
    %v2567 = vunpack.c.l.b16 %v564
    %v2568 = vunpack.c.h.b16 %v564
    %v2569 = vunpack.c.l.b16 %v565
    %v2570 = vunpack.c.h.b16 %v565
    %v2571 = vunpack.c.l.b16 %v566
    %v2572 = vunpack.c.h.b16 %v566
    %v2573 = vunpack.c.l.b16 %v567
    %v2574 = vunpack.c.h.b16 %v567
    %v2575 = vunpack.c.l.b16 %v568
    %v2576 = vunpack.c.h.b16 %v568
    %v2577 = vunpack.c.l.b16 %v569
    %v2578 = vunpack.c.h.b16 %v569
    %v2579 = vunpack.c.l.b16 %v570
    %v2580 = vunpack.c.h.b16 %v570
    %v2581 = vunpack.c.l.b16 %v571
    %v2582 = vunpack.c.h.b16 %v571
    %v2583 = vunpack.c.l.b16 %v572
    %v2584 = vunpack.c.h.b16 %v572
    %v2585 = vunpack.c.l.b16 %v573
    %v2586 = vunpack.c.h.b16 %v573
    %v2587 = vunpack.c.l.b16 %v574
    %v2588 = vunpack.c.h.b16 %v574
    %v2589 = vunpack.c.l.b16 %v575
    %v2590 = vunpack.c.h.b16 %v575
    %v2591 = vunpack.c.l.b16 %v576
    %v2592 = vunpack.c.h.b16 %v576
    %v2593 = vunpack.c.l.b16 %v577
    %v2594 = vunpack.c.h.b16 %v577
    %v2595 = vunpack.c.l.b16 %v578
    %v2596 = vunpack.c.h.b16 %v578
    %v2597 = vunpack.c.l.b16 %v579
    %v2598 = vunpack.c.h.b16 %v579
    %v2599 = vunpack.c.l.b16 %v580
    %v2600 = vunpack.c.h.b16 %v580
    %v2601 = vunpack.c.l.b16 %v581
    %v2602 = vunpack.c.h.b16 %v581
    %v2603 = vunpack.c.l.b16 %v582
    %v2604 = vunpack.c.h.b16 %v582
    %v2605 = vunpack.c.l.b16 %v583
    %v2606 = vunpack.c.h.b16 %v583
    %v2607 = vunpack.c.l.b16 %v584
    %v2608 = vunpack.c.h.b16 %v584
    %v2609 = vunpack.c.l.b16 %v585
    %v2610 = vunpack.c.h.b16 %v585
    %v2611 = vunpack.c.l.b16 %v586
    %v2612 = vunpack.c.h.b16 %v586
    %v2613 = vunpack.c.l.b16 %v587
    %v2614 = vunpack.c.h.b16 %v587
    %v2615 = vunpack.c.l.b16 %v588
    %v2616 = vunpack.c.h.b16 %v588
    %v2617 = vunpack.c.l.b16 %v589
    %v2618 = vunpack.c.h.b16 %v589
    %v2619 = vunpack.c.l.b16 %v590
    %v2620 = vunpack.c.h.b16 %v590
    %v2621 = vunpack.c.l.b16 %v591
    %v2622 = vunpack.c.h.b16 %v591
    %v2623 = vunpack.c.l.b16 %v592
    %v2624 = vunpack.c.h.b16 %v592
    %v2625 = vunpack.c.l.b16 %v593
    %v2626 = vunpack.c.h.b16 %v593
    %v2627 = vunpack.c.l.b16 %v594
    %v2628 = vunpack.c.h.b16 %v594
    %v2629 = vunpack.c.l.b16 %v595
    %v2630 = vunpack.c.h.b16 %v595
    %v2631 = vunpack.c.l.b16 %v596
    %v2632 = vunpack.c.h.b16 %v596
    %v2633 = vunpack.c.l.b16 %v597
    %v2634 = vunpack.c.h.b16 %v597
    %v2635 = vunpack.c.l.b16 %v598
    %v2636 = vunpack.c.h.b16 %v598
    %v2637 = vunpack.c.l.b16 %v599
    %v2638 = vunpack.c.h.b16 %v599
    %v2639 = vunpack.c.l.b16 %v600
    %v2640 = vunpack.c.h.b16 %v600
    %v2641 = vunpack.c.l.b16 %v601
    %v2642 = vunpack.c.h.b16 %v601
    %v2643 = vunpack.c.l.b16 %v602
    %v2644 = vunpack.c.h.b16 %v602
    %v2645 = vunpack.c.l.b16 %v603
    %v2646 = vunpack.c.h.b16 %v603
    %v2647 = vunpack.c.l.b16 %v604
    %v2648 = vunpack.c.h.b16 %v604
    %v2649 = vunpack.c.l.b16 %v605
    %v2650 = vunpack.c.h.b16 %v605
    %v2651 = vunpack.c.l.b16 %v606
    %v2652 = vunpack.c.h.b16 %v606
    %v2653 = vunpack.c.l.b16 %v607
    %v2654 = vunpack.c.h.b16 %v607
    %v2655 = vunpack.c.l.b16 %v608
    %v2656 = vunpack.c.h.b16 %v608
    %v2657 = vunpack.c.l.b16 %v609
    %v2658 = vunpack.c.h.b16 %v609
    %v2659 = vunpack.c.l.b16 %v610
    %v2660 = vunpack.c.h.b16 %v610
    %v2661 = vunpack.c.l.b16 %v611
    %v2662 = vunpack.c.h.b16 %v611
    %v2663 = vunpack.c.l.b16 %v612
    %v2664 = vunpack.c.h.b16 %v612
    %v2665 = vunpack.c.l.b16 %v613
    %v2666 = vunpack.c.h.b16 %v613
    %v2667 = vunpack.c.l.b16 %v614
    %v2668 = vunpack.c.h.b16 %v614
    %v2669 = vunpack.c.l.b16 %v615
    %v2670 = vunpack.c.h.b16 %v615
    %v2671 = vunpack.c.l.b16 %v616
    %v2672 = vunpack.c.h.b16 %v616
    %v2673 = vunpack.c.l.b16 %v617
    %v2674 = vunpack.c.h.b16 %v617
    %v2675 = vunpack.c.l.b16 %v618
    %v2676 = vunpack.c.h.b16 %v618
    %v2677 = vunpack.c.l.b16 %v619
    %v2678 = vunpack.c.h.b16 %v619
    %v2679 = vunpack.c.l.b16 %v620
    %v2680 = vunpack.c.h.b16 %v620
    %v2681 = vunpack.c.l.b16 %v621
    %v2682 = vunpack.c.h.b16 %v621
    %v2683 = vunpack.c.l.b16 %v622
    %v2684 = vunpack.c.h.b16 %v622
    %v2685 = vunpack.c.l.b16 %v623
    %v2686 = vunpack.c.h.b16 %v623
    %v2687 = vunpack.c.l.b16 %v624
    %v2688 = vunpack.c.h.b16 %v624
    %v2689 = vunpack.c.l.b16 %v625
    %v2690 = vunpack.c.h.b16 %v625
    %v2691 = vunpack.c.l.b16 %v626
    %v2692 = vunpack.c.h.b16 %v626
    %v2693 = vunpack.c.l.b16 %v627
    %v2694 = vunpack.c.h.b16 %v627
    %v2695 = vunpack.c.l.b16 %v628
    %v2696 = vunpack.c.h.b16 %v628
    %v2697 = vunpack.c.l.b16 %v629
    %v2698 = vunpack.c.h.b16 %v629
    %v2699 = vunpack.c.l.b16 %v630
    %v2700 = vunpack.c.h.b16 %v630
    %v2701 = vunpack.c.l.b16 %v631
    %v2702 = vunpack.c.h.b16 %v631
    %v2703 = vunpack.c.l.b16 %v632
    %v2704 = vunpack.c.h.b16 %v632
    %v2705 = vunpack.c.l.b16 %v633
    %v2706 = vunpack.c.h.b16 %v633
    %v2707 = vunpack.c.l.b16 %v634
    %v2708 = vunpack.c.h.b16 %v634
    %v2709 = vunpack.c.l.b16 %v635
    %v2710 = vunpack.c.h.b16 %v635
    %v2711 = vunpack.c.l.b16 %v636
    %v2712 = vunpack.c.h.b16 %v636
    %v2713 = vunpack.c.l.b16 %v637
    %v2714 = vunpack.c.h.b16 %v637
    %v2715 = vunpack.c.l.b16 %v638
    %v2716 = vunpack.c.h.b16 %v638
    %v2717 = vunpack.c.l.b16 %v639
    %v2718 = vunpack.c.h.b16 %v639
    %v2719 = vunpack.c.l.b16 %v640
    %v2720 = vunpack.c.h.b16 %v640
    %v2721 = vunpack.c.l.b16 %v641
    %v2722 = vunpack.c.h.b16 %v641
    %v2723 = vunpack.c.l.b16 %v642
    %v2724 = vunpack.c.h.b16 %v642
    %v2725 = vunpack.c.l.b16 %v643
    %v2726 = vunpack.c.h.b16 %v643
    %v2727 = vunpack.c.l.b16 %v644
    %v2728 = vunpack.c.h.b16 %v644
    %v2729 = vunpack.c.l.b16 %v645
    %v2730 = vunpack.c.h.b16 %v645
    %v2731 = vunpack.c.l.b16 %v646
    %v2732 = vunpack.c.h.b16 %v646
    %v2733 = vunpack.c.l.b16 %v647
    %v2734 = vunpack.c.h.b16 %v647
    %v2735 = vunpack.c.l.b16 %v648
    %v2736 = vunpack.c.h.b16 %v648
    %v2737 = vunpack.c.l.b16 %v649
    %v2738 = vunpack.c.h.b16 %v649
    %v2739 = vunpack.c.l.b16 %v650
    %v2740 = vunpack.c.h.b16 %v650
    %v2741 = vunpack.c.l.b16 %v651
    %v2742 = vunpack.c.h.b16 %v651
    %v2743 = vunpack.c.l.b16 %v652
    %v2744 = vunpack.c.h.b16 %v652
    %v2745 = vunpack.c.l.b16 %v653
    %v2746 = vunpack.c.h.b16 %v653
    %v2747 = vunpack.c.l.b16 %v654
    %v2748 = vunpack.c.h.b16 %v654
    %v2749 = vunpack.c.l.b16 %v655
    %v2750 = vunpack.c.h.b16 %v655
    %v2751 = vunpack.c.l.b16 %v656
    %v2752 = vunpack.c.h.b16 %v656
    %v2753 = vunpack.c.l.b16 %v657
    %v2754 = vunpack.c.h.b16 %v657
    %v2755 = vunpack.c.l.b16 %v658
    %v2756 = vunpack.c.h.b16 %v658
    %v2757 = vunpack.c.l.b16 %v659
    %v2758 = vunpack.c.h.b16 %v659
    %v2759 = vunpack.c.l.b16 %v660
    %v2760 = vunpack.c.h.b16 %v660
    %v2761 = vunpack.c.l.b16 %v661
    %v2762 = vunpack.c.h.b16 %v661
    %v2763 = vunpack.c.l.b16 %v662
    %v2764 = vunpack.c.h.b16 %v662
    %v2765 = vunpack.c.l.b16 %v663
    %v2766 = vunpack.c.h.b16 %v663
    %v2767 = vunpack.c.l.b16 %v664
    %v2768 = vunpack.c.h.b16 %v664
    %v2769 = vunpack.c.l.b16 %v665
    %v2770 = vunpack.c.h.b16 %v665
    %v2771 = vunpack.c.l.b16 %v666
    %v2772 = vunpack.c.h.b16 %v666
    %v2773 = vunpack.c.l.b16 %v667
    %v2774 = vunpack.c.h.b16 %v667
    %v2775 = vunpack.c.l.b16 %v668
    %v2776 = vunpack.c.h.b16 %v668
    %v2777 = vunpack.c.l.b16 %v669
    %v2778 = vunpack.c.h.b16 %v669
    %v2779 = vunpack.c.l.b16 %v670
    %v2780 = vunpack.c.h.b16 %v670
    %v2781 = vunpack.c.l.b16 %v671
    %v2782 = vunpack.c.h.b16 %v671
    %v2783 = vunpack.c.l.b16 %v672
    %v2784 = vunpack.c.h.b16 %v672
    %v2785 = vunpack.c.l.b16 %v673
    %v2786 = vunpack.c.h.b16 %v673
    %v2787 = vunpack.c.l.b16 %v674
    %v2788 = vunpack.c.h.b16 %v674
    %v2789 = vunpack.c.l.b16 %v675
    %v2790 = vunpack.c.h.b16 %v675
    %v2791 = vunpack.c.l.b16 %v676
    %v2792 = vunpack.c.h.b16 %v676
    %v2793 = vunpack.c.l.b16 %v677
    %v2794 = vunpack.c.h.b16 %v677
    %v2795 = vunpack.c.l.b16 %v678
    %v2796 = vunpack.c.h.b16 %v678
    %v2797 = vunpack.c.l.b16 %v679
    %v2798 = vunpack.c.h.b16 %v679
    %v2799 = vunpack.c.l.b16 %v680
    %v2800 = vunpack.c.h.b16 %v680
    %v2801 = vunpack.c.l.b16 %v681
    %v2802 = vunpack.c.h.b16 %v681
    %v2803 = vunpack.c.l.b16 %v682
    %v2804 = vunpack.c.h.b16 %v682
    %v2805 = vunpack.c.l.b16 %v683
    %v2806 = vunpack.c.h.b16 %v683
    %v2807 = vunpack.c.l.b16 %v684
    %v2808 = vunpack.c.h.b16 %v684
    %v2809 = vunpack.c.l.b16 %v685
    %v2810 = vunpack.c.h.b16 %v685
    %v2811 = vunpack.c.l.b16 %v686
    %v2812 = vunpack.c.h.b16 %v686
    %v2813 = vunpack.c.l.b16 %v687
    %v2814 = vunpack.c.h.b16 %v687
    %v2815 = vunpack.c.l.b16 %v688
    %v2816 = vunpack.c.h.b16 %v688
    %v2817 = vunpack.c.l.b16 %v689
    %v2818 = vunpack.c.h.b16 %v689
    %v2819 = vunpack.c.l.b16 %v690
    %v2820 = vunpack.c.h.b16 %v690
    %v2821 = vunpack.c.l.b16 %v691
    %v2822 = vunpack.c.h.b16 %v691
    %v2823 = vunpack.c.l.b16 %v692
    %v2824 = vunpack.c.h.b16 %v692
    %v2825 = vunpack.c.l.b16 %v693
    %v2826 = vunpack.c.h.b16 %v693
    %v2827 = vunpack.c.l.b16 %v694
    %v2828 = vunpack.c.h.b16 %v694
    %v2829 = vunpack.c.l.b16 %v695
    %v2830 = vunpack.c.h.b16 %v695
    %v2831 = vunpack.c.l.b16 %v696
    %v2832 = vunpack.c.h.b16 %v696
    %v2833 = vunpack.c.l.b16 %v697
    %v2834 = vunpack.c.h.b16 %v697
    %v2835 = vunpack.c.l.b16 %v698
    %v2836 = vunpack.c.h.b16 %v698
    %v2837 = vunpack.c.l.b16 %v699
    %v2838 = vunpack.c.h.b16 %v699
    %v2839 = vunpack.c.l.b16 %v700
    %v2840 = vunpack.c.h.b16 %v700
    %v2841 = vunpack.c.l.b16 %v701
    %v2842 = vunpack.c.h.b16 %v701
    %v2843 = vunpack.c.l.b16 %v702
    %v2844 = vunpack.c.h.b16 %v702
    %v2845 = vunpack.c.l.b16 %v703
    %v2846 = vunpack.c.h.b16 %v703
    %v2847 = vunpack.c.l.b16 %v704
    %v2848 = vunpack.c.h.b16 %v704
    %v2849 = vunpack.c.l.b16 %v705
    %v2850 = vunpack.c.h.b16 %v705
    %v2851 = vunpack.c.l.b16 %v706
    %v2852 = vunpack.c.h.b16 %v706
    %v2853 = vunpack.c.l.b16 %v707
    %v2854 = vunpack.c.h.b16 %v707
    %v2855 = vunpack.c.l.b16 %v708
    %v2856 = vunpack.c.h.b16 %v708
    %v2857 = vunpack.c.l.b16 %v709
    %v2858 = vunpack.c.h.b16 %v709
    %v2859 = vunpack.c.l.b16 %v710
    %v2860 = vunpack.c.h.b16 %v710
    %v2861 = vunpack.c.l.b16 %v711
    %v2862 = vunpack.c.h.b16 %v711
    %v2863 = vunpack.c.l.b16 %v712
    %v2864 = vunpack.c.h.b16 %v712
    %v2865 = vunpack.c.l.b16 %v713
    %v2866 = vunpack.c.h.b16 %v713
    %v2867 = vunpack.c.l.b16 %v714
    %v2868 = vunpack.c.h.b16 %v714
    %v2869 = vunpack.c.l.b16 %v715
    %v2870 = vunpack.c.h.b16 %v715
    %v2871 = vunpack.c.l.b16 %v716
    %v2872 = vunpack.c.h.b16 %v716
    %v2873 = vunpack.c.l.b16 %v717
    %v2874 = vunpack.c.h.b16 %v717
    %v2875 = vunpack.c.l.b16 %v718
    %v2876 = vunpack.c.h.b16 %v718
    %v2877 = vunpack.c.l.b16 %v719
    %v2878 = vunpack.c.h.b16 %v719
    %v2879 = vunpack.c.l.b16 %v720
    %v2880 = vunpack.c.h.b16 %v720
    %v2881 = vunpack.c.l.b16 %v721
    %v2882 = vunpack.c.h.b16 %v721
    %v2883 = vunpack.c.l.b16 %v722
    %v2884 = vunpack.c.h.b16 %v722
    %v2885 = vunpack.c.l.b16 %v723
    %v2886 = vunpack.c.h.b16 %v723
    %v2887 = vunpack.c.l.b16 %v724
    %v2888 = vunpack.c.h.b16 %v724
    %v2889 = vunpack.c.l.b16 %v725
    %v2890 = vunpack.c.h.b16 %v725
    %v2891 = vunpack.c.l.b16 %v726
    %v2892 = vunpack.c.h.b16 %v726
    %v2893 = vunpack.c.l.b16 %v727
    %v2894 = vunpack.c.h.b16 %v727
    %v2895 = vunpack.c.l.b16 %v728
    %v2896 = vunpack.c.h.b16 %v728
    %v2897 = vunpack.c.l.b16 %v729
    %v2898 = vunpack.c.h.b16 %v729
    %v2899 = vunpack.c.l.b16 %v730
    %v2900 = vunpack.c.h.b16 %v730
    %v2901 = vunpack.c.l.b16 %v731
    %v2902 = vunpack.c.h.b16 %v731
    %v2903 = vunpack.c.l.b16 %v732
    %v2904 = vunpack.c.h.b16 %v732
    %v2905 = vunpack.c.l.b16 %v733
    %v2906 = vunpack.c.h.b16 %v733
    %v2907 = vunpack.c.l.b16 %v734
    %v2908 = vunpack.c.h.b16 %v734
    %v2909 = vunpack.c.l.b16 %v735
    %v2910 = vunpack.c.h.b16 %v735
    %v2911 = vunpack.c.l.b16 %v736
    %v2912 = vunpack.c.h.b16 %v736
    %v2913 = vunpack.c.l.b16 %v737
    %v2914 = vunpack.c.h.b16 %v737
    %v2915 = vunpack.c.l.b16 %v738
    %v2916 = vunpack.c.h.b16 %v738
    %v2917 = vunpack.c.l.b16 %v739
    %v2918 = vunpack.c.h.b16 %v739
    %v2919 = vunpack.c.l.b16 %v740
    %v2920 = vunpack.c.h.b16 %v740
    %v2921 = vunpack.c.l.b16 %v741
    %v2922 = vunpack.c.h.b16 %v741
    %v2923 = vunpack.c.l.b16 %v742
    %v2924 = vunpack.c.h.b16 %v742
    %v2925 = vunpack.c.l.b16 %v743
    %v2926 = vunpack.c.h.b16 %v743
    %v2927 = vunpack.c.l.b16 %v744
    %v2928 = vunpack.c.h.b16 %v744
    %v2929 = vunpack.c.l.b16 %v745
    %v2930 = vunpack.c.h.b16 %v745
    %v2931 = vunpack.c.l.b16 %v746
    %v2932 = vunpack.c.h.b16 %v746
    %v2933 = vunpack.c.l.b16 %v747
    %v2934 = vunpack.c.h.b16 %v747
    %v2935 = vunpack.c.l.b16 %v748
    %v2936 = vunpack.c.h.b16 %v748
    %v2937 = vunpack.c.l.b16 %v749
    %v2938 = vunpack.c.h.b16 %v749
    %v2939 = vunpack.c.l.b16 %v750
    %v2940 = vunpack.c.h.b16 %v750
    %v2941 = vunpack.c.l.b16 %v751
    %v2942 = vunpack.c.h.b16 %v751
    %v2943 = vunpack.c.l.b16 %v752
    %v2944 = vunpack.c.h.b16 %v752
    %v2945 = vunpack.c.l.b16 %v753
    %v2946 = vunpack.c.h.b16 %v753
    %v2947 = vunpack.c.l.b16 %v754
    %v2948 = vunpack.c.h.b16 %v754
    %v2949 = vunpack.c.l.b16 %v755
    %v2950 = vunpack.c.h.b16 %v755
    %v2951 = vunpack.c.l.b16 %v756
    %v2952 = vunpack.c.h.b16 %v756
    %v2953 = vunpack.c.l.b16 %v757
    %v2954 = vunpack.c.h.b16 %v757
    %v2955 = vunpack.c.l.b16 %v758
    %v2956 = vunpack.c.h.b16 %v758
    %v2957 = vunpack.c.l.b16 %v759
    %v2958 = vunpack.c.h.b16 %v759
    %v2959 = vunpack.c.l.b16 %v760
    %v2960 = vunpack.c.h.b16 %v760
    %v2961 = vunpack.c.l.b16 %v761
    %v2962 = vunpack.c.h.b16 %v761
    %v2963 = vunpack.c.l.b16 %v762
    %v2964 = vunpack.c.h.b16 %v762
    %v2965 = vunpack.c.l.b16 %v763
    %v2966 = vunpack.c.h.b16 %v763
    %v2967 = vunpack.c.l.b16 %v764
    %v2968 = vunpack.c.h.b16 %v764
    %v2969 = vunpack.c.l.b16 %v765
    %v2970 = vunpack.c.h.b16 %v765
    %v2971 = vunpack.c.l.b16 %v766
    %v2972 = vunpack.c.h.b16 %v766
    %v2973 = vunpack.c.l.b16 %v767
    %v2974 = vunpack.c.h.b16 %v767
    %v2975 = vunpack.c.l.b16 %v768
    %v2976 = vunpack.c.h.b16 %v768
    %v2977 = vunpack.c.l.b16 %v769
    %v2978 = vunpack.c.h.b16 %v769
    %v2979 = vunpack.c.l.b16 %v770
    %v2980 = vunpack.c.h.b16 %v770
    %v2981 = vunpack.c.l.b16 %v771
    %v2982 = vunpack.c.h.b16 %v771
    %v2983 = vunpack.c.l.b16 %v772
    %v2984 = vunpack.c.h.b16 %v772
    %v2985 = vunpack.c.l.b16 %v773
    %v2986 = vunpack.c.h.b16 %v773
    %v2987 = vunpack.c.l.b16 %v774
    %v2988 = vunpack.c.h.b16 %v774
    %v2989 = vunpack.c.l.b16 %v775
    %v2990 = vunpack.c.h.b16 %v775
    %v2991 = vunpack.c.l.b16 %v776
    %v2992 = vunpack.c.h.b16 %v776
    %v2993 = vunpack.c.l.b16 %v777
    %v2994 = vunpack.c.h.b16 %v777
    %v2995 = vunpack.c.l.b16 %v778
    %v2996 = vunpack.c.h.b16 %v778
    %v2997 = vunpack.c.l.b16 %v779
    %v2998 = vunpack.c.h.b16 %v779
    %v2999 = vunpack.c.l.b16 %v780
    %v3000 = vunpack.c.h.b16 %v780
    %v3001 = vunpack.c.l.b16 %v781
    %v3002 = vunpack.c.h.b16 %v781
    %v3003 = vunpack.c.l.b16 %v782
    %v3004 = vunpack.c.h.b16 %v782
    %v3005 = vunpack.c.l.b16 %v783
    %v3006 = vunpack.c.h.b16 %v783
    %v3007 = vunpack.c.l.b16 %v784
    %v3008 = vunpack.c.h.b16 %v784
    %v3009 = vunpack.c.l.b16 %v785
    %v3010 = vunpack.c.h.b16 %v785
    %v3011 = vunpack.c.l.b16 %v786
    %v3012 = vunpack.c.h.b16 %v786
    %v3013 = vunpack.c.l.b16 %v787
    %v3014 = vunpack.c.h.b16 %v787
    %v3015 = vunpack.c.l.b16 %v788
    %v3016 = vunpack.c.h.b16 %v788
    %v3017 = vunpack.c.l.b16 %v789
    %v3018 = vunpack.c.h.b16 %v789
    %v3019 = vunpack.c.l.b16 %v790
    %v3020 = vunpack.c.h.b16 %v790
    %v3021 = vunpack.c.l.b16 %v791
    %v3022 = vunpack.c.h.b16 %v791
    %v3023 = vunpack.c.l.b16 %v792
    %v3024 = vunpack.c.h.b16 %v792
    %v3025 = vunpack.c.l.b16 %v793
    %v3026 = vunpack.c.h.b16 %v793
    %v3027 = vunpack.c.l.b16 %v794
    %v3028 = vunpack.c.h.b16 %v794
    %v3029 = vunpack.c.l.b16 %v795
    %v3030 = vunpack.c.h.b16 %v795
    %v3031 = vunpack.c.l.b16 %v796
    %v3032 = vunpack.c.h.b16 %v796
    %v3033 = vunpack.c.l.b16 %v797
    %v3034 = vunpack.c.h.b16 %v797
    %v3035 = vunpack.c.l.b16 %v798
    %v3036 = vunpack.c.h.b16 %v798
    %v3037 = vunpack.c.l.b16 %v799
    %v3038 = vunpack.c.h.b16 %v799
    %v3039 = vunpack.c.l.b16 %v800
    %v3040 = vunpack.c.h.b16 %v800
    %v3041 = vunpack.c.l.b16 %v801
    %v3042 = vunpack.c.h.b16 %v801
    %v3043 = vunpack.c.l.b16 %v802
    %v3044 = vunpack.c.h.b16 %v802
    %v3045 = vunpack.c.l.b16 %v803
    %v3046 = vunpack.c.h.b16 %v803
    %v3047 = vunpack.c.l.b16 %v804
    %v3048 = vunpack.c.h.b16 %v804
    %v3049 = vunpack.c.l.b16 %v805
    %v3050 = vunpack.c.h.b16 %v805
    %v3051 = vunpack.c.l.b16 %v806
    %v3052 = vunpack.c.h.b16 %v806
    %v3053 = vunpack.c.l.b16 %v807
    %v3054 = vunpack.c.h.b16 %v807
    %v3055 = vunpack.c.l.b16 %v808
    %v3056 = vunpack.c.h.b16 %v808
    %v3057 = vunpack.c.l.b16 %v809
    %v3058 = vunpack.c.h.b16 %v809
    %v3059 = vunpack.c.l.b16 %v810
    %v3060 = vunpack.c.h.b16 %v810
    %v3061 = vunpack.c.l.b16 %v811
    %v3062 = vunpack.c.h.b16 %v811
    %v3063 = vunpack.c.l.b16 %v812
    %v3064 = vunpack.c.h.b16 %v812
    %v3065 = vunpack.c.l.b16 %v813
    %v3066 = vunpack.c.h.b16 %v813
    %v3067 = vunpack.c.l.b16 %v814
    %v3068 = vunpack.c.h.b16 %v814
    %v3069 = vunpack.c.l.b16 %v815
    %v3070 = vunpack.c.h.b16 %v815
    %v3071 = vunpack.c.l.b16 %v816
    %v3072 = vunpack.c.h.b16 %v816
    %v3073 = vunpack.c.l.b16 %v817
    %v3074 = vunpack.c.h.b16 %v817
    %v3075 = vunpack.c.l.b16 %v818
    %v3076 = vunpack.c.h.b16 %v818
    %v3077 = vunpack.c.l.b16 %v819
    %v3078 = vunpack.c.h.b16 %v819
    %v3079 = vunpack.c.l.b16 %v820
    %v3080 = vunpack.c.h.b16 %v820
    %v3081 = vunpack.c.l.b16 %v821
    %v3082 = vunpack.c.h.b16 %v821
    %v3083 = vunpack.c.l.b16 %v822
    %v3084 = vunpack.c.h.b16 %v822
    %v3085 = vunpack.c.l.b16 %v823
    %v3086 = vunpack.c.h.b16 %v823
    %v3087 = vunpack.c.l.b16 %v824
    %v3088 = vunpack.c.h.b16 %v824
    %v3089 = vunpack.c.l.b16 %v825
    %v3090 = vunpack.c.h.b16 %v825
    %v3091 = vunpack.c.l.b16 %v826
    %v3092 = vunpack.c.h.b16 %v826
    %v3093 = vunpack.c.l.b16 %v827
    %v3094 = vunpack.c.h.b16 %v827
    %v3095 = vunpack.c.l.b16 %v828
    %v3096 = vunpack.c.h.b16 %v828
    %v3097 = vunpack.c.l.b16 %v829
    %v3098 = vunpack.c.h.b16 %v829
    %v3099 = vunpack.c.l.b16 %v830
    %v3100 = vunpack.c.h.b16 %v830
    %v3101 = vunpack.c.l.b16 %v831
    %v3102 = vunpack.c.h.b16 %v831
    %v3103 = vunpack.c.l.b16 %v832
    %v3104 = vunpack.c.h.b16 %v832
    %v3105 = vunpack.c.l.b16 %v833
    %v3106 = vunpack.c.h.b16 %v833
    %v3107 = vunpack.c.l.b16 %v834
    %v3108 = vunpack.c.h.b16 %v834
    %v3109 = vunpack.c.l.b16 %v835
    %v3110 = vunpack.c.h.b16 %v835
    %v3111 = vunpack.c.l.b16 %v836
    %v3112 = vunpack.c.h.b16 %v836
    %v3113 = vunpack.c.l.b16 %v837
    %v3114 = vunpack.c.h.b16 %v837
    %v3115 = vunpack.c.l.b16 %v838
    %v3116 = vunpack.c.h.b16 %v838
    %v3117 = vunpack.c.l.b16 %v839
    %v3118 = vunpack.c.h.b16 %v839
    %v3119 = vunpack.c.l.b16 %v840
    %v3120 = vunpack.c.h.b16 %v840
    %v3121 = vunpack.c.l.b16 %v841
    %v3122 = vunpack.c.h.b16 %v841
    %v3123 = vunpack.c.l.b16 %v842
    %v3124 = vunpack.c.h.b16 %v842
    %v3125 = vunpack.c.l.b16 %v843
    %v3126 = vunpack.c.h.b16 %v843
    %v3127 = vunpack.c.l.b16 %v844
    %v3128 = vunpack.c.h.b16 %v844
    %v3129 = vunpack.c.l.b16 %v845
    %v3130 = vunpack.c.h.b16 %v845
    %v3131 = vunpack.c.l.b16 %v846
    %v3132 = vunpack.c.h.b16 %v846
    %v3133 = vunpack.c.l.b16 %v847
    %v3134 = vunpack.c.h.b16 %v847
    %v3135 = vunpack.c.l.b16 %v848
    %v3136 = vunpack.c.h.b16 %v848
    %v3137 = vunpack.c.l.b16 %v849
    %v3138 = vunpack.c.h.b16 %v849
    %v3139 = vunpack.c.l.b16 %v850
    %v3140 = vunpack.c.h.b16 %v850
    %v3141 = vunpack.c.l.b16 %v851
    %v3142 = vunpack.c.h.b16 %v851
    %v3143 = vunpack.c.l.b16 %v852
    %v3144 = vunpack.c.h.b16 %v852
    %v3145 = vunpack.c.l.b16 %v853
    %v3146 = vunpack.c.h.b16 %v853
    %v3147 = vunpack.c.l.b16 %v854
    %v3148 = vunpack.c.h.b16 %v854
    %v3149 = vunpack.c.l.b16 %v855
    %v3150 = vunpack.c.h.b16 %v855
    %v3151 = vunpack.c.l.b16 %v856
    %v3152 = vunpack.c.h.b16 %v856
    %v3153 = vunpack.c.l.b16 %v857
    %v3154 = vunpack.c.h.b16 %v857
    %v3155 = vunpack.c.l.b16 %v858
    %v3156 = vunpack.c.h.b16 %v858
    %v3157 = vunpack.c.l.b16 %v859
    %v3158 = vunpack.c.h.b16 %v859
    %v3159 = vunpack.c.l.b16 %v860
    %v3160 = vunpack.c.h.b16 %v860
    %v3161 = vunpack.c.l.b16 %v861
    %v3162 = vunpack.c.h.b16 %v861
    %v3163 = vunpack.c.l.b16 %v862
    %v3164 = vunpack.c.h.b16 %v862
    %v3165 = vunpack.c.l.b16 %v863
    %v3166 = vunpack.c.h.b16 %v863
    %v3167 = vunpack.c.l.b16 %v864
    %v3168 = vunpack.c.h.b16 %v864
    %v3169 = vunpack.c.l.b16 %v865
    %v3170 = vunpack.c.h.b16 %v865
    %v3171 = vunpack.c.l.b16 %v866
    %v3172 = vunpack.c.h.b16 %v866
    %v3173 = vunpack.c.l.b16 %v867
    %v3174 = vunpack.c.h.b16 %v867
    %v3175 = vunpack.c.l.b16 %v868
    %v3176 = vunpack.c.h.b16 %v868
    %v3177 = vunpack.c.l.b16 %v869
    %v3178 = vunpack.c.h.b16 %v869
    %v3179 = vunpack.c.l.b16 %v870
    %v3180 = vunpack.c.h.b16 %v870
    %v3181 = vunpack.c.l.b16 %v871
    %v3182 = vunpack.c.h.b16 %v871
    %v3183 = vunpack.c.l.b16 %v872
    %v3184 = vunpack.c.h.b16 %v872
    %v3185 = vunpack.c.l.b16 %v873
    %v3186 = vunpack.c.h.b16 %v873
    %v3187 = vunpack.c.l.b16 %v874
    %v3188 = vunpack.c.h.b16 %v874
    %v3189 = vunpack.c.l.b16 %v875
    %v3190 = vunpack.c.h.b16 %v875
    %v3191 = vunpack.c.l.b16 %v876
    %v3192 = vunpack.c.h.b16 %v876
    %v3193 = vunpack.c.l.b16 %v877
    %v3194 = vunpack.c.h.b16 %v877
    %v3195 = vunpack.c.l.b16 %v878
    %v3196 = vunpack.c.h.b16 %v878
    %v3197 = vunpack.c.l.b16 %v879
    %v3198 = vunpack.c.h.b16 %v879
    %v3199 = vunpack.c.l.b16 %v880
    %v3200 = vunpack.c.h.b16 %v880
    %v3201 = vunpack.c.l.b16 %v881
    %v3202 = vunpack.c.h.b16 %v881
    %v3203 = vunpack.c.l.b16 %v882
    %v3204 = vunpack.c.h.b16 %v882
    %v3205 = vunpack.c.l.b16 %v883
    %v3206 = vunpack.c.h.b16 %v883
    %v3207 = vunpack.c.l.b16 %v884
    %v3208 = vunpack.c.h.b16 %v884
    %v3209 = vunpack.c.l.b16 %v885
    %v3210 = vunpack.c.h.b16 %v885
    %v3211 = vunpack.c.l.b16 %v886
    %v3212 = vunpack.c.h.b16 %v886
    %v3213 = vunpack.c.l.b16 %v887
    %v3214 = vunpack.c.h.b16 %v887
    %v3215 = vunpack.c.l.b16 %v888
    %v3216 = vunpack.c.h.b16 %v888
    %v3217 = vunpack.c.l.b16 %v889
    %v3218 = vunpack.c.h.b16 %v889
    %v3219 = vunpack.c.l.b16 %v890
    %v3220 = vunpack.c.h.b16 %v890
    %v3221 = vunpack.c.l.b16 %v891
    %v3222 = vunpack.c.h.b16 %v891
    %v3223 = vunpack.c.l.b16 %v892
    %v3224 = vunpack.c.h.b16 %v892
    %v3225 = vpack.c.b16 %v1701, %v1689
    %v3226 = vpack.c.b16 %v1702, %v1690
    %v3227 = vpack.c.b16 %v1703, %v1691
    %v3228 = vpack.c.b16 %v1704, %v1692
    %v3229 = vpack.c.b16 %v1705, %v1693
    %v3230 = vpack.c.b16 %v1706, %v1694
    %v3231 = vpack.c.b16 %v1707, %v1695
    %v3232 = vpack.c.b16 %v1708, %v1696
    %v3233 = vpack.c.b16 %v1709, %v1697
    %v3234 = vpack.c.b16 %v1710, %v1698
    %v3235 = vpack.c.b16 %v1711, %v1699
    %v3236 = vpack.c.b16 %v1712, %v1700
    %v3237 = vpack.c.b16 %v1725, %v1713
    %v3238 = vpack.c.b16 %v1726, %v1714
    %v3239 = vpack.c.b16 %v1727, %v1715
    %v3240 = vpack.c.b16 %v1728, %v1716
    %v3241 = vpack.c.b16 %v1729, %v1717
    %v3242 = vpack.c.b16 %v1730, %v1718
    %v3243 = vpack.c.b16 %v1731, %v1719
    %v3244 = vpack.c.b16 %v1732, %v1720
    %v3245 = vpack.c.b16 %v1733, %v1721
    %v3246 = vpack.c.b16 %v1734, %v1722
    %v3247 = vpack.c.b16 %v1735, %v1723
    %v3248 = vpack.c.b16 %v1736, %v1724
    %v3249 = vpack.c.b16 %v1749, %v1737
    %v3250 = vpack.c.b16 %v1750, %v1738
    %v3251 = vpack.c.b16 %v1751, %v1739
    %v3252 = vpack.c.b16 %v1752, %v1740
    %v3253 = vpack.c.b16 %v1753, %v1741
    %v3254 = vpack.c.b16 %v1754, %v1742
    %v3255 = vpack.c.b16 %v1755, %v1743
    %v3256 = vpack.c.b16 %v1756, %v1744
    %v3257 = vpack.c.b16 %v1757, %v1745
    %v3258 = vpack.c.b16 %v1758, %v1746
    %v3259 = vpack.c.b16 %v1759, %v1747
    %v3260 = vpack.c.b16 %v1760, %v1748
    %v3261 = vpack.c.b16 %v1773, %v1761
    %v3262 = vpack.c.b16 %v1774, %v1762
    %v3263 = vpack.c.b16 %v1775, %v1763
    %v3264 = vpack.c.b16 %v1776, %v1764
    %v3265 = vpack.c.b16 %v1777, %v1765
    %v3266 = vpack.c.b16 %v1778, %v1766
    %v3267 = vpack.c.b16 %v1779, %v1767
    %v3268 = vpack.c.b16 %v1780, %v1768
    %v3269 = vpack.c.b16 %v1781, %v1769
    %v3270 = vpack.c.b16 %v1782, %v1770
    %v3271 = vpack.c.b16 %v1783, %v1771
    %v3272 = vpack.c.b16 %v1784, %v1772
    %v3273 = vpack.c.b16 %v1797, %v1785
    %v3274 = vpack.c.b16 %v1798, %v1786
    %v3275 = vpack.c.b16 %v1799, %v1787
    %v3276 = vpack.c.b16 %v1800, %v1788
    %v3277 = vpack.c.b16 %v1801, %v1789
    %v3278 = vpack.c.b16 %v1802, %v1790
    %v3279 = vpack.c.b16 %v1803, %v1791
    %v3280 = vpack.c.b16 %v1804, %v1792
    %v3281 = vpack.c.b16 %v1805, %v1793
    %v3282 = vpack.c.b16 %v1806, %v1794
    %v3283 = vpack.c.b16 %v1807, %v1795
    %v3284 = vpack.c.b16 %v1808, %v1796
    %v3285 = vpack.c.b16 %v1821, %v1809
    %v3286 = vpack.c.b16 %v1822, %v1810
    %v3287 = vpack.c.b16 %v1823, %v1811
    %v3288 = vpack.c.b16 %v1824, %v1812
    %v3289 = vpack.c.b16 %v1825, %v1813
    %v3290 = vpack.c.b16 %v1826, %v1814
    %v3291 = vpack.c.b16 %v1827, %v1815
    %v3292 = vpack.c.b16 %v1828, %v1816
    %v3293 = vpack.c.b16 %v1829, %v1817
    %v3294 = vpack.c.b16 %v1830, %v1818
    %v3295 = vpack.c.b16 %v1831, %v1819
    %v3296 = vpack.c.b16 %v1832, %v1820
    %v3297 = vpack.c.b16 %v1845, %v1833
    %v3298 = vpack.c.b16 %v1846, %v1834
    %v3299 = vpack.c.b16 %v1847, %v1835
    %v3300 = vpack.c.b16 %v1848, %v1836
    %v3301 = vpack.c.b16 %v1849, %v1837
    %v3302 = vpack.c.b16 %v1850, %v1838
    %v3303 = vpack.c.b16 %v1851, %v1839
    %v3304 = vpack.c.b16 %v1852, %v1840
    %v3305 = vpack.c.b16 %v1853, %v1841
    %v3306 = vpack.c.b16 %v1854, %v1842
    %v3307 = vpack.c.b16 %v1855, %v1843
    %v3308 = vpack.c.b16 %v1856, %v1844
    %v3309 = vpack.c.b16 %v1869, %v1857
    %v3310 = vpack.c.b16 %v1870, %v1858
    %v3311 = vpack.c.b16 %v1871, %v1859
    %v3312 = vpack.c.b16 %v1872, %v1860
    %v3313 = vpack.c.b16 %v1873, %v1861
    %v3314 = vpack.c.b16 %v1874, %v1862
    %v3315 = vpack.c.b16 %v1875, %v1863
    %v3316 = vpack.c.b16 %v1876, %v1864
    %v3317 = vpack.c.b16 %v1877, %v1865
    %v3318 = vpack.c.b16 %v1878, %v1866
    %v3319 = vpack.c.b16 %v1879, %v1867
    %v3320 = vpack.c.b16 %v1880, %v1868
    %v3321 = vpack.c.b16 %v1893, %v1881
    %v3322 = vpack.c.b16 %v1894, %v1882
    %v3323 = vpack.c.b16 %v1895, %v1883
    %v3324 = vpack.c.b16 %v1896, %v1884
    %v3325 = vpack.c.b16 %v1897, %v1885
    %v3326 = vpack.c.b16 %v1898, %v1886
    %v3327 = vpack.c.b16 %v1899, %v1887
    %v3328 = vpack.c.b16 %v1900, %v1888
    %v3329 = vpack.c.b16 %v1901, %v1889
    %v3330 = vpack.c.b16 %v1902, %v1890
    %v3331 = vpack.c.b16 %v1903, %v1891
    %v3332 = vpack.c.b16 %v1904, %v1892
    %v3333 = vpack.c.b16 %v1917, %v1905
    %v3334 = vpack.c.b16 %v1918, %v1906
    %v3335 = vpack.c.b16 %v1919, %v1907
    %v3336 = vpack.c.b16 %v1920, %v1908
    %v3337 = vpack.c.b16 %v1921, %v1909
    %v3338 = vpack.c.b16 %v1922, %v1910
    %v3339 = vpack.c.b16 %v1923, %v1911
    %v3340 = vpack.c.b16 %v1924, %v1912
    %v3341 = vpack.c.b16 %v1925, %v1913
    %v3342 = vpack.c.b16 %v1926, %v1914
    %v3343 = vpack.c.b16 %v1927, %v1915
    %v3344 = vpack.c.b16 %v1928, %v1916
    %v3345 = vpack.c.b16 %v1941, %v1929
    %v3346 = vpack.c.b16 %v1942, %v1930
    %v3347 = vpack.c.b16 %v1943, %v1931
    %v3348 = vpack.c.b16 %v1944, %v1932
    %v3349 = vpack.c.b16 %v1945, %v1933
    %v3350 = vpack.c.b16 %v1946, %v1934
    %v3351 = vpack.c.b16 %v1947, %v1935
    %v3352 = vpack.c.b16 %v1948, %v1936
    %v3353 = vpack.c.b16 %v1949, %v1937
    %v3354 = vpack.c.b16 %v1950, %v1938
    %v3355 = vpack.c.b16 %v1951, %v1939
    %v3356 = vpack.c.b16 %v1952, %v1940
    %v3357 = vpack.c.b16 %v1965, %v1953
    %v3358 = vpack.c.b16 %v1966, %v1954
    %v3359 = vpack.c.b16 %v1967, %v1955
    %v3360 = vpack.c.b16 %v1968, %v1956
    %v3361 = vpack.c.b16 %v1969, %v1957
    %v3362 = vpack.c.b16 %v1970, %v1958
    %v3363 = vpack.c.b16 %v1971, %v1959
    %v3364 = vpack.c.b16 %v1972, %v1960
    %v3365 = vpack.c.b16 %v1973, %v1961
    %v3366 = vpack.c.b16 %v1974, %v1962
    %v3367 = vpack.c.b16 %v1975, %v1963
    %v3368 = vpack.c.b16 %v1976, %v1964
    %v3369 = vpack.c.b16 %v1989, %v1977
    %v3370 = vpack.c.b16 %v1990, %v1978
    %v3371 = vpack.c.b16 %v1991, %v1979
    %v3372 = vpack.c.b16 %v1992, %v1980
    %v3373 = vpack.c.b16 %v1993, %v1981
    %v3374 = vpack.c.b16 %v1994, %v1982
    %v3375 = vpack.c.b16 %v1995, %v1983
    %v3376 = vpack.c.b16 %v1996, %v1984
    %v3377 = vpack.c.b16 %v1997, %v1985
    %v3378 = vpack.c.b16 %v1998, %v1986
    %v3379 = vpack.c.b16 %v1999, %v1987
    %v3380 = vpack.c.b16 %v2000, %v1988
    %v3381 = vpack.c.b16 %v2013, %v2001
    %v3382 = vpack.c.b16 %v2014, %v2002
    %v3383 = vpack.c.b16 %v2015, %v2003
    %v3384 = vpack.c.b16 %v2016, %v2004
    %v3385 = vpack.c.b16 %v2017, %v2005
    %v3386 = vpack.c.b16 %v2018, %v2006
    %v3387 = vpack.c.b16 %v2019, %v2007
    %v3388 = vpack.c.b16 %v2020, %v2008
    %v3389 = vpack.c.b16 %v2021, %v2009
    %v3390 = vpack.c.b16 %v2022, %v2010
    %v3391 = vpack.c.b16 %v2023, %v2011
    %v3392 = vpack.c.b16 %v2024, %v2012
    %v3393 = vpack.c.b16 %v2037, %v2025
    %v3394 = vpack.c.b16 %v2038, %v2026
    %v3395 = vpack.c.b16 %v2039, %v2027
    %v3396 = vpack.c.b16 %v2040, %v2028
    %v3397 = vpack.c.b16 %v2041, %v2029
    %v3398 = vpack.c.b16 %v2042, %v2030
    %v3399 = vpack.c.b16 %v2043, %v2031
    %v3400 = vpack.c.b16 %v2044, %v2032
    %v3401 = vpack.c.b16 %v2045, %v2033
    %v3402 = vpack.c.b16 %v2046, %v2034
    %v3403 = vpack.c.b16 %v2047, %v2035
    %v3404 = vpack.c.b16 %v2048, %v2036
    %v3405 = vpack.c.b16 %v2061, %v2049
    %v3406 = vpack.c.b16 %v2062, %v2050
    %v3407 = vpack.c.b16 %v2063, %v2051
    %v3408 = vpack.c.b16 %v2064, %v2052
    %v3409 = vpack.c.b16 %v2065, %v2053
    %v3410 = vpack.c.b16 %v2066, %v2054
    %v3411 = vpack.c.b16 %v2067, %v2055
    %v3412 = vpack.c.b16 %v2068, %v2056
    %v3413 = vpack.c.b16 %v2069, %v2057
    %v3414 = vpack.c.b16 %v2070, %v2058
    %v3415 = vpack.c.b16 %v2071, %v2059
    %v3416 = vpack.c.b16 %v2072, %v2060
    %v3417 = vpack.c.b16 %v2085, %v2073
    %v3418 = vpack.c.b16 %v2086, %v2074
    %v3419 = vpack.c.b16 %v2087, %v2075
    %v3420 = vpack.c.b16 %v2088, %v2076
    %v3421 = vpack.c.b16 %v2089, %v2077
    %v3422 = vpack.c.b16 %v2090, %v2078
    %v3423 = vpack.c.b16 %v2091, %v2079
    %v3424 = vpack.c.b16 %v2092, %v2080
    %v3425 = vpack.c.b16 %v2093, %v2081
    %v3426 = vpack.c.b16 %v2094, %v2082
    %v3427 = vpack.c.b16 %v2095, %v2083
    %v3428 = vpack.c.b16 %v2096, %v2084
    %v3429 = vpack.c.b16 %v2109, %v2097
    %v3430 = vpack.c.b16 %v2110, %v2098
    %v3431 = vpack.c.b16 %v2111, %v2099
    %v3432 = vpack.c.b16 %v2112, %v2100
    %v3433 = vpack.c.b16 %v2113, %v2101
    %v3434 = vpack.c.b16 %v2114, %v2102
    %v3435 = vpack.c.b16 %v2115, %v2103
    %v3436 = vpack.c.b16 %v2116, %v2104
    %v3437 = vpack.c.b16 %v2117, %v2105
    %v3438 = vpack.c.b16 %v2118, %v2106
    %v3439 = vpack.c.b16 %v2119, %v2107
    %v3440 = vpack.c.b16 %v2120, %v2108
    %v3441 = vpack.c.b16 %v2133, %v2121
    %v3442 = vpack.c.b16 %v2134, %v2122
    %v3443 = vpack.c.b16 %v2135, %v2123
    %v3444 = vpack.c.b16 %v2136, %v2124
    %v3445 = vpack.c.b16 %v2137, %v2125
    %v3446 = vpack.c.b16 %v2138, %v2126
    %v3447 = vpack.c.b16 %v2139, %v2127
    %v3448 = vpack.c.b16 %v2140, %v2128
    %v3449 = vpack.c.b16 %v2141, %v2129
    %v3450 = vpack.c.b16 %v2142, %v2130
    %v3451 = vpack.c.b16 %v2143, %v2131
    %v3452 = vpack.c.b16 %v2144, %v2132
    %v3453 = vpack.c.b16 %v2157, %v2145
    %v3454 = vpack.c.b16 %v2158, %v2146
    %v3455 = vpack.c.b16 %v2159, %v2147
    %v3456 = vpack.c.b16 %v2160, %v2148
    %v3457 = vpack.c.b16 %v2161, %v2149
    %v3458 = vpack.c.b16 %v2162, %v2150
    %v3459 = vpack.c.b16 %v2163, %v2151
    %v3460 = vpack.c.b16 %v2164, %v2152
    %v3461 = vpack.c.b16 %v2165, %v2153
    %v3462 = vpack.c.b16 %v2166, %v2154
    %v3463 = vpack.c.b16 %v2167, %v2155
    %v3464 = vpack.c.b16 %v2168, %v2156
    %v3465 = vpack.c.b16 %v2181, %v2169
    %v3466 = vpack.c.b16 %v2182, %v2170
    %v3467 = vpack.c.b16 %v2183, %v2171
    %v3468 = vpack.c.b16 %v2184, %v2172
    %v3469 = vpack.c.b16 %v2185, %v2173
    %v3470 = vpack.c.b16 %v2186, %v2174
    %v3471 = vpack.c.b16 %v2187, %v2175
    %v3472 = vpack.c.b16 %v2188, %v2176
    %v3473 = vpack.c.b16 %v2189, %v2177
    %v3474 = vpack.c.b16 %v2190, %v2178
    %v3475 = vpack.c.b16 %v2191, %v2179
    %v3476 = vpack.c.b16 %v2192, %v2180
    %v3477 = vpack.c.b16 %v2205, %v2193
    %v3478 = vpack.c.b16 %v2206, %v2194
    %v3479 = vpack.c.b16 %v2207, %v2195
    %v3480 = vpack.c.b16 %v2208, %v2196
    %v3481 = vpack.c.b16 %v2209, %v2197
    %v3482 = vpack.c.b16 %v2210, %v2198
    %v3483 = vpack.c.b16 %v2211, %v2199
    %v3484 = vpack.c.b16 %v2212, %v2200
    %v3485 = vpack.c.b16 %v2213, %v2201
    %v3486 = vpack.c.b16 %v2214, %v2202
    %v3487 = vpack.c.b16 %v2215, %v2203
    %v3488 = vpack.c.b16 %v2216, %v2204
    %v3489 = vpack.c.b16 %v2229, %v2217
    %v3490 = vpack.c.b16 %v2230, %v2218
    %v3491 = vpack.c.b16 %v2231, %v2219
    %v3492 = vpack.c.b16 %v2232, %v2220
    %v3493 = vpack.c.b16 %v2233, %v2221
    %v3494 = vpack.c.b16 %v2234, %v2222
    %v3495 = vpack.c.b16 %v2235, %v2223
    %v3496 = vpack.c.b16 %v2236, %v2224
    %v3497 = vpack.c.b16 %v2237, %v2225
    %v3498 = vpack.c.b16 %v2238, %v2226
    %v3499 = vpack.c.b16 %v2239, %v2227
    %v3500 = vpack.c.b16 %v2240, %v2228
    %v3501 = vpack.c.b16 %v2253, %v2241
    %v3502 = vpack.c.b16 %v2254, %v2242
    %v3503 = vpack.c.b16 %v2255, %v2243
    %v3504 = vpack.c.b16 %v2256, %v2244
    %v3505 = vpack.c.b16 %v2257, %v2245
    %v3506 = vpack.c.b16 %v2258, %v2246
    %v3507 = vpack.c.b16 %v2259, %v2247
    %v3508 = vpack.c.b16 %v2260, %v2248
    %v3509 = vpack.c.b16 %v2261, %v2249
    %v3510 = vpack.c.b16 %v2262, %v2250
    %v3511 = vpack.c.b16 %v2263, %v2251
    %v3512 = vpack.c.b16 %v2264, %v2252
    %v3513 = vpack.c.b16 %v2277, %v2265
    %v3514 = vpack.c.b16 %v2278, %v2266
    %v3515 = vpack.c.b16 %v2279, %v2267
    %v3516 = vpack.c.b16 %v2280, %v2268
    %v3517 = vpack.c.b16 %v2281, %v2269
    %v3518 = vpack.c.b16 %v2282, %v2270
    %v3519 = vpack.c.b16 %v2283, %v2271
    %v3520 = vpack.c.b16 %v2284, %v2272
    %v3521 = vpack.c.b16 %v2285, %v2273
    %v3522 = vpack.c.b16 %v2286, %v2274
    %v3523 = vpack.c.b16 %v2287, %v2275
    %v3524 = vpack.c.b16 %v2288, %v2276
    %v3525 = vpack.c.b16 %v2301, %v2289
    %v3526 = vpack.c.b16 %v2302, %v2290
    %v3527 = vpack.c.b16 %v2303, %v2291
    %v3528 = vpack.c.b16 %v2304, %v2292
    %v3529 = vpack.c.b16 %v2305, %v2293
    %v3530 = vpack.c.b16 %v2306, %v2294
    %v3531 = vpack.c.b16 %v2307, %v2295
    %v3532 = vpack.c.b16 %v2308, %v2296
    %v3533 = vpack.c.b16 %v2309, %v2297
    %v3534 = vpack.c.b16 %v2310, %v2298
    %v3535 = vpack.c.b16 %v2311, %v2299
    %v3536 = vpack.c.b16 %v2312, %v2300
    %v3537 = vpack.c.b16 %v2325, %v2313
    %v3538 = vpack.c.b16 %v2326, %v2314
    %v3539 = vpack.c.b16 %v2327, %v2315
    %v3540 = vpack.c.b16 %v2328, %v2316
    %v3541 = vpack.c.b16 %v2329, %v2317
    %v3542 = vpack.c.b16 %v2330, %v2318
    %v3543 = vpack.c.b16 %v2331, %v2319
    %v3544 = vpack.c.b16 %v2332, %v2320
    %v3545 = vpack.c.b16 %v2333, %v2321
    %v3546 = vpack.c.b16 %v2334, %v2322
    %v3547 = vpack.c.b16 %v2335, %v2323
    %v3548 = vpack.c.b16 %v2336, %v2324
    %v3549 = vpack.c.b16 %v2349, %v2337
    %v3550 = vpack.c.b16 %v2350, %v2338
    %v3551 = vpack.c.b16 %v2351, %v2339
    %v3552 = vpack.c.b16 %v2352, %v2340
    %v3553 = vpack.c.b16 %v2353, %v2341
    %v3554 = vpack.c.b16 %v2354, %v2342
    %v3555 = vpack.c.b16 %v2355, %v2343
    %v3556 = vpack.c.b16 %v2356, %v2344
    %v3557 = vpack.c.b16 %v2357, %v2345
    %v3558 = vpack.c.b16 %v2358, %v2346
    %v3559 = vpack.c.b16 %v2359, %v2347
    %v3560 = vpack.c.b16 %v2360, %v2348
    %v3561 = vpack.c.b16 %v2373, %v2361
    %v3562 = vpack.c.b16 %v2374, %v2362
    %v3563 = vpack.c.b16 %v2375, %v2363
    %v3564 = vpack.c.b16 %v2376, %v2364
    %v3565 = vpack.c.b16 %v2377, %v2365
    %v3566 = vpack.c.b16 %v2378, %v2366
    %v3567 = vpack.c.b16 %v2379, %v2367
    %v3568 = vpack.c.b16 %v2380, %v2368
    %v3569 = vpack.c.b16 %v2381, %v2369
    %v3570 = vpack.c.b16 %v2382, %v2370
    %v3571 = vpack.c.b16 %v2383, %v2371
    %v3572 = vpack.c.b16 %v2384, %v2372
    %v3573 = vpack.c.b16 %v2397, %v2385
    %v3574 = vpack.c.b16 %v2398, %v2386
    %v3575 = vpack.c.b16 %v2399, %v2387
    %v3576 = vpack.c.b16 %v2400, %v2388
    %v3577 = vpack.c.b16 %v2401, %v2389
    %v3578 = vpack.c.b16 %v2402, %v2390
    %v3579 = vpack.c.b16 %v2403, %v2391
    %v3580 = vpack.c.b16 %v2404, %v2392
    %v3581 = vpack.c.b16 %v2405, %v2393
    %v3582 = vpack.c.b16 %v2406, %v2394
    %v3583 = vpack.c.b16 %v2407, %v2395
    %v3584 = vpack.c.b16 %v2408, %v2396
    %v3585 = vpack.c.b16 %v2421, %v2409
    %v3586 = vpack.c.b16 %v2422, %v2410
    %v3587 = vpack.c.b16 %v2423, %v2411
    %v3588 = vpack.c.b16 %v2424, %v2412
    %v3589 = vpack.c.b16 %v2425, %v2413
    %v3590 = vpack.c.b16 %v2426, %v2414
    %v3591 = vpack.c.b16 %v2427, %v2415
    %v3592 = vpack.c.b16 %v2428, %v2416
    %v3593 = vpack.c.b16 %v2429, %v2417
    %v3594 = vpack.c.b16 %v2430, %v2418
    %v3595 = vpack.c.b16 %v2431, %v2419
    %v3596 = vpack.c.b16 %v2432, %v2420
    %v3597 = vpack.c.b16 %v2445, %v2433
    %v3598 = vpack.c.b16 %v2446, %v2434
    %v3599 = vpack.c.b16 %v2447, %v2435
    %v3600 = vpack.c.b16 %v2448, %v2436
    %v3601 = vpack.c.b16 %v2449, %v2437
    %v3602 = vpack.c.b16 %v2450, %v2438
    %v3603 = vpack.c.b16 %v2451, %v2439
    %v3604 = vpack.c.b16 %v2452, %v2440
    %v3605 = vpack.c.b16 %v2453, %v2441
    %v3606 = vpack.c.b16 %v2454, %v2442
    %v3607 = vpack.c.b16 %v2455, %v2443
    %v3608 = vpack.c.b16 %v2456, %v2444
    %v3609 = vpack.c.b16 %v2469, %v2457
    %v3610 = vpack.c.b16 %v2470, %v2458
    %v3611 = vpack.c.b16 %v2471, %v2459
    %v3612 = vpack.c.b16 %v2472, %v2460
    %v3613 = vpack.c.b16 %v2473, %v2461
    %v3614 = vpack.c.b16 %v2474, %v2462
    %v3615 = vpack.c.b16 %v2475, %v2463
    %v3616 = vpack.c.b16 %v2476, %v2464
    %v3617 = vpack.c.b16 %v2477, %v2465
    %v3618 = vpack.c.b16 %v2478, %v2466
    %v3619 = vpack.c.b16 %v2479, %v2467
    %v3620 = vpack.c.b16 %v2480, %v2468
    %v3621 = vpack.c.b16 %v2493, %v2481
    %v3622 = vpack.c.b16 %v2494, %v2482
    %v3623 = vpack.c.b16 %v2495, %v2483
    %v3624 = vpack.c.b16 %v2496, %v2484
    %v3625 = vpack.c.b16 %v2497, %v2485
    %v3626 = vpack.c.b16 %v2498, %v2486
    %v3627 = vpack.c.b16 %v2499, %v2487
    %v3628 = vpack.c.b16 %v2500, %v2488
    %v3629 = vpack.c.b16 %v2501, %v2489
    %v3630 = vpack.c.b16 %v2502, %v2490
    %v3631 = vpack.c.b16 %v2503, %v2491
    %v3632 = vpack.c.b16 %v2504, %v2492
    %v3633 = vpack.c.b16 %v2517, %v2505
    %v3634 = vpack.c.b16 %v2518, %v2506
    %v3635 = vpack.c.b16 %v2519, %v2507
    %v3636 = vpack.c.b16 %v2520, %v2508
    %v3637 = vpack.c.b16 %v2521, %v2509
    %v3638 = vpack.c.b16 %v2522, %v2510
    %v3639 = vpack.c.b16 %v2523, %v2511
    %v3640 = vpack.c.b16 %v2524, %v2512
    %v3641 = vpack.c.b16 %v2525, %v2513
    %v3642 = vpack.c.b16 %v2526, %v2514
    %v3643 = vpack.c.b16 %v2527, %v2515
    %v3644 = vpack.c.b16 %v2528, %v2516
    %v3645 = vpack.c.b16 %v2541, %v2529
    %v3646 = vpack.c.b16 %v2542, %v2530
    %v3647 = vpack.c.b16 %v2543, %v2531
    %v3648 = vpack.c.b16 %v2544, %v2532
    %v3649 = vpack.c.b16 %v2545, %v2533
    %v3650 = vpack.c.b16 %v2546, %v2534
    %v3651 = vpack.c.b16 %v2547, %v2535
    %v3652 = vpack.c.b16 %v2548, %v2536
    %v3653 = vpack.c.b16 %v2549, %v2537
    %v3654 = vpack.c.b16 %v2550, %v2538
    %v3655 = vpack.c.b16 %v2551, %v2539
    %v3656 = vpack.c.b16 %v2552, %v2540
    %v3657 = vpack.c.b16 %v2565, %v2553
    %v3658 = vpack.c.b16 %v2566, %v2554
    %v3659 = vpack.c.b16 %v2567, %v2555
    %v3660 = vpack.c.b16 %v2568, %v2556
    %v3661 = vpack.c.b16 %v2569, %v2557
    %v3662 = vpack.c.b16 %v2570, %v2558
    %v3663 = vpack.c.b16 %v2571, %v2559
    %v3664 = vpack.c.b16 %v2572, %v2560
    %v3665 = vpack.c.b16 %v2573, %v2561
    %v3666 = vpack.c.b16 %v2574, %v2562
    %v3667 = vpack.c.b16 %v2575, %v2563
    %v3668 = vpack.c.b16 %v2576, %v2564
    %v3669 = vpack.c.b16 %v2589, %v2577
    %v3670 = vpack.c.b16 %v2590, %v2578
    %v3671 = vpack.c.b16 %v2591, %v2579
    %v3672 = vpack.c.b16 %v2592, %v2580
    %v3673 = vpack.c.b16 %v2593, %v2581
    %v3674 = vpack.c.b16 %v2594, %v2582
    %v3675 = vpack.c.b16 %v2595, %v2583
    %v3676 = vpack.c.b16 %v2596, %v2584
    %v3677 = vpack.c.b16 %v2597, %v2585
    %v3678 = vpack.c.b16 %v2598, %v2586
    %v3679 = vpack.c.b16 %v2599, %v2587
    %v3680 = vpack.c.b16 %v2600, %v2588
    %v3681 = vpack.c.b16 %v2613, %v2601
    %v3682 = vpack.c.b16 %v2614, %v2602
    %v3683 = vpack.c.b16 %v2615, %v2603
    %v3684 = vpack.c.b16 %v2616, %v2604
    %v3685 = vpack.c.b16 %v2617, %v2605
    %v3686 = vpack.c.b16 %v2618, %v2606
    %v3687 = vpack.c.b16 %v2619, %v2607
    %v3688 = vpack.c.b16 %v2620, %v2608
    %v3689 = vpack.c.b16 %v2621, %v2609
    %v3690 = vpack.c.b16 %v2622, %v2610
    %v3691 = vpack.c.b16 %v2623, %v2611
    %v3692 = vpack.c.b16 %v2624, %v2612
    %v3693 = vpack.c.b16 %v2637, %v2625
    %v3694 = vpack.c.b16 %v2638, %v2626
    %v3695 = vpack.c.b16 %v2639, %v2627
    %v3696 = vpack.c.b16 %v2640, %v2628
    %v3697 = vpack.c.b16 %v2641, %v2629
    %v3698 = vpack.c.b16 %v2642, %v2630
    %v3699 = vpack.c.b16 %v2643, %v2631
    %v3700 = vpack.c.b16 %v2644, %v2632
    %v3701 = vpack.c.b16 %v2645, %v2633
    %v3702 = vpack.c.b16 %v2646, %v2634
    %v3703 = vpack.c.b16 %v2647, %v2635
    %v3704 = vpack.c.b16 %v2648, %v2636
    %v3705 = vpack.c.b16 %v2661, %v2649
    %v3706 = vpack.c.b16 %v2662, %v2650
    %v3707 = vpack.c.b16 %v2663, %v2651
    %v3708 = vpack.c.b16 %v2664, %v2652
    %v3709 = vpack.c.b16 %v2665, %v2653
    %v3710 = vpack.c.b16 %v2666, %v2654
    %v3711 = vpack.c.b16 %v2667, %v2655
    %v3712 = vpack.c.b16 %v2668, %v2656
    %v3713 = vpack.c.b16 %v2669, %v2657
    %v3714 = vpack.c.b16 %v2670, %v2658
    %v3715 = vpack.c.b16 %v2671, %v2659
    %v3716 = vpack.c.b16 %v2672, %v2660
    %v3717 = vpack.c.b16 %v2685, %v2673
    %v3718 = vpack.c.b16 %v2686, %v2674
    %v3719 = vpack.c.b16 %v2687, %v2675
    %v3720 = vpack.c.b16 %v2688, %v2676
    %v3721 = vpack.c.b16 %v2689, %v2677
    %v3722 = vpack.c.b16 %v2690, %v2678
    %v3723 = vpack.c.b16 %v2691, %v2679
    %v3724 = vpack.c.b16 %v2692, %v2680
    %v3725 = vpack.c.b16 %v2693, %v2681
    %v3726 = vpack.c.b16 %v2694, %v2682
    %v3727 = vpack.c.b16 %v2695, %v2683
    %v3728 = vpack.c.b16 %v2696, %v2684
    %v3729 = vpack.c.b16 %v2709, %v2697
    %v3730 = vpack.c.b16 %v2710, %v2698
    %v3731 = vpack.c.b16 %v2711, %v2699
    %v3732 = vpack.c.b16 %v2712, %v2700
    %v3733 = vpack.c.b16 %v2713, %v2701
    %v3734 = vpack.c.b16 %v2714, %v2702
    %v3735 = vpack.c.b16 %v2715, %v2703
    %v3736 = vpack.c.b16 %v2716, %v2704
    %v3737 = vpack.c.b16 %v2717, %v2705
    %v3738 = vpack.c.b16 %v2718, %v2706
    %v3739 = vpack.c.b16 %v2719, %v2707
    %v3740 = vpack.c.b16 %v2720, %v2708
    %v3741 = vpack.c.b16 %v2733, %v2721
    %v3742 = vpack.c.b16 %v2734, %v2722
    %v3743 = vpack.c.b16 %v2735, %v2723
    %v3744 = vpack.c.b16 %v2736, %v2724
    %v3745 = vpack.c.b16 %v2737, %v2725
    %v3746 = vpack.c.b16 %v2738, %v2726
    %v3747 = vpack.c.b16 %v2739, %v2727
    %v3748 = vpack.c.b16 %v2740, %v2728
    %v3749 = vpack.c.b16 %v2741, %v2729
    %v3750 = vpack.c.b16 %v2742, %v2730
    %v3751 = vpack.c.b16 %v2743, %v2731
    %v3752 = vpack.c.b16 %v2744, %v2732
    %v3753 = vpack.c.b16 %v2757, %v2745
    %v3754 = vpack.c.b16 %v2758, %v2746
    %v3755 = vpack.c.b16 %v2759, %v2747
    %v3756 = vpack.c.b16 %v2760, %v2748
    %v3757 = vpack.c.b16 %v2761, %v2749
    %v3758 = vpack.c.b16 %v2762, %v2750
    %v3759 = vpack.c.b16 %v2763, %v2751
    %v3760 = vpack.c.b16 %v2764, %v2752
    %v3761 = vpack.c.b16 %v2765, %v2753
    %v3762 = vpack.c.b16 %v2766, %v2754
    %v3763 = vpack.c.b16 %v2767, %v2755
    %v3764 = vpack.c.b16 %v2768, %v2756
    %v3765 = vpack.c.b16 %v2781, %v2769
    %v3766 = vpack.c.b16 %v2782, %v2770
    %v3767 = vpack.c.b16 %v2783, %v2771
    %v3768 = vpack.c.b16 %v2784, %v2772
    %v3769 = vpack.c.b16 %v2785, %v2773
    %v3770 = vpack.c.b16 %v2786, %v2774
    %v3771 = vpack.c.b16 %v2787, %v2775
    %v3772 = vpack.c.b16 %v2788, %v2776
    %v3773 = vpack.c.b16 %v2789, %v2777
    %v3774 = vpack.c.b16 %v2790, %v2778
    %v3775 = vpack.c.b16 %v2791, %v2779
    %v3776 = vpack.c.b16 %v2792, %v2780
    %v3777 = vpack.c.b16 %v2805, %v2793
    %v3778 = vpack.c.b16 %v2806, %v2794
    %v3779 = vpack.c.b16 %v2807, %v2795
    %v3780 = vpack.c.b16 %v2808, %v2796
    %v3781 = vpack.c.b16 %v2809, %v2797
    %v3782 = vpack.c.b16 %v2810, %v2798
    %v3783 = vpack.c.b16 %v2811, %v2799
    %v3784 = vpack.c.b16 %v2812, %v2800
    %v3785 = vpack.c.b16 %v2813, %v2801
    %v3786 = vpack.c.b16 %v2814, %v2802
    %v3787 = vpack.c.b16 %v2815, %v2803
    %v3788 = vpack.c.b16 %v2816, %v2804
    %v3789 = vpack.c.b16 %v2829, %v2817
    %v3790 = vpack.c.b16 %v2830, %v2818
    %v3791 = vpack.c.b16 %v2831, %v2819
    %v3792 = vpack.c.b16 %v2832, %v2820
    %v3793 = vpack.c.b16 %v2833, %v2821
    %v3794 = vpack.c.b16 %v2834, %v2822
    %v3795 = vpack.c.b16 %v2835, %v2823
    %v3796 = vpack.c.b16 %v2836, %v2824
    %v3797 = vpack.c.b16 %v2837, %v2825
    %v3798 = vpack.c.b16 %v2838, %v2826
    %v3799 = vpack.c.b16 %v2839, %v2827
    %v3800 = vpack.c.b16 %v2840, %v2828
    %v3801 = vpack.c.b16 %v2853, %v2841
    %v3802 = vpack.c.b16 %v2854, %v2842
    %v3803 = vpack.c.b16 %v2855, %v2843
    %v3804 = vpack.c.b16 %v2856, %v2844
    %v3805 = vpack.c.b16 %v2857, %v2845
    %v3806 = vpack.c.b16 %v2858, %v2846
    %v3807 = vpack.c.b16 %v2859, %v2847
    %v3808 = vpack.c.b16 %v2860, %v2848
    %v3809 = vpack.c.b16 %v2861, %v2849
    %v3810 = vpack.c.b16 %v2862, %v2850
    %v3811 = vpack.c.b16 %v2863, %v2851
    %v3812 = vpack.c.b16 %v2864, %v2852
    %v3813 = vpack.c.b16 %v2877, %v2865
    %v3814 = vpack.c.b16 %v2878, %v2866
    %v3815 = vpack.c.b16 %v2879, %v2867
    %v3816 = vpack.c.b16 %v2880, %v2868
    %v3817 = vpack.c.b16 %v2881, %v2869
    %v3818 = vpack.c.b16 %v2882, %v2870
    %v3819 = vpack.c.b16 %v2883, %v2871
    %v3820 = vpack.c.b16 %v2884, %v2872
    %v3821 = vpack.c.b16 %v2885, %v2873
    %v3822 = vpack.c.b16 %v2886, %v2874
    %v3823 = vpack.c.b16 %v2887, %v2875
    %v3824 = vpack.c.b16 %v2888, %v2876
    %v3825 = vpack.c.b16 %v2901, %v2889
    %v3826 = vpack.c.b16 %v2902, %v2890
    %v3827 = vpack.c.b16 %v2903, %v2891
    %v3828 = vpack.c.b16 %v2904, %v2892
    %v3829 = vpack.c.b16 %v2905, %v2893
    %v3830 = vpack.c.b16 %v2906, %v2894
    %v3831 = vpack.c.b16 %v2907, %v2895
    %v3832 = vpack.c.b16 %v2908, %v2896
    %v3833 = vpack.c.b16 %v2909, %v2897
    %v3834 = vpack.c.b16 %v2910, %v2898
    %v3835 = vpack.c.b16 %v2911, %v2899
    %v3836 = vpack.c.b16 %v2912, %v2900
    %v3837 = vpack.c.b16 %v2925, %v2913
    %v3838 = vpack.c.b16 %v2926, %v2914
    %v3839 = vpack.c.b16 %v2927, %v2915
    %v3840 = vpack.c.b16 %v2928, %v2916
    %v3841 = vpack.c.b16 %v2929, %v2917
    %v3842 = vpack.c.b16 %v2930, %v2918
    %v3843 = vpack.c.b16 %v2931, %v2919
    %v3844 = vpack.c.b16 %v2932, %v2920
    %v3845 = vpack.c.b16 %v2933, %v2921
    %v3846 = vpack.c.b16 %v2934, %v2922
    %v3847 = vpack.c.b16 %v2935, %v2923
    %v3848 = vpack.c.b16 %v2936, %v2924
    %v3849 = vpack.c.b16 %v2949, %v2937
    %v3850 = vpack.c.b16 %v2950, %v2938
    %v3851 = vpack.c.b16 %v2951, %v2939
    %v3852 = vpack.c.b16 %v2952, %v2940
    %v3853 = vpack.c.b16 %v2953, %v2941
    %v3854 = vpack.c.b16 %v2954, %v2942
    %v3855 = vpack.c.b16 %v2955, %v2943
    %v3856 = vpack.c.b16 %v2956, %v2944
    %v3857 = vpack.c.b16 %v2957, %v2945
    %v3858 = vpack.c.b16 %v2958, %v2946
    %v3859 = vpack.c.b16 %v2959, %v2947
    %v3860 = vpack.c.b16 %v2960, %v2948
    %v3861 = vpack.c.b16 %v2973, %v2961
    %v3862 = vpack.c.b16 %v2974, %v2962
    %v3863 = vpack.c.b16 %v2975, %v2963
    %v3864 = vpack.c.b16 %v2976, %v2964
    %v3865 = vpack.c.b16 %v2977, %v2965
    %v3866 = vpack.c.b16 %v2978, %v2966
    %v3867 = vpack.c.b16 %v2979, %v2967
    %v3868 = vpack.c.b16 %v2980, %v2968
    %v3869 = vpack.c.b16 %v2981, %v2969
    %v3870 = vpack.c.b16 %v2982, %v2970
    %v3871 = vpack.c.b16 %v2983, %v2971
    %v3872 = vpack.c.b16 %v2984, %v2972
    %v3873 = vpack.c.b16 %v2997, %v2985
    %v3874 = vpack.c.b16 %v2998, %v2986
    %v3875 = vpack.c.b16 %v2999, %v2987
    %v3876 = vpack.c.b16 %v3000, %v2988
    %v3877 = vpack.c.b16 %v3001, %v2989
    %v3878 = vpack.c.b16 %v3002, %v2990
    %v3879 = vpack.c.b16 %v3003, %v2991
    %v3880 = vpack.c.b16 %v3004, %v2992
    %v3881 = vpack.c.b16 %v3005, %v2993
    %v3882 = vpack.c.b16 %v3006, %v2994
    %v3883 = vpack.c.b16 %v3007, %v2995
    %v3884 = vpack.c.b16 %v3008, %v2996
    %v3885 = vpack.c.b16 %v3021, %v3009
    %v3886 = vpack.c.b16 %v3022, %v3010
    %v3887 = vpack.c.b16 %v3023, %v3011
    %v3888 = vpack.c.b16 %v3024, %v3012
    %v3889 = vpack.c.b16 %v3025, %v3013
    %v3890 = vpack.c.b16 %v3026, %v3014
    %v3891 = vpack.c.b16 %v3027, %v3015
    %v3892 = vpack.c.b16 %v3028, %v3016
    %v3893 = vpack.c.b16 %v3029, %v3017
    %v3894 = vpack.c.b16 %v3030, %v3018
    %v3895 = vpack.c.b16 %v3031, %v3019
    %v3896 = vpack.c.b16 %v3032, %v3020
    %v3897 = vpack.c.b16 %v3045, %v3033
    %v3898 = vpack.c.b16 %v3046, %v3034
    %v3899 = vpack.c.b16 %v3047, %v3035
    %v3900 = vpack.c.b16 %v3048, %v3036
    %v3901 = vpack.c.b16 %v3049, %v3037
    %v3902 = vpack.c.b16 %v3050, %v3038
    %v3903 = vpack.c.b16 %v3051, %v3039
    %v3904 = vpack.c.b16 %v3052, %v3040
    %v3905 = vpack.c.b16 %v3053, %v3041
    %v3906 = vpack.c.b16 %v3054, %v3042
    %v3907 = vpack.c.b16 %v3055, %v3043
    %v3908 = vpack.c.b16 %v3056, %v3044
    %v3909 = vpack.c.b16 %v3069, %v3057
    %v3910 = vpack.c.b16 %v3070, %v3058
    %v3911 = vpack.c.b16 %v3071, %v3059
    %v3912 = vpack.c.b16 %v3072, %v3060
    %v3913 = vpack.c.b16 %v3073, %v3061
    %v3914 = vpack.c.b16 %v3074, %v3062
    %v3915 = vpack.c.b16 %v3075, %v3063
    %v3916 = vpack.c.b16 %v3076, %v3064
    %v3917 = vpack.c.b16 %v3077, %v3065
    %v3918 = vpack.c.b16 %v3078, %v3066
    %v3919 = vpack.c.b16 %v3079, %v3067
    %v3920 = vpack.c.b16 %v3080, %v3068
    %v3921 = vpack.c.b16 %v3093, %v3081
    %v3922 = vpack.c.b16 %v3094, %v3082
    %v3923 = vpack.c.b16 %v3095, %v3083
    %v3924 = vpack.c.b16 %v3096, %v3084
    %v3925 = vpack.c.b16 %v3097, %v3085
    %v3926 = vpack.c.b16 %v3098, %v3086
    %v3927 = vpack.c.b16 %v3099, %v3087
    %v3928 = vpack.c.b16 %v3100, %v3088
    %v3929 = vpack.c.b16 %v3101, %v3089
    %v3930 = vpack.c.b16 %v3102, %v3090
    %v3931 = vpack.c.b16 %v3103, %v3091
    %v3932 = vpack.c.b16 %v3104, %v3092
    %v3933 = vpack.c.b16 %v3117, %v3105
    %v3934 = vpack.c.b16 %v3118, %v3106
    %v3935 = vpack.c.b16 %v3119, %v3107
    %v3936 = vpack.c.b16 %v3120, %v3108
    %v3937 = vpack.c.b16 %v3121, %v3109
    %v3938 = vpack.c.b16 %v3122, %v3110
    %v3939 = vpack.c.b16 %v3123, %v3111
    %v3940 = vpack.c.b16 %v3124, %v3112
    %v3941 = vpack.c.b16 %v3125, %v3113
    %v3942 = vpack.c.b16 %v3126, %v3114
    %v3943 = vpack.c.b16 %v3127, %v3115
    %v3944 = vpack.c.b16 %v3128, %v3116
    %v3945 = vpack.c.b16 %v3141, %v3129
    %v3946 = vpack.c.b16 %v3142, %v3130
    %v3947 = vpack.c.b16 %v3143, %v3131
    %v3948 = vpack.c.b16 %v3144, %v3132
    %v3949 = vpack.c.b16 %v3145, %v3133
    %v3950 = vpack.c.b16 %v3146, %v3134
    %v3951 = vpack.c.b16 %v3147, %v3135
    %v3952 = vpack.c.b16 %v3148, %v3136
    %v3953 = vpack.c.b16 %v3149, %v3137
    %v3954 = vpack.c.b16 %v3150, %v3138
    %v3955 = vpack.c.b16 %v3151, %v3139
    %v3956 = vpack.c.b16 %v3152, %v3140
    %v3957 = vpack.c.b16 %v3165, %v3153
    %v3958 = vpack.c.b16 %v3166, %v3154
    %v3959 = vpack.c.b16 %v3167, %v3155
    %v3960 = vpack.c.b16 %v3168, %v3156
    %v3961 = vpack.c.b16 %v3169, %v3157
    %v3962 = vpack.c.b16 %v3170, %v3158
    %v3963 = vpack.c.b16 %v3171, %v3159
    %v3964 = vpack.c.b16 %v3172, %v3160
    %v3965 = vpack.c.b16 %v3173, %v3161
    %v3966 = vpack.c.b16 %v3174, %v3162
    %v3967 = vpack.c.b16 %v3175, %v3163
    %v3968 = vpack.c.b16 %v3176, %v3164
    %v3969 = vpack.c.b16 %v3189, %v3177
    %v3970 = vpack.c.b16 %v3190, %v3178
    %v3971 = vpack.c.b16 %v3191, %v3179
    %v3972 = vpack.c.b16 %v3192, %v3180
    %v3973 = vpack.c.b16 %v3193, %v3181
    %v3974 = vpack.c.b16 %v3194, %v3182
    %v3975 = vpack.c.b16 %v3195, %v3183
    %v3976 = vpack.c.b16 %v3196, %v3184
    %v3977 = vpack.c.b16 %v3197, %v3185
    %v3978 = vpack.c.b16 %v3198, %v3186
    %v3979 = vpack.c.b16 %v3199, %v3187
    %v3980 = vpack.c.b16 %v3200, %v3188
    %v3981 = vpack.c.b16 %v3213, %v3201
    %v3982 = vpack.c.b16 %v3214, %v3202
    %v3983 = vpack.c.b16 %v3215, %v3203
    %v3984 = vpack.c.b16 %v3216, %v3204
    %v3985 = vpack.c.b16 %v3217, %v3205
    %v3986 = vpack.c.b16 %v3218, %v3206
    %v3987 = vpack.c.b16 %v3219, %v3207
    %v3988 = vpack.c.b16 %v3220, %v3208
    %v3989 = vpack.c.b16 %v3221, %v3209
    %v3990 = vpack.c.b16 %v3222, %v3210
    %v3991 = vpack.c.b16 %v3223, %v3211
    %v3992 = vpack.c.b16 %v3224, %v3212
    %4761 = vmatpush.bf16.msra.mxu0 %v3309
    %4762 = vmatpush.bf16.msra.mxu0 %v3297
    %4763 = vmatpush.bf16.msra.mxu0 %v3285
    %4764 = vmatpush.bf16.msra.mxu0 %v3273
    %4765 = vmatpush.bf16.msra.mxu0 %v3261
    %4766 = vmatpush.bf16.msra.mxu0 %v3249
    %4767 = vmatpush.bf16.msra.mxu0 %v3237
    %4768 = vmatpush.bf16.msra.mxu0 %v3225
    %4769 = vmatmul.bf16.gmra.mxu0 %v905
    %v4770 = vpop.f32.mrf.mxu0
    %v4771 = vadd.f32 0.0, %v4770
    %v4772 = vpop.f32.mrf.mxu0
    %4773 = vdwg.mxu0
    %4774 = vmatpush.bf16.msra.mxu0 %v3405
    %4775 = vmatpush.bf16.msra.mxu0 %v3393
    %4776 = vmatpush.bf16.msra.mxu0 %v3381
    %4777 = vmatpush.bf16.msra.mxu0 %v3369
    %4778 = vmatpush.bf16.msra.mxu0 %v3357
    %4779 = vmatpush.bf16.msra.mxu0 %v3345
    %4780 = vmatpush.bf16.msra.mxu0 %v3333
    %4781 = vmatpush.bf16.msra.mxu0 %v3321
    %4782 = vmatmul.bf16.gmra.mxu0 %v906
    %v4783 = vpop.f32.mrf.mxu0
    %v4784 = vadd.f32 %v4771, %v4783
    %v4785 = vpop.f32.mrf.mxu0
    %4786 = vdwg.mxu0
    %4787 = vmatpush.bf16.msra.mxu0 %v3501
    %4788 = vmatpush.bf16.msra.mxu0 %v3489
    %4789 = vmatpush.bf16.msra.mxu0 %v3477
    %4790 = vmatpush.bf16.msra.mxu0 %v3465
    %4791 = vmatpush.bf16.msra.mxu0 %v3453
    %4792 = vmatpush.bf16.msra.mxu0 %v3441
    %4793 = vmatpush.bf16.msra.mxu0 %v3429
    %4794 = vmatpush.bf16.msra.mxu0 %v3417
    %4795 = vmatmul.bf16.gmra.mxu0 %v907
    %v4796 = vpop.f32.mrf.mxu0
    %v4797 = vadd.f32 %v4784, %v4796
    %v4798 = vpop.f32.mrf.mxu0
    %4799 = vdwg.mxu0
    %4800 = vmatpush.bf16.msra.mxu0 %v3597
    %4801 = vmatpush.bf16.msra.mxu0 %v3585
    %4802 = vmatpush.bf16.msra.mxu0 %v3573
    %4803 = vmatpush.bf16.msra.mxu0 %v3561
    %4804 = vmatpush.bf16.msra.mxu0 %v3549
    %4805 = vmatpush.bf16.msra.mxu0 %v3537
    %4806 = vmatpush.bf16.msra.mxu0 %v3525
    %4807 = vmatpush.bf16.msra.mxu0 %v3513
    %4808 = vmatmul.bf16.gmra.mxu0 %v908
    %v4809 = vpop.f32.mrf.mxu0
    %v4810 = vadd.f32 %v4797, %v4809
    %v4811 = vpop.f32.mrf.mxu0
    %4812 = vdwg.mxu0
    %4813 = vmatpush.bf16.msra.mxu0 %v3693
    %4814 = vmatpush.bf16.msra.mxu0 %v3681
    %4815 = vmatpush.bf16.msra.mxu0 %v3669
    %4816 = vmatpush.bf16.msra.mxu0 %v3657
    %4817 = vmatpush.bf16.msra.mxu0 %v3645
    %4818 = vmatpush.bf16.msra.mxu0 %v3633
    %4819 = vmatpush.bf16.msra.mxu0 %v3621
    %4820 = vmatpush.bf16.msra.mxu0 %v3609
    %4821 = vmatmul.bf16.gmra.mxu0 %v909
    %v4822 = vpop.f32.mrf.mxu0
    %v4823 = vadd.f32 %v4810, %v4822
    %v4824 = vpop.f32.mrf.mxu0
    %4825 = vdwg.mxu0
    %4826 = vmatpush.bf16.msra.mxu0 %v3789
    %4827 = vmatpush.bf16.msra.mxu0 %v3777
    %4828 = vmatpush.bf16.msra.mxu0 %v3765
    %4829 = vmatpush.bf16.msra.mxu0 %v3753
    %4830 = vmatpush.bf16.msra.mxu0 %v3741
    %4831 = vmatpush.bf16.msra.mxu0 %v3729
    %4832 = vmatpush.bf16.msra.mxu0 %v3717
    %4833 = vmatpush.bf16.msra.mxu0 %v3705
    %4834 = vmatmul.bf16.gmra.mxu0 %v910
    %v4835 = vpop.f32.mrf.mxu0
    %v4836 = vadd.f32 %v4823, %v4835
    %v4837 = vpop.f32.mrf.mxu0
    %4838 = vdwg.mxu0
    %4839 = vmatpush.bf16.msra.mxu0 %v3885
    %4840 = vmatpush.bf16.msra.mxu0 %v3873
    %4841 = vmatpush.bf16.msra.mxu0 %v3861
    %4842 = vmatpush.bf16.msra.mxu0 %v3849
    %4843 = vmatpush.bf16.msra.mxu0 %v3837
    %4844 = vmatpush.bf16.msra.mxu0 %v3825
    %4845 = vmatpush.bf16.msra.mxu0 %v3813
    %4846 = vmatpush.bf16.msra.mxu0 %v3801
    %4847 = vmatmul.bf16.gmra.mxu0 %v911
    %v4848 = vpop.f32.mrf.mxu0
    %v4849 = vadd.f32 %v4836, %v4848
    %v4850 = vpop.f32.mrf.mxu0
    %4851 = vdwg.mxu0
    %4852 = vmatpush.bf16.msra.mxu0 %v3981
    %4853 = vmatpush.bf16.msra.mxu0 %v3969
    %4854 = vmatpush.bf16.msra.mxu0 %v3957
    %4855 = vmatpush.bf16.msra.mxu0 %v3945
    %4856 = vmatpush.bf16.msra.mxu0 %v3933
    %4857 = vmatpush.bf16.msra.mxu0 %v3921
    %4858 = vmatpush.bf16.msra.mxu0 %v3909
    %4859 = vmatpush.bf16.msra.mxu0 %v3897
    %4860 = vmatmul.bf16.gmra.mxu0 %v912
    %v4861 = vpop.f32.mrf.mxu0
    %v4862 = vadd.f32 %v4849, %v4861
    %v4863 = vpop.f32.mrf.mxu0
    %4864 = vdwg.mxu0
    %4865 = vmatpush.bf16.msra.mxu0 %v3310
    %4866 = vmatpush.bf16.msra.mxu0 %v3298
    %4867 = vmatpush.bf16.msra.mxu0 %v3286
    %4868 = vmatpush.bf16.msra.mxu0 %v3274
    %4869 = vmatpush.bf16.msra.mxu0 %v3262
    %4870 = vmatpush.bf16.msra.mxu0 %v3250
    %4871 = vmatpush.bf16.msra.mxu0 %v3238
    %4872 = vmatpush.bf16.msra.mxu0 %v3226
    %4873 = vmatmul.bf16.gmra.mxu0 %v905
    %v4874 = vpop.f32.mrf.mxu0
    %v4875 = vadd.f32 0.0, %v4874
    %v4876 = vpop.f32.mrf.mxu0
    %4877 = vdwg.mxu0
    %4878 = vmatpush.bf16.msra.mxu0 %v3406
    %4879 = vmatpush.bf16.msra.mxu0 %v3394
    %4880 = vmatpush.bf16.msra.mxu0 %v3382
    %4881 = vmatpush.bf16.msra.mxu0 %v3370
    %4882 = vmatpush.bf16.msra.mxu0 %v3358
    %4883 = vmatpush.bf16.msra.mxu0 %v3346
    %4884 = vmatpush.bf16.msra.mxu0 %v3334
    %4885 = vmatpush.bf16.msra.mxu0 %v3322
    %4886 = vmatmul.bf16.gmra.mxu0 %v906
    %v4887 = vpop.f32.mrf.mxu0
    %v4888 = vadd.f32 %v4875, %v4887
    %v4889 = vpop.f32.mrf.mxu0
    %4890 = vdwg.mxu0
    %4891 = vmatpush.bf16.msra.mxu0 %v3502
    %4892 = vmatpush.bf16.msra.mxu0 %v3490
    %4893 = vmatpush.bf16.msra.mxu0 %v3478
    %4894 = vmatpush.bf16.msra.mxu0 %v3466
    %4895 = vmatpush.bf16.msra.mxu0 %v3454
    %4896 = vmatpush.bf16.msra.mxu0 %v3442
    %4897 = vmatpush.bf16.msra.mxu0 %v3430
    %4898 = vmatpush.bf16.msra.mxu0 %v3418
    %4899 = vmatmul.bf16.gmra.mxu0 %v907
    %v4900 = vpop.f32.mrf.mxu0
    %v4901 = vadd.f32 %v4888, %v4900
    %v4902 = vpop.f32.mrf.mxu0
    %4903 = vdwg.mxu0
    %4904 = vmatpush.bf16.msra.mxu0 %v3598
    %4905 = vmatpush.bf16.msra.mxu0 %v3586
    %4906 = vmatpush.bf16.msra.mxu0 %v3574
    %4907 = vmatpush.bf16.msra.mxu0 %v3562
    %4908 = vmatpush.bf16.msra.mxu0 %v3550
    %4909 = vmatpush.bf16.msra.mxu0 %v3538
    %4910 = vmatpush.bf16.msra.mxu0 %v3526
    %4911 = vmatpush.bf16.msra.mxu0 %v3514
    %4912 = vmatmul.bf16.gmra.mxu0 %v908
    %v4913 = vpop.f32.mrf.mxu0
    %v4914 = vadd.f32 %v4901, %v4913
    %v4915 = vpop.f32.mrf.mxu0
    %4916 = vdwg.mxu0
    %4917 = vmatpush.bf16.msra.mxu0 %v3694
    %4918 = vmatpush.bf16.msra.mxu0 %v3682
    %4919 = vmatpush.bf16.msra.mxu0 %v3670
    %4920 = vmatpush.bf16.msra.mxu0 %v3658
    %4921 = vmatpush.bf16.msra.mxu0 %v3646
    %4922 = vmatpush.bf16.msra.mxu0 %v3634
    %4923 = vmatpush.bf16.msra.mxu0 %v3622
    %4924 = vmatpush.bf16.msra.mxu0 %v3610
    %4925 = vmatmul.bf16.gmra.mxu0 %v909
    %v4926 = vpop.f32.mrf.mxu0
    %v4927 = vadd.f32 %v4914, %v4926
    %v4928 = vpop.f32.mrf.mxu0
    %4929 = vdwg.mxu0
    %4930 = vmatpush.bf16.msra.mxu0 %v3790
    %4931 = vmatpush.bf16.msra.mxu0 %v3778
    %4932 = vmatpush.bf16.msra.mxu0 %v3766
    %4933 = vmatpush.bf16.msra.mxu0 %v3754
    %4934 = vmatpush.bf16.msra.mxu0 %v3742
    %4935 = vmatpush.bf16.msra.mxu0 %v3730
    %4936 = vmatpush.bf16.msra.mxu0 %v3718
    %4937 = vmatpush.bf16.msra.mxu0 %v3706
    %4938 = vmatmul.bf16.gmra.mxu0 %v910
    %v4939 = vpop.f32.mrf.mxu0
    %v4940 = vadd.f32 %v4927, %v4939
    %v4941 = vpop.f32.mrf.mxu0
    %4942 = vdwg.mxu0
    %4943 = vmatpush.bf16.msra.mxu0 %v3886
    %4944 = vmatpush.bf16.msra.mxu0 %v3874
    %4945 = vmatpush.bf16.msra.mxu0 %v3862
    %4946 = vmatpush.bf16.msra.mxu0 %v3850
    %4947 = vmatpush.bf16.msra.mxu0 %v3838
    %4948 = vmatpush.bf16.msra.mxu0 %v3826
    %4949 = vmatpush.bf16.msra.mxu0 %v3814
    %4950 = vmatpush.bf16.msra.mxu0 %v3802
    %4951 = vmatmul.bf16.gmra.mxu0 %v911
    %v4952 = vpop.f32.mrf.mxu0
    %v4953 = vadd.f32 %v4940, %v4952
    %v4954 = vpop.f32.mrf.mxu0
    %4955 = vdwg.mxu0
    %4956 = vmatpush.bf16.msra.mxu0 %v3982
    %4957 = vmatpush.bf16.msra.mxu0 %v3970
    %4958 = vmatpush.bf16.msra.mxu0 %v3958
    %4959 = vmatpush.bf16.msra.mxu0 %v3946
    %4960 = vmatpush.bf16.msra.mxu0 %v3934
    %4961 = vmatpush.bf16.msra.mxu0 %v3922
    %4962 = vmatpush.bf16.msra.mxu0 %v3910
    %4963 = vmatpush.bf16.msra.mxu0 %v3898
    %4964 = vmatmul.bf16.gmra.mxu0 %v912
    %v4965 = vpop.f32.mrf.mxu0
    %v4966 = vadd.f32 %v4953, %v4965
    %v4967 = vpop.f32.mrf.mxu0
    %4968 = vdwg.mxu0
    %4969 = vmatpush.bf16.msra.mxu0 %v3311
    %4970 = vmatpush.bf16.msra.mxu0 %v3299
    %4971 = vmatpush.bf16.msra.mxu0 %v3287
    %4972 = vmatpush.bf16.msra.mxu0 %v3275
    %4973 = vmatpush.bf16.msra.mxu0 %v3263
    %4974 = vmatpush.bf16.msra.mxu0 %v3251
    %4975 = vmatpush.bf16.msra.mxu0 %v3239
    %4976 = vmatpush.bf16.msra.mxu0 %v3227
    %4977 = vmatmul.bf16.gmra.mxu0 %v905
    %v4978 = vpop.f32.mrf.mxu0
    %v4979 = vadd.f32 0.0, %v4978
    %v4980 = vpop.f32.mrf.mxu0
    %4981 = vdwg.mxu0
    %4982 = vmatpush.bf16.msra.mxu0 %v3407
    %4983 = vmatpush.bf16.msra.mxu0 %v3395
    %4984 = vmatpush.bf16.msra.mxu0 %v3383
    %4985 = vmatpush.bf16.msra.mxu0 %v3371
    %4986 = vmatpush.bf16.msra.mxu0 %v3359
    %4987 = vmatpush.bf16.msra.mxu0 %v3347
    %4988 = vmatpush.bf16.msra.mxu0 %v3335
    %4989 = vmatpush.bf16.msra.mxu0 %v3323
    %4990 = vmatmul.bf16.gmra.mxu0 %v906
    %v4991 = vpop.f32.mrf.mxu0
    %v4992 = vadd.f32 %v4979, %v4991
    %v4993 = vpop.f32.mrf.mxu0
    %4994 = vdwg.mxu0
    %4995 = vmatpush.bf16.msra.mxu0 %v3503
    %4996 = vmatpush.bf16.msra.mxu0 %v3491
    %4997 = vmatpush.bf16.msra.mxu0 %v3479
    %4998 = vmatpush.bf16.msra.mxu0 %v3467
    %4999 = vmatpush.bf16.msra.mxu0 %v3455
    %5000 = vmatpush.bf16.msra.mxu0 %v3443
    %5001 = vmatpush.bf16.msra.mxu0 %v3431
    %5002 = vmatpush.bf16.msra.mxu0 %v3419
    %5003 = vmatmul.bf16.gmra.mxu0 %v907
    %v5004 = vpop.f32.mrf.mxu0
    %v5005 = vadd.f32 %v4992, %v5004
    %v5006 = vpop.f32.mrf.mxu0
    %5007 = vdwg.mxu0
    %5008 = vmatpush.bf16.msra.mxu0 %v3599
    %5009 = vmatpush.bf16.msra.mxu0 %v3587
    %5010 = vmatpush.bf16.msra.mxu0 %v3575
    %5011 = vmatpush.bf16.msra.mxu0 %v3563
    %5012 = vmatpush.bf16.msra.mxu0 %v3551
    %5013 = vmatpush.bf16.msra.mxu0 %v3539
    %5014 = vmatpush.bf16.msra.mxu0 %v3527
    %5015 = vmatpush.bf16.msra.mxu0 %v3515
    %5016 = vmatmul.bf16.gmra.mxu0 %v908
    %v5017 = vpop.f32.mrf.mxu0
    %v5018 = vadd.f32 %v5005, %v5017
    %v5019 = vpop.f32.mrf.mxu0
    %5020 = vdwg.mxu0
    %5021 = vmatpush.bf16.msra.mxu0 %v3695
    %5022 = vmatpush.bf16.msra.mxu0 %v3683
    %5023 = vmatpush.bf16.msra.mxu0 %v3671
    %5024 = vmatpush.bf16.msra.mxu0 %v3659
    %5025 = vmatpush.bf16.msra.mxu0 %v3647
    %5026 = vmatpush.bf16.msra.mxu0 %v3635
    %5027 = vmatpush.bf16.msra.mxu0 %v3623
    %5028 = vmatpush.bf16.msra.mxu0 %v3611
    %5029 = vmatmul.bf16.gmra.mxu0 %v909
    %v5030 = vpop.f32.mrf.mxu0
    %v5031 = vadd.f32 %v5018, %v5030
    %v5032 = vpop.f32.mrf.mxu0
    %5033 = vdwg.mxu0
    %5034 = vmatpush.bf16.msra.mxu0 %v3791
    %5035 = vmatpush.bf16.msra.mxu0 %v3779
    %5036 = vmatpush.bf16.msra.mxu0 %v3767
    %5037 = vmatpush.bf16.msra.mxu0 %v3755
    %5038 = vmatpush.bf16.msra.mxu0 %v3743
    %5039 = vmatpush.bf16.msra.mxu0 %v3731
    %5040 = vmatpush.bf16.msra.mxu0 %v3719
    %5041 = vmatpush.bf16.msra.mxu0 %v3707
    %5042 = vmatmul.bf16.gmra.mxu0 %v910
    %v5043 = vpop.f32.mrf.mxu0
    %v5044 = vadd.f32 %v5031, %v5043
    %v5045 = vpop.f32.mrf.mxu0
    %5046 = vdwg.mxu0
    %5047 = vmatpush.bf16.msra.mxu0 %v3887
    %5048 = vmatpush.bf16.msra.mxu0 %v3875
    %5049 = vmatpush.bf16.msra.mxu0 %v3863
    %5050 = vmatpush.bf16.msra.mxu0 %v3851
    %5051 = vmatpush.bf16.msra.mxu0 %v3839
    %5052 = vmatpush.bf16.msra.mxu0 %v3827
    %5053 = vmatpush.bf16.msra.mxu0 %v3815
    %5054 = vmatpush.bf16.msra.mxu0 %v3803
    %5055 = vmatmul.bf16.gmra.mxu0 %v911
    %v5056 = vpop.f32.mrf.mxu0
    %v5057 = vadd.f32 %v5044, %v5056
    %v5058 = vpop.f32.mrf.mxu0
    %5059 = vdwg.mxu0
    %5060 = vmatpush.bf16.msra.mxu0 %v3983
    %5061 = vmatpush.bf16.msra.mxu0 %v3971
    %5062 = vmatpush.bf16.msra.mxu0 %v3959
    %5063 = vmatpush.bf16.msra.mxu0 %v3947
    %5064 = vmatpush.bf16.msra.mxu0 %v3935
    %5065 = vmatpush.bf16.msra.mxu0 %v3923
    %5066 = vmatpush.bf16.msra.mxu0 %v3911
    %5067 = vmatpush.bf16.msra.mxu0 %v3899
    %5068 = vmatmul.bf16.gmra.mxu0 %v912
    %v5069 = vpop.f32.mrf.mxu0
    %v5070 = vadd.f32 %v5057, %v5069
    %v5071 = vpop.f32.mrf.mxu0
    %5072 = vdwg.mxu0
    %5073 = vmatpush.bf16.msra.mxu0 %v3312
    %5074 = vmatpush.bf16.msra.mxu0 %v3300
    %5075 = vmatpush.bf16.msra.mxu0 %v3288
    %5076 = vmatpush.bf16.msra.mxu0 %v3276
    %5077 = vmatpush.bf16.msra.mxu0 %v3264
    %5078 = vmatpush.bf16.msra.mxu0 %v3252
    %5079 = vmatpush.bf16.msra.mxu0 %v3240
    %5080 = vmatpush.bf16.msra.mxu0 %v3228
    %5081 = vmatmul.bf16.gmra.mxu0 %v905
    %v5082 = vpop.f32.mrf.mxu0
    %v5083 = vadd.f32 0.0, %v5082
    %v5084 = vpop.f32.mrf.mxu0
    %5085 = vdwg.mxu0
    %5086 = vmatpush.bf16.msra.mxu0 %v3408
    %5087 = vmatpush.bf16.msra.mxu0 %v3396
    %5088 = vmatpush.bf16.msra.mxu0 %v3384
    %5089 = vmatpush.bf16.msra.mxu0 %v3372
    %5090 = vmatpush.bf16.msra.mxu0 %v3360
    %5091 = vmatpush.bf16.msra.mxu0 %v3348
    %5092 = vmatpush.bf16.msra.mxu0 %v3336
    %5093 = vmatpush.bf16.msra.mxu0 %v3324
    %5094 = vmatmul.bf16.gmra.mxu0 %v906
    %v5095 = vpop.f32.mrf.mxu0
    %v5096 = vadd.f32 %v5083, %v5095
    %v5097 = vpop.f32.mrf.mxu0
    %5098 = vdwg.mxu0
    %5099 = vmatpush.bf16.msra.mxu0 %v3504
    %5100 = vmatpush.bf16.msra.mxu0 %v3492
    %5101 = vmatpush.bf16.msra.mxu0 %v3480
    %5102 = vmatpush.bf16.msra.mxu0 %v3468
    %5103 = vmatpush.bf16.msra.mxu0 %v3456
    %5104 = vmatpush.bf16.msra.mxu0 %v3444
    %5105 = vmatpush.bf16.msra.mxu0 %v3432
    %5106 = vmatpush.bf16.msra.mxu0 %v3420
    %5107 = vmatmul.bf16.gmra.mxu0 %v907
    %v5108 = vpop.f32.mrf.mxu0
    %v5109 = vadd.f32 %v5096, %v5108
    %v5110 = vpop.f32.mrf.mxu0
    %5111 = vdwg.mxu0
    %5112 = vmatpush.bf16.msra.mxu0 %v3600
    %5113 = vmatpush.bf16.msra.mxu0 %v3588
    %5114 = vmatpush.bf16.msra.mxu0 %v3576
    %5115 = vmatpush.bf16.msra.mxu0 %v3564
    %5116 = vmatpush.bf16.msra.mxu0 %v3552
    %5117 = vmatpush.bf16.msra.mxu0 %v3540
    %5118 = vmatpush.bf16.msra.mxu0 %v3528
    %5119 = vmatpush.bf16.msra.mxu0 %v3516
    %5120 = vmatmul.bf16.gmra.mxu0 %v908
    %v5121 = vpop.f32.mrf.mxu0
    %v5122 = vadd.f32 %v5109, %v5121
    %v5123 = vpop.f32.mrf.mxu0
    %5124 = vdwg.mxu0
    %5125 = vmatpush.bf16.msra.mxu0 %v3696
    %5126 = vmatpush.bf16.msra.mxu0 %v3684
    %5127 = vmatpush.bf16.msra.mxu0 %v3672
    %5128 = vmatpush.bf16.msra.mxu0 %v3660
    %5129 = vmatpush.bf16.msra.mxu0 %v3648
    %5130 = vmatpush.bf16.msra.mxu0 %v3636
    %5131 = vmatpush.bf16.msra.mxu0 %v3624
    %5132 = vmatpush.bf16.msra.mxu0 %v3612
    %5133 = vmatmul.bf16.gmra.mxu0 %v909
    %v5134 = vpop.f32.mrf.mxu0
    %v5135 = vadd.f32 %v5122, %v5134
    %v5136 = vpop.f32.mrf.mxu0
    %5137 = vdwg.mxu0
    %5138 = vmatpush.bf16.msra.mxu0 %v3792
    %5139 = vmatpush.bf16.msra.mxu0 %v3780
    %5140 = vmatpush.bf16.msra.mxu0 %v3768
    %5141 = vmatpush.bf16.msra.mxu0 %v3756
    %5142 = vmatpush.bf16.msra.mxu0 %v3744
    %5143 = vmatpush.bf16.msra.mxu0 %v3732
    %5144 = vmatpush.bf16.msra.mxu0 %v3720
    %5145 = vmatpush.bf16.msra.mxu0 %v3708
    %5146 = vmatmul.bf16.gmra.mxu0 %v910
    %v5147 = vpop.f32.mrf.mxu0
    %v5148 = vadd.f32 %v5135, %v5147
    %v5149 = vpop.f32.mrf.mxu0
    %5150 = vdwg.mxu0
    %5151 = vmatpush.bf16.msra.mxu0 %v3888
    %5152 = vmatpush.bf16.msra.mxu0 %v3876
    %5153 = vmatpush.bf16.msra.mxu0 %v3864
    %5154 = vmatpush.bf16.msra.mxu0 %v3852
    %5155 = vmatpush.bf16.msra.mxu0 %v3840
    %5156 = vmatpush.bf16.msra.mxu0 %v3828
    %5157 = vmatpush.bf16.msra.mxu0 %v3816
    %5158 = vmatpush.bf16.msra.mxu0 %v3804
    %5159 = vmatmul.bf16.gmra.mxu0 %v911
    %v5160 = vpop.f32.mrf.mxu0
    %v5161 = vadd.f32 %v5148, %v5160
    %v5162 = vpop.f32.mrf.mxu0
    %5163 = vdwg.mxu0
    %5164 = vmatpush.bf16.msra.mxu0 %v3984
    %5165 = vmatpush.bf16.msra.mxu0 %v3972
    %5166 = vmatpush.bf16.msra.mxu0 %v3960
    %5167 = vmatpush.bf16.msra.mxu0 %v3948
    %5168 = vmatpush.bf16.msra.mxu0 %v3936
    %5169 = vmatpush.bf16.msra.mxu0 %v3924
    %5170 = vmatpush.bf16.msra.mxu0 %v3912
    %5171 = vmatpush.bf16.msra.mxu0 %v3900
    %5172 = vmatmul.bf16.gmra.mxu0 %v912
    %v5173 = vpop.f32.mrf.mxu0
    %v5174 = vadd.f32 %v5161, %v5173
    %v5175 = vpop.f32.mrf.mxu0
    %5176 = vdwg.mxu0
    %5177 = vmatpush.bf16.msra.mxu0 %v3313
    %5178 = vmatpush.bf16.msra.mxu0 %v3301
    %5179 = vmatpush.bf16.msra.mxu0 %v3289
    %5180 = vmatpush.bf16.msra.mxu0 %v3277
    %5181 = vmatpush.bf16.msra.mxu0 %v3265
    %5182 = vmatpush.bf16.msra.mxu0 %v3253
    %5183 = vmatpush.bf16.msra.mxu0 %v3241
    %5184 = vmatpush.bf16.msra.mxu0 %v3229
    %5185 = vmatmul.bf16.gmra.mxu0 %v905
    %v5186 = vpop.f32.mrf.mxu0
    %v5187 = vadd.f32 0.0, %v5186
    %v5188 = vpop.f32.mrf.mxu0
    %5189 = vdwg.mxu0
    %5190 = vmatpush.bf16.msra.mxu0 %v3409
    %5191 = vmatpush.bf16.msra.mxu0 %v3397
    %5192 = vmatpush.bf16.msra.mxu0 %v3385
    %5193 = vmatpush.bf16.msra.mxu0 %v3373
    %5194 = vmatpush.bf16.msra.mxu0 %v3361
    %5195 = vmatpush.bf16.msra.mxu0 %v3349
    %5196 = vmatpush.bf16.msra.mxu0 %v3337
    %5197 = vmatpush.bf16.msra.mxu0 %v3325
    %5198 = vmatmul.bf16.gmra.mxu0 %v906
    %v5199 = vpop.f32.mrf.mxu0
    %v5200 = vadd.f32 %v5187, %v5199
    %v5201 = vpop.f32.mrf.mxu0
    %5202 = vdwg.mxu0
    %5203 = vmatpush.bf16.msra.mxu0 %v3505
    %5204 = vmatpush.bf16.msra.mxu0 %v3493
    %5205 = vmatpush.bf16.msra.mxu0 %v3481
    %5206 = vmatpush.bf16.msra.mxu0 %v3469
    %5207 = vmatpush.bf16.msra.mxu0 %v3457
    %5208 = vmatpush.bf16.msra.mxu0 %v3445
    %5209 = vmatpush.bf16.msra.mxu0 %v3433
    %5210 = vmatpush.bf16.msra.mxu0 %v3421
    %5211 = vmatmul.bf16.gmra.mxu0 %v907
    %v5212 = vpop.f32.mrf.mxu0
    %v5213 = vadd.f32 %v5200, %v5212
    %v5214 = vpop.f32.mrf.mxu0
    %5215 = vdwg.mxu0
    %5216 = vmatpush.bf16.msra.mxu0 %v3601
    %5217 = vmatpush.bf16.msra.mxu0 %v3589
    %5218 = vmatpush.bf16.msra.mxu0 %v3577
    %5219 = vmatpush.bf16.msra.mxu0 %v3565
    %5220 = vmatpush.bf16.msra.mxu0 %v3553
    %5221 = vmatpush.bf16.msra.mxu0 %v3541
    %5222 = vmatpush.bf16.msra.mxu0 %v3529
    %5223 = vmatpush.bf16.msra.mxu0 %v3517
    %5224 = vmatmul.bf16.gmra.mxu0 %v908
    %v5225 = vpop.f32.mrf.mxu0
    %v5226 = vadd.f32 %v5213, %v5225
    %v5227 = vpop.f32.mrf.mxu0
    %5228 = vdwg.mxu0
    %5229 = vmatpush.bf16.msra.mxu0 %v3697
    %5230 = vmatpush.bf16.msra.mxu0 %v3685
    %5231 = vmatpush.bf16.msra.mxu0 %v3673
    %5232 = vmatpush.bf16.msra.mxu0 %v3661
    %5233 = vmatpush.bf16.msra.mxu0 %v3649
    %5234 = vmatpush.bf16.msra.mxu0 %v3637
    %5235 = vmatpush.bf16.msra.mxu0 %v3625
    %5236 = vmatpush.bf16.msra.mxu0 %v3613
    %5237 = vmatmul.bf16.gmra.mxu0 %v909
    %v5238 = vpop.f32.mrf.mxu0
    %v5239 = vadd.f32 %v5226, %v5238
    %v5240 = vpop.f32.mrf.mxu0
    %5241 = vdwg.mxu0
    %5242 = vmatpush.bf16.msra.mxu0 %v3793
    %5243 = vmatpush.bf16.msra.mxu0 %v3781
    %5244 = vmatpush.bf16.msra.mxu0 %v3769
    %5245 = vmatpush.bf16.msra.mxu0 %v3757
    %5246 = vmatpush.bf16.msra.mxu0 %v3745
    %5247 = vmatpush.bf16.msra.mxu0 %v3733
    %5248 = vmatpush.bf16.msra.mxu0 %v3721
    %5249 = vmatpush.bf16.msra.mxu0 %v3709
    %5250 = vmatmul.bf16.gmra.mxu0 %v910
    %v5251 = vpop.f32.mrf.mxu0
    %v5252 = vadd.f32 %v5239, %v5251
    %v5253 = vpop.f32.mrf.mxu0
    %5254 = vdwg.mxu0
    %5255 = vmatpush.bf16.msra.mxu0 %v3889
    %5256 = vmatpush.bf16.msra.mxu0 %v3877
    %5257 = vmatpush.bf16.msra.mxu0 %v3865
    %5258 = vmatpush.bf16.msra.mxu0 %v3853
    %5259 = vmatpush.bf16.msra.mxu0 %v3841
    %5260 = vmatpush.bf16.msra.mxu0 %v3829
    %5261 = vmatpush.bf16.msra.mxu0 %v3817
    %5262 = vmatpush.bf16.msra.mxu0 %v3805
    %5263 = vmatmul.bf16.gmra.mxu0 %v911
    %v5264 = vpop.f32.mrf.mxu0
    %v5265 = vadd.f32 %v5252, %v5264
    %v5266 = vpop.f32.mrf.mxu0
    %5267 = vdwg.mxu0
    %5268 = vmatpush.bf16.msra.mxu0 %v3985
    %5269 = vmatpush.bf16.msra.mxu0 %v3973
    %5270 = vmatpush.bf16.msra.mxu0 %v3961
    %5271 = vmatpush.bf16.msra.mxu0 %v3949
    %5272 = vmatpush.bf16.msra.mxu0 %v3937
    %5273 = vmatpush.bf16.msra.mxu0 %v3925
    %5274 = vmatpush.bf16.msra.mxu0 %v3913
    %5275 = vmatpush.bf16.msra.mxu0 %v3901
    %5276 = vmatmul.bf16.gmra.mxu0 %v912
    %v5277 = vpop.f32.mrf.mxu0
    %v5278 = vadd.f32 %v5265, %v5277
    %v5279 = vpop.f32.mrf.mxu0
    %5280 = vdwg.mxu0
    %5281 = vmatpush.bf16.msra.mxu0 %v3314
    %5282 = vmatpush.bf16.msra.mxu0 %v3302
    %5283 = vmatpush.bf16.msra.mxu0 %v3290
    %5284 = vmatpush.bf16.msra.mxu0 %v3278
    %5285 = vmatpush.bf16.msra.mxu0 %v3266
    %5286 = vmatpush.bf16.msra.mxu0 %v3254
    %5287 = vmatpush.bf16.msra.mxu0 %v3242
    %5288 = vmatpush.bf16.msra.mxu0 %v3230
    %5289 = vmatmul.bf16.gmra.mxu0 %v905
    %v5290 = vpop.f32.mrf.mxu0
    %v5291 = vadd.f32 0.0, %v5290
    %v5292 = vpop.f32.mrf.mxu0
    %5293 = vdwg.mxu0
    %5294 = vmatpush.bf16.msra.mxu0 %v3410
    %5295 = vmatpush.bf16.msra.mxu0 %v3398
    %5296 = vmatpush.bf16.msra.mxu0 %v3386
    %5297 = vmatpush.bf16.msra.mxu0 %v3374
    %5298 = vmatpush.bf16.msra.mxu0 %v3362
    %5299 = vmatpush.bf16.msra.mxu0 %v3350
    %5300 = vmatpush.bf16.msra.mxu0 %v3338
    %5301 = vmatpush.bf16.msra.mxu0 %v3326
    %5302 = vmatmul.bf16.gmra.mxu0 %v906
    %v5303 = vpop.f32.mrf.mxu0
    %v5304 = vadd.f32 %v5291, %v5303
    %v5305 = vpop.f32.mrf.mxu0
    %5306 = vdwg.mxu0
    %5307 = vmatpush.bf16.msra.mxu0 %v3506
    %5308 = vmatpush.bf16.msra.mxu0 %v3494
    %5309 = vmatpush.bf16.msra.mxu0 %v3482
    %5310 = vmatpush.bf16.msra.mxu0 %v3470
    %5311 = vmatpush.bf16.msra.mxu0 %v3458
    %5312 = vmatpush.bf16.msra.mxu0 %v3446
    %5313 = vmatpush.bf16.msra.mxu0 %v3434
    %5314 = vmatpush.bf16.msra.mxu0 %v3422
    %5315 = vmatmul.bf16.gmra.mxu0 %v907
    %v5316 = vpop.f32.mrf.mxu0
    %v5317 = vadd.f32 %v5304, %v5316
    %v5318 = vpop.f32.mrf.mxu0
    %5319 = vdwg.mxu0
    %5320 = vmatpush.bf16.msra.mxu0 %v3602
    %5321 = vmatpush.bf16.msra.mxu0 %v3590
    %5322 = vmatpush.bf16.msra.mxu0 %v3578
    %5323 = vmatpush.bf16.msra.mxu0 %v3566
    %5324 = vmatpush.bf16.msra.mxu0 %v3554
    %5325 = vmatpush.bf16.msra.mxu0 %v3542
    %5326 = vmatpush.bf16.msra.mxu0 %v3530
    %5327 = vmatpush.bf16.msra.mxu0 %v3518
    %5328 = vmatmul.bf16.gmra.mxu0 %v908
    %v5329 = vpop.f32.mrf.mxu0
    %v5330 = vadd.f32 %v5317, %v5329
    %v5331 = vpop.f32.mrf.mxu0
    %5332 = vdwg.mxu0
    %5333 = vmatpush.bf16.msra.mxu0 %v3698
    %5334 = vmatpush.bf16.msra.mxu0 %v3686
    %5335 = vmatpush.bf16.msra.mxu0 %v3674
    %5336 = vmatpush.bf16.msra.mxu0 %v3662
    %5337 = vmatpush.bf16.msra.mxu0 %v3650
    %5338 = vmatpush.bf16.msra.mxu0 %v3638
    %5339 = vmatpush.bf16.msra.mxu0 %v3626
    %5340 = vmatpush.bf16.msra.mxu0 %v3614
    %5341 = vmatmul.bf16.gmra.mxu0 %v909
    %v5342 = vpop.f32.mrf.mxu0
    %v5343 = vadd.f32 %v5330, %v5342
    %v5344 = vpop.f32.mrf.mxu0
    %5345 = vdwg.mxu0
    %5346 = vmatpush.bf16.msra.mxu0 %v3794
    %5347 = vmatpush.bf16.msra.mxu0 %v3782
    %5348 = vmatpush.bf16.msra.mxu0 %v3770
    %5349 = vmatpush.bf16.msra.mxu0 %v3758
    %5350 = vmatpush.bf16.msra.mxu0 %v3746
    %5351 = vmatpush.bf16.msra.mxu0 %v3734
    %5352 = vmatpush.bf16.msra.mxu0 %v3722
    %5353 = vmatpush.bf16.msra.mxu0 %v3710
    %5354 = vmatmul.bf16.gmra.mxu0 %v910
    %v5355 = vpop.f32.mrf.mxu0
    %v5356 = vadd.f32 %v5343, %v5355
    %v5357 = vpop.f32.mrf.mxu0
    %5358 = vdwg.mxu0
    %5359 = vmatpush.bf16.msra.mxu0 %v3890
    %5360 = vmatpush.bf16.msra.mxu0 %v3878
    %5361 = vmatpush.bf16.msra.mxu0 %v3866
    %5362 = vmatpush.bf16.msra.mxu0 %v3854
    %5363 = vmatpush.bf16.msra.mxu0 %v3842
    %5364 = vmatpush.bf16.msra.mxu0 %v3830
    %5365 = vmatpush.bf16.msra.mxu0 %v3818
    %5366 = vmatpush.bf16.msra.mxu0 %v3806
    %5367 = vmatmul.bf16.gmra.mxu0 %v911
    %v5368 = vpop.f32.mrf.mxu0
    %v5369 = vadd.f32 %v5356, %v5368
    %v5370 = vpop.f32.mrf.mxu0
    %5371 = vdwg.mxu0
    %5372 = vmatpush.bf16.msra.mxu0 %v3986
    %5373 = vmatpush.bf16.msra.mxu0 %v3974
    %5374 = vmatpush.bf16.msra.mxu0 %v3962
    %5375 = vmatpush.bf16.msra.mxu0 %v3950
    %5376 = vmatpush.bf16.msra.mxu0 %v3938
    %5377 = vmatpush.bf16.msra.mxu0 %v3926
    %5378 = vmatpush.bf16.msra.mxu0 %v3914
    %5379 = vmatpush.bf16.msra.mxu0 %v3902
    %5380 = vmatmul.bf16.gmra.mxu0 %v912
    %v5381 = vpop.f32.mrf.mxu0
    %v5382 = vadd.f32 %v5369, %v5381
    %v5383 = vpop.f32.mrf.mxu0
    %5384 = vdwg.mxu0
    %5385 = vmatpush.bf16.msra.mxu0 %v3315
    %5386 = vmatpush.bf16.msra.mxu0 %v3303
    %5387 = vmatpush.bf16.msra.mxu0 %v3291
    %5388 = vmatpush.bf16.msra.mxu0 %v3279
    %5389 = vmatpush.bf16.msra.mxu0 %v3267
    %5390 = vmatpush.bf16.msra.mxu0 %v3255
    %5391 = vmatpush.bf16.msra.mxu0 %v3243
    %5392 = vmatpush.bf16.msra.mxu0 %v3231
    %5393 = vmatmul.bf16.gmra.mxu0 %v905
    %v5394 = vpop.f32.mrf.mxu0
    %v5395 = vadd.f32 0.0, %v5394
    %v5396 = vpop.f32.mrf.mxu0
    %5397 = vdwg.mxu0
    %5398 = vmatpush.bf16.msra.mxu0 %v3411
    %5399 = vmatpush.bf16.msra.mxu0 %v3399
    %5400 = vmatpush.bf16.msra.mxu0 %v3387
    %5401 = vmatpush.bf16.msra.mxu0 %v3375
    %5402 = vmatpush.bf16.msra.mxu0 %v3363
    %5403 = vmatpush.bf16.msra.mxu0 %v3351
    %5404 = vmatpush.bf16.msra.mxu0 %v3339
    %5405 = vmatpush.bf16.msra.mxu0 %v3327
    %5406 = vmatmul.bf16.gmra.mxu0 %v906
    %v5407 = vpop.f32.mrf.mxu0
    %v5408 = vadd.f32 %v5395, %v5407
    %v5409 = vpop.f32.mrf.mxu0
    %5410 = vdwg.mxu0
    %5411 = vmatpush.bf16.msra.mxu0 %v3507
    %5412 = vmatpush.bf16.msra.mxu0 %v3495
    %5413 = vmatpush.bf16.msra.mxu0 %v3483
    %5414 = vmatpush.bf16.msra.mxu0 %v3471
    %5415 = vmatpush.bf16.msra.mxu0 %v3459
    %5416 = vmatpush.bf16.msra.mxu0 %v3447
    %5417 = vmatpush.bf16.msra.mxu0 %v3435
    %5418 = vmatpush.bf16.msra.mxu0 %v3423
    %5419 = vmatmul.bf16.gmra.mxu0 %v907
    %v5420 = vpop.f32.mrf.mxu0
    %v5421 = vadd.f32 %v5408, %v5420
    %v5422 = vpop.f32.mrf.mxu0
    %5423 = vdwg.mxu0
    %5424 = vmatpush.bf16.msra.mxu0 %v3603
    %5425 = vmatpush.bf16.msra.mxu0 %v3591
    %5426 = vmatpush.bf16.msra.mxu0 %v3579
    %5427 = vmatpush.bf16.msra.mxu0 %v3567
    %5428 = vmatpush.bf16.msra.mxu0 %v3555
    %5429 = vmatpush.bf16.msra.mxu0 %v3543
    %5430 = vmatpush.bf16.msra.mxu0 %v3531
    %5431 = vmatpush.bf16.msra.mxu0 %v3519
    %5432 = vmatmul.bf16.gmra.mxu0 %v908
    %v5433 = vpop.f32.mrf.mxu0
    %v5434 = vadd.f32 %v5421, %v5433
    %v5435 = vpop.f32.mrf.mxu0
    %5436 = vdwg.mxu0
    %5437 = vmatpush.bf16.msra.mxu0 %v3699
    %5438 = vmatpush.bf16.msra.mxu0 %v3687
    %5439 = vmatpush.bf16.msra.mxu0 %v3675
    %5440 = vmatpush.bf16.msra.mxu0 %v3663
    %5441 = vmatpush.bf16.msra.mxu0 %v3651
    %5442 = vmatpush.bf16.msra.mxu0 %v3639
    %5443 = vmatpush.bf16.msra.mxu0 %v3627
    %5444 = vmatpush.bf16.msra.mxu0 %v3615
    %5445 = vmatmul.bf16.gmra.mxu0 %v909
    %v5446 = vpop.f32.mrf.mxu0
    %v5447 = vadd.f32 %v5434, %v5446
    %v5448 = vpop.f32.mrf.mxu0
    %5449 = vdwg.mxu0
    %5450 = vmatpush.bf16.msra.mxu0 %v3795
    %5451 = vmatpush.bf16.msra.mxu0 %v3783
    %5452 = vmatpush.bf16.msra.mxu0 %v3771
    %5453 = vmatpush.bf16.msra.mxu0 %v3759
    %5454 = vmatpush.bf16.msra.mxu0 %v3747
    %5455 = vmatpush.bf16.msra.mxu0 %v3735
    %5456 = vmatpush.bf16.msra.mxu0 %v3723
    %5457 = vmatpush.bf16.msra.mxu0 %v3711
    %5458 = vmatmul.bf16.gmra.mxu0 %v910
    %v5459 = vpop.f32.mrf.mxu0
    %v5460 = vadd.f32 %v5447, %v5459
    %v5461 = vpop.f32.mrf.mxu0
    %5462 = vdwg.mxu0
    %5463 = vmatpush.bf16.msra.mxu0 %v3891
    %5464 = vmatpush.bf16.msra.mxu0 %v3879
    %5465 = vmatpush.bf16.msra.mxu0 %v3867
    %5466 = vmatpush.bf16.msra.mxu0 %v3855
    %5467 = vmatpush.bf16.msra.mxu0 %v3843
    %5468 = vmatpush.bf16.msra.mxu0 %v3831
    %5469 = vmatpush.bf16.msra.mxu0 %v3819
    %5470 = vmatpush.bf16.msra.mxu0 %v3807
    %5471 = vmatmul.bf16.gmra.mxu0 %v911
    %v5472 = vpop.f32.mrf.mxu0
    %v5473 = vadd.f32 %v5460, %v5472
    %v5474 = vpop.f32.mrf.mxu0
    %5475 = vdwg.mxu0
    %5476 = vmatpush.bf16.msra.mxu0 %v3987
    %5477 = vmatpush.bf16.msra.mxu0 %v3975
    %5478 = vmatpush.bf16.msra.mxu0 %v3963
    %5479 = vmatpush.bf16.msra.mxu0 %v3951
    %5480 = vmatpush.bf16.msra.mxu0 %v3939
    %5481 = vmatpush.bf16.msra.mxu0 %v3927
    %5482 = vmatpush.bf16.msra.mxu0 %v3915
    %5483 = vmatpush.bf16.msra.mxu0 %v3903
    %5484 = vmatmul.bf16.gmra.mxu0 %v912
    %v5485 = vpop.f32.mrf.mxu0
    %v5486 = vadd.f32 %v5473, %v5485
    %v5487 = vpop.f32.mrf.mxu0
    %5488 = vdwg.mxu0
    %5489 = vmatpush.bf16.msra.mxu0 %v3316
    %5490 = vmatpush.bf16.msra.mxu0 %v3304
    %5491 = vmatpush.bf16.msra.mxu0 %v3292
    %5492 = vmatpush.bf16.msra.mxu0 %v3280
    %5493 = vmatpush.bf16.msra.mxu0 %v3268
    %5494 = vmatpush.bf16.msra.mxu0 %v3256
    %5495 = vmatpush.bf16.msra.mxu0 %v3244
    %5496 = vmatpush.bf16.msra.mxu0 %v3232
    %5497 = vmatmul.bf16.gmra.mxu0 %v905
    %v5498 = vpop.f32.mrf.mxu0
    %v5499 = vadd.f32 0.0, %v5498
    %v5500 = vpop.f32.mrf.mxu0
    %5501 = vdwg.mxu0
    %5502 = vmatpush.bf16.msra.mxu0 %v3412
    %5503 = vmatpush.bf16.msra.mxu0 %v3400
    %5504 = vmatpush.bf16.msra.mxu0 %v3388
    %5505 = vmatpush.bf16.msra.mxu0 %v3376
    %5506 = vmatpush.bf16.msra.mxu0 %v3364
    %5507 = vmatpush.bf16.msra.mxu0 %v3352
    %5508 = vmatpush.bf16.msra.mxu0 %v3340
    %5509 = vmatpush.bf16.msra.mxu0 %v3328
    %5510 = vmatmul.bf16.gmra.mxu0 %v906
    %v5511 = vpop.f32.mrf.mxu0
    %v5512 = vadd.f32 %v5499, %v5511
    %v5513 = vpop.f32.mrf.mxu0
    %5514 = vdwg.mxu0
    %5515 = vmatpush.bf16.msra.mxu0 %v3508
    %5516 = vmatpush.bf16.msra.mxu0 %v3496
    %5517 = vmatpush.bf16.msra.mxu0 %v3484
    %5518 = vmatpush.bf16.msra.mxu0 %v3472
    %5519 = vmatpush.bf16.msra.mxu0 %v3460
    %5520 = vmatpush.bf16.msra.mxu0 %v3448
    %5521 = vmatpush.bf16.msra.mxu0 %v3436
    %5522 = vmatpush.bf16.msra.mxu0 %v3424
    %5523 = vmatmul.bf16.gmra.mxu0 %v907
    %v5524 = vpop.f32.mrf.mxu0
    %v5525 = vadd.f32 %v5512, %v5524
    %v5526 = vpop.f32.mrf.mxu0
    %5527 = vdwg.mxu0
    %5528 = vmatpush.bf16.msra.mxu0 %v3604
    %5529 = vmatpush.bf16.msra.mxu0 %v3592
    %5530 = vmatpush.bf16.msra.mxu0 %v3580
    %5531 = vmatpush.bf16.msra.mxu0 %v3568
    %5532 = vmatpush.bf16.msra.mxu0 %v3556
    %5533 = vmatpush.bf16.msra.mxu0 %v3544
    %5534 = vmatpush.bf16.msra.mxu0 %v3532
    %5535 = vmatpush.bf16.msra.mxu0 %v3520
    %5536 = vmatmul.bf16.gmra.mxu0 %v908
    %v5537 = vpop.f32.mrf.mxu0
    %v5538 = vadd.f32 %v5525, %v5537
    %v5539 = vpop.f32.mrf.mxu0
    %5540 = vdwg.mxu0
    %5541 = vmatpush.bf16.msra.mxu0 %v3700
    %5542 = vmatpush.bf16.msra.mxu0 %v3688
    %5543 = vmatpush.bf16.msra.mxu0 %v3676
    %5544 = vmatpush.bf16.msra.mxu0 %v3664
    %5545 = vmatpush.bf16.msra.mxu0 %v3652
    %5546 = vmatpush.bf16.msra.mxu0 %v3640
    %5547 = vmatpush.bf16.msra.mxu0 %v3628
    %5548 = vmatpush.bf16.msra.mxu0 %v3616
    %5549 = vmatmul.bf16.gmra.mxu0 %v909
    %v5550 = vpop.f32.mrf.mxu0
    %v5551 = vadd.f32 %v5538, %v5550
    %v5552 = vpop.f32.mrf.mxu0
    %5553 = vdwg.mxu0
    %5554 = vmatpush.bf16.msra.mxu0 %v3796
    %5555 = vmatpush.bf16.msra.mxu0 %v3784
    %5556 = vmatpush.bf16.msra.mxu0 %v3772
    %5557 = vmatpush.bf16.msra.mxu0 %v3760
    %5558 = vmatpush.bf16.msra.mxu0 %v3748
    %5559 = vmatpush.bf16.msra.mxu0 %v3736
    %5560 = vmatpush.bf16.msra.mxu0 %v3724
    %5561 = vmatpush.bf16.msra.mxu0 %v3712
    %5562 = vmatmul.bf16.gmra.mxu0 %v910
    %v5563 = vpop.f32.mrf.mxu0
    %v5564 = vadd.f32 %v5551, %v5563
    %v5565 = vpop.f32.mrf.mxu0
    %5566 = vdwg.mxu0
    %5567 = vmatpush.bf16.msra.mxu0 %v3892
    %5568 = vmatpush.bf16.msra.mxu0 %v3880
    %5569 = vmatpush.bf16.msra.mxu0 %v3868
    %5570 = vmatpush.bf16.msra.mxu0 %v3856
    %5571 = vmatpush.bf16.msra.mxu0 %v3844
    %5572 = vmatpush.bf16.msra.mxu0 %v3832
    %5573 = vmatpush.bf16.msra.mxu0 %v3820
    %5574 = vmatpush.bf16.msra.mxu0 %v3808
    %5575 = vmatmul.bf16.gmra.mxu0 %v911
    %v5576 = vpop.f32.mrf.mxu0
    %v5577 = vadd.f32 %v5564, %v5576
    %v5578 = vpop.f32.mrf.mxu0
    %5579 = vdwg.mxu0
    %5580 = vmatpush.bf16.msra.mxu0 %v3988
    %5581 = vmatpush.bf16.msra.mxu0 %v3976
    %5582 = vmatpush.bf16.msra.mxu0 %v3964
    %5583 = vmatpush.bf16.msra.mxu0 %v3952
    %5584 = vmatpush.bf16.msra.mxu0 %v3940
    %5585 = vmatpush.bf16.msra.mxu0 %v3928
    %5586 = vmatpush.bf16.msra.mxu0 %v3916
    %5587 = vmatpush.bf16.msra.mxu0 %v3904
    %5588 = vmatmul.bf16.gmra.mxu0 %v912
    %v5589 = vpop.f32.mrf.mxu0
    %v5590 = vadd.f32 %v5577, %v5589
    %v5591 = vpop.f32.mrf.mxu0
    %5592 = vdwg.mxu0
    %5593 = vmatpush.bf16.msra.mxu0 %v3317
    %5594 = vmatpush.bf16.msra.mxu0 %v3305
    %5595 = vmatpush.bf16.msra.mxu0 %v3293
    %5596 = vmatpush.bf16.msra.mxu0 %v3281
    %5597 = vmatpush.bf16.msra.mxu0 %v3269
    %5598 = vmatpush.bf16.msra.mxu0 %v3257
    %5599 = vmatpush.bf16.msra.mxu0 %v3245
    %5600 = vmatpush.bf16.msra.mxu0 %v3233
    %5601 = vmatmul.bf16.gmra.mxu0 %v905
    %v5602 = vpop.f32.mrf.mxu0
    %v5603 = vadd.f32 0.0, %v5602
    %v5604 = vpop.f32.mrf.mxu0
    %5605 = vdwg.mxu0
    %5606 = vmatpush.bf16.msra.mxu0 %v3413
    %5607 = vmatpush.bf16.msra.mxu0 %v3401
    %5608 = vmatpush.bf16.msra.mxu0 %v3389
    %5609 = vmatpush.bf16.msra.mxu0 %v3377
    %5610 = vmatpush.bf16.msra.mxu0 %v3365
    %5611 = vmatpush.bf16.msra.mxu0 %v3353
    %5612 = vmatpush.bf16.msra.mxu0 %v3341
    %5613 = vmatpush.bf16.msra.mxu0 %v3329
    %5614 = vmatmul.bf16.gmra.mxu0 %v906
    %v5615 = vpop.f32.mrf.mxu0
    %v5616 = vadd.f32 %v5603, %v5615
    %v5617 = vpop.f32.mrf.mxu0
    %5618 = vdwg.mxu0
    %5619 = vmatpush.bf16.msra.mxu0 %v3509
    %5620 = vmatpush.bf16.msra.mxu0 %v3497
    %5621 = vmatpush.bf16.msra.mxu0 %v3485
    %5622 = vmatpush.bf16.msra.mxu0 %v3473
    %5623 = vmatpush.bf16.msra.mxu0 %v3461
    %5624 = vmatpush.bf16.msra.mxu0 %v3449
    %5625 = vmatpush.bf16.msra.mxu0 %v3437
    %5626 = vmatpush.bf16.msra.mxu0 %v3425
    %5627 = vmatmul.bf16.gmra.mxu0 %v907
    %v5628 = vpop.f32.mrf.mxu0
    %v5629 = vadd.f32 %v5616, %v5628
    %v5630 = vpop.f32.mrf.mxu0
    %5631 = vdwg.mxu0
    %5632 = vmatpush.bf16.msra.mxu0 %v3605
    %5633 = vmatpush.bf16.msra.mxu0 %v3593
    %5634 = vmatpush.bf16.msra.mxu0 %v3581
    %5635 = vmatpush.bf16.msra.mxu0 %v3569
    %5636 = vmatpush.bf16.msra.mxu0 %v3557
    %5637 = vmatpush.bf16.msra.mxu0 %v3545
    %5638 = vmatpush.bf16.msra.mxu0 %v3533
    %5639 = vmatpush.bf16.msra.mxu0 %v3521
    %5640 = vmatmul.bf16.gmra.mxu0 %v908
    %v5641 = vpop.f32.mrf.mxu0
    %v5642 = vadd.f32 %v5629, %v5641
    %v5643 = vpop.f32.mrf.mxu0
    %5644 = vdwg.mxu0
    %5645 = vmatpush.bf16.msra.mxu0 %v3701
    %5646 = vmatpush.bf16.msra.mxu0 %v3689
    %5647 = vmatpush.bf16.msra.mxu0 %v3677
    %5648 = vmatpush.bf16.msra.mxu0 %v3665
    %5649 = vmatpush.bf16.msra.mxu0 %v3653
    %5650 = vmatpush.bf16.msra.mxu0 %v3641
    %5651 = vmatpush.bf16.msra.mxu0 %v3629
    %5652 = vmatpush.bf16.msra.mxu0 %v3617
    %5653 = vmatmul.bf16.gmra.mxu0 %v909
    %v5654 = vpop.f32.mrf.mxu0
    %v5655 = vadd.f32 %v5642, %v5654
    %v5656 = vpop.f32.mrf.mxu0
    %5657 = vdwg.mxu0
    %5658 = vmatpush.bf16.msra.mxu0 %v3797
    %5659 = vmatpush.bf16.msra.mxu0 %v3785
    %5660 = vmatpush.bf16.msra.mxu0 %v3773
    %5661 = vmatpush.bf16.msra.mxu0 %v3761
    %5662 = vmatpush.bf16.msra.mxu0 %v3749
    %5663 = vmatpush.bf16.msra.mxu0 %v3737
    %5664 = vmatpush.bf16.msra.mxu0 %v3725
    %5665 = vmatpush.bf16.msra.mxu0 %v3713
    %5666 = vmatmul.bf16.gmra.mxu0 %v910
    %v5667 = vpop.f32.mrf.mxu0
    %v5668 = vadd.f32 %v5655, %v5667
    %v5669 = vpop.f32.mrf.mxu0
    %5670 = vdwg.mxu0
    %5671 = vmatpush.bf16.msra.mxu0 %v3893
    %5672 = vmatpush.bf16.msra.mxu0 %v3881
    %5673 = vmatpush.bf16.msra.mxu0 %v3869
    %5674 = vmatpush.bf16.msra.mxu0 %v3857
    %5675 = vmatpush.bf16.msra.mxu0 %v3845
    %5676 = vmatpush.bf16.msra.mxu0 %v3833
    %5677 = vmatpush.bf16.msra.mxu0 %v3821
    %5678 = vmatpush.bf16.msra.mxu0 %v3809
    %5679 = vmatmul.bf16.gmra.mxu0 %v911
    %v5680 = vpop.f32.mrf.mxu0
    %v5681 = vadd.f32 %v5668, %v5680
    %v5682 = vpop.f32.mrf.mxu0
    %5683 = vdwg.mxu0
    %5684 = vmatpush.bf16.msra.mxu0 %v3989
    %5685 = vmatpush.bf16.msra.mxu0 %v3977
    %5686 = vmatpush.bf16.msra.mxu0 %v3965
    %5687 = vmatpush.bf16.msra.mxu0 %v3953
    %5688 = vmatpush.bf16.msra.mxu0 %v3941
    %5689 = vmatpush.bf16.msra.mxu0 %v3929
    %5690 = vmatpush.bf16.msra.mxu0 %v3917
    %5691 = vmatpush.bf16.msra.mxu0 %v3905
    %5692 = vmatmul.bf16.gmra.mxu0 %v912
    %v5693 = vpop.f32.mrf.mxu0
    %v5694 = vadd.f32 %v5681, %v5693
    %v5695 = vpop.f32.mrf.mxu0
    %5696 = vdwg.mxu0
    %5697 = vmatpush.bf16.msra.mxu0 %v3318
    %5698 = vmatpush.bf16.msra.mxu0 %v3306
    %5699 = vmatpush.bf16.msra.mxu0 %v3294
    %5700 = vmatpush.bf16.msra.mxu0 %v3282
    %5701 = vmatpush.bf16.msra.mxu0 %v3270
    %5702 = vmatpush.bf16.msra.mxu0 %v3258
    %5703 = vmatpush.bf16.msra.mxu0 %v3246
    %5704 = vmatpush.bf16.msra.mxu0 %v3234
    %5705 = vmatmul.bf16.gmra.mxu0 %v905
    %v5706 = vpop.f32.mrf.mxu0
    %v5707 = vadd.f32 0.0, %v5706
    %v5708 = vpop.f32.mrf.mxu0
    %5709 = vdwg.mxu0
    %5710 = vmatpush.bf16.msra.mxu0 %v3414
    %5711 = vmatpush.bf16.msra.mxu0 %v3402
    %5712 = vmatpush.bf16.msra.mxu0 %v3390
    %5713 = vmatpush.bf16.msra.mxu0 %v3378
    %5714 = vmatpush.bf16.msra.mxu0 %v3366
    %5715 = vmatpush.bf16.msra.mxu0 %v3354
    %5716 = vmatpush.bf16.msra.mxu0 %v3342
    %5717 = vmatpush.bf16.msra.mxu0 %v3330
    %5718 = vmatmul.bf16.gmra.mxu0 %v906
    %v5719 = vpop.f32.mrf.mxu0
    %v5720 = vadd.f32 %v5707, %v5719
    %v5721 = vpop.f32.mrf.mxu0
    %5722 = vdwg.mxu0
    %5723 = vmatpush.bf16.msra.mxu0 %v3510
    %5724 = vmatpush.bf16.msra.mxu0 %v3498
    %5725 = vmatpush.bf16.msra.mxu0 %v3486
    %5726 = vmatpush.bf16.msra.mxu0 %v3474
    %5727 = vmatpush.bf16.msra.mxu0 %v3462
    %5728 = vmatpush.bf16.msra.mxu0 %v3450
    %5729 = vmatpush.bf16.msra.mxu0 %v3438
    %5730 = vmatpush.bf16.msra.mxu0 %v3426
    %5731 = vmatmul.bf16.gmra.mxu0 %v907
    %v5732 = vpop.f32.mrf.mxu0
    %v5733 = vadd.f32 %v5720, %v5732
    %v5734 = vpop.f32.mrf.mxu0
    %5735 = vdwg.mxu0
    %5736 = vmatpush.bf16.msra.mxu0 %v3606
    %5737 = vmatpush.bf16.msra.mxu0 %v3594
    %5738 = vmatpush.bf16.msra.mxu0 %v3582
    %5739 = vmatpush.bf16.msra.mxu0 %v3570
    %5740 = vmatpush.bf16.msra.mxu0 %v3558
    %5741 = vmatpush.bf16.msra.mxu0 %v3546
    %5742 = vmatpush.bf16.msra.mxu0 %v3534
    %5743 = vmatpush.bf16.msra.mxu0 %v3522
    %5744 = vmatmul.bf16.gmra.mxu0 %v908
    %v5745 = vpop.f32.mrf.mxu0
    %v5746 = vadd.f32 %v5733, %v5745
    %v5747 = vpop.f32.mrf.mxu0
    %5748 = vdwg.mxu0
    %5749 = vmatpush.bf16.msra.mxu0 %v3702
    %5750 = vmatpush.bf16.msra.mxu0 %v3690
    %5751 = vmatpush.bf16.msra.mxu0 %v3678
    %5752 = vmatpush.bf16.msra.mxu0 %v3666
    %5753 = vmatpush.bf16.msra.mxu0 %v3654
    %5754 = vmatpush.bf16.msra.mxu0 %v3642
    %5755 = vmatpush.bf16.msra.mxu0 %v3630
    %5756 = vmatpush.bf16.msra.mxu0 %v3618
    %5757 = vmatmul.bf16.gmra.mxu0 %v909
    %v5758 = vpop.f32.mrf.mxu0
    %v5759 = vadd.f32 %v5746, %v5758
    %v5760 = vpop.f32.mrf.mxu0
    %5761 = vdwg.mxu0
    %5762 = vmatpush.bf16.msra.mxu0 %v3798
    %5763 = vmatpush.bf16.msra.mxu0 %v3786
    %5764 = vmatpush.bf16.msra.mxu0 %v3774
    %5765 = vmatpush.bf16.msra.mxu0 %v3762
    %5766 = vmatpush.bf16.msra.mxu0 %v3750
    %5767 = vmatpush.bf16.msra.mxu0 %v3738
    %5768 = vmatpush.bf16.msra.mxu0 %v3726
    %5769 = vmatpush.bf16.msra.mxu0 %v3714
    %5770 = vmatmul.bf16.gmra.mxu0 %v910
    %v5771 = vpop.f32.mrf.mxu0
    %v5772 = vadd.f32 %v5759, %v5771
    %v5773 = vpop.f32.mrf.mxu0
    %5774 = vdwg.mxu0
    %5775 = vmatpush.bf16.msra.mxu0 %v3894
    %5776 = vmatpush.bf16.msra.mxu0 %v3882
    %5777 = vmatpush.bf16.msra.mxu0 %v3870
    %5778 = vmatpush.bf16.msra.mxu0 %v3858
    %5779 = vmatpush.bf16.msra.mxu0 %v3846
    %5780 = vmatpush.bf16.msra.mxu0 %v3834
    %5781 = vmatpush.bf16.msra.mxu0 %v3822
    %5782 = vmatpush.bf16.msra.mxu0 %v3810
    %5783 = vmatmul.bf16.gmra.mxu0 %v911
    %v5784 = vpop.f32.mrf.mxu0
    %v5785 = vadd.f32 %v5772, %v5784
    %v5786 = vpop.f32.mrf.mxu0
    %5787 = vdwg.mxu0
    %5788 = vmatpush.bf16.msra.mxu0 %v3990
    %5789 = vmatpush.bf16.msra.mxu0 %v3978
    %5790 = vmatpush.bf16.msra.mxu0 %v3966
    %5791 = vmatpush.bf16.msra.mxu0 %v3954
    %5792 = vmatpush.bf16.msra.mxu0 %v3942
    %5793 = vmatpush.bf16.msra.mxu0 %v3930
    %5794 = vmatpush.bf16.msra.mxu0 %v3918
    %5795 = vmatpush.bf16.msra.mxu0 %v3906
    %5796 = vmatmul.bf16.gmra.mxu0 %v912
    %v5797 = vpop.f32.mrf.mxu0
    %v5798 = vadd.f32 %v5785, %v5797
    %v5799 = vpop.f32.mrf.mxu0
    %5800 = vdwg.mxu0
    %5801 = vmatpush.bf16.msra.mxu0 %v3319
    %5802 = vmatpush.bf16.msra.mxu0 %v3307
    %5803 = vmatpush.bf16.msra.mxu0 %v3295
    %5804 = vmatpush.bf16.msra.mxu0 %v3283
    %5805 = vmatpush.bf16.msra.mxu0 %v3271
    %5806 = vmatpush.bf16.msra.mxu0 %v3259
    %5807 = vmatpush.bf16.msra.mxu0 %v3247
    %5808 = vmatpush.bf16.msra.mxu0 %v3235
    %5809 = vmatmul.bf16.gmra.mxu0 %v905
    %v5810 = vpop.f32.mrf.mxu0
    %v5811 = vadd.f32 0.0, %v5810
    %v5812 = vpop.f32.mrf.mxu0
    %5813 = vdwg.mxu0
    %5814 = vmatpush.bf16.msra.mxu0 %v3415
    %5815 = vmatpush.bf16.msra.mxu0 %v3403
    %5816 = vmatpush.bf16.msra.mxu0 %v3391
    %5817 = vmatpush.bf16.msra.mxu0 %v3379
    %5818 = vmatpush.bf16.msra.mxu0 %v3367
    %5819 = vmatpush.bf16.msra.mxu0 %v3355
    %5820 = vmatpush.bf16.msra.mxu0 %v3343
    %5821 = vmatpush.bf16.msra.mxu0 %v3331
    %5822 = vmatmul.bf16.gmra.mxu0 %v906
    %v5823 = vpop.f32.mrf.mxu0
    %v5824 = vadd.f32 %v5811, %v5823
    %v5825 = vpop.f32.mrf.mxu0
    %5826 = vdwg.mxu0
    %5827 = vmatpush.bf16.msra.mxu0 %v3511
    %5828 = vmatpush.bf16.msra.mxu0 %v3499
    %5829 = vmatpush.bf16.msra.mxu0 %v3487
    %5830 = vmatpush.bf16.msra.mxu0 %v3475
    %5831 = vmatpush.bf16.msra.mxu0 %v3463
    %5832 = vmatpush.bf16.msra.mxu0 %v3451
    %5833 = vmatpush.bf16.msra.mxu0 %v3439
    %5834 = vmatpush.bf16.msra.mxu0 %v3427
    %5835 = vmatmul.bf16.gmra.mxu0 %v907
    %v5836 = vpop.f32.mrf.mxu0
    %v5837 = vadd.f32 %v5824, %v5836
    %v5838 = vpop.f32.mrf.mxu0
    %5839 = vdwg.mxu0
    %5840 = vmatpush.bf16.msra.mxu0 %v3607
    %5841 = vmatpush.bf16.msra.mxu0 %v3595
    %5842 = vmatpush.bf16.msra.mxu0 %v3583
    %5843 = vmatpush.bf16.msra.mxu0 %v3571
    %5844 = vmatpush.bf16.msra.mxu0 %v3559
    %5845 = vmatpush.bf16.msra.mxu0 %v3547
    %5846 = vmatpush.bf16.msra.mxu0 %v3535
    %5847 = vmatpush.bf16.msra.mxu0 %v3523
    %5848 = vmatmul.bf16.gmra.mxu0 %v908
    %v5849 = vpop.f32.mrf.mxu0
    %v5850 = vadd.f32 %v5837, %v5849
    %v5851 = vpop.f32.mrf.mxu0
    %5852 = vdwg.mxu0
    %5853 = vmatpush.bf16.msra.mxu0 %v3703
    %5854 = vmatpush.bf16.msra.mxu0 %v3691
    %5855 = vmatpush.bf16.msra.mxu0 %v3679
    %5856 = vmatpush.bf16.msra.mxu0 %v3667
    %5857 = vmatpush.bf16.msra.mxu0 %v3655
    %5858 = vmatpush.bf16.msra.mxu0 %v3643
    %5859 = vmatpush.bf16.msra.mxu0 %v3631
    %5860 = vmatpush.bf16.msra.mxu0 %v3619
    %5861 = vmatmul.bf16.gmra.mxu0 %v909
    %v5862 = vpop.f32.mrf.mxu0
    %v5863 = vadd.f32 %v5850, %v5862
    %v5864 = vpop.f32.mrf.mxu0
    %5865 = vdwg.mxu0
    %5866 = vmatpush.bf16.msra.mxu0 %v3799
    %5867 = vmatpush.bf16.msra.mxu0 %v3787
    %5868 = vmatpush.bf16.msra.mxu0 %v3775
    %5869 = vmatpush.bf16.msra.mxu0 %v3763
    %5870 = vmatpush.bf16.msra.mxu0 %v3751
    %5871 = vmatpush.bf16.msra.mxu0 %v3739
    %5872 = vmatpush.bf16.msra.mxu0 %v3727
    %5873 = vmatpush.bf16.msra.mxu0 %v3715
    %5874 = vmatmul.bf16.gmra.mxu0 %v910
    %v5875 = vpop.f32.mrf.mxu0
    %v5876 = vadd.f32 %v5863, %v5875
    %v5877 = vpop.f32.mrf.mxu0
    %5878 = vdwg.mxu0
    %5879 = vmatpush.bf16.msra.mxu0 %v3895
    %5880 = vmatpush.bf16.msra.mxu0 %v3883
    %5881 = vmatpush.bf16.msra.mxu0 %v3871
    %5882 = vmatpush.bf16.msra.mxu0 %v3859
    %5883 = vmatpush.bf16.msra.mxu0 %v3847
    %5884 = vmatpush.bf16.msra.mxu0 %v3835
    %5885 = vmatpush.bf16.msra.mxu0 %v3823
    %5886 = vmatpush.bf16.msra.mxu0 %v3811
    %5887 = vmatmul.bf16.gmra.mxu0 %v911
    %v5888 = vpop.f32.mrf.mxu0
    %v5889 = vadd.f32 %v5876, %v5888
    %v5890 = vpop.f32.mrf.mxu0
    %5891 = vdwg.mxu0
    %5892 = vmatpush.bf16.msra.mxu0 %v3991
    %5893 = vmatpush.bf16.msra.mxu0 %v3979
    %5894 = vmatpush.bf16.msra.mxu0 %v3967
    %5895 = vmatpush.bf16.msra.mxu0 %v3955
    %5896 = vmatpush.bf16.msra.mxu0 %v3943
    %5897 = vmatpush.bf16.msra.mxu0 %v3931
    %5898 = vmatpush.bf16.msra.mxu0 %v3919
    %5899 = vmatpush.bf16.msra.mxu0 %v3907
    %5900 = vmatmul.bf16.gmra.mxu0 %v912
    %v5901 = vpop.f32.mrf.mxu0
    %v5902 = vadd.f32 %v5889, %v5901
    %v5903 = vpop.f32.mrf.mxu0
    %5904 = vdwg.mxu0
    %5905 = vmatpush.bf16.msra.mxu0 %v3320
    %5906 = vmatpush.bf16.msra.mxu0 %v3308
    %5907 = vmatpush.bf16.msra.mxu0 %v3296
    %5908 = vmatpush.bf16.msra.mxu0 %v3284
    %5909 = vmatpush.bf16.msra.mxu0 %v3272
    %5910 = vmatpush.bf16.msra.mxu0 %v3260
    %5911 = vmatpush.bf16.msra.mxu0 %v3248
    %5912 = vmatpush.bf16.msra.mxu0 %v3236
    %5913 = vmatmul.bf16.gmra.mxu0 %v905
    %v5914 = vpop.f32.mrf.mxu0
    %v5915 = vadd.f32 0.0, %v5914
    %v5916 = vpop.f32.mrf.mxu0
    %5917 = vdwg.mxu0
    %5918 = vmatpush.bf16.msra.mxu0 %v3416
    %5919 = vmatpush.bf16.msra.mxu0 %v3404
    %5920 = vmatpush.bf16.msra.mxu0 %v3392
    %5921 = vmatpush.bf16.msra.mxu0 %v3380
    %5922 = vmatpush.bf16.msra.mxu0 %v3368
    %5923 = vmatpush.bf16.msra.mxu0 %v3356
    %5924 = vmatpush.bf16.msra.mxu0 %v3344
    %5925 = vmatpush.bf16.msra.mxu0 %v3332
    %5926 = vmatmul.bf16.gmra.mxu0 %v906
    %v5927 = vpop.f32.mrf.mxu0
    %v5928 = vadd.f32 %v5915, %v5927
    %v5929 = vpop.f32.mrf.mxu0
    %5930 = vdwg.mxu0
    %5931 = vmatpush.bf16.msra.mxu0 %v3512
    %5932 = vmatpush.bf16.msra.mxu0 %v3500
    %5933 = vmatpush.bf16.msra.mxu0 %v3488
    %5934 = vmatpush.bf16.msra.mxu0 %v3476
    %5935 = vmatpush.bf16.msra.mxu0 %v3464
    %5936 = vmatpush.bf16.msra.mxu0 %v3452
    %5937 = vmatpush.bf16.msra.mxu0 %v3440
    %5938 = vmatpush.bf16.msra.mxu0 %v3428
    %5939 = vmatmul.bf16.gmra.mxu0 %v907
    %v5940 = vpop.f32.mrf.mxu0
    %v5941 = vadd.f32 %v5928, %v5940
    %v5942 = vpop.f32.mrf.mxu0
    %5943 = vdwg.mxu0
    %5944 = vmatpush.bf16.msra.mxu0 %v3608
    %5945 = vmatpush.bf16.msra.mxu0 %v3596
    %5946 = vmatpush.bf16.msra.mxu0 %v3584
    %5947 = vmatpush.bf16.msra.mxu0 %v3572
    %5948 = vmatpush.bf16.msra.mxu0 %v3560
    %5949 = vmatpush.bf16.msra.mxu0 %v3548
    %5950 = vmatpush.bf16.msra.mxu0 %v3536
    %5951 = vmatpush.bf16.msra.mxu0 %v3524
    %5952 = vmatmul.bf16.gmra.mxu0 %v908
    %v5953 = vpop.f32.mrf.mxu0
    %v5954 = vadd.f32 %v5941, %v5953
    %v5955 = vpop.f32.mrf.mxu0
    %5956 = vdwg.mxu0
    %5957 = vmatpush.bf16.msra.mxu0 %v3704
    %5958 = vmatpush.bf16.msra.mxu0 %v3692
    %5959 = vmatpush.bf16.msra.mxu0 %v3680
    %5960 = vmatpush.bf16.msra.mxu0 %v3668
    %5961 = vmatpush.bf16.msra.mxu0 %v3656
    %5962 = vmatpush.bf16.msra.mxu0 %v3644
    %5963 = vmatpush.bf16.msra.mxu0 %v3632
    %5964 = vmatpush.bf16.msra.mxu0 %v3620
    %5965 = vmatmul.bf16.gmra.mxu0 %v909
    %v5966 = vpop.f32.mrf.mxu0
    %v5967 = vadd.f32 %v5954, %v5966
    %v5968 = vpop.f32.mrf.mxu0
    %5969 = vdwg.mxu0
    %5970 = vmatpush.bf16.msra.mxu0 %v3800
    %5971 = vmatpush.bf16.msra.mxu0 %v3788
    %5972 = vmatpush.bf16.msra.mxu0 %v3776
    %5973 = vmatpush.bf16.msra.mxu0 %v3764
    %5974 = vmatpush.bf16.msra.mxu0 %v3752
    %5975 = vmatpush.bf16.msra.mxu0 %v3740
    %5976 = vmatpush.bf16.msra.mxu0 %v3728
    %5977 = vmatpush.bf16.msra.mxu0 %v3716
    %5978 = vmatmul.bf16.gmra.mxu0 %v910
    %v5979 = vpop.f32.mrf.mxu0
    %v5980 = vadd.f32 %v5967, %v5979
    %v5981 = vpop.f32.mrf.mxu0
    %5982 = vdwg.mxu0
    %5983 = vmatpush.bf16.msra.mxu0 %v3896
    %5984 = vmatpush.bf16.msra.mxu0 %v3884
    %5985 = vmatpush.bf16.msra.mxu0 %v3872
    %5986 = vmatpush.bf16.msra.mxu0 %v3860
    %5987 = vmatpush.bf16.msra.mxu0 %v3848
    %5988 = vmatpush.bf16.msra.mxu0 %v3836
    %5989 = vmatpush.bf16.msra.mxu0 %v3824
    %5990 = vmatpush.bf16.msra.mxu0 %v3812
    %5991 = vmatmul.bf16.gmra.mxu0 %v911
    %v5992 = vpop.f32.mrf.mxu0
    %v5993 = vadd.f32 %v5980, %v5992
    %v5994 = vpop.f32.mrf.mxu0
    %5995 = vdwg.mxu0
    %5996 = vmatpush.bf16.msra.mxu0 %v3992
    %5997 = vmatpush.bf16.msra.mxu0 %v3980
    %5998 = vmatpush.bf16.msra.mxu0 %v3968
    %5999 = vmatpush.bf16.msra.mxu0 %v3956
    %6000 = vmatpush.bf16.msra.mxu0 %v3944
    %6001 = vmatpush.bf16.msra.mxu0 %v3932
    %6002 = vmatpush.bf16.msra.mxu0 %v3920
    %6003 = vmatpush.bf16.msra.mxu0 %v3908
    %6004 = vmatmul.bf16.gmra.mxu0 %v912
    %v6005 = vpop.f32.mrf.mxu0
    %v6006 = vadd.f32 %v5993, %v6005
    %v6007 = vpop.f32.mrf.mxu0
    %6008 = vdwg.mxu0
    %v6009 = vadd.f32 %v109, %v4862
    %v6010 = vadd.f32 %v110, %v4966
    %v6011 = vadd.f32 %v111, %v5070
    %v6012 = vadd.f32 %v112, %v5174
    %v6013 = vadd.f32 %v113, %v5278
    %v6014 = vadd.f32 %v114, %v5382
    %v6015 = vadd.f32 %v115, %v5486
    %v6016 = vadd.f32 %v116, %v5590
    %v6017 = vadd.f32 %v117, %v5694
    %v6018 = vadd.f32 %v118, %v5798
    %v6019 = vadd.f32 %v119, %v5902
    %v6020 = vadd.f32 %v120, %v6006
    %6021 = vst [vmem:[#allocation2] sm:$0xff] %v6009
    %6022 = vst [vmem:[#allocation2 + $0x8] sm:$0xff] %v6010
    %6023 = vst [vmem:[#allocation2 + $0x10] sm:$0xff] %v6011
    %6024 = vst [vmem:[#allocation2 + $0x18] sm:$0xff] %v6012
    %6025 = vst [vmem:[#allocation2 + $0x20] sm:$0xff] %v6013
    %6026 = vst [vmem:[#allocation2 + $0x28] sm:$0xff] %v6014
    %6027 = vst [vmem:[#allocation2 + $0x30] sm:$0xff] %v6015
    %6028 = vst [vmem:[#allocation2 + $0x38] sm:$0xff] %v6016
    %6029 = vst [vmem:[#allocation2 + $0x40] sm:$0xff] %v6017
    %6030 = vst [vmem:[#allocation2 + $0x48] sm:$0xff] %v6018
    %6031 = vst [vmem:[#allocation2 + $0x50] sm:$0xff] %v6019
    %6032 = vst [vmem:[#allocation2 + $0x58] sm:$0xff] %v6020
    // Predicated region
    $region46: #{tpu_custom_call.1} parent=1 // pred_check
      %p6033 = pneg %p93
    $region47: #{tpu_custom_call.1} parent=1 // pred_check_branch
      %6035 = sbr.rel (%p6033) target = $region49
    $region48: #{tpu_custom_call.1} parent=1 // pred_region
      %v6036 = vld [vmem:[#allocation2] sm:$0xff]
      %v6037 = vld [vmem:[#allocation2 + $0x8] sm:$0xff]
      %v6038 = vld [vmem:[#allocation2 + $0x10] sm:$0xff]
      %v6039 = vld [vmem:[#allocation2 + $0x18] sm:$0xff]
      %v6040 = vld [vmem:[#allocation2 + $0x20] sm:$0xff]
      %v6041 = vld [vmem:[#allocation2 + $0x28] sm:$0xff]
      %v6042 = vld [vmem:[#allocation2 + $0x30] sm:$0xff]
      %v6043 = vld [vmem:[#allocation2 + $0x38] sm:$0xff]
      %v6044 = vld [vmem:[#allocation2 + $0x40] sm:$0xff]
      %v6045 = vld [vmem:[#allocation2 + $0x48] sm:$0xff]
      %v6046 = vld [vmem:[#allocation2 + $0x50] sm:$0xff]
      %v6047 = vld [vmem:[#allocation2 + $0x58] sm:$0xff]
      %v6048 = vld [vmem:[#allocation8] sm:$0xff]
      %v6049 = vld [vmem:[#allocation8 + $0x8] sm:$0xf]
      %v6052 = vperm.slane %v6048, 0
      %v6053 = vperm.slane %v6048, 1
      %v6054 = vperm.slane %v6048, 2
      %v6055 = vperm.slane %v6048, 3
      %v6056 = vperm.slane %v6048, 4
      %v6057 = vperm.slane %v6048, 5
      %v6058 = vperm.slane %v6048, 6
      %v6059 = vperm.slane %v6048, 7
      %v6060 = vperm.slane %v6049, 0
      %v6061 = vperm.slane %v6049, 1
      %v6062 = vperm.slane %v6049, 2
      %v6063 = vperm.slane %v6049, 3
      %v6076 = vadd.f32 %v6036, %v6052
      %v6077 = vadd.f32 %v6037, %v6053
      %v6078 = vadd.f32 %v6038, %v6054
      %v6079 = vadd.f32 %v6039, %v6055
      %v6080 = vadd.f32 %v6040, %v6056
      %v6081 = vadd.f32 %v6041, %v6057
      %v6082 = vadd.f32 %v6042, %v6058
      %v6083 = vadd.f32 %v6043, %v6059
      %v6084 = vadd.f32 %v6044, %v6060
      %v6085 = vadd.f32 %v6045, %v6061
      %v6086 = vadd.f32 %v6046, %v6062
      %v6087 = vadd.f32 %v6047, %v6063
      %v6088 = vmax.f32 %v6076, 0.0
      %v6089 = vmax.f32 %v6077, 0.0
      %v6090 = vmax.f32 %v6078, 0.0
      %v6091 = vmax.f32 %v6079, 0.0
      %v6092 = vmax.f32 %v6080, 0.0
      %v6093 = vmax.f32 %v6081, 0.0
      %v6094 = vmax.f32 %v6082, 0.0
      %v6095 = vmax.f32 %v6083, 0.0
      %v6096 = vmax.f32 %v6084, 0.0
      %v6097 = vmax.f32 %v6085, 0.0
      %v6098 = vmax.f32 %v6086, 0.0
      %v6099 = vpack.c.bf16 %v6088, %v6088
      %v6100 = vpack.c.bf16 %v6089, %v6089
      %v6101 = vpack.c.bf16 %v6090, %v6090
      %v6102 = vpack.c.bf16 %v6091, %v6091
      %v6103 = vpack.c.bf16 %v6092, %v6092
      %v6104 = vpack.c.bf16 %v6093, %v6093
      %v6105 = vpack.c.bf16 %v6094, %v6094
      %v6106 = vpack.c.bf16 %v6095, %v6095
      %v6107 = vpack.c.bf16 %v6096, %v6096
      %v6108 = vpack.c.bf16 %v6097, %v6097
      %v6109 = vpack.c.bf16 %v6098, %v6098
      %v6110 = vld [vmem:[#allocation9] sm:$0xf]
      %v6111 = vld [vmem:[#allocation9 + $0x4] sm:$0xf]
      %v6112 = vld [vmem:[#allocation9 + $0x8] sm:$0xf]
      %v6113 = vld [vmem:[#allocation9 + $0xc] sm:$0xf]
      %v6114 = vld [vmem:[#allocation9 + $0x10] sm:$0xf]
      %v6115 = vld [vmem:[#allocation9 + $0x14] sm:$0xf]
      %v6116 = vld [vmem:[#allocation9 + $0x18] sm:$0xf]
      %v6117 = vld [vmem:[#allocation9 + $0x1c] sm:$0xf]
      %v6118 = vld [vmem:[#allocation9 + $0x20] sm:$0xf]
      %v6119 = vld [vmem:[#allocation9 + $0x24] sm:$0xf]
      %v6120 = vld [vmem:[#allocation9 + $0x28] sm:$0xf]
      %v6121 = vld [vmem:[#allocation9 + $0x2c] sm:$0xf]
      %v6122 = vld [vmem:[#allocation9 + $0x30] sm:$0xf]
      %v6123 = vld [vmem:[#allocation9 + $0x34] sm:$0xf]
      %v6124 = vld [vmem:[#allocation9 + $0x38] sm:$0xf]
      %v6125 = vld [vmem:[#allocation9 + $0x3c] sm:$0xf]
      %v6126 = vld [vmem:[#allocation9 + $0x40] sm:$0xf]
      %v6127 = vld [vmem:[#allocation9 + $0x44] sm:$0xf]
      %v6128 = vld [vmem:[#allocation9 + $0x48] sm:$0xf]
      %v6129 = vld [vmem:[#allocation9 + $0x4c] sm:$0xf]
      %v6130 = vld [vmem:[#allocation9 + $0x50] sm:$0xf]
      %v6131 = vld [vmem:[#allocation9 + $0x54] sm:$0xf]
      %v6132 = vld [vmem:[#allocation9 + $0x58] sm:$0xf]
      %v6133 = vld [vmem:[#allocation9 + $0x5c] sm:$0xf]
      %v6134 = vld [vmem:[#allocation9 + $0x60] sm:$0xf]
      %v6135 = vld [vmem:[#allocation9 + $0x64] sm:$0xf]
      %v6136 = vld [vmem:[#allocation9 + $0x68] sm:$0xf]
      %v6137 = vld [vmem:[#allocation9 + $0x6c] sm:$0xf]
      %v6138 = vld [vmem:[#allocation9 + $0x70] sm:$0xf]
      %v6139 = vld [vmem:[#allocation9 + $0x74] sm:$0xf]
      %v6140 = vld [vmem:[#allocation9 + $0x78] sm:$0xf]
      %v6141 = vld [vmem:[#allocation9 + $0x7c] sm:$0xf]
      %v6142 = vld [vmem:[#allocation9 + $0x80] sm:$0xf]
      %v6143 = vld [vmem:[#allocation9 + $0x84] sm:$0xf]
      %v6144 = vld [vmem:[#allocation9 + $0x88] sm:$0xf]
      %v6145 = vld [vmem:[#allocation9 + $0x8c] sm:$0xf]
      %v6146 = vld [vmem:[#allocation9 + $0x90] sm:$0xf]
      %v6147 = vld [vmem:[#allocation9 + $0x94] sm:$0xf]
      %v6148 = vld [vmem:[#allocation9 + $0x98] sm:$0xf]
      %v6149 = vld [vmem:[#allocation9 + $0x9c] sm:$0xf]
      %v6150 = vld [vmem:[#allocation9 + $0xa0] sm:$0xf]
      %v6151 = vld [vmem:[#allocation9 + $0xa4] sm:$0xf]
      %v6152 = vld [vmem:[#allocation9 + $0xa8] sm:$0xf]
      %v6153 = vld [vmem:[#allocation9 + $0xac] sm:$0xf]
      %v6154 = vld [vmem:[#allocation9 + $0xb0] sm:$0xf]
      %v6155 = vld [vmem:[#allocation9 + $0xb4] sm:$0xf]
      %v6156 = vld [vmem:[#allocation9 + $0xb8] sm:$0xf]
      %v6157 = vld [vmem:[#allocation9 + $0xbc] sm:$0xf]
      %v6158 = vld [vmem:[#allocation9 + $0xc0] sm:$0xf]
      %v6159 = vld [vmem:[#allocation9 + $0xc4] sm:$0xf]
      %v6160 = vld [vmem:[#allocation9 + $0xc8] sm:$0xf]
      %v6161 = vld [vmem:[#allocation9 + $0xcc] sm:$0xf]
      %v6162 = vld [vmem:[#allocation9 + $0xd0] sm:$0xf]
      %v6163 = vld [vmem:[#allocation9 + $0xd4] sm:$0xf]
      %v6164 = vld [vmem:[#allocation9 + $0xd8] sm:$0xf]
      %v6165 = vld [vmem:[#allocation9 + $0xdc] sm:$0xf]
      %v6166 = vld [vmem:[#allocation9 + $0xe0] sm:$0xf]
      %v6167 = vld [vmem:[#allocation9 + $0xe4] sm:$0xf]
      %v6168 = vld [vmem:[#allocation9 + $0xe8] sm:$0xf]
      %v6169 = vld [vmem:[#allocation9 + $0xec] sm:$0xf]
      %v6170 = vld [vmem:[#allocation9 + $0xf0] sm:$0xf]
      %v6171 = vld [vmem:[#allocation9 + $0xf4] sm:$0xf]
      %v6172 = vld [vmem:[#allocation9 + $0xf8] sm:$0xf]
      %v6173 = vld [vmem:[#allocation9 + $0xfc] sm:$0xf]
      %v6174 = vld [vmem:[#allocation9 + $0x100] sm:$0xf]
      %v6175 = vld [vmem:[#allocation9 + $0x104] sm:$0xf]
      %v6176 = vld [vmem:[#allocation9 + $0x108] sm:$0xf]
      %v6177 = vld [vmem:[#allocation9 + $0x10c] sm:$0xf]
      %v6178 = vld [vmem:[#allocation9 + $0x110] sm:$0xf]
      %v6179 = vld [vmem:[#allocation9 + $0x114] sm:$0xf]
      %v6180 = vld [vmem:[#allocation9 + $0x118] sm:$0xf]
      %v6181 = vld [vmem:[#allocation9 + $0x11c] sm:$0xf]
      %v6182 = vld [vmem:[#allocation9 + $0x120] sm:$0xf]
      %v6183 = vld [vmem:[#allocation9 + $0x124] sm:$0xf]
      %v6184 = vld [vmem:[#allocation9 + $0x128] sm:$0xf]
      %v6185 = vld [vmem:[#allocation9 + $0x12c] sm:$0xf]
      %v6186 = vld [vmem:[#allocation9 + $0x130] sm:$0xf]
      %v6187 = vld [vmem:[#allocation9 + $0x134] sm:$0xf]
      %v6188 = vld [vmem:[#allocation9 + $0x138] sm:$0xf]
      %v6189 = vld [vmem:[#allocation9 + $0x13c] sm:$0xf]
      %v6190 = vld [vmem:[#allocation9 + $0x140] sm:$0xf]
      %v6191 = vld [vmem:[#allocation9 + $0x144] sm:$0xf]
      %v6192 = vld [vmem:[#allocation9 + $0x148] sm:$0xf]
      %v6193 = vld [vmem:[#allocation9 + $0x14c] sm:$0xf]
      %v6194 = vld [vmem:[#allocation9 + $0x150] sm:$0xf]
      %v6195 = vld [vmem:[#allocation9 + $0x154] sm:$0xf]
      %v6196 = vld [vmem:[#allocation9 + $0x158] sm:$0xf]
      %v6197 = vld [vmem:[#allocation9 + $0x15c] sm:$0xf]
      %v6198 = vld [vmem:[#allocation9 + $0x160] sm:$0xf]
      %v6199 = vld [vmem:[#allocation9 + $0x164] sm:$0xf]
      %v6200 = vld [vmem:[#allocation9 + $0x168] sm:$0xf]
      %v6201 = vld [vmem:[#allocation9 + $0x16c] sm:$0xf]
      %v6202 = vld [vmem:[#allocation9 + $0x170] sm:$0xf]
      %v6203 = vld [vmem:[#allocation9 + $0x174] sm:$0xf]
      %v6204 = vld [vmem:[#allocation9 + $0x178] sm:$0xf]
      %v6205 = vld [vmem:[#allocation9 + $0x17c] sm:$0xf]
      %v6206 = vld [vmem:[#allocation9 + $0x180] sm:$0xf]
      %v6207 = vld [vmem:[#allocation9 + $0x184] sm:$0xf]
      %v6208 = vld [vmem:[#allocation9 + $0x188] sm:$0xf]
      %v6209 = vld [vmem:[#allocation9 + $0x18c] sm:$0xf]
      %v6210 = vld [vmem:[#allocation9 + $0x190] sm:$0xf]
      %v6211 = vld [vmem:[#allocation9 + $0x194] sm:$0xf]
      %v6212 = vld [vmem:[#allocation9 + $0x198] sm:$0xf]
      %v6213 = vld [vmem:[#allocation9 + $0x19c] sm:$0xf]
      %v6214 = vld [vmem:[#allocation9 + $0x1a0] sm:$0xf]
      %v6215 = vld [vmem:[#allocation9 + $0x1a4] sm:$0xf]
      %v6216 = vld [vmem:[#allocation9 + $0x1a8] sm:$0xf]
      %v6217 = vld [vmem:[#allocation9 + $0x1ac] sm:$0xf]
      %v6218 = vld [vmem:[#allocation9 + $0x1b0] sm:$0xf]
      %v6219 = vld [vmem:[#allocation9 + $0x1b4] sm:$0xf]
      %v6220 = vld [vmem:[#allocation9 + $0x1b8] sm:$0xf]
      %v6221 = vld [vmem:[#allocation9 + $0x1bc] sm:$0xf]
      %v6222 = vld [vmem:[#allocation9 + $0x1c0] sm:$0xf]
      %v6223 = vld [vmem:[#allocation9 + $0x1c4] sm:$0xf]
      %v6224 = vld [vmem:[#allocation9 + $0x1c8] sm:$0xf]
      %v6225 = vld [vmem:[#allocation9 + $0x1cc] sm:$0xf]
      %v6226 = vld [vmem:[#allocation9 + $0x1d0] sm:$0xf]
      %v6227 = vld [vmem:[#allocation9 + $0x1d4] sm:$0xf]
      %v6228 = vld [vmem:[#allocation9 + $0x1d8] sm:$0xf]
      %v6229 = vld [vmem:[#allocation9 + $0x1dc] sm:$0xf]
      %v6230 = vld [vmem:[#allocation9 + $0x1e0] sm:$0xf]
      %v6231 = vld [vmem:[#allocation9 + $0x1e4] sm:$0xf]
      %v6232 = vld [vmem:[#allocation9 + $0x1e8] sm:$0xf]
      %v6233 = vld [vmem:[#allocation9 + $0x1ec] sm:$0xf]
      %v6234 = vld [vmem:[#allocation9 + $0x1f0] sm:$0xf]
      %v6235 = vld [vmem:[#allocation9 + $0x1f4] sm:$0xf]
      %v6236 = vld [vmem:[#allocation9 + $0x1f8] sm:$0xf]
      %v6237 = vld [vmem:[#allocation9 + $0x1fc] sm:$0xf]
      %v6238 = vld [vmem:[#allocation9 + $0x200] sm:$0xf]
      %v6239 = vld [vmem:[#allocation9 + $0x204] sm:$0xf]
      %v6240 = vld [vmem:[#allocation9 + $0x208] sm:$0xf]
      %v6241 = vld [vmem:[#allocation9 + $0x20c] sm:$0xf]
      %v6242 = vld [vmem:[#allocation9 + $0x210] sm:$0xf]
      %v6243 = vld [vmem:[#allocation9 + $0x214] sm:$0xf]
      %v6244 = vld [vmem:[#allocation9 + $0x218] sm:$0xf]
      %v6245 = vld [vmem:[#allocation9 + $0x21c] sm:$0xf]
      %v6246 = vld [vmem:[#allocation9 + $0x220] sm:$0xf]
      %v6247 = vld [vmem:[#allocation9 + $0x224] sm:$0xf]
      %v6248 = vld [vmem:[#allocation9 + $0x228] sm:$0xf]
      %v6249 = vld [vmem:[#allocation9 + $0x22c] sm:$0xf]
      %v6250 = vld [vmem:[#allocation9 + $0x230] sm:$0xf]
      %v6251 = vld [vmem:[#allocation9 + $0x234] sm:$0xf]
      %v6252 = vld [vmem:[#allocation9 + $0x238] sm:$0xf]
      %v6253 = vld [vmem:[#allocation9 + $0x23c] sm:$0xf]
      %v6254 = vld [vmem:[#allocation9 + $0x240] sm:$0xf]
      %v6255 = vld [vmem:[#allocation9 + $0x244] sm:$0xf]
      %v6256 = vld [vmem:[#allocation9 + $0x248] sm:$0xf]
      %v6257 = vld [vmem:[#allocation9 + $0x24c] sm:$0xf]
      %v6258 = vld [vmem:[#allocation9 + $0x250] sm:$0xf]
      %v6259 = vld [vmem:[#allocation9 + $0x254] sm:$0xf]
      %v6260 = vld [vmem:[#allocation9 + $0x258] sm:$0xf]
      %v6261 = vld [vmem:[#allocation9 + $0x25c] sm:$0xf]
      %v6262 = vld [vmem:[#allocation9 + $0x260] sm:$0xf]
      %v6263 = vld [vmem:[#allocation9 + $0x264] sm:$0xf]
      %v6264 = vld [vmem:[#allocation9 + $0x268] sm:$0xf]
      %v6265 = vld [vmem:[#allocation9 + $0x26c] sm:$0xf]
      %v6266 = vld [vmem:[#allocation9 + $0x270] sm:$0xf]
      %v6267 = vld [vmem:[#allocation9 + $0x274] sm:$0xf]
      %v6268 = vld [vmem:[#allocation9 + $0x278] sm:$0xf]
      %v6269 = vld [vmem:[#allocation9 + $0x27c] sm:$0xf]
      %v6270 = vld [vmem:[#allocation9 + $0x280] sm:$0xf]
      %v6271 = vld [vmem:[#allocation9 + $0x284] sm:$0xf]
      %v6272 = vld [vmem:[#allocation9 + $0x288] sm:$0xf]
      %v6273 = vld [vmem:[#allocation9 + $0x28c] sm:$0xf]
      %v6274 = vld [vmem:[#allocation9 + $0x290] sm:$0xf]
      %v6275 = vld [vmem:[#allocation9 + $0x294] sm:$0xf]
      %v6276 = vld [vmem:[#allocation9 + $0x298] sm:$0xf]
      %v6277 = vld [vmem:[#allocation9 + $0x29c] sm:$0xf]
      %v6278 = vld [vmem:[#allocation9 + $0x2a0] sm:$0xf]
      %v6279 = vld [vmem:[#allocation9 + $0x2a4] sm:$0xf]
      %v6280 = vld [vmem:[#allocation9 + $0x2a8] sm:$0xf]
      %v6281 = vld [vmem:[#allocation9 + $0x2ac] sm:$0xf]
      %v6282 = vld [vmem:[#allocation9 + $0x2b0] sm:$0xf]
      %v6283 = vld [vmem:[#allocation9 + $0x2b4] sm:$0xf]
      %v6284 = vld [vmem:[#allocation9 + $0x2b8] sm:$0xf]
      %v6285 = vld [vmem:[#allocation9 + $0x2bc] sm:$0xf]
      %v6286 = vld [vmem:[#allocation11] sm:$0x1]
      %v6288 = vperm.slane %v6286, 0
      %v6466 = vunpack.c.l.b16 %v6110
      %v6467 = vunpack.c.l.b16 %v6111
      %v6468 = vunpack.c.l.b16 %v6112
      %v6469 = vunpack.c.l.b16 %v6113
      %v6470 = vunpack.c.l.b16 %v6114
      %v6471 = vunpack.c.l.b16 %v6115
      %v6472 = vunpack.c.l.b16 %v6116
      %v6473 = vunpack.c.l.b16 %v6117
      %v6474 = vunpack.c.l.b16 %v6118
      %v6475 = vunpack.c.l.b16 %v6119
      %v6476 = vunpack.c.l.b16 %v6120
      %v6477 = vunpack.c.l.b16 %v6121
      %v6478 = vunpack.c.l.b16 %v6122
      %v6479 = vunpack.c.l.b16 %v6123
      %v6480 = vunpack.c.l.b16 %v6124
      %v6481 = vunpack.c.l.b16 %v6125
      %v6482 = vunpack.c.l.b16 %v6126
      %v6483 = vunpack.c.l.b16 %v6127
      %v6484 = vunpack.c.l.b16 %v6128
      %v6485 = vunpack.c.l.b16 %v6129
      %v6486 = vunpack.c.l.b16 %v6130
      %v6487 = vunpack.c.l.b16 %v6131
      %v6488 = vunpack.c.l.b16 %v6132
      %v6489 = vunpack.c.l.b16 %v6133
      %v6490 = vunpack.c.l.b16 %v6134
      %v6491 = vunpack.c.l.b16 %v6135
      %v6492 = vunpack.c.l.b16 %v6136
      %v6493 = vunpack.c.l.b16 %v6137
      %v6494 = vunpack.c.l.b16 %v6138
      %v6495 = vunpack.c.l.b16 %v6139
      %v6496 = vunpack.c.l.b16 %v6140
      %v6497 = vunpack.c.l.b16 %v6141
      %v6498 = vunpack.c.l.b16 %v6142
      %v6499 = vunpack.c.l.b16 %v6143
      %v6500 = vunpack.c.l.b16 %v6144
      %v6501 = vunpack.c.l.b16 %v6145
      %v6502 = vunpack.c.l.b16 %v6146
      %v6503 = vunpack.c.l.b16 %v6147
      %v6504 = vunpack.c.l.b16 %v6148
      %v6505 = vunpack.c.l.b16 %v6149
      %v6506 = vunpack.c.l.b16 %v6150
      %v6507 = vunpack.c.l.b16 %v6151
      %v6508 = vunpack.c.l.b16 %v6152
      %v6509 = vunpack.c.l.b16 %v6153
      %v6510 = vunpack.c.l.b16 %v6154
      %v6511 = vunpack.c.l.b16 %v6155
      %v6512 = vunpack.c.l.b16 %v6156
      %v6513 = vunpack.c.l.b16 %v6157
      %v6514 = vunpack.c.l.b16 %v6158
      %v6515 = vunpack.c.l.b16 %v6159
      %v6516 = vunpack.c.l.b16 %v6160
      %v6517 = vunpack.c.l.b16 %v6161
      %v6518 = vunpack.c.l.b16 %v6162
      %v6519 = vunpack.c.l.b16 %v6163
      %v6520 = vunpack.c.l.b16 %v6164
      %v6521 = vunpack.c.l.b16 %v6165
      %v6522 = vunpack.c.l.b16 %v6166
      %v6523 = vunpack.c.l.b16 %v6167
      %v6524 = vunpack.c.l.b16 %v6168
      %v6525 = vunpack.c.l.b16 %v6169
      %v6526 = vunpack.c.l.b16 %v6170
      %v6527 = vunpack.c.l.b16 %v6171
      %v6528 = vunpack.c.l.b16 %v6172
      %v6529 = vunpack.c.l.b16 %v6173
      %v6530 = vunpack.c.l.b16 %v6174
      %v6531 = vunpack.c.l.b16 %v6175
      %v6532 = vunpack.c.l.b16 %v6176
      %v6533 = vunpack.c.l.b16 %v6177
      %v6534 = vunpack.c.l.b16 %v6178
      %v6535 = vunpack.c.l.b16 %v6179
      %v6536 = vunpack.c.l.b16 %v6180
      %v6537 = vunpack.c.l.b16 %v6181
      %v6538 = vunpack.c.l.b16 %v6182
      %v6539 = vunpack.c.l.b16 %v6183
      %v6540 = vunpack.c.l.b16 %v6184
      %v6541 = vunpack.c.l.b16 %v6185
      %v6542 = vunpack.c.l.b16 %v6186
      %v6543 = vunpack.c.l.b16 %v6187
      %v6544 = vunpack.c.l.b16 %v6188
      %v6545 = vunpack.c.l.b16 %v6189
      %v6546 = vunpack.c.l.b16 %v6190
      %v6547 = vunpack.c.l.b16 %v6191
      %v6548 = vunpack.c.l.b16 %v6192
      %v6549 = vunpack.c.l.b16 %v6193
      %v6550 = vunpack.c.l.b16 %v6194
      %v6551 = vunpack.c.l.b16 %v6195
      %v6552 = vunpack.c.l.b16 %v6196
      %v6553 = vunpack.c.l.b16 %v6197
      %v6554 = vunpack.c.l.b16 %v6198
      %v6555 = vunpack.c.l.b16 %v6199
      %v6556 = vunpack.c.l.b16 %v6200
      %v6557 = vunpack.c.l.b16 %v6201
      %v6558 = vunpack.c.l.b16 %v6202
      %v6559 = vunpack.c.l.b16 %v6203
      %v6560 = vunpack.c.l.b16 %v6204
      %v6561 = vunpack.c.l.b16 %v6205
      %v6562 = vunpack.c.l.b16 %v6206
      %v6563 = vunpack.c.l.b16 %v6207
      %v6564 = vunpack.c.l.b16 %v6208
      %v6565 = vunpack.c.l.b16 %v6209
      %v6566 = vunpack.c.l.b16 %v6210
      %v6567 = vunpack.c.l.b16 %v6211
      %v6568 = vunpack.c.l.b16 %v6212
      %v6569 = vunpack.c.l.b16 %v6213
      %v6570 = vunpack.c.l.b16 %v6214
      %v6571 = vunpack.c.l.b16 %v6215
      %v6572 = vunpack.c.l.b16 %v6216
      %v6573 = vunpack.c.l.b16 %v6217
      %v6574 = vunpack.c.l.b16 %v6218
      %v6575 = vunpack.c.l.b16 %v6219
      %v6576 = vunpack.c.l.b16 %v6220
      %v6577 = vunpack.c.l.b16 %v6221
      %v6578 = vunpack.c.l.b16 %v6222
      %v6579 = vunpack.c.l.b16 %v6223
      %v6580 = vunpack.c.l.b16 %v6224
      %v6581 = vunpack.c.l.b16 %v6225
      %v6582 = vunpack.c.l.b16 %v6226
      %v6583 = vunpack.c.l.b16 %v6227
      %v6584 = vunpack.c.l.b16 %v6228
      %v6585 = vunpack.c.l.b16 %v6229
      %v6586 = vunpack.c.l.b16 %v6230
      %v6587 = vunpack.c.l.b16 %v6231
      %v6588 = vunpack.c.l.b16 %v6232
      %v6589 = vunpack.c.l.b16 %v6233
      %v6590 = vunpack.c.l.b16 %v6234
      %v6591 = vunpack.c.l.b16 %v6235
      %v6592 = vunpack.c.l.b16 %v6236
      %v6593 = vunpack.c.l.b16 %v6237
      %v6594 = vunpack.c.l.b16 %v6238
      %v6595 = vunpack.c.l.b16 %v6239
      %v6596 = vunpack.c.l.b16 %v6240
      %v6597 = vunpack.c.l.b16 %v6241
      %v6598 = vunpack.c.l.b16 %v6242
      %v6599 = vunpack.c.l.b16 %v6243
      %v6600 = vunpack.c.l.b16 %v6244
      %v6601 = vunpack.c.l.b16 %v6245
      %v6602 = vunpack.c.l.b16 %v6246
      %v6603 = vunpack.c.l.b16 %v6247
      %v6604 = vunpack.c.l.b16 %v6248
      %v6605 = vunpack.c.l.b16 %v6249
      %v6606 = vunpack.c.l.b16 %v6250
      %v6607 = vunpack.c.l.b16 %v6251
      %v6608 = vunpack.c.l.b16 %v6252
      %v6609 = vunpack.c.l.b16 %v6253
      %v6610 = vunpack.c.l.b16 %v6254
      %v6611 = vunpack.c.l.b16 %v6255
      %v6612 = vunpack.c.l.b16 %v6256
      %v6613 = vunpack.c.l.b16 %v6257
      %v6614 = vunpack.c.l.b16 %v6258
      %v6615 = vunpack.c.l.b16 %v6259
      %v6616 = vunpack.c.l.b16 %v6260
      %v6617 = vunpack.c.l.b16 %v6261
      %v6618 = vunpack.c.l.b16 %v6262
      %v6619 = vunpack.c.l.b16 %v6263
      %v6620 = vunpack.c.l.b16 %v6264
      %v6621 = vunpack.c.l.b16 %v6265
      %v6622 = vunpack.c.l.b16 %v6266
      %v6623 = vunpack.c.l.b16 %v6267
      %v6624 = vunpack.c.l.b16 %v6268
      %v6625 = vunpack.c.l.b16 %v6269
      %v6626 = vunpack.c.l.b16 %v6270
      %v6627 = vunpack.c.l.b16 %v6271
      %v6628 = vunpack.c.l.b16 %v6272
      %v6629 = vunpack.c.l.b16 %v6273
      %v6630 = vunpack.c.l.b16 %v6274
      %v6631 = vunpack.c.l.b16 %v6275
      %v6632 = vunpack.c.l.b16 %v6276
      %v6633 = vunpack.c.l.b16 %v6277
      %v6634 = vunpack.c.l.b16 %v6278
      %v6635 = vunpack.c.l.b16 %v6279
      %v6636 = vunpack.c.l.b16 %v6280
      %v6637 = vunpack.c.l.b16 %v6281
      %v6638 = vunpack.c.l.b16 %v6282
      %v6639 = vunpack.c.l.b16 %v6283
      %v6640 = vunpack.c.l.b16 %v6284
      %v6641 = vunpack.c.l.b16 %v6285
      %v6642 = vpack.c.b16 %v6467, %v6466
      %v6643 = vpack.c.b16 %v6469, %v6468
      %v6644 = vpack.c.b16 %v6471, %v6470
      %v6645 = vpack.c.b16 %v6473, %v6472
      %v6646 = vpack.c.b16 %v6475, %v6474
      %v6647 = vpack.c.b16 %v6477, %v6476
      %v6648 = vpack.c.b16 %v6479, %v6478
      %v6649 = vpack.c.b16 %v6481, %v6480
      %v6650 = vpack.c.b16 %v6483, %v6482
      %v6651 = vpack.c.b16 %v6485, %v6484
      %v6652 = vpack.c.b16 %v6487, %v6486
      %v6653 = vpack.c.b16 %v6489, %v6488
      %v6654 = vpack.c.b16 %v6491, %v6490
      %v6655 = vpack.c.b16 %v6493, %v6492
      %v6656 = vpack.c.b16 %v6495, %v6494
      %v6657 = vpack.c.b16 %v6497, %v6496
      %v6658 = vpack.c.b16 %v6499, %v6498
      %v6659 = vpack.c.b16 %v6501, %v6500
      %v6660 = vpack.c.b16 %v6503, %v6502
      %v6661 = vpack.c.b16 %v6505, %v6504
      %v6662 = vpack.c.b16 %v6507, %v6506
      %v6663 = vpack.c.b16 %v6509, %v6508
      %v6664 = vpack.c.b16 %v6511, %v6510
      %v6665 = vpack.c.b16 %v6513, %v6512
      %v6666 = vpack.c.b16 %v6515, %v6514
      %v6667 = vpack.c.b16 %v6517, %v6516
      %v6668 = vpack.c.b16 %v6519, %v6518
      %v6669 = vpack.c.b16 %v6521, %v6520
      %v6670 = vpack.c.b16 %v6523, %v6522
      %v6671 = vpack.c.b16 %v6525, %v6524
      %v6672 = vpack.c.b16 %v6527, %v6526
      %v6673 = vpack.c.b16 %v6529, %v6528
      %v6674 = vpack.c.b16 %v6531, %v6530
      %v6675 = vpack.c.b16 %v6533, %v6532
      %v6676 = vpack.c.b16 %v6535, %v6534
      %v6677 = vpack.c.b16 %v6537, %v6536
      %v6678 = vpack.c.b16 %v6539, %v6538
      %v6679 = vpack.c.b16 %v6541, %v6540
      %v6680 = vpack.c.b16 %v6543, %v6542
      %v6681 = vpack.c.b16 %v6545, %v6544
      %v6682 = vpack.c.b16 %v6547, %v6546
      %v6683 = vpack.c.b16 %v6549, %v6548
      %v6684 = vpack.c.b16 %v6551, %v6550
      %v6685 = vpack.c.b16 %v6553, %v6552
      %v6686 = vpack.c.b16 %v6555, %v6554
      %v6687 = vpack.c.b16 %v6557, %v6556
      %v6688 = vpack.c.b16 %v6559, %v6558
      %v6689 = vpack.c.b16 %v6561, %v6560
      %v6690 = vpack.c.b16 %v6563, %v6562
      %v6691 = vpack.c.b16 %v6565, %v6564
      %v6692 = vpack.c.b16 %v6567, %v6566
      %v6693 = vpack.c.b16 %v6569, %v6568
      %v6694 = vpack.c.b16 %v6571, %v6570
      %v6695 = vpack.c.b16 %v6573, %v6572
      %v6696 = vpack.c.b16 %v6575, %v6574
      %v6697 = vpack.c.b16 %v6577, %v6576
      %v6698 = vpack.c.b16 %v6579, %v6578
      %v6699 = vpack.c.b16 %v6581, %v6580
      %v6700 = vpack.c.b16 %v6583, %v6582
      %v6701 = vpack.c.b16 %v6585, %v6584
      %v6702 = vpack.c.b16 %v6587, %v6586
      %v6703 = vpack.c.b16 %v6589, %v6588
      %v6704 = vpack.c.b16 %v6591, %v6590
      %v6705 = vpack.c.b16 %v6593, %v6592
      %v6706 = vpack.c.b16 %v6595, %v6594
      %v6707 = vpack.c.b16 %v6597, %v6596
      %v6708 = vpack.c.b16 %v6599, %v6598
      %v6709 = vpack.c.b16 %v6601, %v6600
      %v6710 = vpack.c.b16 %v6603, %v6602
      %v6711 = vpack.c.b16 %v6605, %v6604
      %v6712 = vpack.c.b16 %v6607, %v6606
      %v6713 = vpack.c.b16 %v6609, %v6608
      %v6714 = vpack.c.b16 %v6611, %v6610
      %v6715 = vpack.c.b16 %v6613, %v6612
      %v6716 = vpack.c.b16 %v6615, %v6614
      %v6717 = vpack.c.b16 %v6617, %v6616
      %v6718 = vpack.c.b16 %v6619, %v6618
      %v6719 = vpack.c.b16 %v6621, %v6620
      %v6720 = vpack.c.b16 %v6623, %v6622
      %v6721 = vpack.c.b16 %v6625, %v6624
      %v6722 = vpack.c.b16 %v6627, %v6626
      %v6723 = vpack.c.b16 %v6629, %v6628
      %v6724 = vpack.c.b16 %v6631, %v6630
      %v6725 = vpack.c.b16 %v6633, %v6632
      %v6726 = vpack.c.b16 %v6635, %v6634
      %v6727 = vpack.c.b16 %v6637, %v6636
      %v6728 = vpack.c.b16 %v6639, %v6638
      %v6729 = vpack.c.b16 %v6641, %v6640
      %6818 = vmatpush.bf16.msra.mxu0 %v6649
      %6819 = vmatpush.bf16.msra.mxu0 %v6648
      %6820 = vmatpush.bf16.msra.mxu0 %v6647
      %6821 = vmatpush.bf16.msra.mxu0 %v6646
      %6822 = vmatpush.bf16.msra.mxu0 %v6645
      %6823 = vmatpush.bf16.msra.mxu0 %v6644
      %6824 = vmatpush.bf16.msra.mxu0 %v6643
      %6825 = vmatpush.bf16.msra.mxu0 %v6642
      %6826 = vmatmul.bf16.gmra.mxu0 %v6099
      %v6827 = vpop.f32.mrf.mxu0
      %v6828 = vadd.f32 %v6288, %v6827
      %v6829 = vpop.f32.mrf.mxu0
      %6830 = vdwg.mxu0
      %6831 = vmatpush.bf16.msra.mxu0 %v6657
      %6832 = vmatpush.bf16.msra.mxu0 %v6656
      %6833 = vmatpush.bf16.msra.mxu0 %v6655
      %6834 = vmatpush.bf16.msra.mxu0 %v6654
      %6835 = vmatpush.bf16.msra.mxu0 %v6653
      %6836 = vmatpush.bf16.msra.mxu0 %v6652
      %6837 = vmatpush.bf16.msra.mxu0 %v6651
      %6838 = vmatpush.bf16.msra.mxu0 %v6650
      %6839 = vmatmul.bf16.gmra.mxu0 %v6100
      %v6840 = vpop.f32.mrf.mxu0
      %v6841 = vadd.f32 %v6828, %v6840
      %v6842 = vpop.f32.mrf.mxu0
      %6843 = vdwg.mxu0
      %6844 = vmatpush.bf16.msra.mxu0 %v6665
      %6845 = vmatpush.bf16.msra.mxu0 %v6664
      %6846 = vmatpush.bf16.msra.mxu0 %v6663
      %6847 = vmatpush.bf16.msra.mxu0 %v6662
      %6848 = vmatpush.bf16.msra.mxu0 %v6661
      %6849 = vmatpush.bf16.msra.mxu0 %v6660
      %6850 = vmatpush.bf16.msra.mxu0 %v6659
      %6851 = vmatpush.bf16.msra.mxu0 %v6658
      %6852 = vmatmul.bf16.gmra.mxu0 %v6101
      %v6853 = vpop.f32.mrf.mxu0
      %v6854 = vadd.f32 %v6841, %v6853
      %v6855 = vpop.f32.mrf.mxu0
      %6856 = vdwg.mxu0
      %6857 = vmatpush.bf16.msra.mxu0 %v6673
      %6858 = vmatpush.bf16.msra.mxu0 %v6672
      %6859 = vmatpush.bf16.msra.mxu0 %v6671
      %6860 = vmatpush.bf16.msra.mxu0 %v6670
      %6861 = vmatpush.bf16.msra.mxu0 %v6669
      %6862 = vmatpush.bf16.msra.mxu0 %v6668
      %6863 = vmatpush.bf16.msra.mxu0 %v6667
      %6864 = vmatpush.bf16.msra.mxu0 %v6666
      %6865 = vmatmul.bf16.gmra.mxu0 %v6102
      %v6866 = vpop.f32.mrf.mxu0
      %v6867 = vadd.f32 %v6854, %v6866
      %v6868 = vpop.f32.mrf.mxu0
      %6869 = vdwg.mxu0
      %6870 = vmatpush.bf16.msra.mxu0 %v6681
      %6871 = vmatpush.bf16.msra.mxu0 %v6680
      %6872 = vmatpush.bf16.msra.mxu0 %v6679
      %6873 = vmatpush.bf16.msra.mxu0 %v6678
      %6874 = vmatpush.bf16.msra.mxu0 %v6677
      %6875 = vmatpush.bf16.msra.mxu0 %v6676
      %6876 = vmatpush.bf16.msra.mxu0 %v6675
      %6877 = vmatpush.bf16.msra.mxu0 %v6674
      %6878 = vmatmul.bf16.gmra.mxu0 %v6103
      %v6879 = vpop.f32.mrf.mxu0
      %v6880 = vadd.f32 %v6867, %v6879
      %v6881 = vpop.f32.mrf.mxu0
      %6882 = vdwg.mxu0
      %6883 = vmatpush.bf16.msra.mxu0 %v6689
      %6884 = vmatpush.bf16.msra.mxu0 %v6688
      %6885 = vmatpush.bf16.msra.mxu0 %v6687
      %6886 = vmatpush.bf16.msra.mxu0 %v6686
      %6887 = vmatpush.bf16.msra.mxu0 %v6685
      %6888 = vmatpush.bf16.msra.mxu0 %v6684
      %6889 = vmatpush.bf16.msra.mxu0 %v6683
      %6890 = vmatpush.bf16.msra.mxu0 %v6682
      %6891 = vmatmul.bf16.gmra.mxu0 %v6104
      %v6892 = vpop.f32.mrf.mxu0
      %v6893 = vadd.f32 %v6880, %v6892
      %v6894 = vpop.f32.mrf.mxu0
      %6895 = vdwg.mxu0
      %6896 = vmatpush.bf16.msra.mxu0 %v6697
      %6897 = vmatpush.bf16.msra.mxu0 %v6696
      %6898 = vmatpush.bf16.msra.mxu0 %v6695
      %6899 = vmatpush.bf16.msra.mxu0 %v6694
      %6900 = vmatpush.bf16.msra.mxu0 %v6693
      %6901 = vmatpush.bf16.msra.mxu0 %v6692
      %6902 = vmatpush.bf16.msra.mxu0 %v6691
      %6903 = vmatpush.bf16.msra.mxu0 %v6690
      %6904 = vmatmul.bf16.gmra.mxu0 %v6105
      %v6905 = vpop.f32.mrf.mxu0
      %v6906 = vadd.f32 %v6893, %v6905
      %v6907 = vpop.f32.mrf.mxu0
      %6908 = vdwg.mxu0
      %6909 = vmatpush.bf16.msra.mxu0 %v6705
      %6910 = vmatpush.bf16.msra.mxu0 %v6704
      %6911 = vmatpush.bf16.msra.mxu0 %v6703
      %6912 = vmatpush.bf16.msra.mxu0 %v6702
      %6913 = vmatpush.bf16.msra.mxu0 %v6701
      %6914 = vmatpush.bf16.msra.mxu0 %v6700
      %6915 = vmatpush.bf16.msra.mxu0 %v6699
      %6916 = vmatpush.bf16.msra.mxu0 %v6698
      %6917 = vmatmul.bf16.gmra.mxu0 %v6106
      %v6918 = vpop.f32.mrf.mxu0
      %v6919 = vadd.f32 %v6906, %v6918
      %v6920 = vpop.f32.mrf.mxu0
      %6921 = vdwg.mxu0
      %6922 = vmatpush.bf16.msra.mxu0 %v6713
      %6923 = vmatpush.bf16.msra.mxu0 %v6712
      %6924 = vmatpush.bf16.msra.mxu0 %v6711
      %6925 = vmatpush.bf16.msra.mxu0 %v6710
      %6926 = vmatpush.bf16.msra.mxu0 %v6709
      %6927 = vmatpush.bf16.msra.mxu0 %v6708
      %6928 = vmatpush.bf16.msra.mxu0 %v6707
      %6929 = vmatpush.bf16.msra.mxu0 %v6706
      %6930 = vmatmul.bf16.gmra.mxu0 %v6107
      %v6931 = vpop.f32.mrf.mxu0
      %v6932 = vadd.f32 %v6919, %v6931
      %v6933 = vpop.f32.mrf.mxu0
      %6934 = vdwg.mxu0
      %6935 = vmatpush.bf16.msra.mxu0 %v6721
      %6936 = vmatpush.bf16.msra.mxu0 %v6720
      %6937 = vmatpush.bf16.msra.mxu0 %v6719
      %6938 = vmatpush.bf16.msra.mxu0 %v6718
      %6939 = vmatpush.bf16.msra.mxu0 %v6717
      %6940 = vmatpush.bf16.msra.mxu0 %v6716
      %6941 = vmatpush.bf16.msra.mxu0 %v6715
      %6942 = vmatpush.bf16.msra.mxu0 %v6714
      %6943 = vmatmul.bf16.gmra.mxu0 %v6108
      %v6944 = vpop.f32.mrf.mxu0
      %v6945 = vadd.f32 %v6932, %v6944
      %v6946 = vpop.f32.mrf.mxu0
      %6947 = vdwg.mxu0
      %6948 = vmatpush.bf16.msra.mxu0 %v6729
      %6949 = vmatpush.bf16.msra.mxu0 %v6728
      %6950 = vmatpush.bf16.msra.mxu0 %v6727
      %6951 = vmatpush.bf16.msra.mxu0 %v6726
      %6952 = vmatpush.bf16.msra.mxu0 %v6725
      %6953 = vmatpush.bf16.msra.mxu0 %v6724
      %6954 = vmatpush.bf16.msra.mxu0 %v6723
      %6955 = vmatpush.bf16.msra.mxu0 %v6722
      %6956 = vmatmul.bf16.gmra.mxu0 %v6109
      %v6957 = vpop.f32.mrf.mxu0
      %v6958 = vadd.f32 %v6945, %v6957
      %v6959 = vpop.f32.mrf.mxu0
      %6960 = vdwg.mxu0
      %v6961 = vlaneseq
      %v6962 = vand.u32 %v6961, 127
      %6963 = vmax.xlane.f32.xlu0 %v6958
      %v6964 = vpop.xlane.xlu0 %6963
      %v6965 = vsub.f32 %v6958, %v6964
      %v6966 = vmul.f32 %v6965, 1.442695
      %v6967 = vpow.pop %v6966
      %v6968 = vcvt.s32.f32 %v6962
      %v6969 = vmul.f32 %v6968, 3.0
      %v6970 = vmul.f32 %v6967, %v6969
      %6971 = vadd.xlane.f32.xlu0 %v6970
      %v6972 = vpop.xlane.xlu0 %6971
      %6973 = vadd.xlane.f32.xlu0 %v6967
      %v6974 = vpop.xlane.xlu0 %6973
      %v6975 = vrcp.pop %v6974
      %v6976 = vmul.f32 %v6974, %v6975
      %v6977 = vsub.f32 1.0, %v6976
      %v6978 = vmul.f32 %v6975, %v6977
      %v6979 = vadd.f32 %v6975, %v6978
      %vm6980 = vweird.f32 %v6974
      %vm6981 = vweird.f32 %v6975
      %vm6982 = vmor %vm6980, %vm6981
      %v6983 = vsel %vm6982, %v6975, %v6979
      %v6984 = vand.u32 2147483647, %v6974
      %vm6985 = vcmp.eq.f32.partialorder %v6984, 8.507059e+37
      %v6986 = vand.u32 %v6974, 2147483648
      %v6987 = vor.u32 1.1754944e-38, %v6986
      %v6988 = vsel %vm6985, %v6987, %v6983
      %v6989 = vmul.f32 %v6972, %v6988
      %vm6990 = vcmp.lt.s32.totalorder %v6962, 31
      %v6991 = vsel %vm6990, %v6958, %v6087
      %vm6992 = vcmp.eq.s32.totalorder %v6962, 31
      %v6993 = vsel %vm6992, %v6989, %v6991
      %6994 = vst [vmem:[#allocation12] sm:$0xff] %v6993
    $region49: #{tpu_custom_call.1} parent=1 // pred_fallthru
      _
    // Predicated region
    $region50: #{tpu_custom_call.1} parent=1 // pred_check
      _
    $region51: #{tpu_custom_call.1} parent=1 // pred_check_branch
      %6996 = sbr.rel (0) target = $region53
    $region52: #{tpu_custom_call.1} parent=1 // pred_region
      %6998 = vsyncadd [#allocation5], 0
      %s7000 = sshll.u32 [#allocation12], 4
      %s7001 = int_to_ptr.vmem [resolvable:$true] %s7000
      %s7002 = sshll.u32 %s5, 4
      %s7003 = int_to_ptr.hbm [resolvable:$true] %s7002
      %7005 = dma.vmem_to_hbm [thread:$0]  %s7001, 128, %s7003, [#allocation5]
    $region53: #{tpu_custom_call.1} parent=1 // pred_fallthru
      _
    // Predicated region
    $region54: #{tpu_custom_call.1} parent=1 // pred_check
      _
    $region55: #{tpu_custom_call.1} parent=1 // pred_check_branch
      %7007 = sbr.rel (0) target = $region57
    $region56: #{tpu_custom_call.1} parent=1 // pred_region
      %7009 = dma.done [#allocation5], 128
    $region57: #{tpu_custom_call.1} parent=1 // pred_fallthru
      _
    %7010 = vsyncpa [#allocation4], 1
    %7011 = vsyncpa [#allocation7], 1
    %7012 = vsyncpa [#allocation10], 1
    %7013 = vsyncpa [#allocation5], 1

// kernel: tpu_custom_call.1
$region0: #{tpu_custom_call.1}
  #allocation0 [shape = 'u32[]', space=smem, size = 0x4, offset = 0x4, fixed_abs, tag = 'smem constant byte address 0x4 - core index']
  #allocation1 [shape = 'u32[72,128]{1,0:T(1,128)}', space=vmem, size = 0x9000, scoped, tag = 'internal scratch']
  #allocation2 [shape = 'f32[8,1536]{1,0:T(8,128)}', space=vmem, size = 0xc000, scoped, tag = 'scratch operand']
  %s0 = inlined_call_operand.hbm [shape: bf16[8,1024], index: 0, kind: input, shape index: {}]
  %s1 = inlined_call_operand.hbm [shape: bf16[1024,1536], index: 1, kind: input, shape index: {}]
  %s2 = inlined_call_operand.hbm [shape: f32[1,1536], index: 2, kind: input, shape index: {}]
  %s3 = inlined_call_operand.hbm [shape: bf16[1408,128], index: 3, kind: input, shape index: {}]
  %s4 = inlined_call_operand.hbm [shape: f32[1,128], index: 4, kind: input, shape index: {}]
  %s5 = inlined_call_operand.hbm [shape: f32[8,128], index: 5, kind: output, shape index: {}]
  %s6 = sld [smem:[#allocation0]]
  $region58: #{tpu_custom_call.1} parent=0
    _
  %s8 = ssub.s32 1, %s6
  %s9 = scalar_select 0, %s8, %s6
  $region1: #{tpu_custom_call.1} parent=0
    #allocation3 [shape = 'u8[16384]{0}', space=vmem, size = 0x4000, scoped, tag = 'input window, operand 0, single buffered']
    #allocation4 [shape = 's32[1]{0}', space=sflag, size = 0x4, scoped, tag = 'scoped memory for tpu_custom_call.1']
    #allocation5 [shape = 's32[1]{0}', space=sflag, size = 0x4, scoped, tag = 'scoped memory for tpu_custom_call.1']
    #allocation6 [shape = 'u8[3145728]{0}', space=vmem, size = 0x300000, scoped, tag = 'input window, operand 1, single buffered']
    #allocation7 [shape = 's32[1]{0}', space=sflag, size = 0x4, scoped, tag = 'scoped memory for tpu_custom_call.1']
    #allocation8 [shape = 'u8[6144]{0}', space=vmem, size = 0x1800, scoped, tag = 'input window, operand 2, single buffered']
    #allocation9 [shape = 'u8[360448]{0}', space=vmem, size = 0x58000, scoped, tag = 'input window, operand 3, single buffered']
    #allocation10 [shape = 's32[1]{0}', space=sflag, size = 0x4, scoped, tag = 'scoped memory for tpu_custom_call.1']
    #allocation11 [shape = 'u8[512]{0}', space=vmem, size = 0x400, scoped, tag = 'input window, operand 4, single buffered']
    #allocation12 [shape = 'u8[4096]{0}', space=vmem, size = 0x1000, scoped, tag = 'output window, operand 0, single buffered']
    %10 = vsyncpa [#allocation4], 0
    %11 = vsyncpa [#allocation7], 0
    %12 = vsyncpa [#allocation10], 0
    %13 = vsyncpa [#allocation5], 0
    // Predicated region
    $region2: #{tpu_custom_call.1} parent=1 // pred_check
      _
    $region3: #{tpu_custom_call.1} parent=1 // pred_check_branch
      %15 = sbr.rel (0) target = $region5
    $region4: #{tpu_custom_call.1} parent=1 // pred_region
      %17 = vsyncadd [#allocation4], 0
      %s19 = sshll.u32 %s0, 4
      %s20 = int_to_ptr.hbm [resolvable:$true] %s19
      %s21 = sshll.u32 [#allocation3], 4
      %s22 = int_to_ptr.vmem [resolvable:$true] %s21
      %24 = dma.hbm_to_vmem [thread:$0]  %s20, 512, %s22, [#allocation4]
    $region5: #{tpu_custom_call.1} parent=1 // pred_fallthru
      _
    // Predicated region
    $region6: #{tpu_custom_call.1} parent=1 // pred_check
      _
    $region7: #{tpu_custom_call.1} parent=1 // pred_check_branch
      %26 = sbr.rel (0) target = $region9
    $region8: #{tpu_custom_call.1} parent=1 // pred_region
      %28 = vsyncadd [#allocation7], 0
      %s29 = sshll.u32 %s1, 4
      %s30 = int_to_ptr.hbm [resolvable:$true] %s29
      %s31 = sshll.u32 [#allocation6], 4
      %s32 = int_to_ptr.vmem [resolvable:$true] %s31
      %37 = dma.hbm_to_vmem [thread:$0]  %s30, 98304, %s32, [#allocation7], 768, 768, 48
    $region9: #{tpu_custom_call.1} parent=1 // pred_fallthru
      _
    // Predicated region
    $region10: #{tpu_custom_call.1} parent=1 // pred_check
      _
    $region11: #{tpu_custom_call.1} parent=1 // pred_check_branch
      %39 = sbr.rel (0) target = $region13
    $region12: #{tpu_custom_call.1} parent=1 // pred_region
      %41 = vsyncadd [#allocation7], 0
      %s43 = sshll.u32 %s2, 4
      %s44 = int_to_ptr.hbm [resolvable:$true] %s43
      %s45 = sshll.u32 [#allocation8], 4
      %s46 = int_to_ptr.vmem [resolvable:$true] %s45
      %48 = dma.hbm_to_vmem [thread:$0]  %s44, 192, %s46, [#allocation7]
    $region13: #{tpu_custom_call.1} parent=1 // pred_fallthru
      _
    // Predicated region
    $region14: #{tpu_custom_call.1} parent=1 // pred_check
      _
    $region15: #{tpu_custom_call.1} parent=1 // pred_check_branch
      %50 = sbr.rel (0) target = $region17
    $region16: #{tpu_custom_call.1} parent=1 // pred_region
      %52 = vsyncadd [#allocation10], 0
      %s53 = sshll.u32 %s3, 4
      %s54 = int_to_ptr.hbm [resolvable:$true] %s53
      %s55 = sshll.u32 [#allocation9], 4
      %s56 = int_to_ptr.vmem [resolvable:$true] %s55
      %61 = dma.hbm_to_vmem [thread:$0]  %s54, 11264, %s56, [#allocation10], 64, 64, 4
    $region17: #{tpu_custom_call.1} parent=1 // pred_fallthru
      _
    // Predicated region
    $region18: #{tpu_custom_call.1} parent=1 // pred_check
      _
    $region19: #{tpu_custom_call.1} parent=1 // pred_check_branch
      %63 = sbr.rel (0) target = $region21
    $region20: #{tpu_custom_call.1} parent=1 // pred_region
      %65 = vsyncadd [#allocation10], 0
      %s67 = sshll.u32 %s4, 4
      %s68 = int_to_ptr.hbm [resolvable:$true] %s67
      %s69 = sshll.u32 [#allocation11], 4
      %s70 = int_to_ptr.vmem [resolvable:$true] %s69
      %72 = dma.hbm_to_vmem [thread:$0]  %s68, 16, %s70, [#allocation10]
    $region21: #{tpu_custom_call.1} parent=1 // pred_fallthru
      _
    // Predicated region
    $region22: #{tpu_custom_call.1} parent=1 // pred_check
      _
    $region23: #{tpu_custom_call.1} parent=1 // pred_check_branch
      %74 = sbr.rel (0) target = $region25
    $region24: #{tpu_custom_call.1} parent=1 // pred_region
      %76 = dma.done [#allocation4], 512
    $region25: #{tpu_custom_call.1} parent=1 // pred_fallthru
      _
    // Predicated region
    $region26: #{tpu_custom_call.1} parent=1 // pred_check
      _
    $region27: #{tpu_custom_call.1} parent=1 // pred_check_branch
      %78 = sbr.rel (0) target = $region29
    $region28: #{tpu_custom_call.1} parent=1 // pred_region
      %80 = dma.done [#allocation7], 98304
    $region29: #{tpu_custom_call.1} parent=1 // pred_fallthru
      _
    // Predicated region
    $region30: #{tpu_custom_call.1} parent=1 // pred_check
      _
    $region31: #{tpu_custom_call.1} parent=1 // pred_check_branch
      %82 = sbr.rel (0) target = $region33
    $region32: #{tpu_custom_call.1} parent=1 // pred_region
      %84 = dma.done [#allocation7], 192
    $region33: #{tpu_custom_call.1} parent=1 // pred_fallthru
      _
    // Predicated region
    $region34: #{tpu_custom_call.1} parent=1 // pred_check
      _
    $region35: #{tpu_custom_call.1} parent=1 // pred_check_branch
      %86 = sbr.rel (0) target = $region37
    $region36: #{tpu_custom_call.1} parent=1 // pred_region
      %88 = dma.done [#allocation10], 11264
    $region37: #{tpu_custom_call.1} parent=1 // pred_fallthru
      _
    // Predicated region
    $region38: #{tpu_custom_call.1} parent=1 // pred_check
      _
    $region39: #{tpu_custom_call.1} parent=1 // pred_check_branch
      %90 = sbr.rel (0) target = $region41
    $region40: #{tpu_custom_call.1} parent=1 // pred_region
      %92 = dma.done [#allocation10], 16
    $region41: #{tpu_custom_call.1} parent=1 // pred_fallthru
      _
    %p93 = scmp.eq.s32.totalorder 0, 0
    // Predicated region
    $region42: #{tpu_custom_call.1} parent=1 // pred_check
      %p94 = pneg %p93
    $region43: #{tpu_custom_call.1} parent=1 // pred_check_branch
      %96 = sbr.rel (%p94) target = $region45
    $region44: #{tpu_custom_call.1} parent=1 // pred_region
      %97 = vst [vmem:[#allocation2] sm:$0xff] 0.0
      %98 = vst [vmem:[#allocation2 + $0x8] sm:$0xff] 0.0
      %99 = vst [vmem:[#allocation2 + $0x10] sm:$0xff] 0.0
      %100 = vst [vmem:[#allocation2 + $0x18] sm:$0xff] 0.0
      %101 = vst [vmem:[#allocation2 + $0x20] sm:$0xff] 0.0
      %102 = vst [vmem:[#allocation2 + $0x28] sm:$0xff] 0.0
      %103 = vst [vmem:[#allocation2 + $0x30] sm:$0xff] 0.0
      %104 = vst [vmem:[#allocation2 + $0x38] sm:$0xff] 0.0
      %105 = vst [vmem:[#allocation2 + $0x40] sm:$0xff] 0.0
      %106 = vst [vmem:[#allocation2 + $0x48] sm:$0xff] 0.0
      %107 = vst [vmem:[#allocation2 + $0x50] sm:$0xff] 0.0
      %108 = vst [vmem:[#allocation2 + $0x58] sm:$0xff] 0.0
    $region45: #{tpu_custom_call.1} parent=1 // pred_fallthru
      _
    %v109 = vld [vmem:[#allocation2] sm:$0xff]
    %v110 = vld [vmem:[#allocation2 + $0x8] sm:$0xff]
    %v111 = vld [vmem:[#allocation2 + $0x10] sm:$0xff]
    %v112 = vld [vmem:[#allocation2 + $0x18] sm:$0xff]
    %v113 = vld [vmem:[#allocation2 + $0x20] sm:$0xff]
    %v114 = vld [vmem:[#allocation2 + $0x28] sm:$0xff]
    %v115 = vld [vmem:[#allocation2 + $0x30] sm:$0xff]
    %v116 = vld [vmem:[#allocation2 + $0x38] sm:$0xff]
    %v117 = vld [vmem:[#allocation2 + $0x40] sm:$0xff]
    %v118 = vld [vmem:[#allocation2 + $0x48] sm:$0xff]
    %v119 = vld [vmem:[#allocation2 + $0x50] sm:$0xff]
    %v120 = vld [vmem:[#allocation2 + $0x58] sm:$0xff]
    %v121 = vld [vmem:[#allocation3] sm:$0xff]
    %v122 = vld [vmem:[#allocation3 + $0x8] sm:$0xff]
    %v123 = vld [vmem:[#allocation3 + $0x10] sm:$0xff]
    %v124 = vld [vmem:[#allocation3 + $0x18] sm:$0xff]
    %v125 = vld [vmem:[#allocation6] sm:$0xff]
    %v126 = vld [vmem:[#allocation6 + $0x8] sm:$0xff]
    %v127 = vld [vmem:[#allocation6 + $0x10] sm:$0xff]
    %v128 = vld [vmem:[#allocation6 + $0x18] sm:$0xff]
    %v129 = vld [vmem:[#allocation6 + $0x20] sm:$0xff]
    %v130 = vld [vmem:[#allocation6 + $0x28] sm:$0xff]
    %v131 = vld [vmem:[#allocation6 + $0x30] sm:$0xff]
    %v132 = vld [vmem:[#allocation6 + $0x38] sm:$0xff]
    %v133 = vld [vmem:[#allocation6 + $0x40] sm:$0xff]
    %v134 = vld [vmem:[#allocation6 + $0x48] sm:$0xff]
    %v135 = vld [vmem:[#allocation6 + $0x50] sm:$0xff]
    %v136 = vld [vmem:[#allocation6 + $0x58] sm:$0xff]
    %v137 = vld [vmem:[#allocation6 + $0x60] sm:$0xff]
    %v138 = vld [vmem:[#allocation6 + $0x68] sm:$0xff]
    %v139 = vld [vmem:[#allocation6 + $0x70] sm:$0xff]
    %v140 = vld [vmem:[#allocation6 + $0x78] sm:$0xff]
    %v141 = vld [vmem:[#allocation6 + $0x80] sm:$0xff]
    %v142 = vld [vmem:[#allocation6 + $0x88] sm:$0xff]
    %v143 = vld [vmem:[#allocation6 + $0x90] sm:$0xff]
    %v144 = vld [vmem:[#allocation6 + $0x98] sm:$0xff]
    %v145 = vld [vmem:[#allocation6 + $0xa0] sm:$0xff]
    %v146 = vld [vmem:[#allocation6 + $0xa8] sm:$0xff]
    %v147 = vld [vmem:[#allocation6 + $0xb0] sm:$0xff]
    %v148 = vld [vmem:[#allocation6 + $0xb8] sm:$0xff]
    %v149 = vld [vmem:[#allocation6 + $0xc0] sm:$0xff]
    %v150 = vld [vmem:[#allocation6 + $0xc8] sm:$0xff]
    %v151 = vld [vmem:[#allocation6 + $0xd0] sm:$0xff]
    %v152 = vld [vmem:[#allocation6 + $0xd8] sm:$0xff]
    %v153 = vld [vmem:[#allocation6 + $0xe0] sm:$0xff]
    %v154 = vld [vmem:[#allocation6 + $0xe8] sm:$0xff]
    %v155 = vld [vmem:[#allocation6 + $0xf0] sm:$0xff]
    %v156 = vld [vmem:[#allocation6 + $0xf8] sm:$0xff]
    %v157 = vld [vmem:[#allocation6 + $0x100] sm:$0xff]
    %v158 = vld [vmem:[#allocation6 + $0x108] sm:$0xff]
    %v159 = vld [vmem:[#allocation6 + $0x110] sm:$0xff]
    %v160 = vld [vmem:[#allocation6 + $0x118] sm:$0xff]
    %v161 = vld [vmem:[#allocation6 + $0x120] sm:$0xff]
    %v162 = vld [vmem:[#allocation6 + $0x128] sm:$0xff]
    %v163 = vld [vmem:[#allocation6 + $0x130] sm:$0xff]
    %v164 = vld [vmem:[#allocation6 + $0x138] sm:$0xff]
    %v165 = vld [vmem:[#allocation6 + $0x140] sm:$0xff]
    %v166 = vld [vmem:[#allocation6 + $0x148] sm:$0xff]
    %v167 = vld [vmem:[#allocation6 + $0x150] sm:$0xff]
    %v168 = vld [vmem:[#allocation6 + $0x158] sm:$0xff]
    %v169 = vld [vmem:[#allocation6 + $0x160] sm:$0xff]
    %v170 = vld [vmem:[#allocation6 + $0x168] sm:$0xff]
    %v171 = vld [vmem:[#allocation6 + $0x170] sm:$0xff]
    %v172 = vld [vmem:[#allocation6 + $0x178] sm:$0xff]
    %v173 = vld [vmem:[#allocation6 + $0x180] sm:$0xff]
    %v174 = vld [vmem:[#allocation6 + $0x188] sm:$0xff]
    %v175 = vld [vmem:[#allocation6 + $0x190] sm:$0xff]
    %v176 = vld [vmem:[#allocation6 + $0x198] sm:$0xff]
    %v177 = vld [vmem:[#allocation6 + $0x1a0] sm:$0xff]
    %v178 = vld [vmem:[#allocation6 + $0x1a8] sm:$0xff]
    %v179 = vld [vmem:[#allocation6 + $0x1b0] sm:$0xff]
    %v180 = vld [vmem:[#allocation6 + $0x1b8] sm:$0xff]
    %v181 = vld [vmem:[#allocation6 + $0x1c0] sm:$0xff]
    %v182 = vld [vmem:[#allocation6 + $0x1c8] sm:$0xff]
    %v183 = vld [vmem:[#allocation6 + $0x1d0] sm:$0xff]
    %v184 = vld [vmem:[#allocation6 + $0x1d8] sm:$0xff]
    %v185 = vld [vmem:[#allocation6 + $0x1e0] sm:$0xff]
    %v186 = vld [vmem:[#allocation6 + $0x1e8] sm:$0xff]
    %v187 = vld [vmem:[#allocation6 + $0x1f0] sm:$0xff]
    %v188 = vld [vmem:[#allocation6 + $0x1f8] sm:$0xff]
    %v189 = vld [vmem:[#allocation6 + $0x200] sm:$0xff]
    %v190 = vld [vmem:[#allocation6 + $0x208] sm:$0xff]
    %v191 = vld [vmem:[#allocation6 + $0x210] sm:$0xff]
    %v192 = vld [vmem:[#allocation6 + $0x218] sm:$0xff]
    %v193 = vld [vmem:[#allocation6 + $0x220] sm:$0xff]
    %v194 = vld [vmem:[#allocation6 + $0x228] sm:$0xff]
    %v195 = vld [vmem:[#allocation6 + $0x230] sm:$0xff]
    %v196 = vld [vmem:[#allocation6 + $0x238] sm:$0xff]
    %v197 = vld [vmem:[#allocation6 + $0x240] sm:$0xff]
    %v198 = vld [vmem:[#allocation6 + $0x248] sm:$0xff]
    %v199 = vld [vmem:[#allocation6 + $0x250] sm:$0xff]
    %v200 = vld [vmem:[#allocation6 + $0x258] sm:$0xff]
    %v201 = vld [vmem:[#allocation6 + $0x260] sm:$0xff]
    %v202 = vld [vmem:[#allocation6 + $0x268] sm:$0xff]
    %v203 = vld [vmem:[#allocation6 + $0x270] sm:$0xff]
    %v204 = vld [vmem:[#allocation6 + $0x278] sm:$0xff]
    %v205 = vld [vmem:[#allocation6 + $0x280] sm:$0xff]
    %v206 = vld [vmem:[#allocation6 + $0x288] sm:$0xff]
    %v207 = vld [vmem:[#allocation6 + $0x290] sm:$0xff]
    %v208 = vld [vmem:[#allocation6 + $0x298] sm:$0xff]
    %v209 = vld [vmem:[#allocation6 + $0x2a0] sm:$0xff]
    %v210 = vld [vmem:[#allocation6 + $0x2a8] sm:$0xff]
    %v211 = vld [vmem:[#allocation6 + $0x2b0] sm:$0xff]
    %v212 = vld [vmem:[#allocation6 + $0x2b8] sm:$0xff]
    %v213 = vld [vmem:[#allocation6 + $0x2c0] sm:$0xff]
    %v214 = vld [vmem:[#allocation6 + $0x2c8] sm:$0xff]
    %v215 = vld [vmem:[#allocation6 + $0x2d0] sm:$0xff]
    %v216 = vld [vmem:[#allocation6 + $0x2d8] sm:$0xff]
    %v217 = vld [vmem:[#allocation6 + $0x2e0] sm:$0xff]
    %v218 = vld [vmem:[#allocation6 + $0x2e8] sm:$0xff]
    %v219 = vld [vmem:[#allocation6 + $0x2f0] sm:$0xff]
    %v220 = vld [vmem:[#allocation6 + $0x2f8] sm:$0xff]
    %v221 = vld [vmem:[#allocation6 + $0x300] sm:$0xff]
    %v222 = vld [vmem:[#allocation6 + $0x308] sm:$0xff]
    %v223 = vld [vmem:[#allocation6 + $0x310] sm:$0xff]
    %v224 = vld [vmem:[#allocation6 + $0x318] sm:$0xff]
    %v225 = vld [vmem:[#allocation6 + $0x320] sm:$0xff]
    %v226 = vld [vmem:[#allocation6 + $0x328] sm:$0xff]
    %v227 = vld [vmem:[#allocation6 + $0x330] sm:$0xff]
    %v228 = vld [vmem:[#allocation6 + $0x338] sm:$0xff]
    %v229 = vld [vmem:[#allocation6 + $0x340] sm:$0xff]
    %v230 = vld [vmem:[#allocation6 + $0x348] sm:$0xff]
    %v231 = vld [vmem:[#allocation6 + $0x350] sm:$0xff]
    %v232 = vld [vmem:[#allocation6 + $0x358] sm:$0xff]
    %v233 = vld [vmem:[#allocation6 + $0x360] sm:$0xff]
    %v234 = vld [vmem:[#allocation6 + $0x368] sm:$0xff]
    %v235 = vld [vmem:[#allocation6 + $0x370] sm:$0xff]
    %v236 = vld [vmem:[#allocation6 + $0x378] sm:$0xff]
    %v237 = vld [vmem:[#allocation6 + $0x380] sm:$0xff]
    %v238 = vld [vmem:[#allocation6 + $0x388] sm:$0xff]
    %v239 = vld [vmem:[#allocation6 + $0x390] sm:$0xff]
    %v240 = vld [vmem:[#allocation6 + $0x398] sm:$0xff]
    %v241 = vld [vmem:[#allocation6 + $0x3a0] sm:$0xff]
    %v242 = vld [vmem:[#allocation6 + $0x3a8] sm:$0xff]
    %v243 = vld [vmem:[#allocation6 + $0x3b0] sm:$0xff]
    %v244 = vld [vmem:[#allocation6 + $0x3b8] sm:$0xff]
    %v245 = vld [vmem:[#allocation6 + $0x3c0] sm:$0xff]
    %v246 = vld [vmem:[#allocation6 + $0x3c8] sm:$0xff]
    %v247 = vld [vmem:[#allocation6 + $0x3d0] sm:$0xff]
    %v248 = vld [vmem:[#allocation6 + $0x3d8] sm:$0xff]
    %v249 = vld [vmem:[#allocation6 + $0x3e0] sm:$0xff]
    %v250 = vld [vmem:[#allocation6 + $0x3e8] sm:$0xff]
    %v251 = vld [vmem:[#allocation6 + $0x3f0] sm:$0xff]
    %v252 = vld [vmem:[#allocation6 + $0x3f8] sm:$0xff]
    %v253 = vld [vmem:[#allocation6 + $0x400] sm:$0xff]
    %v254 = vld [vmem:[#allocation6 + $0x408] sm:$0xff]
    %v255 = vld [vmem:[#allocation6 + $0x410] sm:$0xff]
    %v256 = vld [vmem:[#allocation6 + $0x418] sm:$0xff]
    %v257 = vld [vmem:[#allocation6 + $0x420] sm:$0xff]
    %v258 = vld [vmem:[#allocation6 + $0x428] sm:$0xff]
    %v259 = vld [vmem:[#allocation6 + $0x430] sm:$0xff]
    %v260 = vld [vmem:[#allocation6 + $0x438] sm:$0xff]
    %v261 = vld [vmem:[#allocation6 + $0x440] sm:$0xff]
    %v262 = vld [vmem:[#allocation6 + $0x448] sm:$0xff]
    %v263 = vld [vmem:[#allocation6 + $0x450] sm:$0xff]
    %v264 = vld [vmem:[#allocation6 + $0x458] sm:$0xff]
    %v265 = vld [vmem:[#allocation6 + $0x460] sm:$0xff]
    %v266 = vld [vmem:[#allocation6 + $0x468] sm:$0xff]
    %v267 = vld [vmem:[#allocation6 + $0x470] sm:$0xff]
    %v268 = vld [vmem:[#allocation6 + $0x478] sm:$0xff]
    %v269 = vld [vmem:[#allocation6 + $0x480] sm:$0xff]
    %v270 = vld [vmem:[#allocation6 + $0x488] sm:$0xff]
    %v271 = vld [vmem:[#allocation6 + $0x490] sm:$0xff]
    %v272 = vld [vmem:[#allocation6 + $0x498] sm:$0xff]
    %v273 = vld [vmem:[#allocation6 + $0x4a0] sm:$0xff]
    %v274 = vld [vmem:[#allocation6 + $0x4a8] sm:$0xff]
    %v275 = vld [vmem:[#allocation6 + $0x4b0] sm:$0xff]
    %v276 = vld [vmem:[#allocation6 + $0x4b8] sm:$0xff]
    %v277 = vld [vmem:[#allocation6 + $0x4c0] sm:$0xff]
    %v278 = vld [vmem:[#allocation6 + $0x4c8] sm:$0xff]
    %v279 = vld [vmem:[#allocation6 + $0x4d0] sm:$0xff]
    %v280 = vld [vmem:[#allocation6 + $0x4d8] sm:$0xff]
    %v281 = vld [vmem:[#allocation6 + $0x4e0] sm:$0xff]
    %v282 = vld [vmem:[#allocation6 + $0x4e8] sm:$0xff]
    %v283 = vld [vmem:[#allocation6 + $0x4f0] sm:$0xff]
    %v284 = vld [vmem:[#allocation6 + $0x4f8] sm:$0xff]
    %v285 = vld [vmem:[#allocation6 + $0x500] sm:$0xff]
    %v286 = vld [vmem:[#allocation6 + $0x508] sm:$0xff]
    %v287 = vld [vmem:[#allocation6 + $0x510] sm:$0xff]
    %v288 = vld [vmem:[#allocation6 + $0x518] sm:$0xff]
    %v289 = vld [vmem:[#allocation6 + $0x520] sm:$0xff]
    %v290 = vld [vmem:[#allocation6 + $0x528] sm:$0xff]
    %v291 = vld [vmem:[#allocation6 + $0x530] sm:$0xff]
    %v292 = vld [vmem:[#allocation6 + $0x538] sm:$0xff]
    %v293 = vld [vmem:[#allocation6 + $0x540] sm:$0xff]
    %v294 = vld [vmem:[#allocation6 + $0x548] sm:$0xff]
    %v295 = vld [vmem:[#allocation6 + $0x550] sm:$0xff]
    %v296 = vld [vmem:[#allocation6 + $0x558] sm:$0xff]
    %v297 = vld [vmem:[#allocation6 + $0x560] sm:$0xff]
    %v298 = vld [vmem:[#allocation6 + $0x568] sm:$0xff]
    %v299 = vld [vmem:[#allocation6 + $0x570] sm:$0xff]
    %v300 = vld [vmem:[#allocation6 + $0x578] sm:$0xff]
    %v301 = vld [vmem:[#allocation6 + $0x580] sm:$0xff]
    %v302 = vld [vmem:[#allocation6 + $0x588] sm:$0xff]
    %v303 = vld [vmem:[#allocation6 + $0x590] sm:$0xff]
    %v304 = vld [vmem:[#allocation6 + $0x598] sm:$0xff]
    %v305 = vld [vmem:[#allocation6 + $0x5a0] sm:$0xff]
    %v306 = vld [vmem:[#allocation6 + $0x5a8] sm:$0xff]
    %v307 = vld [vmem:[#allocation6 + $0x5b0] sm:$0xff]
    %v308 = vld [vmem:[#allocation6 + $0x5b8] sm:$0xff]
    %v309 = vld [vmem:[#allocation6 + $0x5c0] sm:$0xff]
    %v310 = vld [vmem:[#allocation6 + $0x5c8] sm:$0xff]
    %v311 = vld [vmem:[#allocation6 + $0x5d0] sm:$0xff]
    %v312 = vld [vmem:[#allocation6 + $0x5d8] sm:$0xff]
    %v313 = vld [vmem:[#allocation6 + $0x5e0] sm:$0xff]
    %v314 = vld [vmem:[#allocation6 + $0x5e8] sm:$0xff]
    %v315 = vld [vmem:[#allocation6 + $0x5f0] sm:$0xff]
    %v316 = vld [vmem:[#allocation6 + $0x5f8] sm:$0xff]
    %v317 = vld [vmem:[#allocation6 + $0x600] sm:$0xff]
    %v318 = vld [vmem:[#allocation6 + $0x608] sm:$0xff]
    %v319 = vld [vmem:[#allocation6 + $0x610] sm:$0xff]
    %v320 = vld [vmem:[#allocation6 + $0x618] sm:$0xff]
    %v321 = vld [vmem:[#allocation6 + $0x620] sm:$0xff]
    %v322 = vld [vmem:[#allocation6 + $0x628] sm:$0xff]
    %v323 = vld [vmem:[#allocation6 + $0x630] sm:$0xff]
    %v324 = vld [vmem:[#allocation6 + $0x638] sm:$0xff]
    %v325 = vld [vmem:[#allocation6 + $0x640] sm:$0xff]
    %v326 = vld [vmem:[#allocation6 + $0x648] sm:$0xff]
    %v327 = vld [vmem:[#allocation6 + $0x650] sm:$0xff]
    %v328 = vld [vmem:[#allocation6 + $0x658] sm:$0xff]
    %v329 = vld [vmem:[#allocation6 + $0x660] sm:$0xff]
    %v330 = vld [vmem:[#allocation6 + $0x668] sm:$0xff]
    %v331 = vld [vmem:[#allocation6 + $0x670] sm:$0xff]
    %v332 = vld [vmem:[#allocation6 + $0x678] sm:$0xff]
    %v333 = vld [vmem:[#allocation6 + $0x680] sm:$0xff]
    %v334 = vld [vmem:[#allocation6 + $0x688] sm:$0xff]
    %v335 = vld [vmem:[#allocation6 + $0x690] sm:$0xff]
    %v336 = vld [vmem:[#allocation6 + $0x698] sm:$0xff]
    %v337 = vld [vmem:[#allocation6 + $0x6a0] sm:$0xff]
    %v338 = vld [vmem:[#allocation6 + $0x6a8] sm:$0xff]
    %v339 = vld [vmem:[#allocation6 + $0x6b0] sm:$0xff]
    %v340 = vld [vmem:[#allocation6 + $0x6b8] sm:$0xff]
    %v341 = vld [vmem:[#allocation6 + $0x6c0] sm:$0xff]
    %v342 = vld [vmem:[#allocation6 + $0x6c8] sm:$0xff]
    %v343 = vld [vmem:[#allocation6 + $0x6d0] sm:$0xff]
    %v344 = vld [vmem:[#allocation6 + $0x6d8] sm:$0xff]
    %v345 = vld [vmem:[#allocation6 + $0x6e0] sm:$0xff]
    %v346 = vld [vmem:[#allocation6 + $0x6e8] sm:$0xff]
    %v347 = vld [vmem:[#allocation6 + $0x6f0] sm:$0xff]
    %v348 = vld [vmem:[#allocation6 + $0x6f8] sm:$0xff]
    %v349 = vld [vmem:[#allocation6 + $0x700] sm:$0xff]
    %v350 = vld [vmem:[#allocation6 + $0x708] sm:$0xff]
    %v351 = vld [vmem:[#allocation6 + $0x710] sm:$0xff]
    %v352 = vld [vmem:[#allocation6 + $0x718] sm:$0xff]
    %v353 = vld [vmem:[#allocation6 + $0x720] sm:$0xff]
    %v354 = vld [vmem:[#allocation6 + $0x728] sm:$0xff]
    %v355 = vld [vmem:[#allocation6 + $0x730] sm:$0xff]
    %v356 = vld [vmem:[#allocation6 + $0x738] sm:$0xff]
    %v357 = vld [vmem:[#allocation6 + $0x740] sm:$0xff]
    %v358 = vld [vmem:[#allocation6 + $0x748] sm:$0xff]
    %v359 = vld [vmem:[#allocation6 + $0x750] sm:$0xff]
    %v360 = vld [vmem:[#allocation6 + $0x758] sm:$0xff]
    %v361 = vld [vmem:[#allocation6 + $0x760] sm:$0xff]
    %v362 = vld [vmem:[#allocation6 + $0x768] sm:$0xff]
    %v363 = vld [vmem:[#allocation6 + $0x770] sm:$0xff]
    %v364 = vld [vmem:[#allocation6 + $0x778] sm:$0xff]
    %v365 = vld [vmem:[#allocation6 + $0x780] sm:$0xff]
    %v366 = vld [vmem:[#allocation6 + $0x788] sm:$0xff]
    %v367 = vld [vmem:[#allocation6 + $0x790] sm:$0xff]
    %v368 = vld [vmem:[#allocation6 + $0x798] sm:$0xff]
    %v369 = vld [vmem:[#allocation6 + $0x7a0] sm:$0xff]
    %v370 = vld [vmem:[#allocation6 + $0x7a8] sm:$0xff]
    %v371 = vld [vmem:[#allocation6 + $0x7b0] sm:$0xff]
    %v372 = vld [vmem:[#allocation6 + $0x7b8] sm:$0xff]
    %v373 = vld [vmem:[#allocation6 + $0x7c0] sm:$0xff]
    %v374 = vld [vmem:[#allocation6 + $0x7c8] sm:$0xff]
    %v375 = vld [vmem:[#allocation6 + $0x7d0] sm:$0xff]
    %v376 = vld [vmem:[#allocation6 + $0x7d8] sm:$0xff]
    %v377 = vld [vmem:[#allocation6 + $0x7e0] sm:$0xff]
    %v378 = vld [vmem:[#allocation6 + $0x7e8] sm:$0xff]
    %v379 = vld [vmem:[#allocation6 + $0x7f0] sm:$0xff]
    %v380 = vld [vmem:[#allocation6 + $0x7f8] sm:$0xff]
    %v381 = vld [vmem:[#allocation6 + $0x800] sm:$0xff]
    %v382 = vld [vmem:[#allocation6 + $0x808] sm:$0xff]
    %v383 = vld [vmem:[#allocation6 + $0x810] sm:$0xff]
    %v384 = vld [vmem:[#allocation6 + $0x818] sm:$0xff]
    %v385 = vld [vmem:[#allocation6 + $0x820] sm:$0xff]
    %v386 = vld [vmem:[#allocation6 + $0x828] sm:$0xff]
    %v387 = vld [vmem:[#allocation6 + $0x830] sm:$0xff]
    %v388 = vld [vmem:[#allocation6 + $0x838] sm:$0xff]
    %v389 = vld [vmem:[#allocation6 + $0x840] sm:$0xff]
    %v390 = vld [vmem:[#allocation6 + $0x848] sm:$0xff]
    %v391 = vld [vmem:[#allocation6 + $0x850] sm:$0xff]
    %v392 = vld [vmem:[#allocation6 + $0x858] sm:$0xff]
    %v393 = vld [vmem:[#allocation6 + $0x860] sm:$0xff]
    %v394 = vld [vmem:[#allocation6 + $0x868] sm:$0xff]
    %v395 = vld [vmem:[#allocation6 + $0x870] sm:$0xff]
    %v396 = vld [vmem:[#allocation6 + $0x878] sm:$0xff]
    %v397 = vld [vmem:[#allocation6 + $0x880] sm:$0xff]
    %v398 = vld [vmem:[#allocation6 + $0x888] sm:$0xff]
    %v399 = vld [vmem:[#allocation6 + $0x890] sm:$0xff]
    %v400 = vld [vmem:[#allocation6 + $0x898] sm:$0xff]
    %v401 = vld [vmem:[#allocation6 + $0x8a0] sm:$0xff]
    %v402 = vld [vmem:[#allocation6 + $0x8a8] sm:$0xff]
    %v403 = vld [vmem:[#allocation6 + $0x8b0] sm:$0xff]
    %v404 = vld [vmem:[#allocation6 + $0x8b8] sm:$0xff]
    %v405 = vld [vmem:[#allocation6 + $0x8c0] sm:$0xff]
    %v406 = vld [vmem:[#allocation6 + $0x8c8] sm:$0xff]
    %v407 = vld [vmem:[#allocation6 + $0x8d0] sm:$0xff]
    %v408 = vld [vmem:[#allocation6 + $0x8d8] sm:$0xff]
    %v409 = vld [vmem:[#allocation6 + $0x8e0] sm:$0xff]
    %v410 = vld [vmem:[#allocation6 + $0x8e8] sm:$0xff]
    %v411 = vld [vmem:[#allocation6 + $0x8f0] sm:$0xff]
    %v412 = vld [vmem:[#allocation6 + $0x8f8] sm:$0xff]
    %v413 = vld [vmem:[#allocation6 + $0x900] sm:$0xff]
    %v414 = vld [vmem:[#allocation6 + $0x908] sm:$0xff]
    %v415 = vld [vmem:[#allocation6 + $0x910] sm:$0xff]
    %v416 = vld [vmem:[#allocation6 + $0x918] sm:$0xff]
    %v417 = vld [vmem:[#allocation6 + $0x920] sm:$0xff]
    %v418 = vld [vmem:[#allocation6 + $0x928] sm:$0xff]
    %v419 = vld [vmem:[#allocation6 + $0x930] sm:$0xff]
    %v420 = vld [vmem:[#allocation6 + $0x938] sm:$0xff]
    %v421 = vld [vmem:[#allocation6 + $0x940] sm:$0xff]
    %v422 = vld [vmem:[#allocation6 + $0x948] sm:$0xff]
    %v423 = vld [vmem:[#allocation6 + $0x950] sm:$0xff]
    %v424 = vld [vmem:[#allocation6 + $0x958] sm:$0xff]
    %v425 = vld [vmem:[#allocation6 + $0x960] sm:$0xff]
    %v426 = vld [vmem:[#allocation6 + $0x968] sm:$0xff]
    %v427 = vld [vmem:[#allocation6 + $0x970] sm:$0xff]
    %v428 = vld [vmem:[#allocation6 + $0x978] sm:$0xff]
    %v429 = vld [vmem:[#allocation6 + $0x980] sm:$0xff]
    %v430 = vld [vmem:[#allocation6 + $0x988] sm:$0xff]
    %v431 = vld [vmem:[#allocation6 + $0x990] sm:$0xff]
    %v432 = vld [vmem:[#allocation6 + $0x998] sm:$0xff]
    %v433 = vld [vmem:[#allocation6 + $0x9a0] sm:$0xff]
    %v434 = vld [vmem:[#allocation6 + $0x9a8] sm:$0xff]
    %v435 = vld [vmem:[#allocation6 + $0x9b0] sm:$0xff]
    %v436 = vld [vmem:[#allocation6 + $0x9b8] sm:$0xff]
    %v437 = vld [vmem:[#allocation6 + $0x9c0] sm:$0xff]
    %v438 = vld [vmem:[#allocation6 + $0x9c8] sm:$0xff]
    %v439 = vld [vmem:[#allocation6 + $0x9d0] sm:$0xff]
    %v440 = vld [vmem:[#allocation6 + $0x9d8] sm:$0xff]
    %v441 = vld [vmem:[#allocation6 + $0x9e0] sm:$0xff]
    %v442 = vld [vmem:[#allocation6 + $0x9e8] sm:$0xff]
    %v443 = vld [vmem:[#allocation6 + $0x9f0] sm:$0xff]
    %v444 = vld [vmem:[#allocation6 + $0x9f8] sm:$0xff]
    %v445 = vld [vmem:[#allocation6 + $0xa00] sm:$0xff]
    %v446 = vld [vmem:[#allocation6 + $0xa08] sm:$0xff]
    %v447 = vld [vmem:[#allocation6 + $0xa10] sm:$0xff]
    %v448 = vld [vmem:[#allocation6 + $0xa18] sm:$0xff]
    %v449 = vld [vmem:[#allocation6 + $0xa20] sm:$0xff]
    %v450 = vld [vmem:[#allocation6 + $0xa28] sm:$0xff]
    %v451 = vld [vmem:[#allocation6 + $0xa30] sm:$0xff]
    %v452 = vld [vmem:[#allocation6 + $0xa38] sm:$0xff]
    %v453 = vld [vmem:[#allocation6 + $0xa40] sm:$0xff]
    %v454 = vld [vmem:[#allocation6 + $0xa48] sm:$0xff]
    %v455 = vld [vmem:[#allocation6 + $0xa50] sm:$0xff]
    %v456 = vld [vmem:[#allocation6 + $0xa58] sm:$0xff]
    %v457 = vld [vmem:[#allocation6 + $0xa60] sm:$0xff]
    %v458 = vld [vmem:[#allocation6 + $0xa68] sm:$0xff]
    %v459 = vld [vmem:[#allocation6 + $0xa70] sm:$0xff]
    %v460 = vld [vmem:[#allocation6 + $0xa78] sm:$0xff]
    %v461 = vld [vmem:[#allocation6 + $0xa80] sm:$0xff]
    %v462 = vld [vmem:[#allocation6 + $0xa88] sm:$0xff]
    %v463 = vld [vmem:[#allocation6 + $0xa90] sm:$0xff]
    %v464 = vld [vmem:[#allocation6 + $0xa98] sm:$0xff]
    %v465 = vld [vmem:[#allocation6 + $0xaa0] sm:$0xff]
    %v466 = vld [vmem:[#allocation6 + $0xaa8] sm:$0xff]
    %v467 = vld [vmem:[#allocation6 + $0xab0] sm:$0xff]
    %v468 = vld [vmem:[#allocation6 + $0xab8] sm:$0xff]
    %v469 = vld [vmem:[#allocation6 + $0xac0] sm:$0xff]
    %v470 = vld [vmem:[#allocation6 + $0xac8] sm:$0xff]
    %v471 = vld [vmem:[#allocation6 + $0xad0] sm:$0xff]
    %v472 = vld [vmem:[#allocation6 + $0xad8] sm:$0xff]
    %v473 = vld [vmem:[#allocation6 + $0xae0] sm:$0xff]
    %v474 = vld [vmem:[#allocation6 + $0xae8] sm:$0xff]
    %v475 = vld [vmem:[#allocation6 + $0xaf0] sm:$0xff]
    %v476 = vld [vmem:[#allocation6 + $0xaf8] sm:$0xff]
    %v477 = vld [vmem:[#allocation6 + $0xb00] sm:$0xff]
    %v478 = vld [vmem:[#allocation6 + $0xb08] sm:$0xff]
    %v479 = vld [vmem:[#allocation6 + $0xb10] sm:$0xff]
    %v480 = vld [vmem:[#allocation6 + $0xb18] sm:$0xff]
    %v481 = vld [vmem:[#allocation6 + $0xb20] sm:$0xff]
    %v482 = vld [vmem:[#allocation6 + $0xb28] sm:$0xff]
    %v483 = vld [vmem:[#allocation6 + $0xb30] sm:$0xff]
    %v484 = vld [vmem:[#allocation6 + $0xb38] sm:$0xff]
    %v485 = vld [vmem:[#allocation6 + $0xb40] sm:$0xff]
    %v486 = vld [vmem:[#allocation6 + $0xb48] sm:$0xff]
    %v487 = vld [vmem:[#allocation6 + $0xb50] sm:$0xff]
    %v488 = vld [vmem:[#allocation6 + $0xb58] sm:$0xff]
    %v489 = vld [vmem:[#allocation6 + $0xb60] sm:$0xff]
    %v490 = vld [vmem:[#allocation6 + $0xb68] sm:$0xff]
    %v491 = vld [vmem:[#allocation6 + $0xb70] sm:$0xff]
    %v492 = vld [vmem:[#allocation6 + $0xb78] sm:$0xff]
    %v493 = vld [vmem:[#allocation6 + $0xb80] sm:$0xff]
    %v494 = vld [vmem:[#allocation6 + $0xb88] sm:$0xff]
    %v495 = vld [vmem:[#allocation6 + $0xb90] sm:$0xff]
    %v496 = vld [vmem:[#allocation6 + $0xb98] sm:$0xff]
    %v497 = vld [vmem:[#allocation6 + $0xba0] sm:$0xff]
    %v498 = vld [vmem:[#allocation6 + $0xba8] sm:$0xff]
    %v499 = vld [vmem:[#allocation6 + $0xbb0] sm:$0xff]
    %v500 = vld [vmem:[#allocation6 + $0xbb8] sm:$0xff]
    %v501 = vld [vmem:[#allocation6 + $0xbc0] sm:$0xff]
    %v502 = vld [vmem:[#allocation6 + $0xbc8] sm:$0xff]
    %v503 = vld [vmem:[#allocation6 + $0xbd0] sm:$0xff]
    %v504 = vld [vmem:[#allocation6 + $0xbd8] sm:$0xff]
    %v505 = vld [vmem:[#allocation6 + $0xbe0] sm:$0xff]
    %v506 = vld [vmem:[#allocation6 + $0xbe8] sm:$0xff]
    %v507 = vld [vmem:[#allocation6 + $0xbf0] sm:$0xff]
    %v508 = vld [vmem:[#allocation6 + $0xbf8] sm:$0xff]
    %v509 = vld [vmem:[#allocation6 + $0xc00] sm:$0xff]
    %v510 = vld [vmem:[#allocation6 + $0xc08] sm:$0xff]
    %v511 = vld [vmem:[#allocation6 + $0xc10] sm:$0xff]
    %v512 = vld [vmem:[#allocation6 + $0xc18] sm:$0xff]
    %v513 = vld [vmem:[#allocation6 + $0xc20] sm:$0xff]
    %v514 = vld [vmem:[#allocation6 + $0xc28] sm:$0xff]
    %v515 = vld [vmem:[#allocation6 + $0xc30] sm:$0xff]
    %v516 = vld [vmem:[#allocation6 + $0xc38] sm:$0xff]
    %v517 = vld [vmem:[#allocation6 + $0xc40] sm:$0xff]
    %v518 = vld [vmem:[#allocation6 + $0xc48] sm:$0xff]
    %v519 = vld [vmem:[#allocation6 + $0xc50] sm:$0xff]
    %v520 = vld [vmem:[#allocation6 + $0xc58] sm:$0xff]
    %v521 = vld [vmem:[#allocation6 + $0xc60] sm:$0xff]
    %v522 = vld [vmem:[#allocation6 + $0xc68] sm:$0xff]
    %v523 = vld [vmem:[#allocation6 + $0xc70] sm:$0xff]
    %v524 = vld [vmem:[#allocation6 + $0xc78] sm:$0xff]
    %v525 = vld [vmem:[#allocation6 + $0xc80] sm:$0xff]
    %v526 = vld [vmem:[#allocation6 + $0xc88] sm:$0xff]
    %v527 = vld [vmem:[#allocation6 + $0xc90] sm:$0xff]
    %v528 = vld [vmem:[#allocation6 + $0xc98] sm:$0xff]
    %v529 = vld [vmem:[#allocation6 + $0xca0] sm:$0xff]
    %v530 = vld [vmem:[#allocation6 + $0xca8] sm:$0xff]
    %v531 = vld [vmem:[#allocation6 + $0xcb0] sm:$0xff]
    %v532 = vld [vmem:[#allocation6 + $0xcb8] sm:$0xff]
    %v533 = vld [vmem:[#allocation6 + $0xcc0] sm:$0xff]
    %v534 = vld [vmem:[#allocation6 + $0xcc8] sm:$0xff]
    %v535 = vld [vmem:[#allocation6 + $0xcd0] sm:$0xff]
    %v536 = vld [vmem:[#allocation6 + $0xcd8] sm:$0xff]
    %v537 = vld [vmem:[#allocation6 + $0xce0] sm:$0xff]
    %v538 = vld [vmem:[#allocation6 + $0xce8] sm:$0xff]
    %v539 = vld [vmem:[#allocation6 + $0xcf0] sm:$0xff]
    %v540 = vld [vmem:[#allocation6 + $0xcf8] sm:$0xff]
    %v541 = vld [vmem:[#allocation6 + $0xd00] sm:$0xff]
    %v542 = vld [vmem:[#allocation6 + $0xd08] sm:$0xff]
    %v543 = vld [vmem:[#allocation6 + $0xd10] sm:$0xff]
    %v544 = vld [vmem:[#allocation6 + $0xd18] sm:$0xff]
    %v545 = vld [vmem:[#allocation6 + $0xd20] sm:$0xff]
    %v546 = vld [vmem:[#allocation6 + $0xd28] sm:$0xff]
    %v547 = vld [vmem:[#allocation6 + $0xd30] sm:$0xff]
    %v548 = vld [vmem:[#allocation6 + $0xd38] sm:$0xff]
    %v549 = vld [vmem:[#allocation6 + $0xd40] sm:$0xff]
    %v550 = vld [vmem:[#allocation6 + $0xd48] sm:$0xff]
    %v551 = vld [vmem:[#allocation6 + $0xd50] sm:$0xff]
    %v552 = vld [vmem:[#allocation6 + $0xd58] sm:$0xff]
    %v553 = vld [vmem:[#allocation6 + $0xd60] sm:$0xff]
    %v554 = vld [vmem:[#allocation6 + $0xd68] sm:$0xff]
    %v555 = vld [vmem:[#allocation6 + $0xd70] sm:$0xff]
    %v556 = vld [vmem:[#allocation6 + $0xd78] sm:$0xff]
    %v557 = vld [vmem:[#allocation6 + $0xd80] sm:$0xff]
    %v558 = vld [vmem:[#allocation6 + $0xd88] sm:$0xff]
    %v559 = vld [vmem:[#allocation6 + $0xd90] sm:$0xff]
    %v560 = vld [vmem:[#allocation6 + $0xd98] sm:$0xff]
    %v561 = vld [vmem:[#allocation6 + $0xda0] sm:$0xff]
    %v562 = vld [vmem:[#allocation6 + $0xda8] sm:$0xff]
    %v563 = vld [vmem:[#allocation6 + $0xdb0] sm:$0xff]
    %v564 = vld [vmem:[#allocation6 + $0xdb8] sm:$0xff]
    %v565 = vld [vmem:[#allocation6 + $0xdc0] sm:$0xff]
    %v566 = vld [vmem:[#allocation6 + $0xdc8] sm:$0xff]
    %v567 = vld [vmem:[#allocation6 + $0xdd0] sm:$0xff]
    %v568 = vld [vmem:[#allocation6 + $0xdd8] sm:$0xff]
    %v569 = vld [vmem:[#allocation6 + $0xde0] sm:$0xff]
    %v570 = vld [vmem:[#allocation6 + $0xde8] sm:$0xff]
    %v571 = vld [vmem:[#allocation6 + $0xdf0] sm:$0xff]
    %v572 = vld [vmem:[#allocation6 + $0xdf8] sm:$0xff]
    %v573 = vld [vmem:[#allocation6 + $0xe00] sm:$0xff]
    %v574 = vld [vmem:[#allocation6 + $0xe08] sm:$0xff]
    %v575 = vld [vmem:[#allocation6 + $0xe10] sm:$0xff]
    %v576 = vld [vmem:[#allocation6 + $0xe18] sm:$0xff]
    %v577 = vld [vmem:[#allocation6 + $0xe20] sm:$0xff]
    %v578 = vld [vmem:[#allocation6 + $0xe28] sm:$0xff]
    %v579 = vld [vmem:[#allocation6 + $0xe30] sm:$0xff]
    %v580 = vld [vmem:[#allocation6 + $0xe38] sm:$0xff]
    %v581 = vld [vmem:[#allocation6 + $0xe40] sm:$0xff]
    %v582 = vld [vmem:[#allocation6 + $0xe48] sm:$0xff]
    %v583 = vld [vmem:[#allocation6 + $0xe50] sm:$0xff]
    %v584 = vld [vmem:[#allocation6 + $0xe58] sm:$0xff]
    %v585 = vld [vmem:[#allocation6 + $0xe60] sm:$0xff]
    %v586 = vld [vmem:[#allocation6 + $0xe68] sm:$0xff]
    %v587 = vld [vmem:[#allocation6 + $0xe70] sm:$0xff]
    %v588 = vld [vmem:[#allocation6 + $0xe78] sm:$0xff]
    %v589 = vld [vmem:[#allocation6 + $0xe80] sm:$0xff]
    %v590 = vld [vmem:[#allocation6 + $0xe88] sm:$0xff]
    %v591 = vld [vmem:[#allocation6 + $0xe90] sm:$0xff]
    %v592 = vld [vmem:[#allocation6 + $0xe98] sm:$0xff]
    %v593 = vld [vmem:[#allocation6 + $0xea0] sm:$0xff]
    %v594 = vld [vmem:[#allocation6 + $0xea8] sm:$0xff]
    %v595 = vld [vmem:[#allocation6 + $0xeb0] sm:$0xff]
    %v596 = vld [vmem:[#allocation6 + $0xeb8] sm:$0xff]
    %v597 = vld [vmem:[#allocation6 + $0xec0] sm:$0xff]
    %v598 = vld [vmem:[#allocation6 + $0xec8] sm:$0xff]
    %v599 = vld [vmem:[#allocation6 + $0xed0] sm:$0xff]
    %v600 = vld [vmem:[#allocation6 + $0xed8] sm:$0xff]
    %v601 = vld [vmem:[#allocation6 + $0xee0] sm:$0xff]
    %v602 = vld [vmem:[#allocation6 + $0xee8] sm:$0xff]
    %v603 = vld [vmem:[#allocation6 + $0xef0] sm:$0xff]
    %v604 = vld [vmem:[#allocation6 + $0xef8] sm:$0xff]
    %v605 = vld [vmem:[#allocation6 + $0xf00] sm:$0xff]
    %v606 = vld [vmem:[#allocation6 + $0xf08] sm:$0xff]
    %v607 = vld [vmem:[#allocation6 + $0xf10] sm:$0xff]
    %v608 = vld [vmem:[#allocation6 + $0xf18] sm:$0xff]
    %v609 = vld [vmem:[#allocation6 + $0xf20] sm:$0xff]
    %v610 = vld [vmem:[#allocation6 + $0xf28] sm:$0xff]
    %v611 = vld [vmem:[#allocation6 + $0xf30] sm:$0xff]
    %v612 = vld [vmem:[#allocation6 + $0xf38] sm:$0xff]
    %v613 = vld [vmem:[#allocation6 + $0xf40] sm:$0xff]
    %v614 = vld [vmem:[#allocation6 + $0xf48] sm:$0xff]
    %v615 = vld [vmem:[#allocation6 + $0xf50] sm:$0xff]
    %v616 = vld [vmem:[#allocation6 + $0xf58] sm:$0xff]
    %v617 = vld [vmem:[#allocation6 + $0xf60] sm:$0xff]
    %v618 = vld [vmem:[#allocation6 + $0xf68] sm:$0xff]
    %v619 = vld [vmem:[#allocation6 + $0xf70] sm:$0xff]
    %v620 = vld [vmem:[#allocation6 + $0xf78] sm:$0xff]
    %v621 = vld [vmem:[#allocation6 + $0xf80] sm:$0xff]
    %v622 = vld [vmem:[#allocation6 + $0xf88] sm:$0xff]
    %v623 = vld [vmem:[#allocation6 + $0xf90] sm:$0xff]
    %v624 = vld [vmem:[#allocation6 + $0xf98] sm:$0xff]
    %v625 = vld [vmem:[#allocation6 + $0xfa0] sm:$0xff]
    %v626 = vld [vmem:[#allocation6 + $0xfa8] sm:$0xff]
    %v627 = vld [vmem:[#allocation6 + $0xfb0] sm:$0xff]
    %v628 = vld [vmem:[#allocation6 + $0xfb8] sm:$0xff]
    %v629 = vld [vmem:[#allocation6 + $0xfc0] sm:$0xff]
    %v630 = vld [vmem:[#allocation6 + $0xfc8] sm:$0xff]
    %v631 = vld [vmem:[#allocation6 + $0xfd0] sm:$0xff]
    %v632 = vld [vmem:[#allocation6 + $0xfd8] sm:$0xff]
    %v633 = vld [vmem:[#allocation6 + $0xfe0] sm:$0xff]
    %v634 = vld [vmem:[#allocation6 + $0xfe8] sm:$0xff]
    %v635 = vld [vmem:[#allocation6 + $0xff0] sm:$0xff]
    %v636 = vld [vmem:[#allocation6 + $0xff8] sm:$0xff]
    %v637 = vld [vmem:[#allocation6 + $0x1000] sm:$0xff]
    %v638 = vld [vmem:[#allocation6 + $0x1008] sm:$0xff]
    %v639 = vld [vmem:[#allocation6 + $0x1010] sm:$0xff]
    %v640 = vld [vmem:[#allocation6 + $0x1018] sm:$0xff]
    %v641 = vld [vmem:[#allocation6 + $0x1020] sm:$0xff]
    %v642 = vld [vmem:[#allocation6 + $0x1028] sm:$0xff]
    %v643 = vld [vmem:[#allocation6 + $0x1030] sm:$0xff]
    %v644 = vld [vmem:[#allocation6 + $0x1038] sm:$0xff]
    %v645 = vld [vmem:[#allocation6 + $0x1040] sm:$0xff]
    %v646 = vld [vmem:[#allocation6 + $0x1048] sm:$0xff]
    %v647 = vld [vmem:[#allocation6 + $0x1050] sm:$0xff]
    %v648 = vld [vmem:[#allocation6 + $0x1058] sm:$0xff]
    %v649 = vld [vmem:[#allocation6 + $0x1060] sm:$0xff]
    %v650 = vld [vmem:[#allocation6 + $0x1068] sm:$0xff]
    %v651 = vld [vmem:[#allocation6 + $0x1070] sm:$0xff]
    %v652 = vld [vmem:[#allocation6 + $0x1078] sm:$0xff]
    %v653 = vld [vmem:[#allocation6 + $0x1080] sm:$0xff]
    %v654 = vld [vmem:[#allocation6 + $0x1088] sm:$0xff]
    %v655 = vld [vmem:[#allocation6 + $0x1090] sm:$0xff]
    %v656 = vld [vmem:[#allocation6 + $0x1098] sm:$0xff]
    %v657 = vld [vmem:[#allocation6 + $0x10a0] sm:$0xff]
    %v658 = vld [vmem:[#allocation6 + $0x10a8] sm:$0xff]
    %v659 = vld [vmem:[#allocation6 + $0x10b0] sm:$0xff]
    %v660 = vld [vmem:[#allocation6 + $0x10b8] sm:$0xff]
    %v661 = vld [vmem:[#allocation6 + $0x10c0] sm:$0xff]
    %v662 = vld [vmem:[#allocation6 + $0x10c8] sm:$0xff]
    %v663 = vld [vmem:[#allocation6 + $0x10d0] sm:$0xff]
    %v664 = vld [vmem:[#allocation6 + $0x10d8] sm:$0xff]
    %v665 = vld [vmem:[#allocation6 + $0x10e0] sm:$0xff]
    %v666 = vld [vmem:[#allocation6 + $0x10e8] sm:$0xff]
    %v667 = vld [vmem:[#allocation6 + $0x10f0] sm:$0xff]
    %v668 = vld [vmem:[#allocation6 + $0x10f8] sm:$0xff]
    %v669 = vld [vmem:[#allocation6 + $0x1100] sm:$0xff]
    %v670 = vld [vmem:[#allocation6 + $0x1108] sm:$0xff]
    %v671 = vld [vmem:[#allocation6 + $0x1110] sm:$0xff]
    %v672 = vld [vmem:[#allocation6 + $0x1118] sm:$0xff]
    %v673 = vld [vmem:[#allocation6 + $0x1120] sm:$0xff]
    %v674 = vld [vmem:[#allocation6 + $0x1128] sm:$0xff]
    %v675 = vld [vmem:[#allocation6 + $0x1130] sm:$0xff]
    %v676 = vld [vmem:[#allocation6 + $0x1138] sm:$0xff]
    %v677 = vld [vmem:[#allocation6 + $0x1140] sm:$0xff]
    %v678 = vld [vmem:[#allocation6 + $0x1148] sm:$0xff]
    %v679 = vld [vmem:[#allocation6 + $0x1150] sm:$0xff]
    %v680 = vld [vmem:[#allocation6 + $0x1158] sm:$0xff]
    %v681 = vld [vmem:[#allocation6 + $0x1160] sm:$0xff]
    %v682 = vld [vmem:[#allocation6 + $0x1168] sm:$0xff]
    %v683 = vld [vmem:[#allocation6 + $0x1170] sm:$0xff]
    %v684 = vld [vmem:[#allocation6 + $0x1178] sm:$0xff]
    %v685 = vld [vmem:[#allocation6 + $0x1180] sm:$0xff]
    %v686 = vld [vmem:[#allocation6 + $0x1188] sm:$0xff]
    %v687 = vld [vmem:[#allocation6 + $0x1190] sm:$0xff]
    %v688 = vld [vmem:[#allocation6 + $0x1198] sm:$0xff]
    %v689 = vld [vmem:[#allocation6 + $0x11a0] sm:$0xff]
    %v690 = vld [vmem:[#allocation6 + $0x11a8] sm:$0xff]
    %v691 = vld [vmem:[#allocation6 + $0x11b0] sm:$0xff]
    %v692 = vld [vmem:[#allocation6 + $0x11b8] sm:$0xff]
    %v693 = vld [vmem:[#allocation6 + $0x11c0] sm:$0xff]
    %v694 = vld [vmem:[#allocation6 + $0x11c8] sm:$0xff]
    %v695 = vld [vmem:[#allocation6 + $0x11d0] sm:$0xff]
    %v696 = vld [vmem:[#allocation6 + $0x11d8] sm:$0xff]
    %v697 = vld [vmem:[#allocation6 + $0x11e0] sm:$0xff]
    %v698 = vld [vmem:[#allocation6 + $0x11e8] sm:$0xff]
    %v699 = vld [vmem:[#allocation6 + $0x11f0] sm:$0xff]
    %v700 = vld [vmem:[#allocation6 + $0x11f8] sm:$0xff]
    %v701 = vld [vmem:[#allocation6 + $0x1200] sm:$0xff]
    %v702 = vld [vmem:[#allocation6 + $0x1208] sm:$0xff]
    %v703 = vld [vmem:[#allocation6 + $0x1210] sm:$0xff]
    %v704 = vld [vmem:[#allocation6 + $0x1218] sm:$0xff]
    %v705 = vld [vmem:[#allocation6 + $0x1220] sm:$0xff]
    %v706 = vld [vmem:[#allocation6 + $0x1228] sm:$0xff]
    %v707 = vld [vmem:[#allocation6 + $0x1230] sm:$0xff]
    %v708 = vld [vmem:[#allocation6 + $0x1238] sm:$0xff]
    %v709 = vld [vmem:[#allocation6 + $0x1240] sm:$0xff]
    %v710 = vld [vmem:[#allocation6 + $0x1248] sm:$0xff]
    %v711 = vld [vmem:[#allocation6 + $0x1250] sm:$0xff]
    %v712 = vld [vmem:[#allocation6 + $0x1258] sm:$0xff]
    %v713 = vld [vmem:[#allocation6 + $0x1260] sm:$0xff]
    %v714 = vld [vmem:[#allocation6 + $0x1268] sm:$0xff]
    %v715 = vld [vmem:[#allocation6 + $0x1270] sm:$0xff]
    %v716 = vld [vmem:[#allocation6 + $0x1278] sm:$0xff]
    %v717 = vld [vmem:[#allocation6 + $0x1280] sm:$0xff]
    %v718 = vld [vmem:[#allocation6 + $0x1288] sm:$0xff]
    %v719 = vld [vmem:[#allocation6 + $0x1290] sm:$0xff]
    %v720 = vld [vmem:[#allocation6 + $0x1298] sm:$0xff]
    %v721 = vld [vmem:[#allocation6 + $0x12a0] sm:$0xff]
    %v722 = vld [vmem:[#allocation6 + $0x12a8] sm:$0xff]
    %v723 = vld [vmem:[#allocation6 + $0x12b0] sm:$0xff]
    %v724 = vld [vmem:[#allocation6 + $0x12b8] sm:$0xff]
    %v725 = vld [vmem:[#allocation6 + $0x12c0] sm:$0xff]
    %v726 = vld [vmem:[#allocation6 + $0x12c8] sm:$0xff]
    %v727 = vld [vmem:[#allocation6 + $0x12d0] sm:$0xff]
    %v728 = vld [vmem:[#allocation6 + $0x12d8] sm:$0xff]
    %v729 = vld [vmem:[#allocation6 + $0x12e0] sm:$0xff]
    %v730 = vld [vmem:[#allocation6 + $0x12e8] sm:$0xff]
    %v731 = vld [vmem:[#allocation6 + $0x12f0] sm:$0xff]
    %v732 = vld [vmem:[#allocation6 + $0x12f8] sm:$0xff]
    %v733 = vld [vmem:[#allocation6 + $0x1300] sm:$0xff]
    %v734 = vld [vmem:[#allocation6 + $0x1308] sm:$0xff]
    %v735 = vld [vmem:[#allocation6 + $0x1310] sm:$0xff]
    %v736 = vld [vmem:[#allocation6 + $0x1318] sm:$0xff]
    %v737 = vld [vmem:[#allocation6 + $0x1320] sm:$0xff]
    %v738 = vld [vmem:[#allocation6 + $0x1328] sm:$0xff]
    %v739 = vld [vmem:[#allocation6 + $0x1330] sm:$0xff]
    %v740 = vld [vmem:[#allocation6 + $0x1338] sm:$0xff]
    %v741 = vld [vmem:[#allocation6 + $0x1340] sm:$0xff]
    %v742 = vld [vmem:[#allocation6 + $0x1348] sm:$0xff]
    %v743 = vld [vmem:[#allocation6 + $0x1350] sm:$0xff]
    %v744 = vld [vmem:[#allocation6 + $0x1358] sm:$0xff]
    %v745 = vld [vmem:[#allocation6 + $0x1360] sm:$0xff]
    %v746 = vld [vmem:[#allocation6 + $0x1368] sm:$0xff]
    %v747 = vld [vmem:[#allocation6 + $0x1370] sm:$0xff]
    %v748 = vld [vmem:[#allocation6 + $0x1378] sm:$0xff]
    %v749 = vld [vmem:[#allocation6 + $0x1380] sm:$0xff]
    %v750 = vld [vmem:[#allocation6 + $0x1388] sm:$0xff]
    %v751 = vld [vmem:[#allocation6 + $0x1390] sm:$0xff]
    %v752 = vld [vmem:[#allocation6 + $0x1398] sm:$0xff]
    %v753 = vld [vmem:[#allocation6 + $0x13a0] sm:$0xff]
    %v754 = vld [vmem:[#allocation6 + $0x13a8] sm:$0xff]
    %v755 = vld [vmem:[#allocation6 + $0x13b0] sm:$0xff]
    %v756 = vld [vmem:[#allocation6 + $0x13b8] sm:$0xff]
    %v757 = vld [vmem:[#allocation6 + $0x13c0] sm:$0xff]
    %v758 = vld [vmem:[#allocation6 + $0x13c8] sm:$0xff]
    %v759 = vld [vmem:[#allocation6 + $0x13d0] sm:$0xff]
    %v760 = vld [vmem:[#allocation6 + $0x13d8] sm:$0xff]
    %v761 = vld [vmem:[#allocation6 + $0x13e0] sm:$0xff]
    %v762 = vld [vmem:[#allocation6 + $0x13e8] sm:$0xff]
    %v763 = vld [vmem:[#allocation6 + $0x13f0] sm:$0xff]
    %v764 = vld [vmem:[#allocation6 + $0x13f8] sm:$0xff]
    %v765 = vld [vmem:[#allocation6 + $0x1400] sm:$0xff]
    %v766 = vld [vmem:[#allocation6 + $0x1408] sm:$0xff]
    %v767 = vld [vmem:[#allocation6 + $0x1410] sm:$0xff]
    %v768 = vld [vmem:[#allocation6 + $0x1418] sm:$0xff]
    %v769 = vld [vmem:[#allocation6 + $0x1420] sm:$0xff]
    %v770 = vld [vmem:[#allocation6 + $0x1428] sm:$0xff]
    %v771 = vld [vmem:[#allocation6 + $0x1430] sm:$0xff]
    %v772 = vld [vmem:[#allocation6 + $0x1438] sm:$0xff]
    %v773 = vld [vmem:[#allocation6 + $0x1440] sm:$0xff]
    %v774 = vld [vmem:[#allocation6 + $0x1448] sm:$0xff]
    %v775 = vld [vmem:[#allocation6 + $0x1450] sm:$0xff]
    %v776 = vld [vmem:[#allocation6 + $0x1458] sm:$0xff]
    %v777 = vld [vmem:[#allocation6 + $0x1460] sm:$0xff]
    %v778 = vld [vmem:[#allocation6 + $0x1468] sm:$0xff]
    %v779 = vld [vmem:[#allocation6 + $0x1470] sm:$0xff]
    %v780 = vld [vmem:[#allocation6 + $0x1478] sm:$0xff]
    %v781 = vld [vmem:[#allocation6 + $0x1480] sm:$0xff]
    %v782 = vld [vmem:[#allocation6 + $0x1488] sm:$0xff]
    %v783 = vld [vmem:[#allocation6 + $0x1490] sm:$0xff]
    %v784 = vld [vmem:[#allocation6 + $0x1498] sm:$0xff]
    %v785 = vld [vmem:[#allocation6 + $0x14a0] sm:$0xff]
    %v786 = vld [vmem:[#allocation6 + $0x14a8] sm:$0xff]
    %v787 = vld [vmem:[#allocation6 + $0x14b0] sm:$0xff]
    %v788 = vld [vmem:[#allocation6 + $0x14b8] sm:$0xff]
    %v789 = vld [vmem:[#allocation6 + $0x14c0] sm:$0xff]
    %v790 = vld [vmem:[#allocation6 + $0x14c8] sm:$0xff]
    %v791 = vld [vmem:[#allocation6 + $0x14d0] sm:$0xff]
    %v792 = vld [vmem:[#allocation6 + $0x14d8] sm:$0xff]
    %v793 = vld [vmem:[#allocation6 + $0x14e0] sm:$0xff]
    %v794 = vld [vmem:[#allocation6 + $0x14e8] sm:$0xff]
    %v795 = vld [vmem:[#allocation6 + $0x14f0] sm:$0xff]
    %v796 = vld [vmem:[#allocation6 + $0x14f8] sm:$0xff]
    %v797 = vld [vmem:[#allocation6 + $0x1500] sm:$0xff]
    %v798 = vld [vmem:[#allocation6 + $0x1508] sm:$0xff]
    %v799 = vld [vmem:[#allocation6 + $0x1510] sm:$0xff]
    %v800 = vld [vmem:[#allocation6 + $0x1518] sm:$0xff]
    %v801 = vld [vmem:[#allocation6 + $0x1520] sm:$0xff]
    %v802 = vld [vmem:[#allocation6 + $0x1528] sm:$0xff]
    %v803 = vld [vmem:[#allocation6 + $0x1530] sm:$0xff]
    %v804 = vld [vmem:[#allocation6 + $0x1538] sm:$0xff]
    %v805 = vld [vmem:[#allocation6 + $0x1540] sm:$0xff]
    %v806 = vld [vmem:[#allocation6 + $0x1548] sm:$0xff]
    %v807 = vld [vmem:[#allocation6 + $0x1550] sm:$0xff]
    %v808 = vld [vmem:[#allocation6 + $0x1558] sm:$0xff]
    %v809 = vld [vmem:[#allocation6 + $0x1560] sm:$0xff]
    %v810 = vld [vmem:[#allocation6 + $0x1568] sm:$0xff]
    %v811 = vld [vmem:[#allocation6 + $0x1570] sm:$0xff]
    %v812 = vld [vmem:[#allocation6 + $0x1578] sm:$0xff]
    %v813 = vld [vmem:[#allocation6 + $0x1580] sm:$0xff]
    %v814 = vld [vmem:[#allocation6 + $0x1588] sm:$0xff]
    %v815 = vld [vmem:[#allocation6 + $0x1590] sm:$0xff]
    %v816 = vld [vmem:[#allocation6 + $0x1598] sm:$0xff]
    %v817 = vld [vmem:[#allocation6 + $0x15a0] sm:$0xff]
    %v818 = vld [vmem:[#allocation6 + $0x15a8] sm:$0xff]
    %v819 = vld [vmem:[#allocation6 + $0x15b0] sm:$0xff]
    %v820 = vld [vmem:[#allocation6 + $0x15b8] sm:$0xff]
    %v821 = vld [vmem:[#allocation6 + $0x15c0] sm:$0xff]
    %v822 = vld [vmem:[#allocation6 + $0x15c8] sm:$0xff]
    %v823 = vld [vmem:[#allocation6 + $0x15d0] sm:$0xff]
    %v824 = vld [vmem:[#allocation6 + $0x15d8] sm:$0xff]
    %v825 = vld [vmem:[#allocation6 + $0x15e0] sm:$0xff]
    %v826 = vld [vmem:[#allocation6 + $0x15e8] sm:$0xff]
    %v827 = vld [vmem:[#allocation6 + $0x15f0] sm:$0xff]
    %v828 = vld [vmem:[#allocation6 + $0x15f8] sm:$0xff]
    %v829 = vld [vmem:[#allocation6 + $0x1600] sm:$0xff]
    %v830 = vld [vmem:[#allocation6 + $0x1608] sm:$0xff]
    %v831 = vld [vmem:[#allocation6 + $0x1610] sm:$0xff]
    %v832 = vld [vmem:[#allocation6 + $0x1618] sm:$0xff]
    %v833 = vld [vmem:[#allocation6 + $0x1620] sm:$0xff]
    %v834 = vld [vmem:[#allocation6 + $0x1628] sm:$0xff]
    %v835 = vld [vmem:[#allocation6 + $0x1630] sm:$0xff]
    %v836 = vld [vmem:[#allocation6 + $0x1638] sm:$0xff]
    %v837 = vld [vmem:[#allocation6 + $0x1640] sm:$0xff]
    %v838 = vld [vmem:[#allocation6 + $0x1648] sm:$0xff]
    %v839 = vld [vmem:[#allocation6 + $0x1650] sm:$0xff]
    %v840 = vld [vmem:[#allocation6 + $0x1658] sm:$0xff]
    %v841 = vld [vmem:[#allocation6 + $0x1660] sm:$0xff]
    %v842 = vld [vmem:[#allocation6 + $0x1668] sm:$0xff]
    %v843 = vld [vmem:[#allocation6 + $0x1670] sm:$0xff]
    %v844 = vld [vmem:[#allocation6 + $0x1678] sm:$0xff]
    %v845 = vld [vmem:[#allocation6 + $0x1680] sm:$0xff]
    %v846 = vld [vmem:[#allocation6 + $0x1688] sm:$0xff]
    %v847 = vld [vmem:[#allocation6 + $0x1690] sm:$0xff]
    %v848 = vld [vmem:[#allocation6 + $0x1698] sm:$0xff]
    %v849 = vld [vmem:[#allocation6 + $0x16a0] sm:$0xff]
    %v850 = vld [vmem:[#allocation6 + $0x16a8] sm:$0xff]
    %v851 = vld [vmem:[#allocation6 + $0x16b0] sm:$0xff]
    %v852 = vld [vmem:[#allocation6 + $0x16b8] sm:$0xff]
    %v853 = vld [vmem:[#allocation6 + $0x16c0] sm:$0xff]
    %v854 = vld [vmem:[#allocation6 + $0x16c8] sm:$0xff]
    %v855 = vld [vmem:[#allocation6 + $0x16d0] sm:$0xff]
    %v856 = vld [vmem:[#allocation6 + $0x16d8] sm:$0xff]
    %v857 = vld [vmem:[#allocation6 + $0x16e0] sm:$0xff]
    %v858 = vld [vmem:[#allocation6 + $0x16e8] sm:$0xff]
    %v859 = vld [vmem:[#allocation6 + $0x16f0] sm:$0xff]
    %v860 = vld [vmem:[#allocation6 + $0x16f8] sm:$0xff]
    %v861 = vld [vmem:[#allocation6 + $0x1700] sm:$0xff]
    %v862 = vld [vmem:[#allocation6 + $0x1708] sm:$0xff]
    %v863 = vld [vmem:[#allocation6 + $0x1710] sm:$0xff]
    %v864 = vld [vmem:[#allocation6 + $0x1718] sm:$0xff]
    %v865 = vld [vmem:[#allocation6 + $0x1720] sm:$0xff]
    %v866 = vld [vmem:[#allocation6 + $0x1728] sm:$0xff]
    %v867 = vld [vmem:[#allocation6 + $0x1730] sm:$0xff]
    %v868 = vld [vmem:[#allocation6 + $0x1738] sm:$0xff]
    %v869 = vld [vmem:[#allocation6 + $0x1740] sm:$0xff]
    %v870 = vld [vmem:[#allocation6 + $0x1748] sm:$0xff]
    %v871 = vld [vmem:[#allocation6 + $0x1750] sm:$0xff]
    %v872 = vld [vmem:[#allocation6 + $0x1758] sm:$0xff]
    %v873 = vld [vmem:[#allocation6 + $0x1760] sm:$0xff]
    %v874 = vld [vmem:[#allocation6 + $0x1768] sm:$0xff]
    %v875 = vld [vmem:[#allocation6 + $0x1770] sm:$0xff]
    %v876 = vld [vmem:[#allocation6 + $0x1778] sm:$0xff]
    %v877 = vld [vmem:[#allocation6 + $0x1780] sm:$0xff]
    %v878 = vld [vmem:[#allocation6 + $0x1788] sm:$0xff]
    %v879 = vld [vmem:[#allocation6 + $0x1790] sm:$0xff]
    %v880 = vld [vmem:[#allocation6 + $0x1798] sm:$0xff]
    %v881 = vld [vmem:[#allocation6 + $0x17a0] sm:$0xff]
    %v882 = vld [vmem:[#allocation6 + $0x17a8] sm:$0xff]
    %v883 = vld [vmem:[#allocation6 + $0x17b0] sm:$0xff]
    %v884 = vld [vmem:[#allocation6 + $0x17b8] sm:$0xff]
    %v885 = vld [vmem:[#allocation6 + $0x17c0] sm:$0xff]
    %v886 = vld [vmem:[#allocation6 + $0x17c8] sm:$0xff]
    %v887 = vld [vmem:[#allocation6 + $0x17d0] sm:$0xff]
    %v888 = vld [vmem:[#allocation6 + $0x17d8] sm:$0xff]
    %v889 = vld [vmem:[#allocation6 + $0x17e0] sm:$0xff]
    %v890 = vld [vmem:[#allocation6 + $0x17e8] sm:$0xff]
    %v891 = vld [vmem:[#allocation6 + $0x17f0] sm:$0xff]
    %v892 = vld [vmem:[#allocation6 + $0x17f8] sm:$0xff]
    %v897 = vunpack.c.l.b16 %v121
    %v898 = vunpack.c.h.b16 %v121
    %v899 = vunpack.c.l.b16 %v122
    %v900 = vunpack.c.h.b16 %v122
    %v901 = vunpack.c.l.b16 %v123
    %v902 = vunpack.c.h.b16 %v123
    %v903 = vunpack.c.l.b16 %v124
    %v904 = vunpack.c.h.b16 %v124
    %v905 = vpack.c.b16 %v897, %v897
    %v906 = vpack.c.b16 %v898, %v898
    %v907 = vpack.c.b16 %v899, %v899
    %v908 = vpack.c.b16 %v900, %v900
    %v909 = vpack.c.b16 %v901, %v901
    %v910 = vpack.c.b16 %v902, %v902
    %v911 = vpack.c.b16 %v903, %v903
    %v912 = vpack.c.b16 %v904, %v904
    %v1689 = vunpack.c.l.b16 %v125
    %v1690 = vunpack.c.h.b16 %v125
    %v1691 = vunpack.c.l.b16 %v126
    %v1692 = vunpack.c.h.b16 %v126
    %v1693 = vunpack.c.l.b16 %v127
    %v1694 = vunpack.c.h.b16 %v127
    %v1695 = vunpack.c.l.b16 %v128
    %v1696 = vunpack.c.h.b16 %v128
    %v1697 = vunpack.c.l.b16 %v129
    %v1698 = vunpack.c.h.b16 %v129
    %v1699 = vunpack.c.l.b16 %v130
    %v1700 = vunpack.c.h.b16 %v130
    %v1701 = vunpack.c.l.b16 %v131
    %v1702 = vunpack.c.h.b16 %v131
    %v1703 = vunpack.c.l.b16 %v132
    %v1704 = vunpack.c.h.b16 %v132
    %v1705 = vunpack.c.l.b16 %v133
    %v1706 = vunpack.c.h.b16 %v133
    %v1707 = vunpack.c.l.b16 %v134
    %v1708 = vunpack.c.h.b16 %v134
    %v1709 = vunpack.c.l.b16 %v135
    %v1710 = vunpack.c.h.b16 %v135
    %v1711 = vunpack.c.l.b16 %v136
    %v1712 = vunpack.c.h.b16 %v136
    %v1713 = vunpack.c.l.b16 %v137
    %v1714 = vunpack.c.h.b16 %v137
    %v1715 = vunpack.c.l.b16 %v138
    %v1716 = vunpack.c.h.b16 %v138
    %v1717 = vunpack.c.l.b16 %v139
    %v1718 = vunpack.c.h.b16 %v139
    %v1719 = vunpack.c.l.b16 %v140
    %v1720 = vunpack.c.h.b16 %v140
    %v1721 = vunpack.c.l.b16 %v141
    %v1722 = vunpack.c.h.b16 %v141
    %v1723 = vunpack.c.l.b16 %v142
    %v1724 = vunpack.c.h.b16 %v142
    %v1725 = vunpack.c.l.b16 %v143
    %v1726 = vunpack.c.h.b16 %v143
    %v1727 = vunpack.c.l.b16 %v144
    %v1728 = vunpack.c.h.b16 %v144
    %v1729 = vunpack.c.l.b16 %v145
    %v1730 = vunpack.c.h.b16 %v145
    %v1731 = vunpack.c.l.b16 %v146
    %v1732 = vunpack.c.h.b16 %v146
    %v1733 = vunpack.c.l.b16 %v147
    %v1734 = vunpack.c.h.b16 %v147
    %v1735 = vunpack.c.l.b16 %v148
    %v1736 = vunpack.c.h.b16 %v148
    %v1737 = vunpack.c.l.b16 %v149
    %v1738 = vunpack.c.h.b16 %v149
    %v1739 = vunpack.c.l.b16 %v150
    %v1740 = vunpack.c.h.b16 %v150
    %v1741 = vunpack.c.l.b16 %v151
    %v1742 = vunpack.c.h.b16 %v151
    %v1743 = vunpack.c.l.b16 %v152
    %v1744 = vunpack.c.h.b16 %v152
    %v1745 = vunpack.c.l.b16 %v153
    %v1746 = vunpack.c.h.b16 %v153
    %v1747 = vunpack.c.l.b16 %v154
    %v1748 = vunpack.c.h.b16 %v154
    %v1749 = vunpack.c.l.b16 %v155
    %v1750 = vunpack.c.h.b16 %v155
    %v1751 = vunpack.c.l.b16 %v156
    %v1752 = vunpack.c.h.b16 %v156
    %v1753 = vunpack.c.l.b16 %v157
    %v1754 = vunpack.c.h.b16 %v157
    %v1755 = vunpack.c.l.b16 %v158
    %v1756 = vunpack.c.h.b16 %v158
    %v1757 = vunpack.c.l.b16 %v159
    %v1758 = vunpack.c.h.b16 %v159
    %v1759 = vunpack.c.l.b16 %v160
    %v1760 = vunpack.c.h.b16 %v160
    %v1761 = vunpack.c.l.b16 %v161
    %v1762 = vunpack.c.h.b16 %v161
    %v1763 = vunpack.c.l.b16 %v162
    %v1764 = vunpack.c.h.b16 %v162
    %v1765 = vunpack.c.l.b16 %v163
    %v1766 = vunpack.c.h.b16 %v163
    %v1767 = vunpack.c.l.b16 %v164
    %v1768 = vunpack.c.h.b16 %v164
    %v1769 = vunpack.c.l.b16 %v165
    %v1770 = vunpack.c.h.b16 %v165
    %v1771 = vunpack.c.l.b16 %v166
    %v1772 = vunpack.c.h.b16 %v166
    %v1773 = vunpack.c.l.b16 %v167
    %v1774 = vunpack.c.h.b16 %v167
    %v1775 = vunpack.c.l.b16 %v168
    %v1776 = vunpack.c.h.b16 %v168
    %v1777 = vunpack.c.l.b16 %v169
    %v1778 = vunpack.c.h.b16 %v169
    %v1779 = vunpack.c.l.b16 %v170
    %v1780 = vunpack.c.h.b16 %v170
    %v1781 = vunpack.c.l.b16 %v171
    %v1782 = vunpack.c.h.b16 %v171
    %v1783 = vunpack.c.l.b16 %v172
    %v1784 = vunpack.c.h.b16 %v172
    %v1785 = vunpack.c.l.b16 %v173
    %v1786 = vunpack.c.h.b16 %v173
    %v1787 = vunpack.c.l.b16 %v174
    %v1788 = vunpack.c.h.b16 %v174
    %v1789 = vunpack.c.l.b16 %v175
    %v1790 = vunpack.c.h.b16 %v175
    %v1791 = vunpack.c.l.b16 %v176
    %v1792 = vunpack.c.h.b16 %v176
    %v1793 = vunpack.c.l.b16 %v177
    %v1794 = vunpack.c.h.b16 %v177
    %v1795 = vunpack.c.l.b16 %v178
    %v1796 = vunpack.c.h.b16 %v178
    %v1797 = vunpack.c.l.b16 %v179
    %v1798 = vunpack.c.h.b16 %v179
    %v1799 = vunpack.c.l.b16 %v180
    %v1800 = vunpack.c.h.b16 %v180
    %v1801 = vunpack.c.l.b16 %v181
    %v1802 = vunpack.c.h.b16 %v181
    %v1803 = vunpack.c.l.b16 %v182
    %v1804 = vunpack.c.h.b16 %v182
    %v1805 = vunpack.c.l.b16 %v183
    %v1806 = vunpack.c.h.b16 %v183
    %v1807 = vunpack.c.l.b16 %v184
    %v1808 = vunpack.c.h.b16 %v184
    %v1809 = vunpack.c.l.b16 %v185
    %v1810 = vunpack.c.h.b16 %v185
    %v1811 = vunpack.c.l.b16 %v186
    %v1812 = vunpack.c.h.b16 %v186
    %v1813 = vunpack.c.l.b16 %v187
    %v1814 = vunpack.c.h.b16 %v187
    %v1815 = vunpack.c.l.b16 %v188
    %v1816 = vunpack.c.h.b16 %v188
    %v1817 = vunpack.c.l.b16 %v189
    %v1818 = vunpack.c.h.b16 %v189
    %v1819 = vunpack.c.l.b16 %v190
    %v1820 = vunpack.c.h.b16 %v190
    %v1821 = vunpack.c.l.b16 %v191
    %v1822 = vunpack.c.h.b16 %v191
    %v1823 = vunpack.c.l.b16 %v192
    %v1824 = vunpack.c.h.b16 %v192
    %v1825 = vunpack.c.l.b16 %v193
    %v1826 = vunpack.c.h.b16 %v193
    %v1827 = vunpack.c.l.b16 %v194
    %v1828 = vunpack.c.h.b16 %v194
    %v1829 = vunpack.c.l.b16 %v195
    %v1830 = vunpack.c.h.b16 %v195
    %v1831 = vunpack.c.l.b16 %v196
    %v1832 = vunpack.c.h.b16 %v196
    %v1833 = vunpack.c.l.b16 %v197
    %v1834 = vunpack.c.h.b16 %v197
    %v1835 = vunpack.c.l.b16 %v198
    %v1836 = vunpack.c.h.b16 %v198
    %v1837 = vunpack.c.l.b16 %v199
    %v1838 = vunpack.c.h.b16 %v199
    %v1839 = vunpack.c.l.b16 %v200
    %v1840 = vunpack.c.h.b16 %v200
    %v1841 = vunpack.c.l.b16 %v201
    %v1842 = vunpack.c.h.b16 %v201
    %v1843 = vunpack.c.l.b16 %v202
    %v1844 = vunpack.c.h.b16 %v202
    %v1845 = vunpack.c.l.b16 %v203
    %v1846 = vunpack.c.h.b16 %v203
    %v1847 = vunpack.c.l.b16 %v204
    %v1848 = vunpack.c.h.b16 %v204
    %v1849 = vunpack.c.l.b16 %v205
    %v1850 = vunpack.c.h.b16 %v205
    %v1851 = vunpack.c.l.b16 %v206
    %v1852 = vunpack.c.h.b16 %v206
    %v1853 = vunpack.c.l.b16 %v207
    %v1854 = vunpack.c.h.b16 %v207
    %v1855 = vunpack.c.l.b16 %v208
    %v1856 = vunpack.c.h.b16 %v208
    %v1857 = vunpack.c.l.b16 %v209
    %v1858 = vunpack.c.h.b16 %v209
    %v1859 = vunpack.c.l.b16 %v210
    %v1860 = vunpack.c.h.b16 %v210
    %v1861 = vunpack.c.l.b16 %v211
    %v1862 = vunpack.c.h.b16 %v211
    %v1863 = vunpack.c.l.b16 %v212
    %v1864 = vunpack.c.h.b16 %v212
    %v1865 = vunpack.c.l.b16 %v213
    %v1866 = vunpack.c.h.b16 %v213
    %v1867 = vunpack.c.l.b16 %v214
    %v1868 = vunpack.c.h.b16 %v214
    %v1869 = vunpack.c.l.b16 %v215
    %v1870 = vunpack.c.h.b16 %v215
    %v1871 = vunpack.c.l.b16 %v216
    %v1872 = vunpack.c.h.b16 %v216
    %v1873 = vunpack.c.l.b16 %v217
    %v1874 = vunpack.c.h.b16 %v217
    %v1875 = vunpack.c.l.b16 %v218
    %v1876 = vunpack.c.h.b16 %v218
    %v1877 = vunpack.c.l.b16 %v219
    %v1878 = vunpack.c.h.b16 %v219
    %v1879 = vunpack.c.l.b16 %v220
    %v1880 = vunpack.c.h.b16 %v220
    %v1881 = vunpack.c.l.b16 %v221
    %v1882 = vunpack.c.h.b16 %v221
    %v1883 = vunpack.c.l.b16 %v222
    %v1884 = vunpack.c.h.b16 %v222
    %v1885 = vunpack.c.l.b16 %v223
    %v1886 = vunpack.c.h.b16 %v223
    %v1887 = vunpack.c.l.b16 %v224
    %v1888 = vunpack.c.h.b16 %v224
    %v1889 = vunpack.c.l.b16 %v225
    %v1890 = vunpack.c.h.b16 %v225
    %v1891 = vunpack.c.l.b16 %v226
    %v1892 = vunpack.c.h.b16 %v226
    %v1893 = vunpack.c.l.b16 %v227
    %v1894 = vunpack.c.h.b16 %v227
    %v1895 = vunpack.c.l.b16 %v228
    %v1896 = vunpack.c.h.b16 %v228
    %v1897 = vunpack.c.l.b16 %v229
    %v1898 = vunpack.c.h.b16 %v229
    %v1899 = vunpack.c.l.b16 %v230
    %v1900 = vunpack.c.h.b16 %v230
    %v1901 = vunpack.c.l.b16 %v231
    %v1902 = vunpack.c.h.b16 %v231
    %v1903 = vunpack.c.l.b16 %v232
    %v1904 = vunpack.c.h.b16 %v232
    %v1905 = vunpack.c.l.b16 %v233
    %v1906 = vunpack.c.h.b16 %v233
    %v1907 = vunpack.c.l.b16 %v234
    %v1908 = vunpack.c.h.b16 %v234
    %v1909 = vunpack.c.l.b16 %v235
    %v1910 = vunpack.c.h.b16 %v235
    %v1911 = vunpack.c.l.b16 %v236
    %v1912 = vunpack.c.h.b16 %v236
    %v1913 = vunpack.c.l.b16 %v237
    %v1914 = vunpack.c.h.b16 %v237
    %v1915 = vunpack.c.l.b16 %v238
    %v1916 = vunpack.c.h.b16 %v238
    %v1917 = vunpack.c.l.b16 %v239
    %v1918 = vunpack.c.h.b16 %v239
    %v1919 = vunpack.c.l.b16 %v240
    %v1920 = vunpack.c.h.b16 %v240
    %v1921 = vunpack.c.l.b16 %v241
    %v1922 = vunpack.c.h.b16 %v241
    %v1923 = vunpack.c.l.b16 %v242
    %v1924 = vunpack.c.h.b16 %v242
    %v1925 = vunpack.c.l.b16 %v243
    %v1926 = vunpack.c.h.b16 %v243
    %v1927 = vunpack.c.l.b16 %v244
    %v1928 = vunpack.c.h.b16 %v244
    %v1929 = vunpack.c.l.b16 %v245
    %v1930 = vunpack.c.h.b16 %v245
    %v1931 = vunpack.c.l.b16 %v246
    %v1932 = vunpack.c.h.b16 %v246
    %v1933 = vunpack.c.l.b16 %v247
    %v1934 = vunpack.c.h.b16 %v247
    %v1935 = vunpack.c.l.b16 %v248
    %v1936 = vunpack.c.h.b16 %v248
    %v1937 = vunpack.c.l.b16 %v249
    %v1938 = vunpack.c.h.b16 %v249
    %v1939 = vunpack.c.l.b16 %v250
    %v1940 = vunpack.c.h.b16 %v250
    %v1941 = vunpack.c.l.b16 %v251
    %v1942 = vunpack.c.h.b16 %v251
    %v1943 = vunpack.c.l.b16 %v252
    %v1944 = vunpack.c.h.b16 %v252
    %v1945 = vunpack.c.l.b16 %v253
    %v1946 = vunpack.c.h.b16 %v253
    %v1947 = vunpack.c.l.b16 %v254
    %v1948 = vunpack.c.h.b16 %v254
    %v1949 = vunpack.c.l.b16 %v255
    %v1950 = vunpack.c.h.b16 %v255
    %v1951 = vunpack.c.l.b16 %v256
    %v1952 = vunpack.c.h.b16 %v256
    %v1953 = vunpack.c.l.b16 %v257
    %v1954 = vunpack.c.h.b16 %v257
    %v1955 = vunpack.c.l.b16 %v258
    %v1956 = vunpack.c.h.b16 %v258
    %v1957 = vunpack.c.l.b16 %v259
    %v1958 = vunpack.c.h.b16 %v259
    %v1959 = vunpack.c.l.b16 %v260
    %v1960 = vunpack.c.h.b16 %v260
    %v1961 = vunpack.c.l.b16 %v261
    %v1962 = vunpack.c.h.b16 %v261
    %v1963 = vunpack.c.l.b16 %v262
    %v1964 = vunpack.c.h.b16 %v262
    %v1965 = vunpack.c.l.b16 %v263
    %v1966 = vunpack.c.h.b16 %v263
    %v1967 = vunpack.c.l.b16 %v264
    %v1968 = vunpack.c.h.b16 %v264
    %v1969 = vunpack.c.l.b16 %v265
    %v1970 = vunpack.c.h.b16 %v265
    %v1971 = vunpack.c.l.b16 %v266
    %v1972 = vunpack.c.h.b16 %v266
    %v1973 = vunpack.c.l.b16 %v267
    %v1974 = vunpack.c.h.b16 %v267
    %v1975 = vunpack.c.l.b16 %v268
    %v1976 = vunpack.c.h.b16 %v268
    %v1977 = vunpack.c.l.b16 %v269
    %v1978 = vunpack.c.h.b16 %v269
    %v1979 = vunpack.c.l.b16 %v270
    %v1980 = vunpack.c.h.b16 %v270
    %v1981 = vunpack.c.l.b16 %v271
    %v1982 = vunpack.c.h.b16 %v271
    %v1983 = vunpack.c.l.b16 %v272
    %v1984 = vunpack.c.h.b16 %v272
    %v1985 = vunpack.c.l.b16 %v273
    %v1986 = vunpack.c.h.b16 %v273
    %v1987 = vunpack.c.l.b16 %v274
    %v1988 = vunpack.c.h.b16 %v274
    %v1989 = vunpack.c.l.b16 %v275
    %v1990 = vunpack.c.h.b16 %v275
    %v1991 = vunpack.c.l.b16 %v276
    %v1992 = vunpack.c.h.b16 %v276
    %v1993 = vunpack.c.l.b16 %v277
    %v1994 = vunpack.c.h.b16 %v277
    %v1995 = vunpack.c.l.b16 %v278
    %v1996 = vunpack.c.h.b16 %v278
    %v1997 = vunpack.c.l.b16 %v279
    %v1998 = vunpack.c.h.b16 %v279
    %v1999 = vunpack.c.l.b16 %v280
    %v2000 = vunpack.c.h.b16 %v280
    %v2001 = vunpack.c.l.b16 %v281
    %v2002 = vunpack.c.h.b16 %v281
    %v2003 = vunpack.c.l.b16 %v282
    %v2004 = vunpack.c.h.b16 %v282
    %v2005 = vunpack.c.l.b16 %v283
    %v2006 = vunpack.c.h.b16 %v283
    %v2007 = vunpack.c.l.b16 %v284
    %v2008 = vunpack.c.h.b16 %v284
    %v2009 = vunpack.c.l.b16 %v285
    %v2010 = vunpack.c.h.b16 %v285
    %v2011 = vunpack.c.l.b16 %v286
    %v2012 = vunpack.c.h.b16 %v286
    %v2013 = vunpack.c.l.b16 %v287
    %v2014 = vunpack.c.h.b16 %v287
    %v2015 = vunpack.c.l.b16 %v288
    %v2016 = vunpack.c.h.b16 %v288
    %v2017 = vunpack.c.l.b16 %v289
    %v2018 = vunpack.c.h.b16 %v289
    %v2019 = vunpack.c.l.b16 %v290
    %v2020 = vunpack.c.h.b16 %v290
    %v2021 = vunpack.c.l.b16 %v291
    %v2022 = vunpack.c.h.b16 %v291
    %v2023 = vunpack.c.l.b16 %v292
    %v2024 = vunpack.c.h.b16 %v292
    %v2025 = vunpack.c.l.b16 %v293
    %v2026 = vunpack.c.h.b16 %v293
    %v2027 = vunpack.c.l.b16 %v294
    %v2028 = vunpack.c.h.b16 %v294
    %v2029 = vunpack.c.l.b16 %v295
    %v2030 = vunpack.c.h.b16 %v295
    %v2031 = vunpack.c.l.b16 %v296
    %v2032 = vunpack.c.h.b16 %v296
    %v2033 = vunpack.c.l.b16 %v297
    %v2034 = vunpack.c.h.b16 %v297
    %v2035 = vunpack.c.l.b16 %v298
    %v2036 = vunpack.c.h.b16 %v298
    %v2037 = vunpack.c.l.b16 %v299
    %v2038 = vunpack.c.h.b16 %v299
    %v2039 = vunpack.c.l.b16 %v300
    %v2040 = vunpack.c.h.b16 %v300
    %v2041 = vunpack.c.l.b16 %v301
    %v2042 = vunpack.c.h.b16 %v301
    %v2043 = vunpack.c.l.b16 %v302
    %v2044 = vunpack.c.h.b16 %v302
    %v2045 = vunpack.c.l.b16 %v303
    %v2046 = vunpack.c.h.b16 %v303
    %v2047 = vunpack.c.l.b16 %v304
    %v2048 = vunpack.c.h.b16 %v304
    %v2049 = vunpack.c.l.b16 %v305
    %v2050 = vunpack.c.h.b16 %v305
    %v2051 = vunpack.c.l.b16 %v306
    %v2052 = vunpack.c.h.b16 %v306
    %v2053 = vunpack.c.l.b16 %v307
    %v2054 = vunpack.c.h.b16 %v307
    %v2055 = vunpack.c.l.b16 %v308
    %v2056 = vunpack.c.h.b16 %v308
    %v2057 = vunpack.c.l.b16 %v309
    %v2058 = vunpack.c.h.b16 %v309
    %v2059 = vunpack.c.l.b16 %v310
    %v2060 = vunpack.c.h.b16 %v310
    %v2061 = vunpack.c.l.b16 %v311
    %v2062 = vunpack.c.h.b16 %v311
    %v2063 = vunpack.c.l.b16 %v312
    %v2064 = vunpack.c.h.b16 %v312
    %v2065 = vunpack.c.l.b16 %v313
    %v2066 = vunpack.c.h.b16 %v313
    %v2067 = vunpack.c.l.b16 %v314
    %v2068 = vunpack.c.h.b16 %v314
    %v2069 = vunpack.c.l.b16 %v315
    %v2070 = vunpack.c.h.b16 %v315
    %v2071 = vunpack.c.l.b16 %v316
    %v2072 = vunpack.c.h.b16 %v316
    %v2073 = vunpack.c.l.b16 %v317
    %v2074 = vunpack.c.h.b16 %v317
    %v2075 = vunpack.c.l.b16 %v318
    %v2076 = vunpack.c.h.b16 %v318
    %v2077 = vunpack.c.l.b16 %v319
    %v2078 = vunpack.c.h.b16 %v319
    %v2079 = vunpack.c.l.b16 %v320
    %v2080 = vunpack.c.h.b16 %v320
    %v2081 = vunpack.c.l.b16 %v321
    %v2082 = vunpack.c.h.b16 %v321
    %v2083 = vunpack.c.l.b16 %v322
    %v2084 = vunpack.c.h.b16 %v322
    %v2085 = vunpack.c.l.b16 %v323
    %v2086 = vunpack.c.h.b16 %v323
    %v2087 = vunpack.c.l.b16 %v324
    %v2088 = vunpack.c.h.b16 %v324
    %v2089 = vunpack.c.l.b16 %v325
    %v2090 = vunpack.c.h.b16 %v325
    %v2091 = vunpack.c.l.b16 %v326
    %v2092 = vunpack.c.h.b16 %v326
    %v2093 = vunpack.c.l.b16 %v327
    %v2094 = vunpack.c.h.b16 %v327
    %v2095 = vunpack.c.l.b16 %v328
    %v2096 = vunpack.c.h.b16 %v328
    %v2097 = vunpack.c.l.b16 %v329
    %v2098 = vunpack.c.h.b16 %v329
    %v2099 = vunpack.c.l.b16 %v330
    %v2100 = vunpack.c.h.b16 %v330
    %v2101 = vunpack.c.l.b16 %v331
    %v2102 = vunpack.c.h.b16 %v331
    %v2103 = vunpack.c.l.b16 %v332
    %v2104 = vunpack.c.h.b16 %v332
    %v2105 = vunpack.c.l.b16 %v333
    %v2106 = vunpack.c.h.b16 %v333
    %v2107 = vunpack.c.l.b16 %v334
    %v2108 = vunpack.c.h.b16 %v334
    %v2109 = vunpack.c.l.b16 %v335
    %v2110 = vunpack.c.h.b16 %v335
    %v2111 = vunpack.c.l.b16 %v336
    %v2112 = vunpack.c.h.b16 %v336
    %v2113 = vunpack.c.l.b16 %v337
    %v2114 = vunpack.c.h.b16 %v337
    %v2115 = vunpack.c.l.b16 %v338
    %v2116 = vunpack.c.h.b16 %v338
    %v2117 = vunpack.c.l.b16 %v339
    %v2118 = vunpack.c.h.b16 %v339
    %v2119 = vunpack.c.l.b16 %v340
    %v2120 = vunpack.c.h.b16 %v340
    %v2121 = vunpack.c.l.b16 %v341
    %v2122 = vunpack.c.h.b16 %v341
    %v2123 = vunpack.c.l.b16 %v342
    %v2124 = vunpack.c.h.b16 %v342
    %v2125 = vunpack.c.l.b16 %v343
    %v2126 = vunpack.c.h.b16 %v343
    %v2127 = vunpack.c.l.b16 %v344
    %v2128 = vunpack.c.h.b16 %v344
    %v2129 = vunpack.c.l.b16 %v345
    %v2130 = vunpack.c.h.b16 %v345
    %v2131 = vunpack.c.l.b16 %v346
    %v2132 = vunpack.c.h.b16 %v346
    %v2133 = vunpack.c.l.b16 %v347
    %v2134 = vunpack.c.h.b16 %v347
    %v2135 = vunpack.c.l.b16 %v348
    %v2136 = vunpack.c.h.b16 %v348
    %v2137 = vunpack.c.l.b16 %v349
    %v2138 = vunpack.c.h.b16 %v349
    %v2139 = vunpack.c.l.b16 %v350
    %v2140 = vunpack.c.h.b16 %v350
    %v2141 = vunpack.c.l.b16 %v351
    %v2142 = vunpack.c.h.b16 %v351
    %v2143 = vunpack.c.l.b16 %v352
    %v2144 = vunpack.c.h.b16 %v352
    %v2145 = vunpack.c.l.b16 %v353
    %v2146 = vunpack.c.h.b16 %v353
    %v2147 = vunpack.c.l.b16 %v354
    %v2148 = vunpack.c.h.b16 %v354
    %v2149 = vunpack.c.l.b16 %v355
    %v2150 = vunpack.c.h.b16 %v355
    %v2151 = vunpack.c.l.b16 %v356
    %v2152 = vunpack.c.h.b16 %v356
    %v2153 = vunpack.c.l.b16 %v357
    %v2154 = vunpack.c.h.b16 %v357
    %v2155 = vunpack.c.l.b16 %v358
    %v2156 = vunpack.c.h.b16 %v358
    %v2157 = vunpack.c.l.b16 %v359
    %v2158 = vunpack.c.h.b16 %v359
    %v2159 = vunpack.c.l.b16 %v360
    %v2160 = vunpack.c.h.b16 %v360
    %v2161 = vunpack.c.l.b16 %v361
    %v2162 = vunpack.c.h.b16 %v361
    %v2163 = vunpack.c.l.b16 %v362
    %v2164 = vunpack.c.h.b16 %v362
    %v2165 = vunpack.c.l.b16 %v363
    %v2166 = vunpack.c.h.b16 %v363
    %v2167 = vunpack.c.l.b16 %v364
    %v2168 = vunpack.c.h.b16 %v364
    %v2169 = vunpack.c.l.b16 %v365
    %v2170 = vunpack.c.h.b16 %v365
    %v2171 = vunpack.c.l.b16 %v366
    %v2172 = vunpack.c.h.b16 %v366
    %v2173 = vunpack.c.l.b16 %v367
    %v2174 = vunpack.c.h.b16 %v367
    %v2175 = vunpack.c.l.b16 %v368
    %v2176 = vunpack.c.h.b16 %v368
    %v2177 = vunpack.c.l.b16 %v369
    %v2178 = vunpack.c.h.b16 %v369
    %v2179 = vunpack.c.l.b16 %v370
    %v2180 = vunpack.c.h.b16 %v370
    %v2181 = vunpack.c.l.b16 %v371
    %v2182 = vunpack.c.h.b16 %v371
    %v2183 = vunpack.c.l.b16 %v372
    %v2184 = vunpack.c.h.b16 %v372
    %v2185 = vunpack.c.l.b16 %v373
    %v2186 = vunpack.c.h.b16 %v373
    %v2187 = vunpack.c.l.b16 %v374
    %v2188 = vunpack.c.h.b16 %v374
    %v2189 = vunpack.c.l.b16 %v375
    %v2190 = vunpack.c.h.b16 %v375
    %v2191 = vunpack.c.l.b16 %v376
    %v2192 = vunpack.c.h.b16 %v376
    %v2193 = vunpack.c.l.b16 %v377
    %v2194 = vunpack.c.h.b16 %v377
    %v2195 = vunpack.c.l.b16 %v378
    %v2196 = vunpack.c.h.b16 %v378
    %v2197 = vunpack.c.l.b16 %v379
    %v2198 = vunpack.c.h.b16 %v379
    %v2199 = vunpack.c.l.b16 %v380
    %v2200 = vunpack.c.h.b16 %v380
    %v2201 = vunpack.c.l.b16 %v381
    %v2202 = vunpack.c.h.b16 %v381
    %v2203 = vunpack.c.l.b16 %v382
    %v2204 = vunpack.c.h.b16 %v382
    %v2205 = vunpack.c.l.b16 %v383
    %v2206 = vunpack.c.h.b16 %v383
    %v2207 = vunpack.c.l.b16 %v384
    %v2208 = vunpack.c.h.b16 %v384
    %v2209 = vunpack.c.l.b16 %v385
    %v2210 = vunpack.c.h.b16 %v385
    %v2211 = vunpack.c.l.b16 %v386
    %v2212 = vunpack.c.h.b16 %v386
    %v2213 = vunpack.c.l.b16 %v387
    %v2214 = vunpack.c.h.b16 %v387
    %v2215 = vunpack.c.l.b16 %v388
    %v2216 = vunpack.c.h.b16 %v388
    %v2217 = vunpack.c.l.b16 %v389
    %v2218 = vunpack.c.h.b16 %v389
    %v2219 = vunpack.c.l.b16 %v390
    %v2220 = vunpack.c.h.b16 %v390
    %v2221 = vunpack.c.l.b16 %v391
    %v2222 = vunpack.c.h.b16 %v391
    %v2223 = vunpack.c.l.b16 %v392
    %v2224 = vunpack.c.h.b16 %v392
    %v2225 = vunpack.c.l.b16 %v393
    %v2226 = vunpack.c.h.b16 %v393
    %v2227 = vunpack.c.l.b16 %v394
    %v2228 = vunpack.c.h.b16 %v394
    %v2229 = vunpack.c.l.b16 %v395
    %v2230 = vunpack.c.h.b16 %v395
    %v2231 = vunpack.c.l.b16 %v396
    %v2232 = vunpack.c.h.b16 %v396
    %v2233 = vunpack.c.l.b16 %v397
    %v2234 = vunpack.c.h.b16 %v397
    %v2235 = vunpack.c.l.b16 %v398
    %v2236 = vunpack.c.h.b16 %v398
    %v2237 = vunpack.c.l.b16 %v399
    %v2238 = vunpack.c.h.b16 %v399
    %v2239 = vunpack.c.l.b16 %v400
    %v2240 = vunpack.c.h.b16 %v400
    %v2241 = vunpack.c.l.b16 %v401
    %v2242 = vunpack.c.h.b16 %v401
    %v2243 = vunpack.c.l.b16 %v402
    %v2244 = vunpack.c.h.b16 %v402
    %v2245 = vunpack.c.l.b16 %v403
    %v2246 = vunpack.c.h.b16 %v403
    %v2247 = vunpack.c.l.b16 %v404
    %v2248 = vunpack.c.h.b16 %v404
    %v2249 = vunpack.c.l.b16 %v405
    %v2250 = vunpack.c.h.b16 %v405
    %v2251 = vunpack.c.l.b16 %v406
    %v2252 = vunpack.c.h.b16 %v406
    %v2253 = vunpack.c.l.b16 %v407
    %v2254 = vunpack.c.h.b16 %v407
    %v2255 = vunpack.c.l.b16 %v408
    %v2256 = vunpack.c.h.b16 %v408
    %v2257 = vunpack.c.l.b16 %v409
    %v2258 = vunpack.c.h.b16 %v409
    %v2259 = vunpack.c.l.b16 %v410
    %v2260 = vunpack.c.h.b16 %v410
    %v2261 = vunpack.c.l.b16 %v411
    %v2262 = vunpack.c.h.b16 %v411
    %v2263 = vunpack.c.l.b16 %v412
    %v2264 = vunpack.c.h.b16 %v412
    %v2265 = vunpack.c.l.b16 %v413
    %v2266 = vunpack.c.h.b16 %v413
    %v2267 = vunpack.c.l.b16 %v414
    %v2268 = vunpack.c.h.b16 %v414
    %v2269 = vunpack.c.l.b16 %v415
    %v2270 = vunpack.c.h.b16 %v415
    %v2271 = vunpack.c.l.b16 %v416
    %v2272 = vunpack.c.h.b16 %v416
    %v2273 = vunpack.c.l.b16 %v417
    %v2274 = vunpack.c.h.b16 %v417
    %v2275 = vunpack.c.l.b16 %v418
    %v2276 = vunpack.c.h.b16 %v418
    %v2277 = vunpack.c.l.b16 %v419
    %v2278 = vunpack.c.h.b16 %v419
    %v2279 = vunpack.c.l.b16 %v420
    %v2280 = vunpack.c.h.b16 %v420
    %v2281 = vunpack.c.l.b16 %v421
    %v2282 = vunpack.c.h.b16 %v421
    %v2283 = vunpack.c.l.b16 %v422
    %v2284 = vunpack.c.h.b16 %v422
    %v2285 = vunpack.c.l.b16 %v423
    %v2286 = vunpack.c.h.b16 %v423
    %v2287 = vunpack.c.l.b16 %v424
    %v2288 = vunpack.c.h.b16 %v424
    %v2289 = vunpack.c.l.b16 %v425
    %v2290 = vunpack.c.h.b16 %v425
    %v2291 = vunpack.c.l.b16 %v426
    %v2292 = vunpack.c.h.b16 %v426
    %v2293 = vunpack.c.l.b16 %v427
    %v2294 = vunpack.c.h.b16 %v427
    %v2295 = vunpack.c.l.b16 %v428
    %v2296 = vunpack.c.h.b16 %v428
    %v2297 = vunpack.c.l.b16 %v429
    %v2298 = vunpack.c.h.b16 %v429
    %v2299 = vunpack.c.l.b16 %v430
    %v2300 = vunpack.c.h.b16 %v430
    %v2301 = vunpack.c.l.b16 %v431
    %v2302 = vunpack.c.h.b16 %v431
    %v2303 = vunpack.c.l.b16 %v432
    %v2304 = vunpack.c.h.b16 %v432
    %v2305 = vunpack.c.l.b16 %v433
    %v2306 = vunpack.c.h.b16 %v433
    %v2307 = vunpack.c.l.b16 %v434
    %v2308 = vunpack.c.h.b16 %v434
    %v2309 = vunpack.c.l.b16 %v435
    %v2310 = vunpack.c.h.b16 %v435
    %v2311 = vunpack.c.l.b16 %v436
    %v2312 = vunpack.c.h.b16 %v436
    %v2313 = vunpack.c.l.b16 %v437
    %v2314 = vunpack.c.h.b16 %v437
    %v2315 = vunpack.c.l.b16 %v438
    %v2316 = vunpack.c.h.b16 %v438
    %v2317 = vunpack.c.l.b16 %v439
    %v2318 = vunpack.c.h.b16 %v439
    %v2319 = vunpack.c.l.b16 %v440
    %v2320 = vunpack.c.h.b16 %v440
    %v2321 = vunpack.c.l.b16 %v441
    %v2322 = vunpack.c.h.b16 %v441
    %v2323 = vunpack.c.l.b16 %v442
    %v2324 = vunpack.c.h.b16 %v442
    %v2325 = vunpack.c.l.b16 %v443
    %v2326 = vunpack.c.h.b16 %v443
    %v2327 = vunpack.c.l.b16 %v444
    %v2328 = vunpack.c.h.b16 %v444
    %v2329 = vunpack.c.l.b16 %v445
    %v2330 = vunpack.c.h.b16 %v445
    %v2331 = vunpack.c.l.b16 %v446
    %v2332 = vunpack.c.h.b16 %v446
    %v2333 = vunpack.c.l.b16 %v447
    %v2334 = vunpack.c.h.b16 %v447
    %v2335 = vunpack.c.l.b16 %v448
    %v2336 = vunpack.c.h.b16 %v448
    %v2337 = vunpack.c.l.b16 %v449
    %v2338 = vunpack.c.h.b16 %v449
    %v2339 = vunpack.c.l.b16 %v450
    %v2340 = vunpack.c.h.b16 %v450
    %v2341 = vunpack.c.l.b16 %v451
    %v2342 = vunpack.c.h.b16 %v451
    %v2343 = vunpack.c.l.b16 %v452
    %v2344 = vunpack.c.h.b16 %v452
    %v2345 = vunpack.c.l.b16 %v453
    %v2346 = vunpack.c.h.b16 %v453
    %v2347 = vunpack.c.l.b16 %v454
    %v2348 = vunpack.c.h.b16 %v454
    %v2349 = vunpack.c.l.b16 %v455
    %v2350 = vunpack.c.h.b16 %v455
    %v2351 = vunpack.c.l.b16 %v456
    %v2352 = vunpack.c.h.b16 %v456
    %v2353 = vunpack.c.l.b16 %v457
    %v2354 = vunpack.c.h.b16 %v457
    %v2355 = vunpack.c.l.b16 %v458
    %v2356 = vunpack.c.h.b16 %v458
    %v2357 = vunpack.c.l.b16 %v459
    %v2358 = vunpack.c.h.b16 %v459
    %v2359 = vunpack.c.l.b16 %v460
    %v2360 = vunpack.c.h.b16 %v460
    %v2361 = vunpack.c.l.b16 %v461
    %v2362 = vunpack.c.h.b16 %v461
    %v2363 = vunpack.c.l.b16 %v462
    %v2364 = vunpack.c.h.b16 %v462
    %v2365 = vunpack.c.l.b16 %v463
    %v2366 = vunpack.c.h.b16 %v463
    %v2367 = vunpack.c.l.b16 %v464
    %v2368 = vunpack.c.h.b16 %v464
    %v2369 = vunpack.c.l.b16 %v465
    %v2370 = vunpack.c.h.b16 %v465
    %v2371 = vunpack.c.l.b16 %v466
    %v2372 = vunpack.c.h.b16 %v466
    %v2373 = vunpack.c.l.b16 %v467
    %v2374 = vunpack.c.h.b16 %v467
    %v2375 = vunpack.c.l.b16 %v468
    %v2376 = vunpack.c.h.b16 %v468
    %v2377 = vunpack.c.l.b16 %v469
    %v2378 = vunpack.c.h.b16 %v469
    %v2379 = vunpack.c.l.b16 %v470
    %v2380 = vunpack.c.h.b16 %v470
    %v2381 = vunpack.c.l.b16 %v471
    %v2382 = vunpack.c.h.b16 %v471
    %v2383 = vunpack.c.l.b16 %v472
    %v2384 = vunpack.c.h.b16 %v472
    %v2385 = vunpack.c.l.b16 %v473
    %v2386 = vunpack.c.h.b16 %v473
    %v2387 = vunpack.c.l.b16 %v474
    %v2388 = vunpack.c.h.b16 %v474
    %v2389 = vunpack.c.l.b16 %v475
    %v2390 = vunpack.c.h.b16 %v475
    %v2391 = vunpack.c.l.b16 %v476
    %v2392 = vunpack.c.h.b16 %v476
    %v2393 = vunpack.c.l.b16 %v477
    %v2394 = vunpack.c.h.b16 %v477
    %v2395 = vunpack.c.l.b16 %v478
    %v2396 = vunpack.c.h.b16 %v478
    %v2397 = vunpack.c.l.b16 %v479
    %v2398 = vunpack.c.h.b16 %v479
    %v2399 = vunpack.c.l.b16 %v480
    %v2400 = vunpack.c.h.b16 %v480
    %v2401 = vunpack.c.l.b16 %v481
    %v2402 = vunpack.c.h.b16 %v481
    %v2403 = vunpack.c.l.b16 %v482
    %v2404 = vunpack.c.h.b16 %v482
    %v2405 = vunpack.c.l.b16 %v483
    %v2406 = vunpack.c.h.b16 %v483
    %v2407 = vunpack.c.l.b16 %v484
    %v2408 = vunpack.c.h.b16 %v484
    %v2409 = vunpack.c.l.b16 %v485
    %v2410 = vunpack.c.h.b16 %v485
    %v2411 = vunpack.c.l.b16 %v486
    %v2412 = vunpack.c.h.b16 %v486
    %v2413 = vunpack.c.l.b16 %v487
    %v2414 = vunpack.c.h.b16 %v487
    %v2415 = vunpack.c.l.b16 %v488
    %v2416 = vunpack.c.h.b16 %v488
    %v2417 = vunpack.c.l.b16 %v489
    %v2418 = vunpack.c.h.b16 %v489
    %v2419 = vunpack.c.l.b16 %v490
    %v2420 = vunpack.c.h.b16 %v490
    %v2421 = vunpack.c.l.b16 %v491
    %v2422 = vunpack.c.h.b16 %v491
    %v2423 = vunpack.c.l.b16 %v492
    %v2424 = vunpack.c.h.b16 %v492
    %v2425 = vunpack.c.l.b16 %v493
    %v2426 = vunpack.c.h.b16 %v493
    %v2427 = vunpack.c.l.b16 %v494
    %v2428 = vunpack.c.h.b16 %v494
    %v2429 = vunpack.c.l.b16 %v495
    %v2430 = vunpack.c.h.b16 %v495
    %v2431 = vunpack.c.l.b16 %v496
    %v2432 = vunpack.c.h.b16 %v496
    %v2433 = vunpack.c.l.b16 %v497
    %v2434 = vunpack.c.h.b16 %v497
    %v2435 = vunpack.c.l.b16 %v498
    %v2436 = vunpack.c.h.b16 %v498
    %v2437 = vunpack.c.l.b16 %v499
    %v2438 = vunpack.c.h.b16 %v499
    %v2439 = vunpack.c.l.b16 %v500
    %v2440 = vunpack.c.h.b16 %v500
    %v2441 = vunpack.c.l.b16 %v501
    %v2442 = vunpack.c.h.b16 %v501
    %v2443 = vunpack.c.l.b16 %v502
    %v2444 = vunpack.c.h.b16 %v502
    %v2445 = vunpack.c.l.b16 %v503
    %v2446 = vunpack.c.h.b16 %v503
    %v2447 = vunpack.c.l.b16 %v504
    %v2448 = vunpack.c.h.b16 %v504
    %v2449 = vunpack.c.l.b16 %v505
    %v2450 = vunpack.c.h.b16 %v505
    %v2451 = vunpack.c.l.b16 %v506
    %v2452 = vunpack.c.h.b16 %v506
    %v2453 = vunpack.c.l.b16 %v507
    %v2454 = vunpack.c.h.b16 %v507
    %v2455 = vunpack.c.l.b16 %v508
    %v2456 = vunpack.c.h.b16 %v508
    %v2457 = vunpack.c.l.b16 %v509
    %v2458 = vunpack.c.h.b16 %v509
    %v2459 = vunpack.c.l.b16 %v510
    %v2460 = vunpack.c.h.b16 %v510
    %v2461 = vunpack.c.l.b16 %v511
    %v2462 = vunpack.c.h.b16 %v511
    %v2463 = vunpack.c.l.b16 %v512
    %v2464 = vunpack.c.h.b16 %v512
    %v2465 = vunpack.c.l.b16 %v513
    %v2466 = vunpack.c.h.b16 %v513
    %v2467 = vunpack.c.l.b16 %v514
    %v2468 = vunpack.c.h.b16 %v514
    %v2469 = vunpack.c.l.b16 %v515
    %v2470 = vunpack.c.h.b16 %v515
    %v2471 = vunpack.c.l.b16 %v516
    %v2472 = vunpack.c.h.b16 %v516
    %v2473 = vunpack.c.l.b16 %v517
    %v2474 = vunpack.c.h.b16 %v517
    %v2475 = vunpack.c.l.b16 %v518
    %v2476 = vunpack.c.h.b16 %v518
    %v2477 = vunpack.c.l.b16 %v519
    %v2478 = vunpack.c.h.b16 %v519
    %v2479 = vunpack.c.l.b16 %v520
    %v2480 = vunpack.c.h.b16 %v520
    %v2481 = vunpack.c.l.b16 %v521
    %v2482 = vunpack.c.h.b16 %v521
    %v2483 = vunpack.c.l.b16 %v522
    %v2484 = vunpack.c.h.b16 %v522
    %v2485 = vunpack.c.l.b16 %v523
    %v2486 = vunpack.c.h.b16 %v523
    %v2487 = vunpack.c.l.b16 %v524
    %v2488 = vunpack.c.h.b16 %v524
    %v2489 = vunpack.c.l.b16 %v525
    %v2490 = vunpack.c.h.b16 %v525
    %v2491 = vunpack.c.l.b16 %v526
    %v2492 = vunpack.c.h.b16 %v526
    %v2493 = vunpack.c.l.b16 %v527
    %v2494 = vunpack.c.h.b16 %v527
    %v2495 = vunpack.c.l.b16 %v528
    %v2496 = vunpack.c.h.b16 %v528
    %v2497 = vunpack.c.l.b16 %v529
    %v2498 = vunpack.c.h.b16 %v529
    %v2499 = vunpack.c.l.b16 %v530
    %v2500 = vunpack.c.h.b16 %v530
    %v2501 = vunpack.c.l.b16 %v531
    %v2502 = vunpack.c.h.b16 %v531
    %v2503 = vunpack.c.l.b16 %v532
    %v2504 = vunpack.c.h.b16 %v532
    %v2505 = vunpack.c.l.b16 %v533
    %v2506 = vunpack.c.h.b16 %v533
    %v2507 = vunpack.c.l.b16 %v534
    %v2508 = vunpack.c.h.b16 %v534
    %v2509 = vunpack.c.l.b16 %v535
    %v2510 = vunpack.c.h.b16 %v535
    %v2511 = vunpack.c.l.b16 %v536
    %v2512 = vunpack.c.h.b16 %v536
    %v2513 = vunpack.c.l.b16 %v537
    %v2514 = vunpack.c.h.b16 %v537
    %v2515 = vunpack.c.l.b16 %v538
    %v2516 = vunpack.c.h.b16 %v538
    %v2517 = vunpack.c.l.b16 %v539
    %v2518 = vunpack.c.h.b16 %v539
    %v2519 = vunpack.c.l.b16 %v540
    %v2520 = vunpack.c.h.b16 %v540
    %v2521 = vunpack.c.l.b16 %v541
    %v2522 = vunpack.c.h.b16 %v541
    %v2523 = vunpack.c.l.b16 %v542
    %v2524 = vunpack.c.h.b16 %v542
    %v2525 = vunpack.c.l.b16 %v543
    %v2526 = vunpack.c.h.b16 %v543
    %v2527 = vunpack.c.l.b16 %v544
    %v2528 = vunpack.c.h.b16 %v544
    %v2529 = vunpack.c.l.b16 %v545
    %v2530 = vunpack.c.h.b16 %v545
    %v2531 = vunpack.c.l.b16 %v546
    %v2532 = vunpack.c.h.b16 %v546
    %v2533 = vunpack.c.l.b16 %v547
    %v2534 = vunpack.c.h.b16 %v547
    %v2535 = vunpack.c.l.b16 %v548
    %v2536 = vunpack.c.h.b16 %v548
    %v2537 = vunpack.c.l.b16 %v549
    %v2538 = vunpack.c.h.b16 %v549
    %v2539 = vunpack.c.l.b16 %v550
    %v2540 = vunpack.c.h.b16 %v550
    %v2541 = vunpack.c.l.b16 %v551
    %v2542 = vunpack.c.h.b16 %v551
    %v2543 = vunpack.c.l.b16 %v552
    %v2544 = vunpack.c.h.b16 %v552
    %v2545 = vunpack.c.l.b16 %v553
    %v2546 = vunpack.c.h.b16 %v553
    %v2547 = vunpack.c.l.b16 %v554
    %v2548 = vunpack.c.h.b16 %v554
    %v2549 = vunpack.c.l.b16 %v555
    %v2550 = vunpack.c.h.b16 %v555
    %v2551 = vunpack.c.l.b16 %v556
    %v2552 = vunpack.c.h.b16 %v556
    %v2553 = vunpack.c.l.b16 %v557
    %v2554 = vunpack.c.h.b16 %v557
    %v2555 = vunpack.c.l.b16 %v558
    %v2556 = vunpack.c.h.b16 %v558
    %v2557 = vunpack.c.l.b16 %v559
    %v2558 = vunpack.c.h.b16 %v559
    %v2559 = vunpack.c.l.b16 %v560
    %v2560 = vunpack.c.h.b16 %v560
    %v2561 = vunpack.c.l.b16 %v561
    %v2562 = vunpack.c.h.b16 %v561
    %v2563 = vunpack.c.l.b16 %v562
    %v2564 = vunpack.c.h.b16 %v562
    %v2565 = vunpack.c.l.b16 %v563
    %v2566 = vunpack.c.h.b16 %v563
    %v2567 = vunpack.c.l.b16 %v564
    %v2568 = vunpack.c.h.b16 %v564
    %v2569 = vunpack.c.l.b16 %v565
    %v2570 = vunpack.c.h.b16 %v565
    %v2571 = vunpack.c.l.b16 %v566
    %v2572 = vunpack.c.h.b16 %v566
    %v2573 = vunpack.c.l.b16 %v567
    %v2574 = vunpack.c.h.b16 %v567
    %v2575 = vunpack.c.l.b16 %v568
    %v2576 = vunpack.c.h.b16 %v568
    %v2577 = vunpack.c.l.b16 %v569
    %v2578 = vunpack.c.h.b16 %v569
    %v2579 = vunpack.c.l.b16 %v570
    %v2580 = vunpack.c.h.b16 %v570
    %v2581 = vunpack.c.l.b16 %v571
    %v2582 = vunpack.c.h.b16 %v571
    %v2583 = vunpack.c.l.b16 %v572
    %v2584 = vunpack.c.h.b16 %v572
    %v2585 = vunpack.c.l.b16 %v573
    %v2586 = vunpack.c.h.b16 %v573
    %v2587 = vunpack.c.l.b16 %v574
    %v2588 = vunpack.c.h.b16 %v574
    %v2589 = vunpack.c.l.b16 %v575
    %v2590 = vunpack.c.h.b16 %v575
    %v2591 = vunpack.c.l.b16 %v576
    %v2592 = vunpack.c.h.b16 %v576
    %v2593 = vunpack.c.l.b16 %v577
    %v2594 = vunpack.c.h.b16 %v577
    %v2595 = vunpack.c.l.b16 %v578
    %v2596 = vunpack.c.h.b16 %v578
    %v2597 = vunpack.c.l.b16 %v579
    %v2598 = vunpack.c.h.b16 %v579
    %v2599 = vunpack.c.l.b16 %v580
    %v2600 = vunpack.c.h.b16 %v580
    %v2601 = vunpack.c.l.b16 %v581
    %v2602 = vunpack.c.h.b16 %v581
    %v2603 = vunpack.c.l.b16 %v582
    %v2604 = vunpack.c.h.b16 %v582
    %v2605 = vunpack.c.l.b16 %v583
    %v2606 = vunpack.c.h.b16 %v583
    %v2607 = vunpack.c.l.b16 %v584
    %v2608 = vunpack.c.h.b16 %v584
    %v2609 = vunpack.c.l.b16 %v585
    %v2610 = vunpack.c.h.b16 %v585
    %v2611 = vunpack.c.l.b16 %v586
    %v2612 = vunpack.c.h.b16 %v586
    %v2613 = vunpack.c.l.b16 %v587
    %v2614 = vunpack.c.h.b16 %v587
    %v2615 = vunpack.c.l.b16 %v588
    %v2616 = vunpack.c.h.b16 %v588
    %v2617 = vunpack.c.l.b16 %v589
    %v2618 = vunpack.c.h.b16 %v589
    %v2619 = vunpack.c.l.b16 %v590
    %v2620 = vunpack.c.h.b16 %v590
    %v2621 = vunpack.c.l.b16 %v591
    %v2622 = vunpack.c.h.b16 %v591
    %v2623 = vunpack.c.l.b16 %v592
    %v2624 = vunpack.c.h.b16 %v592
    %v2625 = vunpack.c.l.b16 %v593
    %v2626 = vunpack.c.h.b16 %v593
    %v2627 = vunpack.c.l.b16 %v594
    %v2628 = vunpack.c.h.b16 %v594
    %v2629 = vunpack.c.l.b16 %v595
    %v2630 = vunpack.c.h.b16 %v595
    %v2631 = vunpack.c.l.b16 %v596
    %v2632 = vunpack.c.h.b16 %v596
    %v2633 = vunpack.c.l.b16 %v597
    %v2634 = vunpack.c.h.b16 %v597
    %v2635 = vunpack.c.l.b16 %v598
    %v2636 = vunpack.c.h.b16 %v598
    %v2637 = vunpack.c.l.b16 %v599
    %v2638 = vunpack.c.h.b16 %v599
    %v2639 = vunpack.c.l.b16 %v600
    %v2640 = vunpack.c.h.b16 %v600
    %v2641 = vunpack.c.l.b16 %v601
    %v2642 = vunpack.c.h.b16 %v601
    %v2643 = vunpack.c.l.b16 %v602
    %v2644 = vunpack.c.h.b16 %v602
    %v2645 = vunpack.c.l.b16 %v603
    %v2646 = vunpack.c.h.b16 %v603
    %v2647 = vunpack.c.l.b16 %v604
    %v2648 = vunpack.c.h.b16 %v604
    %v2649 = vunpack.c.l.b16 %v605
    %v2650 = vunpack.c.h.b16 %v605
    %v2651 = vunpack.c.l.b16 %v606
    %v2652 = vunpack.c.h.b16 %v606
    %v2653 = vunpack.c.l.b16 %v607
    %v2654 = vunpack.c.h.b16 %v607
    %v2655 = vunpack.c.l.b16 %v608
    %v2656 = vunpack.c.h.b16 %v608
    %v2657 = vunpack.c.l.b16 %v609
    %v2658 = vunpack.c.h.b16 %v609
    %v2659 = vunpack.c.l.b16 %v610
    %v2660 = vunpack.c.h.b16 %v610
    %v2661 = vunpack.c.l.b16 %v611
    %v2662 = vunpack.c.h.b16 %v611
    %v2663 = vunpack.c.l.b16 %v612
    %v2664 = vunpack.c.h.b16 %v612
    %v2665 = vunpack.c.l.b16 %v613
    %v2666 = vunpack.c.h.b16 %v613
    %v2667 = vunpack.c.l.b16 %v614
    %v2668 = vunpack.c.h.b16 %v614
    %v2669 = vunpack.c.l.b16 %v615
    %v2670 = vunpack.c.h.b16 %v615
    %v2671 = vunpack.c.l.b16 %v616
    %v2672 = vunpack.c.h.b16 %v616
    %v2673 = vunpack.c.l.b16 %v617
    %v2674 = vunpack.c.h.b16 %v617
    %v2675 = vunpack.c.l.b16 %v618
    %v2676 = vunpack.c.h.b16 %v618
    %v2677 = vunpack.c.l.b16 %v619
    %v2678 = vunpack.c.h.b16 %v619
    %v2679 = vunpack.c.l.b16 %v620
    %v2680 = vunpack.c.h.b16 %v620
    %v2681 = vunpack.c.l.b16 %v621
    %v2682 = vunpack.c.h.b16 %v621
    %v2683 = vunpack.c.l.b16 %v622
    %v2684 = vunpack.c.h.b16 %v622
    %v2685 = vunpack.c.l.b16 %v623
    %v2686 = vunpack.c.h.b16 %v623
    %v2687 = vunpack.c.l.b16 %v624
    %v2688 = vunpack.c.h.b16 %v624
    %v2689 = vunpack.c.l.b16 %v625
    %v2690 = vunpack.c.h.b16 %v625
    %v2691 = vunpack.c.l.b16 %v626
    %v2692 = vunpack.c.h.b16 %v626
    %v2693 = vunpack.c.l.b16 %v627
    %v2694 = vunpack.c.h.b16 %v627
    %v2695 = vunpack.c.l.b16 %v628
    %v2696 = vunpack.c.h.b16 %v628
    %v2697 = vunpack.c.l.b16 %v629
    %v2698 = vunpack.c.h.b16 %v629
    %v2699 = vunpack.c.l.b16 %v630
    %v2700 = vunpack.c.h.b16 %v630
    %v2701 = vunpack.c.l.b16 %v631
    %v2702 = vunpack.c.h.b16 %v631
    %v2703 = vunpack.c.l.b16 %v632
    %v2704 = vunpack.c.h.b16 %v632
    %v2705 = vunpack.c.l.b16 %v633
    %v2706 = vunpack.c.h.b16 %v633
    %v2707 = vunpack.c.l.b16 %v634
    %v2708 = vunpack.c.h.b16 %v634
    %v2709 = vunpack.c.l.b16 %v635
    %v2710 = vunpack.c.h.b16 %v635
    %v2711 = vunpack.c.l.b16 %v636
    %v2712 = vunpack.c.h.b16 %v636
    %v2713 = vunpack.c.l.b16 %v637
    %v2714 = vunpack.c.h.b16 %v637
    %v2715 = vunpack.c.l.b16 %v638
    %v2716 = vunpack.c.h.b16 %v638
    %v2717 = vunpack.c.l.b16 %v639
    %v2718 = vunpack.c.h.b16 %v639
    %v2719 = vunpack.c.l.b16 %v640
    %v2720 = vunpack.c.h.b16 %v640
    %v2721 = vunpack.c.l.b16 %v641
    %v2722 = vunpack.c.h.b16 %v641
    %v2723 = vunpack.c.l.b16 %v642
    %v2724 = vunpack.c.h.b16 %v642
    %v2725 = vunpack.c.l.b16 %v643
    %v2726 = vunpack.c.h.b16 %v643
    %v2727 = vunpack.c.l.b16 %v644
    %v2728 = vunpack.c.h.b16 %v644
    %v2729 = vunpack.c.l.b16 %v645
    %v2730 = vunpack.c.h.b16 %v645
    %v2731 = vunpack.c.l.b16 %v646
    %v2732 = vunpack.c.h.b16 %v646
    %v2733 = vunpack.c.l.b16 %v647
    %v2734 = vunpack.c.h.b16 %v647
    %v2735 = vunpack.c.l.b16 %v648
    %v2736 = vunpack.c.h.b16 %v648
    %v2737 = vunpack.c.l.b16 %v649
    %v2738 = vunpack.c.h.b16 %v649
    %v2739 = vunpack.c.l.b16 %v650
    %v2740 = vunpack.c.h.b16 %v650
    %v2741 = vunpack.c.l.b16 %v651
    %v2742 = vunpack.c.h.b16 %v651
    %v2743 = vunpack.c.l.b16 %v652
    %v2744 = vunpack.c.h.b16 %v652
    %v2745 = vunpack.c.l.b16 %v653
    %v2746 = vunpack.c.h.b16 %v653
    %v2747 = vunpack.c.l.b16 %v654
    %v2748 = vunpack.c.h.b16 %v654
    %v2749 = vunpack.c.l.b16 %v655
    %v2750 = vunpack.c.h.b16 %v655
    %v2751 = vunpack.c.l.b16 %v656
    %v2752 = vunpack.c.h.b16 %v656
    %v2753 = vunpack.c.l.b16 %v657
    %v2754 = vunpack.c.h.b16 %v657
    %v2755 = vunpack.c.l.b16 %v658
    %v2756 = vunpack.c.h.b16 %v658
    %v2757 = vunpack.c.l.b16 %v659
    %v2758 = vunpack.c.h.b16 %v659
    %v2759 = vunpack.c.l.b16 %v660
    %v2760 = vunpack.c.h.b16 %v660
    %v2761 = vunpack.c.l.b16 %v661
    %v2762 = vunpack.c.h.b16 %v661
    %v2763 = vunpack.c.l.b16 %v662
    %v2764 = vunpack.c.h.b16 %v662
    %v2765 = vunpack.c.l.b16 %v663
    %v2766 = vunpack.c.h.b16 %v663
    %v2767 = vunpack.c.l.b16 %v664
    %v2768 = vunpack.c.h.b16 %v664
    %v2769 = vunpack.c.l.b16 %v665
    %v2770 = vunpack.c.h.b16 %v665
    %v2771 = vunpack.c.l.b16 %v666
    %v2772 = vunpack.c.h.b16 %v666
    %v2773 = vunpack.c.l.b16 %v667
    %v2774 = vunpack.c.h.b16 %v667
    %v2775 = vunpack.c.l.b16 %v668
    %v2776 = vunpack.c.h.b16 %v668
    %v2777 = vunpack.c.l.b16 %v669
    %v2778 = vunpack.c.h.b16 %v669
    %v2779 = vunpack.c.l.b16 %v670
    %v2780 = vunpack.c.h.b16 %v670
    %v2781 = vunpack.c.l.b16 %v671
    %v2782 = vunpack.c.h.b16 %v671
    %v2783 = vunpack.c.l.b16 %v672
    %v2784 = vunpack.c.h.b16 %v672
    %v2785 = vunpack.c.l.b16 %v673
    %v2786 = vunpack.c.h.b16 %v673
    %v2787 = vunpack.c.l.b16 %v674
    %v2788 = vunpack.c.h.b16 %v674
    %v2789 = vunpack.c.l.b16 %v675
    %v2790 = vunpack.c.h.b16 %v675
    %v2791 = vunpack.c.l.b16 %v676
    %v2792 = vunpack.c.h.b16 %v676
    %v2793 = vunpack.c.l.b16 %v677
    %v2794 = vunpack.c.h.b16 %v677
    %v2795 = vunpack.c.l.b16 %v678
    %v2796 = vunpack.c.h.b16 %v678
    %v2797 = vunpack.c.l.b16 %v679
    %v2798 = vunpack.c.h.b16 %v679
    %v2799 = vunpack.c.l.b16 %v680
    %v2800 = vunpack.c.h.b16 %v680
    %v2801 = vunpack.c.l.b16 %v681
    %v2802 = vunpack.c.h.b16 %v681
    %v2803 = vunpack.c.l.b16 %v682
    %v2804 = vunpack.c.h.b16 %v682
    %v2805 = vunpack.c.l.b16 %v683
    %v2806 = vunpack.c.h.b16 %v683
    %v2807 = vunpack.c.l.b16 %v684
    %v2808 = vunpack.c.h.b16 %v684
    %v2809 = vunpack.c.l.b16 %v685
    %v2810 = vunpack.c.h.b16 %v685
    %v2811 = vunpack.c.l.b16 %v686
    %v2812 = vunpack.c.h.b16 %v686
    %v2813 = vunpack.c.l.b16 %v687
    %v2814 = vunpack.c.h.b16 %v687
    %v2815 = vunpack.c.l.b16 %v688
    %v2816 = vunpack.c.h.b16 %v688
    %v2817 = vunpack.c.l.b16 %v689
    %v2818 = vunpack.c.h.b16 %v689
    %v2819 = vunpack.c.l.b16 %v690
    %v2820 = vunpack.c.h.b16 %v690
    %v2821 = vunpack.c.l.b16 %v691
    %v2822 = vunpack.c.h.b16 %v691
    %v2823 = vunpack.c.l.b16 %v692
    %v2824 = vunpack.c.h.b16 %v692
    %v2825 = vunpack.c.l.b16 %v693
    %v2826 = vunpack.c.h.b16 %v693
    %v2827 = vunpack.c.l.b16 %v694
    %v2828 = vunpack.c.h.b16 %v694
    %v2829 = vunpack.c.l.b16 %v695
    %v2830 = vunpack.c.h.b16 %v695
    %v2831 = vunpack.c.l.b16 %v696
    %v2832 = vunpack.c.h.b16 %v696
    %v2833 = vunpack.c.l.b16 %v697
    %v2834 = vunpack.c.h.b16 %v697
    %v2835 = vunpack.c.l.b16 %v698
    %v2836 = vunpack.c.h.b16 %v698
    %v2837 = vunpack.c.l.b16 %v699
    %v2838 = vunpack.c.h.b16 %v699
    %v2839 = vunpack.c.l.b16 %v700
    %v2840 = vunpack.c.h.b16 %v700
    %v2841 = vunpack.c.l.b16 %v701
    %v2842 = vunpack.c.h.b16 %v701
    %v2843 = vunpack.c.l.b16 %v702
    %v2844 = vunpack.c.h.b16 %v702
    %v2845 = vunpack.c.l.b16 %v703
    %v2846 = vunpack.c.h.b16 %v703
    %v2847 = vunpack.c.l.b16 %v704
    %v2848 = vunpack.c.h.b16 %v704
    %v2849 = vunpack.c.l.b16 %v705
    %v2850 = vunpack.c.h.b16 %v705
    %v2851 = vunpack.c.l.b16 %v706
    %v2852 = vunpack.c.h.b16 %v706
    %v2853 = vunpack.c.l.b16 %v707
    %v2854 = vunpack.c.h.b16 %v707
    %v2855 = vunpack.c.l.b16 %v708
    %v2856 = vunpack.c.h.b16 %v708
    %v2857 = vunpack.c.l.b16 %v709
    %v2858 = vunpack.c.h.b16 %v709
    %v2859 = vunpack.c.l.b16 %v710
    %v2860 = vunpack.c.h.b16 %v710
    %v2861 = vunpack.c.l.b16 %v711
    %v2862 = vunpack.c.h.b16 %v711
    %v2863 = vunpack.c.l.b16 %v712
    %v2864 = vunpack.c.h.b16 %v712
    %v2865 = vunpack.c.l.b16 %v713
    %v2866 = vunpack.c.h.b16 %v713
    %v2867 = vunpack.c.l.b16 %v714
    %v2868 = vunpack.c.h.b16 %v714
    %v2869 = vunpack.c.l.b16 %v715
    %v2870 = vunpack.c.h.b16 %v715
    %v2871 = vunpack.c.l.b16 %v716
    %v2872 = vunpack.c.h.b16 %v716
    %v2873 = vunpack.c.l.b16 %v717
    %v2874 = vunpack.c.h.b16 %v717
    %v2875 = vunpack.c.l.b16 %v718
    %v2876 = vunpack.c.h.b16 %v718
    %v2877 = vunpack.c.l.b16 %v719
    %v2878 = vunpack.c.h.b16 %v719
    %v2879 = vunpack.c.l.b16 %v720
    %v2880 = vunpack.c.h.b16 %v720
    %v2881 = vunpack.c.l.b16 %v721
    %v2882 = vunpack.c.h.b16 %v721
    %v2883 = vunpack.c.l.b16 %v722
    %v2884 = vunpack.c.h.b16 %v722
    %v2885 = vunpack.c.l.b16 %v723
    %v2886 = vunpack.c.h.b16 %v723
    %v2887 = vunpack.c.l.b16 %v724
    %v2888 = vunpack.c.h.b16 %v724
    %v2889 = vunpack.c.l.b16 %v725
    %v2890 = vunpack.c.h.b16 %v725
    %v2891 = vunpack.c.l.b16 %v726
    %v2892 = vunpack.c.h.b16 %v726
    %v2893 = vunpack.c.l.b16 %v727
    %v2894 = vunpack.c.h.b16 %v727
    %v2895 = vunpack.c.l.b16 %v728
    %v2896 = vunpack.c.h.b16 %v728
    %v2897 = vunpack.c.l.b16 %v729
    %v2898 = vunpack.c.h.b16 %v729
    %v2899 = vunpack.c.l.b16 %v730
    %v2900 = vunpack.c.h.b16 %v730
    %v2901 = vunpack.c.l.b16 %v731
    %v2902 = vunpack.c.h.b16 %v731
    %v2903 = vunpack.c.l.b16 %v732
    %v2904 = vunpack.c.h.b16 %v732
    %v2905 = vunpack.c.l.b16 %v733
    %v2906 = vunpack.c.h.b16 %v733
    %v2907 = vunpack.c.l.b16 %v734
    %v2908 = vunpack.c.h.b16 %v734
    %v2909 = vunpack.c.l.b16 %v735
    %v2910 = vunpack.c.h.b16 %v735
    %v2911 = vunpack.c.l.b16 %v736
    %v2912 = vunpack.c.h.b16 %v736
    %v2913 = vunpack.c.l.b16 %v737
    %v2914 = vunpack.c.h.b16 %v737
    %v2915 = vunpack.c.l.b16 %v738
    %v2916 = vunpack.c.h.b16 %v738
    %v2917 = vunpack.c.l.b16 %v739
    %v2918 = vunpack.c.h.b16 %v739
    %v2919 = vunpack.c.l.b16 %v740
    %v2920 = vunpack.c.h.b16 %v740
    %v2921 = vunpack.c.l.b16 %v741
    %v2922 = vunpack.c.h.b16 %v741
    %v2923 = vunpack.c.l.b16 %v742
    %v2924 = vunpack.c.h.b16 %v742
    %v2925 = vunpack.c.l.b16 %v743
    %v2926 = vunpack.c.h.b16 %v743
    %v2927 = vunpack.c.l.b16 %v744
    %v2928 = vunpack.c.h.b16 %v744
    %v2929 = vunpack.c.l.b16 %v745
    %v2930 = vunpack.c.h.b16 %v745
    %v2931 = vunpack.c.l.b16 %v746
    %v2932 = vunpack.c.h.b16 %v746
    %v2933 = vunpack.c.l.b16 %v747
    %v2934 = vunpack.c.h.b16 %v747
    %v2935 = vunpack.c.l.b16 %v748
    %v2936 = vunpack.c.h.b16 %v748
    %v2937 = vunpack.c.l.b16 %v749
    %v2938 = vunpack.c.h.b16 %v749
    %v2939 = vunpack.c.l.b16 %v750
    %v2940 = vunpack.c.h.b16 %v750
    %v2941 = vunpack.c.l.b16 %v751
    %v2942 = vunpack.c.h.b16 %v751
    %v2943 = vunpack.c.l.b16 %v752
    %v2944 = vunpack.c.h.b16 %v752
    %v2945 = vunpack.c.l.b16 %v753
    %v2946 = vunpack.c.h.b16 %v753
    %v2947 = vunpack.c.l.b16 %v754
    %v2948 = vunpack.c.h.b16 %v754
    %v2949 = vunpack.c.l.b16 %v755
    %v2950 = vunpack.c.h.b16 %v755
    %v2951 = vunpack.c.l.b16 %v756
    %v2952 = vunpack.c.h.b16 %v756
    %v2953 = vunpack.c.l.b16 %v757
    %v2954 = vunpack.c.h.b16 %v757
    %v2955 = vunpack.c.l.b16 %v758
    %v2956 = vunpack.c.h.b16 %v758
    %v2957 = vunpack.c.l.b16 %v759
    %v2958 = vunpack.c.h.b16 %v759
    %v2959 = vunpack.c.l.b16 %v760
    %v2960 = vunpack.c.h.b16 %v760
    %v2961 = vunpack.c.l.b16 %v761
    %v2962 = vunpack.c.h.b16 %v761
    %v2963 = vunpack.c.l.b16 %v762
    %v2964 = vunpack.c.h.b16 %v762
    %v2965 = vunpack.c.l.b16 %v763
    %v2966 = vunpack.c.h.b16 %v763
    %v2967 = vunpack.c.l.b16 %v764
    %v2968 = vunpack.c.h.b16 %v764
    %v2969 = vunpack.c.l.b16 %v765
    %v2970 = vunpack.c.h.b16 %v765
    %v2971 = vunpack.c.l.b16 %v766
    %v2972 = vunpack.c.h.b16 %v766
    %v2973 = vunpack.c.l.b16 %v767
    %v2974 = vunpack.c.h.b16 %v767
    %v2975 = vunpack.c.l.b16 %v768
    %v2976 = vunpack.c.h.b16 %v768
    %v2977 = vunpack.c.l.b16 %v769
    %v2978 = vunpack.c.h.b16 %v769
    %v2979 = vunpack.c.l.b16 %v770
    %v2980 = vunpack.c.h.b16 %v770
    %v2981 = vunpack.c.l.b16 %v771
    %v2982 = vunpack.c.h.b16 %v771
    %v2983 = vunpack.c.l.b16 %v772
    %v2984 = vunpack.c.h.b16 %v772
    %v2985 = vunpack.c.l.b16 %v773
    %v2986 = vunpack.c.h.b16 %v773
    %v2987 = vunpack.c.l.b16 %v774
    %v2988 = vunpack.c.h.b16 %v774
    %v2989 = vunpack.c.l.b16 %v775
    %v2990 = vunpack.c.h.b16 %v775
    %v2991 = vunpack.c.l.b16 %v776
    %v2992 = vunpack.c.h.b16 %v776
    %v2993 = vunpack.c.l.b16 %v777
    %v2994 = vunpack.c.h.b16 %v777
    %v2995 = vunpack.c.l.b16 %v778
    %v2996 = vunpack.c.h.b16 %v778
    %v2997 = vunpack.c.l.b16 %v779
    %v2998 = vunpack.c.h.b16 %v779
    %v2999 = vunpack.c.l.b16 %v780
    %v3000 = vunpack.c.h.b16 %v780
    %v3001 = vunpack.c.l.b16 %v781
    %v3002 = vunpack.c.h.b16 %v781
    %v3003 = vunpack.c.l.b16 %v782
    %v3004 = vunpack.c.h.b16 %v782
    %v3005 = vunpack.c.l.b16 %v783
    %v3006 = vunpack.c.h.b16 %v783
    %v3007 = vunpack.c.l.b16 %v784
    %v3008 = vunpack.c.h.b16 %v784
    %v3009 = vunpack.c.l.b16 %v785
    %v3010 = vunpack.c.h.b16 %v785
    %v3011 = vunpack.c.l.b16 %v786
    %v3012 = vunpack.c.h.b16 %v786
    %v3013 = vunpack.c.l.b16 %v787
    %v3014 = vunpack.c.h.b16 %v787
    %v3015 = vunpack.c.l.b16 %v788
    %v3016 = vunpack.c.h.b16 %v788
    %v3017 = vunpack.c.l.b16 %v789
    %v3018 = vunpack.c.h.b16 %v789
    %v3019 = vunpack.c.l.b16 %v790
    %v3020 = vunpack.c.h.b16 %v790
    %v3021 = vunpack.c.l.b16 %v791
    %v3022 = vunpack.c.h.b16 %v791
    %v3023 = vunpack.c.l.b16 %v792
    %v3024 = vunpack.c.h.b16 %v792
    %v3025 = vunpack.c.l.b16 %v793
    %v3026 = vunpack.c.h.b16 %v793
    %v3027 = vunpack.c.l.b16 %v794
    %v3028 = vunpack.c.h.b16 %v794
    %v3029 = vunpack.c.l.b16 %v795
    %v3030 = vunpack.c.h.b16 %v795
    %v3031 = vunpack.c.l.b16 %v796
    %v3032 = vunpack.c.h.b16 %v796
    %v3033 = vunpack.c.l.b16 %v797
    %v3034 = vunpack.c.h.b16 %v797
    %v3035 = vunpack.c.l.b16 %v798
    %v3036 = vunpack.c.h.b16 %v798
    %v3037 = vunpack.c.l.b16 %v799
    %v3038 = vunpack.c.h.b16 %v799
    %v3039 = vunpack.c.l.b16 %v800
    %v3040 = vunpack.c.h.b16 %v800
    %v3041 = vunpack.c.l.b16 %v801
    %v3042 = vunpack.c.h.b16 %v801
    %v3043 = vunpack.c.l.b16 %v802
    %v3044 = vunpack.c.h.b16 %v802
    %v3045 = vunpack.c.l.b16 %v803
    %v3046 = vunpack.c.h.b16 %v803
    %v3047 = vunpack.c.l.b16 %v804
    %v3048 = vunpack.c.h.b16 %v804
    %v3049 = vunpack.c.l.b16 %v805
    %v3050 = vunpack.c.h.b16 %v805
    %v3051 = vunpack.c.l.b16 %v806
    %v3052 = vunpack.c.h.b16 %v806
    %v3053 = vunpack.c.l.b16 %v807
    %v3054 = vunpack.c.h.b16 %v807
    %v3055 = vunpack.c.l.b16 %v808
    %v3056 = vunpack.c.h.b16 %v808
    %v3057 = vunpack.c.l.b16 %v809
    %v3058 = vunpack.c.h.b16 %v809
    %v3059 = vunpack.c.l.b16 %v810
    %v3060 = vunpack.c.h.b16 %v810
    %v3061 = vunpack.c.l.b16 %v811
    %v3062 = vunpack.c.h.b16 %v811
    %v3063 = vunpack.c.l.b16 %v812
    %v3064 = vunpack.c.h.b16 %v812
    %v3065 = vunpack.c.l.b16 %v813
    %v3066 = vunpack.c.h.b16 %v813
    %v3067 = vunpack.c.l.b16 %v814
    %v3068 = vunpack.c.h.b16 %v814
    %v3069 = vunpack.c.l.b16 %v815
    %v3070 = vunpack.c.h.b16 %v815
    %v3071 = vunpack.c.l.b16 %v816
    %v3072 = vunpack.c.h.b16 %v816
    %v3073 = vunpack.c.l.b16 %v817
    %v3074 = vunpack.c.h.b16 %v817
    %v3075 = vunpack.c.l.b16 %v818
    %v3076 = vunpack.c.h.b16 %v818
    %v3077 = vunpack.c.l.b16 %v819
    %v3078 = vunpack.c.h.b16 %v819
    %v3079 = vunpack.c.l.b16 %v820
    %v3080 = vunpack.c.h.b16 %v820
    %v3081 = vunpack.c.l.b16 %v821
    %v3082 = vunpack.c.h.b16 %v821
    %v3083 = vunpack.c.l.b16 %v822
    %v3084 = vunpack.c.h.b16 %v822
    %v3085 = vunpack.c.l.b16 %v823
    %v3086 = vunpack.c.h.b16 %v823
    %v3087 = vunpack.c.l.b16 %v824
    %v3088 = vunpack.c.h.b16 %v824
    %v3089 = vunpack.c.l.b16 %v825
    %v3090 = vunpack.c.h.b16 %v825
    %v3091 = vunpack.c.l.b16 %v826
    %v3092 = vunpack.c.h.b16 %v826
    %v3093 = vunpack.c.l.b16 %v827
    %v3094 = vunpack.c.h.b16 %v827
    %v3095 = vunpack.c.l.b16 %v828
    %v3096 = vunpack.c.h.b16 %v828
    %v3097 = vunpack.c.l.b16 %v829
    %v3098 = vunpack.c.h.b16 %v829
    %v3099 = vunpack.c.l.b16 %v830
    %v3100 = vunpack.c.h.b16 %v830
    %v3101 = vunpack.c.l.b16 %v831
    %v3102 = vunpack.c.h.b16 %v831
    %v3103 = vunpack.c.l.b16 %v832
    %v3104 = vunpack.c.h.b16 %v832
    %v3105 = vunpack.c.l.b16 %v833
    %v3106 = vunpack.c.h.b16 %v833
    %v3107 = vunpack.c.l.b16 %v834
    %v3108 = vunpack.c.h.b16 %v834
    %v3109 = vunpack.c.l.b16 %v835
    %v3110 = vunpack.c.h.b16 %v835
    %v3111 = vunpack.c.l.b16 %v836
    %v3112 = vunpack.c.h.b16 %v836
    %v3113 = vunpack.c.l.b16 %v837
    %v3114 = vunpack.c.h.b16 %v837
    %v3115 = vunpack.c.l.b16 %v838
    %v3116 = vunpack.c.h.b16 %v838
    %v3117 = vunpack.c.l.b16 %v839
    %v3118 = vunpack.c.h.b16 %v839
    %v3119 = vunpack.c.l.b16 %v840
    %v3120 = vunpack.c.h.b16 %v840
    %v3121 = vunpack.c.l.b16 %v841
    %v3122 = vunpack.c.h.b16 %v841
    %v3123 = vunpack.c.l.b16 %v842
    %v3124 = vunpack.c.h.b16 %v842
    %v3125 = vunpack.c.l.b16 %v843
    %v3126 = vunpack.c.h.b16 %v843
    %v3127 = vunpack.c.l.b16 %v844
    %v3128 = vunpack.c.h.b16 %v844
    %v3129 = vunpack.c.l.b16 %v845
    %v3130 = vunpack.c.h.b16 %v845
    %v3131 = vunpack.c.l.b16 %v846
    %v3132 = vunpack.c.h.b16 %v846
    %v3133 = vunpack.c.l.b16 %v847
    %v3134 = vunpack.c.h.b16 %v847
    %v3135 = vunpack.c.l.b16 %v848
    %v3136 = vunpack.c.h.b16 %v848
    %v3137 = vunpack.c.l.b16 %v849
    %v3138 = vunpack.c.h.b16 %v849
    %v3139 = vunpack.c.l.b16 %v850
    %v3140 = vunpack.c.h.b16 %v850
    %v3141 = vunpack.c.l.b16 %v851
    %v3142 = vunpack.c.h.b16 %v851
    %v3143 = vunpack.c.l.b16 %v852
    %v3144 = vunpack.c.h.b16 %v852
    %v3145 = vunpack.c.l.b16 %v853
    %v3146 = vunpack.c.h.b16 %v853
    %v3147 = vunpack.c.l.b16 %v854
    %v3148 = vunpack.c.h.b16 %v854
    %v3149 = vunpack.c.l.b16 %v855
    %v3150 = vunpack.c.h.b16 %v855
    %v3151 = vunpack.c.l.b16 %v856
    %v3152 = vunpack.c.h.b16 %v856
    %v3153 = vunpack.c.l.b16 %v857
    %v3154 = vunpack.c.h.b16 %v857
    %v3155 = vunpack.c.l.b16 %v858
    %v3156 = vunpack.c.h.b16 %v858
    %v3157 = vunpack.c.l.b16 %v859
    %v3158 = vunpack.c.h.b16 %v859
    %v3159 = vunpack.c.l.b16 %v860
    %v3160 = vunpack.c.h.b16 %v860
    %v3161 = vunpack.c.l.b16 %v861
    %v3162 = vunpack.c.h.b16 %v861
    %v3163 = vunpack.c.l.b16 %v862
    %v3164 = vunpack.c.h.b16 %v862
    %v3165 = vunpack.c.l.b16 %v863
    %v3166 = vunpack.c.h.b16 %v863
    %v3167 = vunpack.c.l.b16 %v864
    %v3168 = vunpack.c.h.b16 %v864
    %v3169 = vunpack.c.l.b16 %v865
    %v3170 = vunpack.c.h.b16 %v865
    %v3171 = vunpack.c.l.b16 %v866
    %v3172 = vunpack.c.h.b16 %v866
    %v3173 = vunpack.c.l.b16 %v867
    %v3174 = vunpack.c.h.b16 %v867
    %v3175 = vunpack.c.l.b16 %v868
    %v3176 = vunpack.c.h.b16 %v868
    %v3177 = vunpack.c.l.b16 %v869
    %v3178 = vunpack.c.h.b16 %v869
    %v3179 = vunpack.c.l.b16 %v870
    %v3180 = vunpack.c.h.b16 %v870
    %v3181 = vunpack.c.l.b16 %v871
    %v3182 = vunpack.c.h.b16 %v871
    %v3183 = vunpack.c.l.b16 %v872
    %v3184 = vunpack.c.h.b16 %v872
    %v3185 = vunpack.c.l.b16 %v873
    %v3186 = vunpack.c.h.b16 %v873
    %v3187 = vunpack.c.l.b16 %v874
    %v3188 = vunpack.c.h.b16 %v874
    %v3189 = vunpack.c.l.b16 %v875
    %v3190 = vunpack.c.h.b16 %v875
    %v3191 = vunpack.c.l.b16 %v876
    %v3192 = vunpack.c.h.b16 %v876
    %v3193 = vunpack.c.l.b16 %v877
    %v3194 = vunpack.c.h.b16 %v877
    %v3195 = vunpack.c.l.b16 %v878
    %v3196 = vunpack.c.h.b16 %v878
    %v3197 = vunpack.c.l.b16 %v879
    %v3198 = vunpack.c.h.b16 %v879
    %v3199 = vunpack.c.l.b16 %v880
    %v3200 = vunpack.c.h.b16 %v880
    %v3201 = vunpack.c.l.b16 %v881
    %v3202 = vunpack.c.h.b16 %v881
    %v3203 = vunpack.c.l.b16 %v882
    %v3204 = vunpack.c.h.b16 %v882
    %v3205 = vunpack.c.l.b16 %v883
    %v3206 = vunpack.c.h.b16 %v883
    %v3207 = vunpack.c.l.b16 %v884
    %v3208 = vunpack.c.h.b16 %v884
    %v3209 = vunpack.c.l.b16 %v885
    %v3210 = vunpack.c.h.b16 %v885
    %v3211 = vunpack.c.l.b16 %v886
    %v3212 = vunpack.c.h.b16 %v886
    %v3213 = vunpack.c.l.b16 %v887
    %v3214 = vunpack.c.h.b16 %v887
    %v3215 = vunpack.c.l.b16 %v888
    %v3216 = vunpack.c.h.b16 %v888
    %v3217 = vunpack.c.l.b16 %v889
    %v3218 = vunpack.c.h.b16 %v889
    %v3219 = vunpack.c.l.b16 %v890
    %v3220 = vunpack.c.h.b16 %v890
    %v3221 = vunpack.c.l.b16 %v891
    %v3222 = vunpack.c.h.b16 %v891
    %v3223 = vunpack.c.l.b16 %v892
    %v3224 = vunpack.c.h.b16 %v892
    %v3225 = vpack.c.b16 %v1701, %v1689
    %v3226 = vpack.c.b16 %v1702, %v1690
    %v3227 = vpack.c.b16 %v1703, %v1691
    %v3228 = vpack.c.b16 %v1704, %v1692
    %v3229 = vpack.c.b16 %v1705, %v1693
    %v3230 = vpack.c.b16 %v1706, %v1694
    %v3231 = vpack.c.b16 %v1707, %v1695
    %v3232 = vpack.c.b16 %v1708, %v1696
    %v3233 = vpack.c.b16 %v1709, %v1697
    %v3234 = vpack.c.b16 %v1710, %v1698
    %v3235 = vpack.c.b16 %v1711, %v1699
    %v3236 = vpack.c.b16 %v1712, %v1700
    %v3237 = vpack.c.b16 %v1725, %v1713
    %v3238 = vpack.c.b16 %v1726, %v1714
    %v3239 = vpack.c.b16 %v1727, %v1715
    %v3240 = vpack.c.b16 %v1728, %v1716
    %v3241 = vpack.c.b16 %v1729, %v1717
    %v3242 = vpack.c.b16 %v1730, %v1718
    %v3243 = vpack.c.b16 %v1731, %v1719
    %v3244 = vpack.c.b16 %v1732, %v1720
    %v3245 = vpack.c.b16 %v1733, %v1721
    %v3246 = vpack.c.b16 %v1734, %v1722
    %v3247 = vpack.c.b16 %v1735, %v1723
    %v3248 = vpack.c.b16 %v1736, %v1724
    %v3249 = vpack.c.b16 %v1749, %v1737
    %v3250 = vpack.c.b16 %v1750, %v1738
    %v3251 = vpack.c.b16 %v1751, %v1739
    %v3252 = vpack.c.b16 %v1752, %v1740
    %v3253 = vpack.c.b16 %v1753, %v1741
    %v3254 = vpack.c.b16 %v1754, %v1742
    %v3255 = vpack.c.b16 %v1755, %v1743
    %v3256 = vpack.c.b16 %v1756, %v1744
    %v3257 = vpack.c.b16 %v1757, %v1745
    %v3258 = vpack.c.b16 %v1758, %v1746
    %v3259 = vpack.c.b16 %v1759, %v1747
    %v3260 = vpack.c.b16 %v1760, %v1748
    %v3261 = vpack.c.b16 %v1773, %v1761
    %v3262 = vpack.c.b16 %v1774, %v1762
    %v3263 = vpack.c.b16 %v1775, %v1763
    %v3264 = vpack.c.b16 %v1776, %v1764
    %v3265 = vpack.c.b16 %v1777, %v1765
    %v3266 = vpack.c.b16 %v1778, %v1766
    %v3267 = vpack.c.b16 %v1779, %v1767
    %v3268 = vpack.c.b16 %v1780, %v1768
    %v3269 = vpack.c.b16 %v1781, %v1769
    %v3270 = vpack.c.b16 %v1782, %v1770
    %v3271 = vpack.c.b16 %v1783, %v1771
    %v3272 = vpack.c.b16 %v1784, %v1772
    %v3273 = vpack.c.b16 %v1797, %v1785
    %v3274 = vpack.c.b16 %v1798, %v1786
    %v3275 = vpack.c.b16 %v1799, %v1787
    %v3276 = vpack.c.b16 %v1800, %v1788
    %v3277 = vpack.c.b16 %v1801, %v1789
    %v3278 = vpack.c.b16 %v1802, %v1790
    %v3279 = vpack.c.b16 %v1803, %v1791
    %v3280 = vpack.c.b16 %v1804, %v1792
    %v3281 = vpack.c.b16 %v1805, %v1793
    %v3282 = vpack.c.b16 %v1806, %v1794
    %v3283 = vpack.c.b16 %v1807, %v1795
    %v3284 = vpack.c.b16 %v1808, %v1796
    %v3285 = vpack.c.b16 %v1821, %v1809
    %v3286 = vpack.c.b16 %v1822, %v1810
    %v3287 = vpack.c.b16 %v1823, %v1811
    %v3288 = vpack.c.b16 %v1824, %v1812
    %v3289 = vpack.c.b16 %v1825, %v1813
    %v3290 = vpack.c.b16 %v1826, %v1814
    %v3291 = vpack.c.b16 %v1827, %v1815
    %v3292 = vpack.c.b16 %v1828, %v1816
    %v3293 = vpack.c.b16 %v1829, %v1817
    %v3294 = vpack.c.b16 %v1830, %v1818
    %v3295 = vpack.c.b16 %v1831, %v1819
    %v3296 = vpack.c.b16 %v1832, %v1820
    %v3297 = vpack.c.b16 %v1845, %v1833
    %v3298 = vpack.c.b16 %v1846, %v1834
    %v3299 = vpack.c.b16 %v1847, %v1835
    %v3300 = vpack.c.b16 %v1848, %v1836
    %v3301 = vpack.c.b16 %v1849, %v1837
    %v3302 = vpack.c.b16 %v1850, %v1838
    %v3303 = vpack.c.b16 %v1851, %v1839
    %v3304 = vpack.c.b16 %v1852, %v1840
    %v3305 = vpack.c.b16 %v1853, %v1841
    %v3306 = vpack.c.b16 %v1854, %v1842
    %v3307 = vpack.c.b16 %v1855, %v1843
    %v3308 = vpack.c.b16 %v1856, %v1844
    %v3309 = vpack.c.b16 %v1869, %v1857
    %v3310 = vpack.c.b16 %v1870, %v1858
    %v3311 = vpack.c.b16 %v1871, %v1859
    %v3312 = vpack.c.b16 %v1872, %v1860
    %v3313 = vpack.c.b16 %v1873, %v1861
    %v3314 = vpack.c.b16 %v1874, %v1862
    %v3315 = vpack.c.b16 %v1875, %v1863
    %v3316 = vpack.c.b16 %v1876, %v1864
    %v3317 = vpack.c.b16 %v1877, %v1865
    %v3318 = vpack.c.b16 %v1878, %v1866
    %v3319 = vpack.c.b16 %v1879, %v1867
    %v3320 = vpack.c.b16 %v1880, %v1868
    %v3321 = vpack.c.b16 %v1893, %v1881
    %v3322 = vpack.c.b16 %v1894, %v1882
    %v3323 = vpack.c.b16 %v1895, %v1883
    %v3324 = vpack.c.b16 %v1896, %v1884
    %v3325 = vpack.c.b16 %v1897, %v1885
    %v3326 = vpack.c.b16 %v1898, %v1886
    %v3327 = vpack.c.b16 %v1899, %v1887
    %v3328 = vpack.c.b16 %v1900, %v1888
    %v3329 = vpack.c.b16 %v1901, %v1889
    %v3330 = vpack.c.b16 %v1902, %v1890
    %v3331 = vpack.c.b16 %v1903, %v1891
    %v3332 = vpack.c.b16 %v1904, %v1892
    %v3333 = vpack.c.b16 %v1917, %v1905
    %v3334 = vpack.c.b16 %v1918, %v1906
    %v3335 = vpack.c.b16 %v1919, %v1907
    %v3336 = vpack.c.b16 %v1920, %v1908
    %v3337 = vpack.c.b16 %v1921, %v1909
    %v3338 = vpack.c.b16 %v1922, %v1910
    %v3339 = vpack.c.b16 %v1923, %v1911
    %v3340 = vpack.c.b16 %v1924, %v1912
    %v3341 = vpack.c.b16 %v1925, %v1913
    %v3342 = vpack.c.b16 %v1926, %v1914
    %v3343 = vpack.c.b16 %v1927, %v1915
    %v3344 = vpack.c.b16 %v1928, %v1916
    %v3345 = vpack.c.b16 %v1941, %v1929
    %v3346 = vpack.c.b16 %v1942, %v1930
    %v3347 = vpack.c.b16 %v1943, %v1931
    %v3348 = vpack.c.b16 %v1944, %v1932
    %v3349 = vpack.c.b16 %v1945, %v1933
    %v3350 = vpack.c.b16 %v1946, %v1934
    %v3351 = vpack.c.b16 %v1947, %v1935
    %v3352 = vpack.c.b16 %v1948, %v1936
    %v3353 = vpack.c.b16 %v1949, %v1937
    %v3354 = vpack.c.b16 %v1950, %v1938
    %v3355 = vpack.c.b16 %v1951, %v1939
    %v3356 = vpack.c.b16 %v1952, %v1940
    %v3357 = vpack.c.b16 %v1965, %v1953
    %v3358 = vpack.c.b16 %v1966, %v1954
    %v3359 = vpack.c.b16 %v1967, %v1955
    %v3360 = vpack.c.b16 %v1968, %v1956
    %v3361 = vpack.c.b16 %v1969, %v1957
    %v3362 = vpack.c.b16 %v1970, %v1958
    %v3363 = vpack.c.b16 %v1971, %v1959
    %v3364 = vpack.c.b16 %v1972, %v1960
    %v3365 = vpack.c.b16 %v1973, %v1961
    %v3366 = vpack.c.b16 %v1974, %v1962
    %v3367 = vpack.c.b16 %v1975, %v1963
    %v3368 = vpack.c.b16 %v1976, %v1964
    %v3369 = vpack.c.b16 %v1989, %v1977
    %v3370 = vpack.c.b16 %v1990, %v1978
    %v3371 = vpack.c.b16 %v1991, %v1979
    %v3372 = vpack.c.b16 %v1992, %v1980
    %v3373 = vpack.c.b16 %v1993, %v1981
    %v3374 = vpack.c.b16 %v1994, %v1982
    %v3375 = vpack.c.b16 %v1995, %v1983
    %v3376 = vpack.c.b16 %v1996, %v1984
    %v3377 = vpack.c.b16 %v1997, %v1985
    %v3378 = vpack.c.b16 %v1998, %v1986
    %v3379 = vpack.c.b16 %v1999, %v1987
    %v3380 = vpack.c.b16 %v2000, %v1988
    %v3381 = vpack.c.b16 %v2013, %v2001
    %v3382 = vpack.c.b16 %v2014, %v2002
    %v3383 = vpack.c.b16 %v2015, %v2003
    %v3384 = vpack.c.b16 %v2016, %v2004
    %v3385 = vpack.c.b16 %v2017, %v2005
    %v3386 = vpack.c.b16 %v2018, %v2006
    %v3387 = vpack.c.b16 %v2019, %v2007
    %v3388 = vpack.c.b16 %v2020, %v2008
    %v3389 = vpack.c.b16 %v2021, %v2009
    %v3390 = vpack.c.b16 %v2022, %v2010
    %v3391 = vpack.c.b16 %v2023, %v2011
    %v3392 = vpack.c.b16 %v2024, %v2012
    %v3393 = vpack.c.b16 %v2037, %v2025
    %v3394 = vpack.c.b16 %v2038, %v2026
    %v3395 = vpack.c.b16 %v2039, %v2027
    %v3396 = vpack.c.b16 %v2040, %v2028
    %v3397 = vpack.c.b16 %v2041, %v2029
    %v3398 = vpack.c.b16 %v2042, %v2030
    %v3399 = vpack.c.b16 %v2043, %v2031
    %v3400 = vpack.c.b16 %v2044, %v2032
    %v3401 = vpack.c.b16 %v2045, %v2033
    %v3402 = vpack.c.b16 %v2046, %v2034
    %v3403 = vpack.c.b16 %v2047, %v2035
    %v3404 = vpack.c.b16 %v2048, %v2036
    %v3405 = vpack.c.b16 %v2061, %v2049
    %v3406 = vpack.c.b16 %v2062, %v2050
    %v3407 = vpack.c.b16 %v2063, %v2051
    %v3408 = vpack.c.b16 %v2064, %v2052
    %v3409 = vpack.c.b16 %v2065, %v2053
    %v3410 = vpack.c.b16 %v2066, %v2054
    %v3411 = vpack.c.b16 %v2067, %v2055
    %v3412 = vpack.c.b16 %v2068, %v2056
    %v3413 = vpack.c.b16 %v2069, %v2057
    %v3414 = vpack.c.b16 %v2070, %v2058
    %v3415 = vpack.c.b16 %v2071, %v2059
    %v3416 = vpack.c.b16 %v2072, %v2060
    %v3417 = vpack.c.b16 %v2085, %v2073
    %v3418 = vpack.c.b16 %v2086, %v2074
    %v3419 = vpack.c.b16 %v2087, %v2075
    %v3420 = vpack.c.b16 %v2088, %v2076
    %v3421 = vpack.c.b16 %v2089, %v2077
    %v3422 = vpack.c.b16 %v2090, %v2078
    %v3423 = vpack.c.b16 %v2091, %v2079
    %v3424 = vpack.c.b16 %v2092, %v2080
    %v3425 = vpack.c.b16 %v2093, %v2081
    %v3426 = vpack.c.b16 %v2094, %v2082
    %v3427 = vpack.c.b16 %v2095, %v2083
    %v3428 = vpack.c.b16 %v2096, %v2084
    %v3429 = vpack.c.b16 %v2109, %v2097
    %v3430 = vpack.c.b16 %v2110, %v2098
    %v3431 = vpack.c.b16 %v2111, %v2099
    %v3432 = vpack.c.b16 %v2112, %v2100
    %v3433 = vpack.c.b16 %v2113, %v2101
    %v3434 = vpack.c.b16 %v2114, %v2102
    %v3435 = vpack.c.b16 %v2115, %v2103
    %v3436 = vpack.c.b16 %v2116, %v2104
    %v3437 = vpack.c.b16 %v2117, %v2105
    %v3438 = vpack.c.b16 %v2118, %v2106
    %v3439 = vpack.c.b16 %v2119, %v2107
    %v3440 = vpack.c.b16 %v2120, %v2108
    %v3441 = vpack.c.b16 %v2133, %v2121
    %v3442 = vpack.c.b16 %v2134, %v2122
    %v3443 = vpack.c.b16 %v2135, %v2123
    %v3444 = vpack.c.b16 %v2136, %v2124
    %v3445 = vpack.c.b16 %v2137, %v2125
    %v3446 = vpack.c.b16 %v2138, %v2126
    %v3447 = vpack.c.b16 %v2139, %v2127
    %v3448 = vpack.c.b16 %v2140, %v2128
    %v3449 = vpack.c.b16 %v2141, %v2129
    %v3450 = vpack.c.b16 %v2142, %v2130
    %v3451 = vpack.c.b16 %v2143, %v2131
    %v3452 = vpack.c.b16 %v2144, %v2132
    %v3453 = vpack.c.b16 %v2157, %v2145
    %v3454 = vpack.c.b16 %v2158, %v2146
    %v3455 = vpack.c.b16 %v2159, %v2147
    %v3456 = vpack.c.b16 %v2160, %v2148
    %v3457 = vpack.c.b16 %v2161, %v2149
    %v3458 = vpack.c.b16 %v2162, %v2150
    %v3459 = vpack.c.b16 %v2163, %v2151
    %v3460 = vpack.c.b16 %v2164, %v2152
    %v3461 = vpack.c.b16 %v2165, %v2153
    %v3462 = vpack.c.b16 %v2166, %v2154
    %v3463 = vpack.c.b16 %v2167, %v2155
    %v3464 = vpack.c.b16 %v2168, %v2156
    %v3465 = vpack.c.b16 %v2181, %v2169
    %v3466 = vpack.c.b16 %v2182, %v2170
    %v3467 = vpack.c.b16 %v2183, %v2171
    %v3468 = vpack.c.b16 %v2184, %v2172
    %v3469 = vpack.c.b16 %v2185, %v2173
    %v3470 = vpack.c.b16 %v2186, %v2174
    %v3471 = vpack.c.b16 %v2187, %v2175
    %v3472 = vpack.c.b16 %v2188, %v2176
    %v3473 = vpack.c.b16 %v2189, %v2177
    %v3474 = vpack.c.b16 %v2190, %v2178
    %v3475 = vpack.c.b16 %v2191, %v2179
    %v3476 = vpack.c.b16 %v2192, %v2180
    %v3477 = vpack.c.b16 %v2205, %v2193
    %v3478 = vpack.c.b16 %v2206, %v2194
    %v3479 = vpack.c.b16 %v2207, %v2195
    %v3480 = vpack.c.b16 %v2208, %v2196
    %v3481 = vpack.c.b16 %v2209, %v2197
    %v3482 = vpack.c.b16 %v2210, %v2198
    %v3483 = vpack.c.b16 %v2211, %v2199
    %v3484 = vpack.c.b16 %v2212, %v2200
    %v3485 = vpack.c.b16 %v2213, %v2201
    %v3486 = vpack.c.b16 %v2214, %v2202
    %v3487 = vpack.c.b16 %v2215, %v2203
    %v3488 = vpack.c.b16 %v2216, %v2204
    %v3489 = vpack.c.b16 %v2229, %v2217
    %v3490 = vpack.c.b16 %v2230, %v2218
    %v3491 = vpack.c.b16 %v2231, %v2219
    %v3492 = vpack.c.b16 %v2232, %v2220
    %v3493 = vpack.c.b16 %v2233, %v2221
    %v3494 = vpack.c.b16 %v2234, %v2222
    %v3495 = vpack.c.b16 %v2235, %v2223
    %v3496 = vpack.c.b16 %v2236, %v2224
    %v3497 = vpack.c.b16 %v2237, %v2225
    %v3498 = vpack.c.b16 %v2238, %v2226
    %v3499 = vpack.c.b16 %v2239, %v2227
    %v3500 = vpack.c.b16 %v2240, %v2228
    %v3501 = vpack.c.b16 %v2253, %v2241
    %v3502 = vpack.c.b16 %v2254, %v2242
    %v3503 = vpack.c.b16 %v2255, %v2243
    %v3504 = vpack.c.b16 %v2256, %v2244
    %v3505 = vpack.c.b16 %v2257, %v2245
    %v3506 = vpack.c.b16 %v2258, %v2246
    %v3507 = vpack.c.b16 %v2259, %v2247
    %v3508 = vpack.c.b16 %v2260, %v2248
    %v3509 = vpack.c.b16 %v2261, %v2249
    %v3510 = vpack.c.b16 %v2262, %v2250
    %v3511 = vpack.c.b16 %v2263, %v2251
    %v3512 = vpack.c.b16 %v2264, %v2252
    %v3513 = vpack.c.b16 %v2277, %v2265
    %v3514 = vpack.c.b16 %v2278, %v2266
    %v3515 = vpack.c.b16 %v2279, %v2267
    %v3516 = vpack.c.b16 %v2280, %v2268
    %v3517 = vpack.c.b16 %v2281, %v2269
    %v3518 = vpack.c.b16 %v2282, %v2270
    %v3519 = vpack.c.b16 %v2283, %v2271
    %v3520 = vpack.c.b16 %v2284, %v2272
    %v3521 = vpack.c.b16 %v2285, %v2273
    %v3522 = vpack.c.b16 %v2286, %v2274
    %v3523 = vpack.c.b16 %v2287, %v2275
    %v3524 = vpack.c.b16 %v2288, %v2276
    %v3525 = vpack.c.b16 %v2301, %v2289
    %v3526 = vpack.c.b16 %v2302, %v2290
    %v3527 = vpack.c.b16 %v2303, %v2291
    %v3528 = vpack.c.b16 %v2304, %v2292
    %v3529 = vpack.c.b16 %v2305, %v2293
    %v3530 = vpack.c.b16 %v2306, %v2294
    %v3531 = vpack.c.b16 %v2307, %v2295
    %v3532 = vpack.c.b16 %v2308, %v2296
    %v3533 = vpack.c.b16 %v2309, %v2297
    %v3534 = vpack.c.b16 %v2310, %v2298
    %v3535 = vpack.c.b16 %v2311, %v2299
    %v3536 = vpack.c.b16 %v2312, %v2300
    %v3537 = vpack.c.b16 %v2325, %v2313
    %v3538 = vpack.c.b16 %v2326, %v2314
    %v3539 = vpack.c.b16 %v2327, %v2315
    %v3540 = vpack.c.b16 %v2328, %v2316
    %v3541 = vpack.c.b16 %v2329, %v2317
    %v3542 = vpack.c.b16 %v2330, %v2318
    %v3543 = vpack.c.b16 %v2331, %v2319
    %v3544 = vpack.c.b16 %v2332, %v2320
    %v3545 = vpack.c.b16 %v2333, %v2321
    %v3546 = vpack.c.b16 %v2334, %v2322
    %v3547 = vpack.c.b16 %v2335, %v2323
    %v3548 = vpack.c.b16 %v2336, %v2324
    %v3549 = vpack.c.b16 %v2349, %v2337
    %v3550 = vpack.c.b16 %v2350, %v2338
    %v3551 = vpack.c.b16 %v2351, %v2339
    %v3552 = vpack.c.b16 %v2352, %v2340
    %v3553 = vpack.c.b16 %v2353, %v2341
    %v3554 = vpack.c.b16 %v2354, %v2342
    %v3555 = vpack.c.b16 %v2355, %v2343
    %v3556 = vpack.c.b16 %v2356, %v2344
    %v3557 = vpack.c.b16 %v2357, %v2345
    %v3558 = vpack.c.b16 %v2358, %v2346
    %v3559 = vpack.c.b16 %v2359, %v2347
    %v3560 = vpack.c.b16 %v2360, %v2348
    %v3561 = vpack.c.b16 %v2373, %v2361
    %v3562 = vpack.c.b16 %v2374, %v2362
    %v3563 = vpack.c.b16 %v2375, %v2363
    %v3564 = vpack.c.b16 %v2376, %v2364
    %v3565 = vpack.c.b16 %v2377, %v2365
    %v3566 = vpack.c.b16 %v2378, %v2366
    %v3567 = vpack.c.b16 %v2379, %v2367
    %v3568 = vpack.c.b16 %v2380, %v2368
    %v3569 = vpack.c.b16 %v2381, %v2369
    %v3570 = vpack.c.b16 %v2382, %v2370
    %v3571 = vpack.c.b16 %v2383, %v2371
    %v3572 = vpack.c.b16 %v2384, %v2372
    %v3573 = vpack.c.b16 %v2397, %v2385
    %v3574 = vpack.c.b16 %v2398, %v2386
    %v3575 = vpack.c.b16 %v2399, %v2387
    %v3576 = vpack.c.b16 %v2400, %v2388
    %v3577 = vpack.c.b16 %v2401, %v2389
    %v3578 = vpack.c.b16 %v2402, %v2390
    %v3579 = vpack.c.b16 %v2403, %v2391
    %v3580 = vpack.c.b16 %v2404, %v2392
    %v3581 = vpack.c.b16 %v2405, %v2393
    %v3582 = vpack.c.b16 %v2406, %v2394
    %v3583 = vpack.c.b16 %v2407, %v2395
    %v3584 = vpack.c.b16 %v2408, %v2396
    %v3585 = vpack.c.b16 %v2421, %v2409
    %v3586 = vpack.c.b16 %v2422, %v2410
    %v3587 = vpack.c.b16 %v2423, %v2411
    %v3588 = vpack.c.b16 %v2424, %v2412
    %v3589 = vpack.c.b16 %v2425, %v2413
    %v3590 = vpack.c.b16 %v2426, %v2414
    %v3591 = vpack.c.b16 %v2427, %v2415
    %v3592 = vpack.c.b16 %v2428, %v2416
    %v3593 = vpack.c.b16 %v2429, %v2417
    %v3594 = vpack.c.b16 %v2430, %v2418
    %v3595 = vpack.c.b16 %v2431, %v2419
    %v3596 = vpack.c.b16 %v2432, %v2420
    %v3597 = vpack.c.b16 %v2445, %v2433
    %v3598 = vpack.c.b16 %v2446, %v2434
    %v3599 = vpack.c.b16 %v2447, %v2435
    %v3600 = vpack.c.b16 %v2448, %v2436
    %v3601 = vpack.c.b16 %v2449, %v2437
    %v3602 = vpack.c.b16 %v2450, %v2438
    %v3603 = vpack.c.b16 %v2451, %v2439
    %v3604 = vpack.c.b16 %v2452, %v2440
    %v3605 = vpack.c.b16 %v2453, %v2441
    %v3606 = vpack.c.b16 %v2454, %v2442
    %v3607 = vpack.c.b16 %v2455, %v2443
    %v3608 = vpack.c.b16 %v2456, %v2444
    %v3609 = vpack.c.b16 %v2469, %v2457
    %v3610 = vpack.c.b16 %v2470, %v2458
    %v3611 = vpack.c.b16 %v2471, %v2459
    %v3612 = vpack.c.b16 %v2472, %v2460
    %v3613 = vpack.c.b16 %v2473, %v2461
    %v3614 = vpack.c.b16 %v2474, %v2462
    %v3615 = vpack.c.b16 %v2475, %v2463
    %v3616 = vpack.c.b16 %v2476, %v2464
    %v3617 = vpack.c.b16 %v2477, %v2465
    %v3618 = vpack.c.b16 %v2478, %v2466
    %v3619 = vpack.c.b16 %v2479, %v2467
    %v3620 = vpack.c.b16 %v2480, %v2468
    %v3621 = vpack.c.b16 %v2493, %v2481
    %v3622 = vpack.c.b16 %v2494, %v2482
    %v3623 = vpack.c.b16 %v2495, %v2483
    %v3624 = vpack.c.b16 %v2496, %v2484
    %v3625 = vpack.c.b16 %v2497, %v2485
    %v3626 = vpack.c.b16 %v2498, %v2486
    %v3627 = vpack.c.b16 %v2499, %v2487
    %v3628 = vpack.c.b16 %v2500, %v2488
    %v3629 = vpack.c.b16 %v2501, %v2489
    %v3630 = vpack.c.b16 %v2502, %v2490
    %v3631 = vpack.c.b16 %v2503, %v2491
    %v3632 = vpack.c.b16 %v2504, %v2492
    %v3633 = vpack.c.b16 %v2517, %v2505
    %v3634 = vpack.c.b16 %v2518, %v2506
    %v3635 = vpack.c.b16 %v2519, %v2507
    %v3636 = vpack.c.b16 %v2520, %v2508
    %v3637 = vpack.c.b16 %v2521, %v2509
    %v3638 = vpack.c.b16 %v2522, %v2510
    %v3639 = vpack.c.b16 %v2523, %v2511
    %v3640 = vpack.c.b16 %v2524, %v2512
    %v3641 = vpack.c.b16 %v2525, %v2513
    %v3642 = vpack.c.b16 %v2526, %v2514
    %v3643 = vpack.c.b16 %v2527, %v2515
    %v3644 = vpack.c.b16 %v2528, %v2516
    %v3645 = vpack.c.b16 %v2541, %v2529
    %v3646 = vpack.c.b16 %v2542, %v2530
    %v3647 = vpack.c.b16 %v2543, %v2531
    %v3648 = vpack.c.b16 %v2544, %v2532
    %v3649 = vpack.c.b16 %v2545, %v2533
    %v3650 = vpack.c.b16 %v2546, %v2534
    %v3651 = vpack.c.b16 %v2547, %v2535
    %v3652 = vpack.c.b16 %v2548, %v2536
    %v3653 = vpack.c.b16 %v2549, %v2537
    %v3654 = vpack.c.b16 %v2550, %v2538
    %v3655 = vpack.c.b16 %v2551, %v2539
    %v3656 = vpack.c.b16 %v2552, %v2540
    %v3657 = vpack.c.b16 %v2565, %v2553
    %v3658 = vpack.c.b16 %v2566, %v2554
    %v3659 = vpack.c.b16 %v2567, %v2555
    %v3660 = vpack.c.b16 %v2568, %v2556
    %v3661 = vpack.c.b16 %v2569, %v2557
    %v3662 = vpack.c.b16 %v2570, %v2558
    %v3663 = vpack.c.b16 %v2571, %v2559
    %v3664 = vpack.c.b16 %v2572, %v2560
    %v3665 = vpack.c.b16 %v2573, %v2561
    %v3666 = vpack.c.b16 %v2574, %v2562
    %v3667 = vpack.c.b16 %v2575, %v2563
    %v3668 = vpack.c.b16 %v2576, %v2564
    %v3669 = vpack.c.b16 %v2589, %v2577
    %v3670 = vpack.c.b16 %v2590, %v2578
    %v3671 = vpack.c.b16 %v2591, %v2579
    %v3672 = vpack.c.b16 %v2592, %v2580
    %v3673 = vpack.c.b16 %v2593, %v2581
    %v3674 = vpack.c.b16 %v2594, %v2582
    %v3675 = vpack.c.b16 %v2595, %v2583
    %v3676 = vpack.c.b16 %v2596, %v2584
    %v3677 = vpack.c.b16 %v2597, %v2585
    %v3678 = vpack.c.b16 %v2598, %v2586
    %v3679 = vpack.c.b16 %v2599, %v2587
    %v3680 = vpack.c.b16 %v2600, %v2588
    %v3681 = vpack.c.b16 %v2613, %v2601
    %v3682 = vpack.c.b16 %v2614, %v2602
    %v3683 = vpack.c.b16 %v2615, %v2603
    %v3684 = vpack.c.b16 %v2616, %v2604
    %v3685 = vpack.c.b16 %v2617, %v2605
    %v3686 = vpack.c.b16 %v2618, %v2606
    %v3687 = vpack.c.b16 %v2619, %v2607
    %v3688 = vpack.c.b16 %v2620, %v2608
    %v3689 = vpack.c.b16 %v2621, %v2609
    %v3690 = vpack.c.b16 %v2622, %v2610
    %v3691 = vpack.c.b16 %v2623, %v2611
    %v3692 = vpack.c.b16 %v2624, %v2612
    %v3693 = vpack.c.b16 %v2637, %v2625
    %v3694 = vpack.c.b16 %v2638, %v2626
    %v3695 = vpack.c.b16 %v2639, %v2627
    %v3696 = vpack.c.b16 %v2640, %v2628
    %v3697 = vpack.c.b16 %v2641, %v2629
    %v3698 = vpack.c.b16 %v2642, %v2630
    %v3699 = vpack.c.b16 %v2643, %v2631
    %v3700 = vpack.c.b16 %v2644, %v2632
    %v3701 = vpack.c.b16 %v2645, %v2633
    %v3702 = vpack.c.b16 %v2646, %v2634
    %v3703 = vpack.c.b16 %v2647, %v2635
    %v3704 = vpack.c.b16 %v2648, %v2636
    %v3705 = vpack.c.b16 %v2661, %v2649
    %v3706 = vpack.c.b16 %v2662, %v2650
    %v3707 = vpack.c.b16 %v2663, %v2651
    %v3708 = vpack.c.b16 %v2664, %v2652
    %v3709 = vpack.c.b16 %v2665, %v2653
    %v3710 = vpack.c.b16 %v2666, %v2654
    %v3711 = vpack.c.b16 %v2667, %v2655
    %v3712 = vpack.c.b16 %v2668, %v2656
    %v3713 = vpack.c.b16 %v2669, %v2657
    %v3714 = vpack.c.b16 %v2670, %v2658
    %v3715 = vpack.c.b16 %v2671, %v2659
    %v3716 = vpack.c.b16 %v2672, %v2660
    %v3717 = vpack.c.b16 %v2685, %v2673
    %v3718 = vpack.c.b16 %v2686, %v2674
    %v3719 = vpack.c.b16 %v2687, %v2675
    %v3720 = vpack.c.b16 %v2688, %v2676
    %v3721 = vpack.c.b16 %v2689, %v2677
    %v3722 = vpack.c.b16 %v2690, %v2678
    %v3723 = vpack.c.b16 %v2691, %v2679
    %v3724 = vpack.c.b16 %v2692, %v2680
    %v3725 = vpack.c.b16 %v2693, %v2681
    %v3726 = vpack.c.b16 %v2694, %v2682
    %v3727 = vpack.c.b16 %v2695, %v2683
    %v3728 = vpack.c.b16 %v2696, %v2684
    %v3729 = vpack.c.b16 %v2709, %v2697
    %v3730 = vpack.c.b16 %v2710, %v2698
    %v3731 = vpack.c.b16 %v2711, %v2699
    %v3732 = vpack.c.b16 %v2712, %v2700
    %v3733 = vpack.c.b16 %v2713, %v2701
    %v3734 = vpack.c.b16 %v2714, %v2702
    %v3735 = vpack.c.b16 %v2715, %v2703
    %v3736 = vpack.c.b16 %v2716, %v2704
    %v3737 = vpack.c.b16 %v2717, %v2705
    %v3738 = vpack.c.b16 %v2718, %v2706
    %v3739 = vpack.c.b16 %v2719, %v2707
    %v3740 = vpack.c.b16 %v2720, %v2708
    %v3741 = vpack.c.b16 %v2733, %v2721
    %v3742 = vpack.c.b16 %v2734, %v2722
    %v3743 = vpack.c.b16 %v2735, %v2723
    %v3744 = vpack.c.b16 %v2736, %v2724
    %v3745 = vpack.c.b16 %v2737, %v2725
    %v3746 = vpack.c.b16 %v2738, %v2726
    %v3747 = vpack.c.b16 %v2739, %v2727
    %v3748 = vpack.c.b16 %v2740, %v2728
    %v3749 = vpack.c.b16 %v2741, %v2729
    %v3750 = vpack.c.b16 %v2742, %v2730
    %v3751 = vpack.c.b16 %v2743, %v2731
    %v3752 = vpack.c.b16 %v2744, %v2732
    %v3753 = vpack.c.b16 %v2757, %v2745
    %v3754 = vpack.c.b16 %v2758, %v2746
    %v3755 = vpack.c.b16 %v2759, %v2747
    %v3756 = vpack.c.b16 %v2760, %v2748
    %v3757 = vpack.c.b16 %v2761, %v2749
    %v3758 = vpack.c.b16 %v2762, %v2750
    %v3759 = vpack.c.b16 %v2763, %v2751
    %v3760 = vpack.c.b16 %v2764, %v2752
    %v3761 = vpack.c.b16 %v2765, %v2753
    %v3762 = vpack.c.b16 %v2766, %v2754
    %v3763 = vpack.c.b16 %v2767, %v2755
    %v3764 = vpack.c.b16 %v2768, %v2756
    %v3765 = vpack.c.b16 %v2781, %v2769
    %v3766 = vpack.c.b16 %v2782, %v2770
    %v3767 = vpack.c.b16 %v2783, %v2771
    %v3768 = vpack.c.b16 %v2784, %v2772
    %v3769 = vpack.c.b16 %v2785, %v2773
    %v3770 = vpack.c.b16 %v2786, %v2774
    %v3771 = vpack.c.b16 %v2787, %v2775
    %v3772 = vpack.c.b16 %v2788, %v2776
    %v3773 = vpack.c.b16 %v2789, %v2777
    %v3774 = vpack.c.b16 %v2790, %v2778
    %v3775 = vpack.c.b16 %v2791, %v2779
    %v3776 = vpack.c.b16 %v2792, %v2780
    %v3777 = vpack.c.b16 %v2805, %v2793
    %v3778 = vpack.c.b16 %v2806, %v2794
    %v3779 = vpack.c.b16 %v2807, %v2795
    %v3780 = vpack.c.b16 %v2808, %v2796
    %v3781 = vpack.c.b16 %v2809, %v2797
    %v3782 = vpack.c.b16 %v2810, %v2798
    %v3783 = vpack.c.b16 %v2811, %v2799
    %v3784 = vpack.c.b16 %v2812, %v2800
    %v3785 = vpack.c.b16 %v2813, %v2801
    %v3786 = vpack.c.b16 %v2814, %v2802
    %v3787 = vpack.c.b16 %v2815, %v2803
    %v3788 = vpack.c.b16 %v2816, %v2804
    %v3789 = vpack.c.b16 %v2829, %v2817
    %v3790 = vpack.c.b16 %v2830, %v2818
    %v3791 = vpack.c.b16 %v2831, %v2819
    %v3792 = vpack.c.b16 %v2832, %v2820
    %v3793 = vpack.c.b16 %v2833, %v2821
    %v3794 = vpack.c.b16 %v2834, %v2822
    %v3795 = vpack.c.b16 %v2835, %v2823
    %v3796 = vpack.c.b16 %v2836, %v2824
    %v3797 = vpack.c.b16 %v2837, %v2825
    %v3798 = vpack.c.b16 %v2838, %v2826
    %v3799 = vpack.c.b16 %v2839, %v2827
    %v3800 = vpack.c.b16 %v2840, %v2828
    %v3801 = vpack.c.b16 %v2853, %v2841
    %v3802 = vpack.c.b16 %v2854, %v2842
    %v3803 = vpack.c.b16 %v2855, %v2843
    %v3804 = vpack.c.b16 %v2856, %v2844
    %v3805 = vpack.c.b16 %v2857, %v2845
    %v3806 = vpack.c.b16 %v2858, %v2846
    %v3807 = vpack.c.b16 %v2859, %v2847
    %v3808 = vpack.c.b16 %v2860, %v2848
    %v3809 = vpack.c.b16 %v2861, %v2849
    %v3810 = vpack.c.b16 %v2862, %v2850
    %v3811 = vpack.c.b16 %v2863, %v2851
    %v3812 = vpack.c.b16 %v2864, %v2852
    %v3813 = vpack.c.b16 %v2877, %v2865
    %v3814 = vpack.c.b16 %v2878, %v2866
    %v3815 = vpack.c.b16 %v2879, %v2867
    %v3816 = vpack.c.b16 %v2880, %v2868
    %v3817 = vpack.c.b16 %v2881, %v2869
    %v3818 = vpack.c.b16 %v2882, %v2870
    %v3819 = vpack.c.b16 %v2883, %v2871
    %v3820 = vpack.c.b16 %v2884, %v2872
    %v3821 = vpack.c.b16 %v2885, %v2873
    %v3822 = vpack.c.b16 %v2886, %v2874
    %v3823 = vpack.c.b16 %v2887, %v2875
    %v3824 = vpack.c.b16 %v2888, %v2876
    %v3825 = vpack.c.b16 %v2901, %v2889
    %v3826 = vpack.c.b16 %v2902, %v2890
    %v3827 = vpack.c.b16 %v2903, %v2891
    %v3828 = vpack.c.b16 %v2904, %v2892
    %v3829 = vpack.c.b16 %v2905, %v2893
    %v3830 = vpack.c.b16 %v2906, %v2894
    %v3831 = vpack.c.b16 %v2907, %v2895
    %v3832 = vpack.c.b16 %v2908, %v2896
    %v3833 = vpack.c.b16 %v2909, %v2897
    %v3834 = vpack.c.b16 %v2910, %v2898
    %v3835 = vpack.c.b16 %v2911, %v2899
    %v3836 = vpack.c.b16 %v2912, %v2900
    %v3837 = vpack.c.b16 %v2925, %v2913
    %v3838 = vpack.c.b16 %v2926, %v2914
    %v3839 = vpack.c.b16 %v2927, %v2915
    %v3840 = vpack.c.b16 %v2928, %v2916
    %v3841 = vpack.c.b16 %v2929, %v2917
    %v3842 = vpack.c.b16 %v2930, %v2918
    %v3843 = vpack.c.b16 %v2931, %v2919
    %v3844 = vpack.c.b16 %v2932, %v2920
    %v3845 = vpack.c.b16 %v2933, %v2921
    %v3846 = vpack.c.b16 %v2934, %v2922
    %v3847 = vpack.c.b16 %v2935, %v2923
    %v3848 = vpack.c.b16 %v2936, %v2924
    %v3849 = vpack.c.b16 %v2949, %v2937
    %v3850 = vpack.c.b16 %v2950, %v2938
    %v3851 = vpack.c.b16 %v2951, %v2939
    %v3852 = vpack.c.b16 %v2952, %v2940
    %v3853 = vpack.c.b16 %v2953, %v2941
    %v3854 = vpack.c.b16 %v2954, %v2942
    %v3855 = vpack.c.b16 %v2955, %v2943
    %v3856 = vpack.c.b16 %v2956, %v2944
    %v3857 = vpack.c.b16 %v2957, %v2945
    %v3858 = vpack.c.b16 %v2958, %v2946
    %v3859 = vpack.c.b16 %v2959, %v2947
    %v3860 = vpack.c.b16 %v2960, %v2948
    %v3861 = vpack.c.b16 %v2973, %v2961
    %v3862 = vpack.c.b16 %v2974, %v2962
    %v3863 = vpack.c.b16 %v2975, %v2963
    %v3864 = vpack.c.b16 %v2976, %v2964
    %v3865 = vpack.c.b16 %v2977, %v2965
    %v3866 = vpack.c.b16 %v2978, %v2966
    %v3867 = vpack.c.b16 %v2979, %v2967
    %v3868 = vpack.c.b16 %v2980, %v2968
    %v3869 = vpack.c.b16 %v2981, %v2969
    %v3870 = vpack.c.b16 %v2982, %v2970
    %v3871 = vpack.c.b16 %v2983, %v2971
    %v3872 = vpack.c.b16 %v2984, %v2972
    %v3873 = vpack.c.b16 %v2997, %v2985
    %v3874 = vpack.c.b16 %v2998, %v2986
    %v3875 = vpack.c.b16 %v2999, %v2987
    %v3876 = vpack.c.b16 %v3000, %v2988
    %v3877 = vpack.c.b16 %v3001, %v2989
    %v3878 = vpack.c.b16 %v3002, %v2990
    %v3879 = vpack.c.b16 %v3003, %v2991
    %v3880 = vpack.c.b16 %v3004, %v2992
    %v3881 = vpack.c.b16 %v3005, %v2993
    %v3882 = vpack.c.b16 %v3006, %v2994
    %v3883 = vpack.c.b16 %v3007, %v2995
    %v3884 = vpack.c.b16 %v3008, %v2996
    %v3885 = vpack.c.b16 %v3021, %v3009
    %v3886 = vpack.c.b16 %v3022, %v3010
    %v3887 = vpack.c.b16 %v3023, %v3011
    %v3888 = vpack.c.b16 %v3024, %v3012
    %v3889 = vpack.c.b16 %v3025, %v3013
    %v3890 = vpack.c.b16 %v3026, %v3014
    %v3891 = vpack.c.b16 %v3027, %v3015
    %v3892 = vpack.c.b16 %v3028, %v3016
    %v3893 = vpack.c.b16 %v3029, %v3017
    %v3894 = vpack.c.b16 %v3030, %v3018
    %v3895 = vpack.c.b16 %v3031, %v3019
    %v3896 = vpack.c.b16 %v3032, %v3020
    %v3897 = vpack.c.b16 %v3045, %v3033
    %v3898 = vpack.c.b16 %v3046, %v3034
    %v3899 = vpack.c.b16 %v3047, %v3035
    %v3900 = vpack.c.b16 %v3048, %v3036
    %v3901 = vpack.c.b16 %v3049, %v3037
    %v3902 = vpack.c.b16 %v3050, %v3038
    %v3903 = vpack.c.b16 %v3051, %v3039
    %v3904 = vpack.c.b16 %v3052, %v3040
    %v3905 = vpack.c.b16 %v3053, %v3041
    %v3906 = vpack.c.b16 %v3054, %v3042
    %v3907 = vpack.c.b16 %v3055, %v3043
    %v3908 = vpack.c.b16 %v3056, %v3044
    %v3909 = vpack.c.b16 %v3069, %v3057
    %v3910 = vpack.c.b16 %v3070, %v3058
    %v3911 = vpack.c.b16 %v3071, %v3059
    %v3912 = vpack.c.b16 %v3072, %v3060
    %v3913 = vpack.c.b16 %v3073, %v3061
    %v3914 = vpack.c.b16 %v3074, %v3062
    %v3915 = vpack.c.b16 %v3075, %v3063
    %v3916 = vpack.c.b16 %v3076, %v3064
    %v3917 = vpack.c.b16 %v3077, %v3065
    %v3918 = vpack.c.b16 %v3078, %v3066
    %v3919 = vpack.c.b16 %v3079, %v3067
    %v3920 = vpack.c.b16 %v3080, %v3068
    %v3921 = vpack.c.b16 %v3093, %v3081
    %v3922 = vpack.c.b16 %v3094, %v3082
    %v3923 = vpack.c.b16 %v3095, %v3083
    %v3924 = vpack.c.b16 %v3096, %v3084
    %v3925 = vpack.c.b16 %v3097, %v3085
    %v3926 = vpack.c.b16 %v3098, %v3086
    %v3927 = vpack.c.b16 %v3099, %v3087
    %v3928 = vpack.c.b16 %v3100, %v3088
    %v3929 = vpack.c.b16 %v3101, %v3089
    %v3930 = vpack.c.b16 %v3102, %v3090
    %v3931 = vpack.c.b16 %v3103, %v3091
    %v3932 = vpack.c.b16 %v3104, %v3092
    %v3933 = vpack.c.b16 %v3117, %v3105
    %v3934 = vpack.c.b16 %v3118, %v3106
    %v3935 = vpack.c.b16 %v3119, %v3107
    %v3936 = vpack.c.b16 %v3120, %v3108
    %v3937 = vpack.c.b16 %v3121, %v3109
    %v3938 = vpack.c.b16 %v3122, %v3110
    %v3939 = vpack.c.b16 %v3123, %v3111
    %v3940 = vpack.c.b16 %v3124, %v3112
    %v3941 = vpack.c.b16 %v3125, %v3113
    %v3942 = vpack.c.b16 %v3126, %v3114
    %v3943 = vpack.c.b16 %v3127, %v3115
    %v3944 = vpack.c.b16 %v3128, %v3116
    %v3945 = vpack.c.b16 %v3141, %v3129
    %v3946 = vpack.c.b16 %v3142, %v3130
    %v3947 = vpack.c.b16 %v3143, %v3131
    %v3948 = vpack.c.b16 %v3144, %v3132
    %v3949 = vpack.c.b16 %v3145, %v3133
    %v3950 = vpack.c.b16 %v3146, %v3134
    %v3951 = vpack.c.b16 %v3147, %v3135
    %v3952 = vpack.c.b16 %v3148, %v3136
    %v3953 = vpack.c.b16 %v3149, %v3137
    %v3954 = vpack.c.b16 %v3150, %v3138
    %v3955 = vpack.c.b16 %v3151, %v3139
    %v3956 = vpack.c.b16 %v3152, %v3140
    %v3957 = vpack.c.b16 %v3165, %v3153
    %v3958 = vpack.c.b16 %v3166, %v3154
    %v3959 = vpack.c.b16 %v3167, %v3155
    %v3960 = vpack.c.b16 %v3168, %v3156
    %v3961 = vpack.c.b16 %v3169, %v3157
    %v3962 = vpack.c.b16 %v3170, %v3158
    %v3963 = vpack.c.b16 %v3171, %v3159
    %v3964 = vpack.c.b16 %v3172, %v3160
    %v3965 = vpack.c.b16 %v3173, %v3161
    %v3966 = vpack.c.b16 %v3174, %v3162
    %v3967 = vpack.c.b16 %v3175, %v3163
    %v3968 = vpack.c.b16 %v3176, %v3164
    %v3969 = vpack.c.b16 %v3189, %v3177
    %v3970 = vpack.c.b16 %v3190, %v3178
    %v3971 = vpack.c.b16 %v3191, %v3179
    %v3972 = vpack.c.b16 %v3192, %v3180
    %v3973 = vpack.c.b16 %v3193, %v3181
    %v3974 = vpack.c.b16 %v3194, %v3182
    %v3975 = vpack.c.b16 %v3195, %v3183
    %v3976 = vpack.c.b16 %v3196, %v3184
    %v3977 = vpack.c.b16 %v3197, %v3185
    %v3978 = vpack.c.b16 %v3198, %v3186
    %v3979 = vpack.c.b16 %v3199, %v3187
    %v3980 = vpack.c.b16 %v3200, %v3188
    %v3981 = vpack.c.b16 %v3213, %v3201
    %v3982 = vpack.c.b16 %v3214, %v3202
    %v3983 = vpack.c.b16 %v3215, %v3203
    %v3984 = vpack.c.b16 %v3216, %v3204
    %v3985 = vpack.c.b16 %v3217, %v3205
    %v3986 = vpack.c.b16 %v3218, %v3206
    %v3987 = vpack.c.b16 %v3219, %v3207
    %v3988 = vpack.c.b16 %v3220, %v3208
    %v3989 = vpack.c.b16 %v3221, %v3209
    %v3990 = vpack.c.b16 %v3222, %v3210
    %v3991 = vpack.c.b16 %v3223, %v3211
    %v3992 = vpack.c.b16 %v3224, %v3212
    %4761 = vmatpush.bf16.msra.mxu0 %v3309
    %4762 = vmatpush.bf16.msra.mxu0 %v3297
    %4763 = vmatpush.bf16.msra.mxu0 %v3285
    %4764 = vmatpush.bf16.msra.mxu0 %v3273
    %4765 = vmatpush.bf16.msra.mxu0 %v3261
    %4766 = vmatpush.bf16.msra.mxu0 %v3249
    %4767 = vmatpush.bf16.msra.mxu0 %v3237
    %4768 = vmatpush.bf16.msra.mxu0 %v3225
    %4769 = vmatmul.bf16.gmra.mxu0 %v905
    %v4770 = vpop.f32.mrf.mxu0
    %v4771 = vadd.f32 0.0, %v4770
    %v4772 = vpop.f32.mrf.mxu0
    %4773 = vdwg.mxu0
    %4774 = vmatpush.bf16.msra.mxu0 %v3405
    %4775 = vmatpush.bf16.msra.mxu0 %v3393
    %4776 = vmatpush.bf16.msra.mxu0 %v3381
    %4777 = vmatpush.bf16.msra.mxu0 %v3369
    %4778 = vmatpush.bf16.msra.mxu0 %v3357
    %4779 = vmatpush.bf16.msra.mxu0 %v3345
    %4780 = vmatpush.bf16.msra.mxu0 %v3333
    %4781 = vmatpush.bf16.msra.mxu0 %v3321
    %4782 = vmatmul.bf16.gmra.mxu0 %v906
    %v4783 = vpop.f32.mrf.mxu0
    %v4784 = vadd.f32 %v4771, %v4783
    %v4785 = vpop.f32.mrf.mxu0
    %4786 = vdwg.mxu0
    %4787 = vmatpush.bf16.msra.mxu0 %v3501
    %4788 = vmatpush.bf16.msra.mxu0 %v3489
    %4789 = vmatpush.bf16.msra.mxu0 %v3477
    %4790 = vmatpush.bf16.msra.mxu0 %v3465
    %4791 = vmatpush.bf16.msra.mxu0 %v3453
    %4792 = vmatpush.bf16.msra.mxu0 %v3441
    %4793 = vmatpush.bf16.msra.mxu0 %v3429
    %4794 = vmatpush.bf16.msra.mxu0 %v3417
    %4795 = vmatmul.bf16.gmra.mxu0 %v907
    %v4796 = vpop.f32.mrf.mxu0
    %v4797 = vadd.f32 %v4784, %v4796
    %v4798 = vpop.f32.mrf.mxu0
    %4799 = vdwg.mxu0
    %4800 = vmatpush.bf16.msra.mxu0 %v3597
    %4801 = vmatpush.bf16.msra.mxu0 %v3585
    %4802 = vmatpush.bf16.msra.mxu0 %v3573
    %4803 = vmatpush.bf16.msra.mxu0 %v3561
    %4804 = vmatpush.bf16.msra.mxu0 %v3549
    %4805 = vmatpush.bf16.msra.mxu0 %v3537
    %4806 = vmatpush.bf16.msra.mxu0 %v3525
    %4807 = vmatpush.bf16.msra.mxu0 %v3513
    %4808 = vmatmul.bf16.gmra.mxu0 %v908
    %v4809 = vpop.f32.mrf.mxu0
    %v4810 = vadd.f32 %v4797, %v4809
    %v4811 = vpop.f32.mrf.mxu0
    %4812 = vdwg.mxu0
    %4813 = vmatpush.bf16.msra.mxu0 %v3693
    %4814 = vmatpush.bf16.msra.mxu0 %v3681
    %4815 = vmatpush.bf16.msra.mxu0 %v3669
    %4816 = vmatpush.bf16.msra.mxu0 %v3657
    %4817 = vmatpush.bf16.msra.mxu0 %v3645
    %4818 = vmatpush.bf16.msra.mxu0 %v3633
    %4819 = vmatpush.bf16.msra.mxu0 %v3621
    %4820 = vmatpush.bf16.msra.mxu0 %v3609
    %4821 = vmatmul.bf16.gmra.mxu0 %v909
    %v4822 = vpop.f32.mrf.mxu0
    %v4823 = vadd.f32 %v4810, %v4822
    %v4824 = vpop.f32.mrf.mxu0
    %4825 = vdwg.mxu0
    %4826 = vmatpush.bf16.msra.mxu0 %v3789
    %4827 = vmatpush.bf16.msra.mxu0 %v3777
    %4828 = vmatpush.bf16.msra.mxu0 %v3765
    %4829 = vmatpush.bf16.msra.mxu0 %v3753
    %4830 = vmatpush.bf16.msra.mxu0 %v3741
    %4831 = vmatpush.bf16.msra.mxu0 %v3729
    %4832 = vmatpush.bf16.msra.mxu0 %v3717
    %4833 = vmatpush.bf16.msra.mxu0 %v3705
    %4834 = vmatmul.bf16.gmra.mxu0 %v910
    %v4835 = vpop.f32.mrf.mxu0
    %v4836 = vadd.f32 %v4823, %v4835
    %v4837 = vpop.f32.mrf.mxu0
    %4838 = vdwg.mxu0
    %4839 = vmatpush.bf16.msra.mxu0 %v3885
    %4840 = vmatpush.bf16.msra.mxu0 %v3873
    %4841 = vmatpush.bf16.msra.mxu0 %v3861
    %4842 = vmatpush.bf16.msra.mxu0 %v3849
    %4843 = vmatpush.bf16.msra.mxu0 %v3837
    %4844 = vmatpush.bf16.msra.mxu0 %v3825
    %4845 = vmatpush.bf16.msra.mxu0 %v3813
    %4846 = vmatpush.bf16.msra.mxu0 %v3801
    %4847 = vmatmul.bf16.gmra.mxu0 %v911
    %v4848 = vpop.f32.mrf.mxu0
    %v4849 = vadd.f32 %v4836, %v4848
    %v4850 = vpop.f32.mrf.mxu0
    %4851 = vdwg.mxu0
    %4852 = vmatpush.bf16.msra.mxu0 %v3981
    %4853 = vmatpush.bf16.msra.mxu0 %v3969
    %4854 = vmatpush.bf16.msra.mxu0 %v3957
    %4855 = vmatpush.bf16.msra.mxu0 %v3945
    %4856 = vmatpush.bf16.msra.mxu0 %v3933
    %4857 = vmatpush.bf16.msra.mxu0 %v3921
    %4858 = vmatpush.bf16.msra.mxu0 %v3909
    %4859 = vmatpush.bf16.msra.mxu0 %v3897
    %4860 = vmatmul.bf16.gmra.mxu0 %v912
    %v4861 = vpop.f32.mrf.mxu0
    %v4862 = vadd.f32 %v4849, %v4861
    %v4863 = vpop.f32.mrf.mxu0
    %4864 = vdwg.mxu0
    %4865 = vmatpush.bf16.msra.mxu0 %v3310
    %4866 = vmatpush.bf16.msra.mxu0 %v3298
    %4867 = vmatpush.bf16.msra.mxu0 %v3286
    %4868 = vmatpush.bf16.msra.mxu0 %v3274
    %4869 = vmatpush.bf16.msra.mxu0 %v3262
    %4870 = vmatpush.bf16.msra.mxu0 %v3250
    %4871 = vmatpush.bf16.msra.mxu0 %v3238
    %4872 = vmatpush.bf16.msra.mxu0 %v3226
    %4873 = vmatmul.bf16.gmra.mxu0 %v905
    %v4874 = vpop.f32.mrf.mxu0
    %v4875 = vadd.f32 0.0, %v4874
    %v4876 = vpop.f32.mrf.mxu0
    %4877 = vdwg.mxu0
    %4878 = vmatpush.bf16.msra.mxu0 %v3406
    %4879 = vmatpush.bf16.msra.mxu0 %v3394
    %4880 = vmatpush.bf16.msra.mxu0 %v3382
    %4881 = vmatpush.bf16.msra.mxu0 %v3370
    %4882 = vmatpush.bf16.msra.mxu0 %v3358
    %4883 = vmatpush.bf16.msra.mxu0 %v3346
    %4884 = vmatpush.bf16.msra.mxu0 %v3334
    %4885 = vmatpush.bf16.msra.mxu0 %v3322
    %4886 = vmatmul.bf16.gmra.mxu0 %v906
    %v4887 = vpop.f32.mrf.mxu0
    %v4888 = vadd.f32 %v4875, %v4887
    %v4889 = vpop.f32.mrf.mxu0
    %4890 = vdwg.mxu0
    %4891 = vmatpush.bf16.msra.mxu0 %v3502
    %4892 = vmatpush.bf16.msra.mxu0 %v3490
    %4893 = vmatpush.bf16.msra.mxu0 %v3478
    %4894 = vmatpush.bf16.msra.mxu0 %v3466
    %4895 = vmatpush.bf16.msra.mxu0 %v3454
    %4896 = vmatpush.bf16.msra.mxu0 %v3442
    %4897 = vmatpush.bf16.msra.mxu0 %v3430
    %4898 = vmatpush.bf16.msra.mxu0 %v3418
    %4899 = vmatmul.bf16.gmra.mxu0 %v907
    %v4900 = vpop.f32.mrf.mxu0
    %v4901 = vadd.f32 %v4888, %v4900
    %v4902 = vpop.f32.mrf.mxu0
    %4903 = vdwg.mxu0
    %4904 = vmatpush.bf16.msra.mxu0 %v3598
    %4905 = vmatpush.bf16.msra.mxu0 %v3586
    %4906 = vmatpush.bf16.msra.mxu0 %v3574
    %4907 = vmatpush.bf16.msra.mxu0 %v3562
    %4908 = vmatpush.bf16.msra.mxu0 %v3550
    %4909 = vmatpush.bf16.msra.mxu0 %v3538
    %4910 = vmatpush.bf16.msra.mxu0 %v3526
    %4911 = vmatpush.bf16.msra.mxu0 %v3514
    %4912 = vmatmul.bf16.gmra.mxu0 %v908
    %v4913 = vpop.f32.mrf.mxu0
    %v4914 = vadd.f32 %v4901, %v4913
    %v4915 = vpop.f32.mrf.mxu0
    %4916 = vdwg.mxu0
    %4917 = vmatpush.bf16.msra.mxu0 %v3694
    %4918 = vmatpush.bf16.msra.mxu0 %v3682
    %4919 = vmatpush.bf16.msra.mxu0 %v3670
    %4920 = vmatpush.bf16.msra.mxu0 %v3658
    %4921 = vmatpush.bf16.msra.mxu0 %v3646
    %4922 = vmatpush.bf16.msra.mxu0 %v3634
    %4923 = vmatpush.bf16.msra.mxu0 %v3622
    %4924 = vmatpush.bf16.msra.mxu0 %v3610
    %4925 = vmatmul.bf16.gmra.mxu0 %v909
    %v4926 = vpop.f32.mrf.mxu0
    %v4927 = vadd.f32 %v4914, %v4926
    %v4928 = vpop.f32.mrf.mxu0
    %4929 = vdwg.mxu0
    %4930 = vmatpush.bf16.msra.mxu0 %v3790
    %4931 = vmatpush.bf16.msra.mxu0 %v3778
    %4932 = vmatpush.bf16.msra.mxu0 %v3766
    %4933 = vmatpush.bf16.msra.mxu0 %v3754
    %4934 = vmatpush.bf16.msra.mxu0 %v3742
    %4935 = vmatpush.bf16.msra.mxu0 %v3730
    %4936 = vmatpush.bf16.msra.mxu0 %v3718
    %4937 = vmatpush.bf16.msra.mxu0 %v3706
    %4938 = vmatmul.bf16.gmra.mxu0 %v910
    %v4939 = vpop.f32.mrf.mxu0
    %v4940 = vadd.f32 %v4927, %v4939
    %v4941 = vpop.f32.mrf.mxu0
    %4942 = vdwg.mxu0
    %4943 = vmatpush.bf16.msra.mxu0 %v3886
    %4944 = vmatpush.bf16.msra.mxu0 %v3874
    %4945 = vmatpush.bf16.msra.mxu0 %v3862
    %4946 = vmatpush.bf16.msra.mxu0 %v3850
    %4947 = vmatpush.bf16.msra.mxu0 %v3838
    %4948 = vmatpush.bf16.msra.mxu0 %v3826
    %4949 = vmatpush.bf16.msra.mxu0 %v3814
    %4950 = vmatpush.bf16.msra.mxu0 %v3802
    %4951 = vmatmul.bf16.gmra.mxu0 %v911
    %v4952 = vpop.f32.mrf.mxu0
    %v4953 = vadd.f32 %v4940, %v4952
    %v4954 = vpop.f32.mrf.mxu0
    %4955 = vdwg.mxu0
    %4956 = vmatpush.bf16.msra.mxu0 %v3982
    %4957 = vmatpush.bf16.msra.mxu0 %v3970
    %4958 = vmatpush.bf16.msra.mxu0 %v3958
    %4959 = vmatpush.bf16.msra.mxu0 %v3946
    %4960 = vmatpush.bf16.msra.mxu0 %v3934
    %4961 = vmatpush.bf16.msra.mxu0 %v3922
    %4962 = vmatpush.bf16.msra.mxu0 %v3910
    %4963 = vmatpush.bf16.msra.mxu0 %v3898
    %4964 = vmatmul.bf16.gmra.mxu0 %v912
    %v4965 = vpop.f32.mrf.mxu0
    %v4966 = vadd.f32 %v4953, %v4965
    %v4967 = vpop.f32.mrf.mxu0
    %4968 = vdwg.mxu0
    %4969 = vmatpush.bf16.msra.mxu0 %v3311
    %4970 = vmatpush.bf16.msra.mxu0 %v3299
    %4971 = vmatpush.bf16.msra.mxu0 %v3287
    %4972 = vmatpush.bf16.msra.mxu0 %v3275
    %4973 = vmatpush.bf16.msra.mxu0 %v3263
    %4974 = vmatpush.bf16.msra.mxu0 %v3251
    %4975 = vmatpush.bf16.msra.mxu0 %v3239
    %4976 = vmatpush.bf16.msra.mxu0 %v3227
    %4977 = vmatmul.bf16.gmra.mxu0 %v905
    %v4978 = vpop.f32.mrf.mxu0
    %v4979 = vadd.f32 0.0, %v4978
    %v4980 = vpop.f32.mrf.mxu0
    %4981 = vdwg.mxu0
    %4982 = vmatpush.bf16.msra.mxu0 %v3407
    %4983 = vmatpush.bf16.msra.mxu0 %v3395
    %4984 = vmatpush.bf16.msra.mxu0 %v3383
    %4985 = vmatpush.bf16.msra.mxu0 %v3371
    %4986 = vmatpush.bf16.msra.mxu0 %v3359
    %4987 = vmatpush.bf16.msra.mxu0 %v3347
    %4988 = vmatpush.bf16.msra.mxu0 %v3335
    %4989 = vmatpush.bf16.msra.mxu0 %v3323
    %4990 = vmatmul.bf16.gmra.mxu0 %v906
    %v4991 = vpop.f32.mrf.mxu0
    %v4992 = vadd.f32 %v4979, %v4991
    %v4993 = vpop.f32.mrf.mxu0
    %4994 = vdwg.mxu0
    %4995 = vmatpush.bf16.msra.mxu0 %v3503
    %4996 = vmatpush.bf16.msra.mxu0 %v3491
    %4997 = vmatpush.bf16.msra.mxu0 %v3479
    %4998 = vmatpush.bf16.msra.mxu0 %v3467
    %4999 = vmatpush.bf16.msra.mxu0 %v3455
    %5000 = vmatpush.bf16.msra.mxu0 %v3443
    %5001 = vmatpush.bf16.msra.mxu0 %v3431
    %5002 = vmatpush.bf16.msra.mxu0 %v3419
    %5003 = vmatmul.bf16.gmra.mxu0 %v907
    %v5004 = vpop.f32.mrf.mxu0
    %v5005 = vadd.f32 %v4992, %v5004
    %v5006 = vpop.f32.mrf.mxu0
    %5007 = vdwg.mxu0
    %5008 = vmatpush.bf16.msra.mxu0 %v3599
    %5009 = vmatpush.bf16.msra.mxu0 %v3587
    %5010 = vmatpush.bf16.msra.mxu0 %v3575
    %5011 = vmatpush.bf16.msra.mxu0 %v3563
    %5012 = vmatpush.bf16.msra.mxu0 %v3551
    %5013 = vmatpush.bf16.msra.mxu0 %v3539
    %5014 = vmatpush.bf16.msra.mxu0 %v3527
    %5015 = vmatpush.bf16.msra.mxu0 %v3515
    %5016 = vmatmul.bf16.gmra.mxu0 %v908
    %v5017 = vpop.f32.mrf.mxu0
    %v5018 = vadd.f32 %v5005, %v5017
    %v5019 = vpop.f32.mrf.mxu0
    %5020 = vdwg.mxu0
    %5021 = vmatpush.bf16.msra.mxu0 %v3695
    %5022 = vmatpush.bf16.msra.mxu0 %v3683
    %5023 = vmatpush.bf16.msra.mxu0 %v3671
    %5024 = vmatpush.bf16.msra.mxu0 %v3659
    %5025 = vmatpush.bf16.msra.mxu0 %v3647
    %5026 = vmatpush.bf16.msra.mxu0 %v3635
    %5027 = vmatpush.bf16.msra.mxu0 %v3623
    %5028 = vmatpush.bf16.msra.mxu0 %v3611
    %5029 = vmatmul.bf16.gmra.mxu0 %v909
    %v5030 = vpop.f32.mrf.mxu0
    %v5031 = vadd.f32 %v5018, %v5030
    %v5032 = vpop.f32.mrf.mxu0
    %5033 = vdwg.mxu0
    %5034 = vmatpush.bf16.msra.mxu0 %v3791
    %5035 = vmatpush.bf16.msra.mxu0 %v3779
    %5036 = vmatpush.bf16.msra.mxu0 %v3767
    %5037 = vmatpush.bf16.msra.mxu0 %v3755
    %5038 = vmatpush.bf16.msra.mxu0 %v3743
    %5039 = vmatpush.bf16.msra.mxu0 %v3731
    %5040 = vmatpush.bf16.msra.mxu0 %v3719
    %5041 = vmatpush.bf16.msra.mxu0 %v3707
    %5042 = vmatmul.bf16.gmra.mxu0 %v910
    %v5043 = vpop.f32.mrf.mxu0
    %v5044 = vadd.f32 %v5031, %v5043
    %v5045 = vpop.f32.mrf.mxu0
    %5046 = vdwg.mxu0
    %5047 = vmatpush.bf16.msra.mxu0 %v3887
    %5048 = vmatpush.bf16.msra.mxu0 %v3875
    %5049 = vmatpush.bf16.msra.mxu0 %v3863
    %5050 = vmatpush.bf16.msra.mxu0 %v3851
    %5051 = vmatpush.bf16.msra.mxu0 %v3839
    %5052 = vmatpush.bf16.msra.mxu0 %v3827
    %5053 = vmatpush.bf16.msra.mxu0 %v3815
    %5054 = vmatpush.bf16.msra.mxu0 %v3803
    %5055 = vmatmul.bf16.gmra.mxu0 %v911
    %v5056 = vpop.f32.mrf.mxu0
    %v5057 = vadd.f32 %v5044, %v5056
    %v5058 = vpop.f32.mrf.mxu0
    %5059 = vdwg.mxu0
    %5060 = vmatpush.bf16.msra.mxu0 %v3983
    %5061 = vmatpush.bf16.msra.mxu0 %v3971
    %5062 = vmatpush.bf16.msra.mxu0 %v3959
    %5063 = vmatpush.bf16.msra.mxu0 %v3947
    %5064 = vmatpush.bf16.msra.mxu0 %v3935
    %5065 = vmatpush.bf16.msra.mxu0 %v3923
    %5066 = vmatpush.bf16.msra.mxu0 %v3911
    %5067 = vmatpush.bf16.msra.mxu0 %v3899
    %5068 = vmatmul.bf16.gmra.mxu0 %v912
    %v5069 = vpop.f32.mrf.mxu0
    %v5070 = vadd.f32 %v5057, %v5069
    %v5071 = vpop.f32.mrf.mxu0
    %5072 = vdwg.mxu0
    %5073 = vmatpush.bf16.msra.mxu0 %v3312
    %5074 = vmatpush.bf16.msra.mxu0 %v3300
    %5075 = vmatpush.bf16.msra.mxu0 %v3288
    %5076 = vmatpush.bf16.msra.mxu0 %v3276
    %5077 = vmatpush.bf16.msra.mxu0 %v3264
    %5078 = vmatpush.bf16.msra.mxu0 %v3252
    %5079 = vmatpush.bf16.msra.mxu0 %v3240
    %5080 = vmatpush.bf16.msra.mxu0 %v3228
    %5081 = vmatmul.bf16.gmra.mxu0 %v905
    %v5082 = vpop.f32.mrf.mxu0
    %v5083 = vadd.f32 0.0, %v5082
    %v5084 = vpop.f32.mrf.mxu0
    %5085 = vdwg.mxu0
    %5086 = vmatpush.bf16.msra.mxu0 %v3408
    %5087 = vmatpush.bf16.msra.mxu0 %v3396
    %5088 = vmatpush.bf16.msra.mxu0 %v3384
    %5089 = vmatpush.bf16.msra.mxu0 %v3372
    %5090 = vmatpush.bf16.msra.mxu0 %v3360
    %5091 = vmatpush.bf16.msra.mxu0 %v3348
    %5092 = vmatpush.bf16.msra.mxu0 %v3336
    %5093 = vmatpush.bf16.msra.mxu0 %v3324
    %5094 = vmatmul.bf16.gmra.mxu0 %v906
    %v5095 = vpop.f32.mrf.mxu0
    %v5096 = vadd.f32 %v5083, %v5095
    %v5097 = vpop.f32.mrf.mxu0
    %5098 = vdwg.mxu0
    %5099 = vmatpush.bf16.msra.mxu0 %v3504
    %5100 = vmatpush.bf16.msra.mxu0 %v3492
    %5101 = vmatpush.bf16.msra.mxu0 %v3480
    %5102 = vmatpush.bf16.msra.mxu0 %v3468
    %5103 = vmatpush.bf16.msra.mxu0 %v3456
    %5104 = vmatpush.bf16.msra.mxu0 %v3444
    %5105 = vmatpush.bf16.msra.mxu0 %v3432
    %5106 = vmatpush.bf16.msra.mxu0 %v3420
    %5107 = vmatmul.bf16.gmra.mxu0 %v907
    %v5108 = vpop.f32.mrf.mxu0
    %v5109 = vadd.f32 %v5096, %v5108
    %v5110 = vpop.f32.mrf.mxu0
    %5111 = vdwg.mxu0
    %5112 = vmatpush.bf16.msra.mxu0 %v3600
    %5113 = vmatpush.bf16.msra.mxu0 %v3588
    %5114 = vmatpush.bf16.msra.mxu0 %v3576
    %5115 = vmatpush.bf16.msra.mxu0 %v3564
    %5116 = vmatpush.bf16.msra.mxu0 %v3552
    %5117 = vmatpush.bf16.msra.mxu0 %v3540
    %5118 = vmatpush.bf16.msra.mxu0 %v3528
    %5119 = vmatpush.bf16.msra.mxu0 %v3516
    %5120 = vmatmul.bf16.gmra.mxu0 %v908
    %v5121 = vpop.f32.mrf.mxu0
    %v5122 = vadd.f32 %v5109, %v5121
    %v5123 = vpop.f32.mrf.mxu0
    %5124 = vdwg.mxu0
    %5125 = vmatpush.bf16.msra.mxu0 %v3696
    %5126 = vmatpush.bf16.msra.mxu0 %v3684
    %5127 = vmatpush.bf16.msra.mxu0 %v3672
    %5128 = vmatpush.bf16.msra.mxu0 %v3660
    %5129 = vmatpush.bf16.msra.mxu0 %v3648
    %5130 = vmatpush.bf16.msra.mxu0 %v3636
    %5131 = vmatpush.bf16.msra.mxu0 %v3624
    %5132 = vmatpush.bf16.msra.mxu0 %v3612
    %5133 = vmatmul.bf16.gmra.mxu0 %v909
    %v5134 = vpop.f32.mrf.mxu0
    %v5135 = vadd.f32 %v5122, %v5134
    %v5136 = vpop.f32.mrf.mxu0
    %5137 = vdwg.mxu0
    %5138 = vmatpush.bf16.msra.mxu0 %v3792
    %5139 = vmatpush.bf16.msra.mxu0 %v3780
    %5140 = vmatpush.bf16.msra.mxu0 %v3768
    %5141 = vmatpush.bf16.msra.mxu0 %v3756
    %5142 = vmatpush.bf16.msra.mxu0 %v3744
    %5143 = vmatpush.bf16.msra.mxu0 %v3732
    %5144 = vmatpush.bf16.msra.mxu0 %v3720
    %5145 = vmatpush.bf16.msra.mxu0 %v3708
    %5146 = vmatmul.bf16.gmra.mxu0 %v910
    %v5147 = vpop.f32.mrf.mxu0
    %v5148 = vadd.f32 %v5135, %v5147
    %v5149 = vpop.f32.mrf.mxu0
    %5150 = vdwg.mxu0
    %5151 = vmatpush.bf16.msra.mxu0 %v3888
    %5152 = vmatpush.bf16.msra.mxu0 %v3876
    %5153 = vmatpush.bf16.msra.mxu0 %v3864
    %5154 = vmatpush.bf16.msra.mxu0 %v3852
    %5155 = vmatpush.bf16.msra.mxu0 %v3840
    %5156 = vmatpush.bf16.msra.mxu0 %v3828
    %5157 = vmatpush.bf16.msra.mxu0 %v3816
    %5158 = vmatpush.bf16.msra.mxu0 %v3804
    %5159 = vmatmul.bf16.gmra.mxu0 %v911
    %v5160 = vpop.f32.mrf.mxu0
    %v5161 = vadd.f32 %v5148, %v5160
    %v5162 = vpop.f32.mrf.mxu0
    %5163 = vdwg.mxu0
    %5164 = vmatpush.bf16.msra.mxu0 %v3984
    %5165 = vmatpush.bf16.msra.mxu0 %v3972
    %5166 = vmatpush.bf16.msra.mxu0 %v3960
    %5167 = vmatpush.bf16.msra.mxu0 %v3948
    %5168 = vmatpush.bf16.msra.mxu0 %v3936
    %5169 = vmatpush.bf16.msra.mxu0 %v3924
    %5170 = vmatpush.bf16.msra.mxu0 %v3912
    %5171 = vmatpush.bf16.msra.mxu0 %v3900
    %5172 = vmatmul.bf16.gmra.mxu0 %v912
    %v5173 = vpop.f32.mrf.mxu0
    %v5174 = vadd.f32 %v5161, %v5173
    %v5175 = vpop.f32.mrf.mxu0
    %5176 = vdwg.mxu0
    %5177 = vmatpush.bf16.msra.mxu0 %v3313
    %5178 = vmatpush.bf16.msra.mxu0 %v3301
    %5179 = vmatpush.bf16.msra.mxu0 %v3289
    %5180 = vmatpush.bf16.msra.mxu0 %v3277
    %5181 = vmatpush.bf16.msra.mxu0 %v3265
    %5182 = vmatpush.bf16.msra.mxu0 %v3253
    %5183 = vmatpush.bf16.msra.mxu0 %v3241
    %5184 = vmatpush.bf16.msra.mxu0 %v3229
    %5185 = vmatmul.bf16.gmra.mxu0 %v905
    %v5186 = vpop.f32.mrf.mxu0
    %v5187 = vadd.f32 0.0, %v5186
    %v5188 = vpop.f32.mrf.mxu0
    %5189 = vdwg.mxu0
    %5190 = vmatpush.bf16.msra.mxu0 %v3409
    %5191 = vmatpush.bf16.msra.mxu0 %v3397
    %5192 = vmatpush.bf16.msra.mxu0 %v3385
    %5193 = vmatpush.bf16.msra.mxu0 %v3373
    %5194 = vmatpush.bf16.msra.mxu0 %v3361
    %5195 = vmatpush.bf16.msra.mxu0 %v3349
    %5196 = vmatpush.bf16.msra.mxu0 %v3337
    %5197 = vmatpush.bf16.msra.mxu0 %v3325
    %5198 = vmatmul.bf16.gmra.mxu0 %v906
    %v5199 = vpop.f32.mrf.mxu0
    %v5200 = vadd.f32 %v5187, %v5199
    %v5201 = vpop.f32.mrf.mxu0
    %5202 = vdwg.mxu0
    %5203 = vmatpush.bf16.msra.mxu0 %v3505
    %5204 = vmatpush.bf16.msra.mxu0 %v3493
    %5205 = vmatpush.bf16.msra.mxu0 %v3481
    %5206 = vmatpush.bf16.msra.mxu0 %v3469
    %5207 = vmatpush.bf16.msra.mxu0 %v3457
    %5208 = vmatpush.bf16.msra.mxu0 %v3445
    %5209 = vmatpush.bf16.msra.mxu0 %v3433
    %5210 = vmatpush.bf16.msra.mxu0 %v3421
    %5211 = vmatmul.bf16.gmra.mxu0 %v907
    %v5212 = vpop.f32.mrf.mxu0
    %v5213 = vadd.f32 %v5200, %v5212
    %v5214 = vpop.f32.mrf.mxu0
    %5215 = vdwg.mxu0
    %5216 = vmatpush.bf16.msra.mxu0 %v3601
    %5217 = vmatpush.bf16.msra.mxu0 %v3589
    %5218 = vmatpush.bf16.msra.mxu0 %v3577
    %5219 = vmatpush.bf16.msra.mxu0 %v3565
    %5220 = vmatpush.bf16.msra.mxu0 %v3553
    %5221 = vmatpush.bf16.msra.mxu0 %v3541
    %5222 = vmatpush.bf16.msra.mxu0 %v3529
    %5223 = vmatpush.bf16.msra.mxu0 %v3517
    %5224 = vmatmul.bf16.gmra.mxu0 %v908
    %v5225 = vpop.f32.mrf.mxu0
    %v5226 = vadd.f32 %v5213, %v5225
    %v5227 = vpop.f32.mrf.mxu0
    %5228 = vdwg.mxu0
    %5229 = vmatpush.bf16.msra.mxu0 %v3697
    %5230 = vmatpush.bf16.msra.mxu0 %v3685
    %5231 = vmatpush.bf16.msra.mxu0 %v3673
    %5232 = vmatpush.bf16.msra.mxu0 %v3661
    %5233 = vmatpush.bf16.msra.mxu0 %v3649
    %5234 = vmatpush.bf16.msra.mxu0 %v3637
    %5235 = vmatpush.bf16.msra.mxu0 %v3625
    %5236 = vmatpush.bf16.msra.mxu0 %v3613
    %5237 = vmatmul.bf16.gmra.mxu0 %v909
    %v5238 = vpop.f32.mrf.mxu0
    %v5239 = vadd.f32 %v5226, %v5238
    %v5240 = vpop.f32.mrf.mxu0
    %5241 = vdwg.mxu0
    %5242 = vmatpush.bf16.msra.mxu0 %v3793
    %5243 = vmatpush.bf16.msra.mxu0 %v3781
    %5244 = vmatpush.bf16.msra.mxu0 %v3769
    %5245 = vmatpush.bf16.msra.mxu0 %v3757
    %5246 = vmatpush.bf16.msra.mxu0 %v3745
    %5247 = vmatpush.bf16.msra.mxu0 %v3733
    %5248 = vmatpush.bf16.msra.mxu0 %v3721
    %5249 = vmatpush.bf16.msra.mxu0 %v3709
    %5250 = vmatmul.bf16.gmra.mxu0 %v910
    %v5251 = vpop.f32.mrf.mxu0
    %v5252 = vadd.f32 %v5239, %v5251
    %v5253 = vpop.f32.mrf.mxu0
    %5254 = vdwg.mxu0
    %5255 = vmatpush.bf16.msra.mxu0 %v3889
    %5256 = vmatpush.bf16.msra.mxu0 %v3877
    %5257 = vmatpush.bf16.msra.mxu0 %v3865
    %5258 = vmatpush.bf16.msra.mxu0 %v3853
    %5259 = vmatpush.bf16.msra.mxu0 %v3841
    %5260 = vmatpush.bf16.msra.mxu0 %v3829
    %5261 = vmatpush.bf16.msra.mxu0 %v3817
    %5262 = vmatpush.bf16.msra.mxu0 %v3805
    %5263 = vmatmul.bf16.gmra.mxu0 %v911
    %v5264 = vpop.f32.mrf.mxu0
    %v5265 = vadd.f32 %v5252, %v5264
    %v5266 = vpop.f32.mrf.mxu0
    %5267 = vdwg.mxu0
    %5268 = vmatpush.bf16.msra.mxu0 %v3985
    %5269 = vmatpush.bf16.msra.mxu0 %v3973
    %5270 = vmatpush.bf16.msra.mxu0 %v3961
    %5271 = vmatpush.bf16.msra.mxu0 %v3949
    %5272 = vmatpush.bf16.msra.mxu0 %v3937
    %5273 = vmatpush.bf16.msra.mxu0 %v3925
    %5274 = vmatpush.bf16.msra.mxu0 %v3913
    %5275 = vmatpush.bf16.msra.mxu0 %v3901
    %5276 = vmatmul.bf16.gmra.mxu0 %v912
    %v5277 = vpop.f32.mrf.mxu0
    %v5278 = vadd.f32 %v5265, %v5277
    %v5279 = vpop.f32.mrf.mxu0
    %5280 = vdwg.mxu0
    %5281 = vmatpush.bf16.msra.mxu0 %v3314
    %5282 = vmatpush.bf16.msra.mxu0 %v3302
    %5283 = vmatpush.bf16.msra.mxu0 %v3290
    %5284 = vmatpush.bf16.msra.mxu0 %v3278
    %5285 = vmatpush.bf16.msra.mxu0 %v3266
    %5286 = vmatpush.bf16.msra.mxu0 %v3254
    %5287 = vmatpush.bf16.msra.mxu0 %v3242
    %5288 = vmatpush.bf16.msra.mxu0 %v3230
    %5289 = vmatmul.bf16.gmra.mxu0 %v905
    %v5290 = vpop.f32.mrf.mxu0
    %v5291 = vadd.f32 0.0, %v5290
    %v5292 = vpop.f32.mrf.mxu0
    %5293 = vdwg.mxu0
    %5294 = vmatpush.bf16.msra.mxu0 %v3410
    %5295 = vmatpush.bf16.msra.mxu0 %v3398
    %5296 = vmatpush.bf16.msra.mxu0 %v3386
    %5297 = vmatpush.bf16.msra.mxu0 %v3374
    %5298 = vmatpush.bf16.msra.mxu0 %v3362
    %5299 = vmatpush.bf16.msra.mxu0 %v3350
    %5300 = vmatpush.bf16.msra.mxu0 %v3338
    %5301 = vmatpush.bf16.msra.mxu0 %v3326
    %5302 = vmatmul.bf16.gmra.mxu0 %v906
    %v5303 = vpop.f32.mrf.mxu0
    %v5304 = vadd.f32 %v5291, %v5303
    %v5305 = vpop.f32.mrf.mxu0
    %5306 = vdwg.mxu0
    %5307 = vmatpush.bf16.msra.mxu0 %v3506
    %5308 = vmatpush.bf16.msra.mxu0 %v3494
    %5309 = vmatpush.bf16.msra.mxu0 %v3482
    %5310 = vmatpush.bf16.msra.mxu0 %v3470
    %5311 = vmatpush.bf16.msra.mxu0 %v3458
    %5312 = vmatpush.bf16.msra.mxu0 %v3446
    %5313 = vmatpush.bf16.msra.mxu0 %v3434
    %5314 = vmatpush.bf16.msra.mxu0 %v3422
    %5315 = vmatmul.bf16.gmra.mxu0 %v907
    %v5316 = vpop.f32.mrf.mxu0
    %v5317 = vadd.f32 %v5304, %v5316
    %v5318 = vpop.f32.mrf.mxu0
    %5319 = vdwg.mxu0
    %5320 = vmatpush.bf16.msra.mxu0 %v3602
    %5321 = vmatpush.bf16.msra.mxu0 %v3590
    %5322 = vmatpush.bf16.msra.mxu0 %v3578
    %5323 = vmatpush.bf16.msra.mxu0 %v3566
    %5324 = vmatpush.bf16.msra.mxu0 %v3554
    %5325 = vmatpush.bf16.msra.mxu0 %v3542
    %5326 = vmatpush.bf16.msra.mxu0 %v3530
    %5327 = vmatpush.bf16.msra.mxu0 %v3518
    %5328 = vmatmul.bf16.gmra.mxu0 %v908
    %v5329 = vpop.f32.mrf.mxu0
    %v5330 = vadd.f32 %v5317, %v5329
    %v5331 = vpop.f32.mrf.mxu0
    %5332 = vdwg.mxu0
    %5333 = vmatpush.bf16.msra.mxu0 %v3698
    %5334 = vmatpush.bf16.msra.mxu0 %v3686
    %5335 = vmatpush.bf16.msra.mxu0 %v3674
    %5336 = vmatpush.bf16.msra.mxu0 %v3662
    %5337 = vmatpush.bf16.msra.mxu0 %v3650
    %5338 = vmatpush.bf16.msra.mxu0 %v3638
    %5339 = vmatpush.bf16.msra.mxu0 %v3626
    %5340 = vmatpush.bf16.msra.mxu0 %v3614
    %5341 = vmatmul.bf16.gmra.mxu0 %v909
    %v5342 = vpop.f32.mrf.mxu0
    %v5343 = vadd.f32 %v5330, %v5342
    %v5344 = vpop.f32.mrf.mxu0
    %5345 = vdwg.mxu0
    %5346 = vmatpush.bf16.msra.mxu0 %v3794
    %5347 = vmatpush.bf16.msra.mxu0 %v3782
    %5348 = vmatpush.bf16.msra.mxu0 %v3770
    %5349 = vmatpush.bf16.msra.mxu0 %v3758
    %5350 = vmatpush.bf16.msra.mxu0 %v3746
    %5351 = vmatpush.bf16.msra.mxu0 %v3734
    %5352 = vmatpush.bf16.msra.mxu0 %v3722
    %5353 = vmatpush.bf16.msra.mxu0 %v3710
    %5354 = vmatmul.bf16.gmra.mxu0 %v910
    %v5355 = vpop.f32.mrf.mxu0
    %v5356 = vadd.f32 %v5343, %v5355
    %v5357 = vpop.f32.mrf.mxu0
    %5358 = vdwg.mxu0
    %5359 = vmatpush.bf16.msra.mxu0 %v3890
    %5360 = vmatpush.bf16.msra.mxu0 %v3878
    %5361 = vmatpush.bf16.msra.mxu0 %v3866
    %5362 = vmatpush.bf16.msra.mxu0 %v3854
    %5363 = vmatpush.bf16.msra.mxu0 %v3842
    %5364 = vmatpush.bf16.msra.mxu0 %v3830
    %5365 = vmatpush.bf16.msra.mxu0 %v3818
    %5366 = vmatpush.bf16.msra.mxu0 %v3806
    %5367 = vmatmul.bf16.gmra.mxu0 %v911
    %v5368 = vpop.f32.mrf.mxu0
    %v5369 = vadd.f32 %v5356, %v5368
    %v5370 = vpop.f32.mrf.mxu0
    %5371 = vdwg.mxu0
    %5372 = vmatpush.bf16.msra.mxu0 %v3986
    %5373 = vmatpush.bf16.msra.mxu0 %v3974
    %5374 = vmatpush.bf16.msra.mxu0 %v3962
    %5375 = vmatpush.bf16.msra.mxu0 %v3950
    %5376 = vmatpush.bf16.msra.mxu0 %v3938
    %5377 = vmatpush.bf16.msra.mxu0 %v3926
    %5378 = vmatpush.bf16.msra.mxu0 %v3914
    %5379 = vmatpush.bf16.msra.mxu0 %v3902
    %5380 = vmatmul.bf16.gmra.mxu0 %v912
    %v5381 = vpop.f32.mrf.mxu0
    %v5382 = vadd.f32 %v5369, %v5381
    %v5383 = vpop.f32.mrf.mxu0
    %5384 = vdwg.mxu0
    %5385 = vmatpush.bf16.msra.mxu0 %v3315
    %5386 = vmatpush.bf16.msra.mxu0 %v3303
    %5387 = vmatpush.bf16.msra.mxu0 %v3291
    %5388 = vmatpush.bf16.msra.mxu0 %v3279
    %5389 = vmatpush.bf16.msra.mxu0 %v3267
    %5390 = vmatpush.bf16.msra.mxu0 %v3255
    %5391 = vmatpush.bf16.msra.mxu0 %v3243
    %5392 = vmatpush.bf16.msra.mxu0 %v3231
    %5393 = vmatmul.bf16.gmra.mxu0 %v905
    %v5394 = vpop.f32.mrf.mxu0
    %v5395 = vadd.f32 0.0, %v5394
    %v5396 = vpop.f32.mrf.mxu0
    %5397 = vdwg.mxu0
    %5398 = vmatpush.bf16.msra.mxu0 %v3411
    %5399 = vmatpush.bf16.msra.mxu0 %v3399
    %5400 = vmatpush.bf16.msra.mxu0 %v3387
    %5401 = vmatpush.bf16.msra.mxu0 %v3375
    %5402 = vmatpush.bf16.msra.mxu0 %v3363
    %5403 = vmatpush.bf16.msra.mxu0 %v3351
    %5404 = vmatpush.bf16.msra.mxu0 %v3339
    %5405 = vmatpush.bf16.msra.mxu0 %v3327
    %5406 = vmatmul.bf16.gmra.mxu0 %v906
    %v5407 = vpop.f32.mrf.mxu0
    %v5408 = vadd.f32 %v5395, %v5407
    %v5409 = vpop.f32.mrf.mxu0
    %5410 = vdwg.mxu0
    %5411 = vmatpush.bf16.msra.mxu0 %v3507
    %5412 = vmatpush.bf16.msra.mxu0 %v3495
    %5413 = vmatpush.bf16.msra.mxu0 %v3483
    %5414 = vmatpush.bf16.msra.mxu0 %v3471
    %5415 = vmatpush.bf16.msra.mxu0 %v3459
    %5416 = vmatpush.bf16.msra.mxu0 %v3447
    %5417 = vmatpush.bf16.msra.mxu0 %v3435
    %5418 = vmatpush.bf16.msra.mxu0 %v3423
    %5419 = vmatmul.bf16.gmra.mxu0 %v907
    %v5420 = vpop.f32.mrf.mxu0
    %v5421 = vadd.f32 %v5408, %v5420
    %v5422 = vpop.f32.mrf.mxu0
    %5423 = vdwg.mxu0
    %5424 = vmatpush.bf16.msra.mxu0 %v3603
    %5425 = vmatpush.bf16.msra.mxu0 %v3591
    %5426 = vmatpush.bf16.msra.mxu0 %v3579
    %5427 = vmatpush.bf16.msra.mxu0 %v3567
    %5428 = vmatpush.bf16.msra.mxu0 %v3555
    %5429 = vmatpush.bf16.msra.mxu0 %v3543
    %5430 = vmatpush.bf16.msra.mxu0 %v3531
    %5431 = vmatpush.bf16.msra.mxu0 %v3519
    %5432 = vmatmul.bf16.gmra.mxu0 %v908
    %v5433 = vpop.f32.mrf.mxu0
    %v5434 = vadd.f32 %v5421, %v5433
    %v5435 = vpop.f32.mrf.mxu0
    %5436 = vdwg.mxu0
    %5437 = vmatpush.bf16.msra.mxu0 %v3699
    %5438 = vmatpush.bf16.msra.mxu0 %v3687
    %5439 = vmatpush.bf16.msra.mxu0 %v3675
    %5440 = vmatpush.bf16.msra.mxu0 %v3663
    %5441 = vmatpush.bf16.msra.mxu0 %v3651
    %5442 = vmatpush.bf16.msra.mxu0 %v3639
    %5443 = vmatpush.bf16.msra.mxu0 %v3627
    %5444 = vmatpush.bf16.msra.mxu0 %v3615
    %5445 = vmatmul.bf16.gmra.mxu0 %v909
    %v5446 = vpop.f32.mrf.mxu0
    %v5447 = vadd.f32 %v5434, %v5446
    %v5448 = vpop.f32.mrf.mxu0
    %5449 = vdwg.mxu0
    %5450 = vmatpush.bf16.msra.mxu0 %v3795
    %5451 = vmatpush.bf16.msra.mxu0 %v3783
    %5452 = vmatpush.bf16.msra.mxu0 %v3771
    %5453 = vmatpush.bf16.msra.mxu0 %v3759
    %5454 = vmatpush.bf16.msra.mxu0 %v3747
    %5455 = vmatpush.bf16.msra.mxu0 %v3735
    %5456 = vmatpush.bf16.msra.mxu0 %v3723
    %5457 = vmatpush.bf16.msra.mxu0 %v3711
    %5458 = vmatmul.bf16.gmra.mxu0 %v910
    %v5459 = vpop.f32.mrf.mxu0
    %v5460 = vadd.f32 %v5447, %v5459
    %v5461 = vpop.f32.mrf.mxu0
    %5462 = vdwg.mxu0
    %5463 = vmatpush.bf16.msra.mxu0 %v3891
    %5464 = vmatpush.bf16.msra.mxu0 %v3879
    %5465 = vmatpush.bf16.msra.mxu0 %v3867
    %5466 = vmatpush.bf16.msra.mxu0 %v3855
    %5467 = vmatpush.bf16.msra.mxu0 %v3843
    %5468 = vmatpush.bf16.msra.mxu0 %v3831
    %5469 = vmatpush.bf16.msra.mxu0 %v3819
    %5470 = vmatpush.bf16.msra.mxu0 %v3807
    %5471 = vmatmul.bf16.gmra.mxu0 %v911
    %v5472 = vpop.f32.mrf.mxu0
    %v5473 = vadd.f32 %v5460, %v5472
    %v5474 = vpop.f32.mrf.mxu0
    %5475 = vdwg.mxu0
    %5476 = vmatpush.bf16.msra.mxu0 %v3987
    %5477 = vmatpush.bf16.msra.mxu0 %v3975
    %5478 = vmatpush.bf16.msra.mxu0 %v3963
    %5479 = vmatpush.bf16.msra.mxu0 %v3951
    %5480 = vmatpush.bf16.msra.mxu0 %v3939
    %5481 = vmatpush.bf16.msra.mxu0 %v3927
    %5482 = vmatpush.bf16.msra.mxu0 %v3915
    %5483 = vmatpush.bf16.msra.mxu0 %v3903
    %5484 = vmatmul.bf16.gmra.mxu0 %v912
    %v5485 = vpop.f32.mrf.mxu0
    %v5486 = vadd.f32 %v5473, %v5485
    %v5487 = vpop.f32.mrf.mxu0
    %5488 = vdwg.mxu0
    %5489 = vmatpush.bf16.msra.mxu0 %v3316
    %5490 = vmatpush.bf16.msra.mxu0 %v3304
    %5491 = vmatpush.bf16.msra.mxu0 %v3292
    %5492 = vmatpush.bf16.msra.mxu0 %v3280
    %5493 = vmatpush.bf16.msra.mxu0 %v3268
    %5494 = vmatpush.bf16.msra.mxu0 %v3256
    %5495 = vmatpush.bf16.msra.mxu0 %v3244
    %5496 = vmatpush.bf16.msra.mxu0 %v3232
    %5497 = vmatmul.bf16.gmra.mxu0 %v905
    %v5498 = vpop.f32.mrf.mxu0
    %v5499 = vadd.f32 0.0, %v5498
    %v5500 = vpop.f32.mrf.mxu0
    %5501 = vdwg.mxu0
    %5502 = vmatpush.bf16.msra.mxu0 %v3412
    %5503 = vmatpush.bf16.msra.mxu0 %v3400
    %5504 = vmatpush.bf16.msra.mxu0 %v3388
    %5505 = vmatpush.bf16.msra.mxu0 %v3376
    %5506 = vmatpush.bf16.msra.mxu0 %v3364
    %5507 = vmatpush.bf16.msra.mxu0 %v3352
    %5508 = vmatpush.bf16.msra.mxu0 %v3340
    %5509 = vmatpush.bf16.msra.mxu0 %v3328
    %5510 = vmatmul.bf16.gmra.mxu0 %v906
    %v5511 = vpop.f32.mrf.mxu0
    %v5512 = vadd.f32 %v5499, %v5511
    %v5513 = vpop.f32.mrf.mxu0
    %5514 = vdwg.mxu0
    %5515 = vmatpush.bf16.msra.mxu0 %v3508
    %5516 = vmatpush.bf16.msra.mxu0 %v3496
    %5517 = vmatpush.bf16.msra.mxu0 %v3484
    %5518 = vmatpush.bf16.msra.mxu0 %v3472
    %5519 = vmatpush.bf16.msra.mxu0 %v3460
    %5520 = vmatpush.bf16.msra.mxu0 %v3448
    %5521 = vmatpush.bf16.msra.mxu0 %v3436
    %5522 = vmatpush.bf16.msra.mxu0 %v3424
    %5523 = vmatmul.bf16.gmra.mxu0 %v907
    %v5524 = vpop.f32.mrf.mxu0
    %v5525 = vadd.f32 %v5512, %v5524
    %v5526 = vpop.f32.mrf.mxu0
    %5527 = vdwg.mxu0
    %5528 = vmatpush.bf16.msra.mxu0 %v3604
    %5529 = vmatpush.bf16.msra.mxu0 %v3592
    %5530 = vmatpush.bf16.msra.mxu0 %v3580
    %5531 = vmatpush.bf16.msra.mxu0 %v3568
    %5532 = vmatpush.bf16.msra.mxu0 %v3556
    %5533 = vmatpush.bf16.msra.mxu0 %v3544
    %5534 = vmatpush.bf16.msra.mxu0 %v3532
    %5535 = vmatpush.bf16.msra.mxu0 %v3520
    %5536 = vmatmul.bf16.gmra.mxu0 %v908
    %v5537 = vpop.f32.mrf.mxu0
    %v5538 = vadd.f32 %v5525, %v5537
    %v5539 = vpop.f32.mrf.mxu0
    %5540 = vdwg.mxu0
    %5541 = vmatpush.bf16.msra.mxu0 %v3700
    %5542 = vmatpush.bf16.msra.mxu0 %v3688
    %5543 = vmatpush.bf16.msra.mxu0 %v3676
    %5544 = vmatpush.bf16.msra.mxu0 %v3664
    %5545 = vmatpush.bf16.msra.mxu0 %v3652
    %5546 = vmatpush.bf16.msra.mxu0 %v3640
    %5547 = vmatpush.bf16.msra.mxu0 %v3628
    %5548 = vmatpush.bf16.msra.mxu0 %v3616
    %5549 = vmatmul.bf16.gmra.mxu0 %v909
    %v5550 = vpop.f32.mrf.mxu0
    %v5551 = vadd.f32 %v5538, %v5550
    %v5552 = vpop.f32.mrf.mxu0
    %5553 = vdwg.mxu0
    %5554 = vmatpush.bf16.msra.mxu0 %v3796
    %5555 = vmatpush.bf16.msra.mxu0 %v3784
    %5556 = vmatpush.bf16.msra.mxu0 %v3772
    %5557 = vmatpush.bf16.msra.mxu0 %v3760
    %5558 = vmatpush.bf16.msra.mxu0 %v3748
    %5559 = vmatpush.bf16.msra.mxu0 %v3736
    %5560 = vmatpush.bf16.msra.mxu0 %v3724
    %5561 = vmatpush.bf16.msra.mxu0 %v3712
    %5562 = vmatmul.bf16.gmra.mxu0 %v910
    %v5563 = vpop.f32.mrf.mxu0
    %v5564 = vadd.f32 %v5551, %v5563
    %v5565 = vpop.f32.mrf.mxu0
    %5566 = vdwg.mxu0
    %5567 = vmatpush.bf16.msra.mxu0 %v3892
    %5568 = vmatpush.bf16.msra.mxu0 %v3880
    %5569 = vmatpush.bf16.msra.mxu0 %v3868
    %5570 = vmatpush.bf16.msra.mxu0 %v3856
    %5571 = vmatpush.bf16.msra.mxu0 %v3844
    %5572 = vmatpush.bf16.msra.mxu0 %v3832
    %5573 = vmatpush.bf16.msra.mxu0 %v3820
    %5574 = vmatpush.bf16.msra.mxu0 %v3808
    %5575 = vmatmul.bf16.gmra.mxu0 %v911
    %v5576 = vpop.f32.mrf.mxu0
    %v5577 = vadd.f32 %v5564, %v5576
    %v5578 = vpop.f32.mrf.mxu0
    %5579 = vdwg.mxu0
    %5580 = vmatpush.bf16.msra.mxu0 %v3988
    %5581 = vmatpush.bf16.msra.mxu0 %v3976
    %5582 = vmatpush.bf16.msra.mxu0 %v3964
    %5583 = vmatpush.bf16.msra.mxu0 %v3952
    %5584 = vmatpush.bf16.msra.mxu0 %v3940
    %5585 = vmatpush.bf16.msra.mxu0 %v3928
    %5586 = vmatpush.bf16.msra.mxu0 %v3916
    %5587 = vmatpush.bf16.msra.mxu0 %v3904
    %5588 = vmatmul.bf16.gmra.mxu0 %v912
    %v5589 = vpop.f32.mrf.mxu0
    %v5590 = vadd.f32 %v5577, %v5589
    %v5591 = vpop.f32.mrf.mxu0
    %5592 = vdwg.mxu0
    %5593 = vmatpush.bf16.msra.mxu0 %v3317
    %5594 = vmatpush.bf16.msra.mxu0 %v3305
    %5595 = vmatpush.bf16.msra.mxu0 %v3293
    %5596 = vmatpush.bf16.msra.mxu0 %v3281
    %5597 = vmatpush.bf16.msra.mxu0 %v3269
    %5598 = vmatpush.bf16.msra.mxu0 %v3257
    %5599 = vmatpush.bf16.msra.mxu0 %v3245
    %5600 = vmatpush.bf16.msra.mxu0 %v3233
    %5601 = vmatmul.bf16.gmra.mxu0 %v905
    %v5602 = vpop.f32.mrf.mxu0
    %v5603 = vadd.f32 0.0, %v5602
    %v5604 = vpop.f32.mrf.mxu0
    %5605 = vdwg.mxu0
    %5606 = vmatpush.bf16.msra.mxu0 %v3413
    %5607 = vmatpush.bf16.msra.mxu0 %v3401
    %5608 = vmatpush.bf16.msra.mxu0 %v3389
    %5609 = vmatpush.bf16.msra.mxu0 %v3377
    %5610 = vmatpush.bf16.msra.mxu0 %v3365
    %5611 = vmatpush.bf16.msra.mxu0 %v3353
    %5612 = vmatpush.bf16.msra.mxu0 %v3341
    %5613 = vmatpush.bf16.msra.mxu0 %v3329
    %5614 = vmatmul.bf16.gmra.mxu0 %v906
    %v5615 = vpop.f32.mrf.mxu0
    %v5616 = vadd.f32 %v5603, %v5615
    %v5617 = vpop.f32.mrf.mxu0
    %5618 = vdwg.mxu0
    %5619 = vmatpush.bf16.msra.mxu0 %v3509
    %5620 = vmatpush.bf16.msra.mxu0 %v3497
    %5621 = vmatpush.bf16.msra.mxu0 %v3485
    %5622 = vmatpush.bf16.msra.mxu0 %v3473
    %5623 = vmatpush.bf16.msra.mxu0 %v3461
    %5624 = vmatpush.bf16.msra.mxu0 %v3449
    %5625 = vmatpush.bf16.msra.mxu0 %v3437
    %5626 = vmatpush.bf16.msra.mxu0 %v3425
    %5627 = vmatmul.bf16.gmra.mxu0 %v907
    %v5628 = vpop.f32.mrf.mxu0
    %v5629 = vadd.f32 %v5616, %v5628
    %v5630 = vpop.f32.mrf.mxu0
    %5631 = vdwg.mxu0
    %5632 = vmatpush.bf16.msra.mxu0 %v3605
    %5633 = vmatpush.bf16.msra.mxu0 %v3593
    %5634 = vmatpush.bf16.msra.mxu0 %v3581
    %5635 = vmatpush.bf16.msra.mxu0 %v3569
    %5636 = vmatpush.bf16.msra.mxu0 %v3557
    %5637 = vmatpush.bf16.msra.mxu0 %v3545
    %5638 = vmatpush.bf16.msra.mxu0 %v3533
    %5639 = vmatpush.bf16.msra.mxu0 %v3521
    %5640 = vmatmul.bf16.gmra.mxu0 %v908
    %v5641 = vpop.f32.mrf.mxu0
    %v5642 = vadd.f32 %v5629, %v5641
    %v5643 = vpop.f32.mrf.mxu0
    %5644 = vdwg.mxu0
    %5645 = vmatpush.bf16.msra.mxu0 %v3701
    %5646 = vmatpush.bf16.msra.mxu0 %v3689
    %5647 = vmatpush.bf16.msra.mxu0 %v3677
    %5648 = vmatpush.bf16.msra.mxu0 %v3665
    %5649 = vmatpush.bf16.msra.mxu0 %v3653
    %5650 = vmatpush.bf16.msra.mxu0 %v3641
    %5651 = vmatpush.bf16.msra.mxu0 %v3629
    %5652 = vmatpush.bf16.msra.mxu0 %v3617
    %5653 = vmatmul.bf16.gmra.mxu0 %v909
    %v5654 = vpop.f32.mrf.mxu0
    %v5655 = vadd.f32 %v5642, %v5654
    %v5656 = vpop.f32.mrf.mxu0
    %5657 = vdwg.mxu0
    %5658 = vmatpush.bf16.msra.mxu0 %v3797
    %5659 = vmatpush.bf16.msra.mxu0 %v3785
    %5660 = vmatpush.bf16.msra.mxu0 %v3773
    %5661 = vmatpush.bf16.msra.mxu0 %v3761
    %5662 = vmatpush.bf16.msra.mxu0 %v3749
    %5663 = vmatpush.bf16.msra.mxu0 %v3737
    %5664 = vmatpush.bf16.msra.mxu0 %v3725
    %5665 = vmatpush.bf16.msra.mxu0 %v3713
    %5666 = vmatmul.bf16.gmra.mxu0 %v910
    %v5667 = vpop.f32.mrf.mxu0
    %v5668 = vadd.f32 %v5655, %v5667
    %v5669 = vpop.f32.mrf.mxu0
    %5670 = vdwg.mxu0
    %5671 = vmatpush.bf16.msra.mxu0 %v3893
    %5672 = vmatpush.bf16.msra.mxu0 %v3881
    %5673 = vmatpush.bf16.msra.mxu0 %v3869
    %5674 = vmatpush.bf16.msra.mxu0 %v3857
    %5675 = vmatpush.bf16.msra.mxu0 %v3845
    %5676 = vmatpush.bf16.msra.mxu0 %v3833
    %5677 = vmatpush.bf16.msra.mxu0 %v3821
    %5678 = vmatpush.bf16.msra.mxu0 %v3809
    %5679 = vmatmul.bf16.gmra.mxu0 %v911
    %v5680 = vpop.f32.mrf.mxu0
    %v5681 = vadd.f32 %v5668, %v5680
    %v5682 = vpop.f32.mrf.mxu0
    %5683 = vdwg.mxu0
    %5684 = vmatpush.bf16.msra.mxu0 %v3989
    %5685 = vmatpush.bf16.msra.mxu0 %v3977
    %5686 = vmatpush.bf16.msra.mxu0 %v3965
    %5687 = vmatpush.bf16.msra.mxu0 %v3953
    %5688 = vmatpush.bf16.msra.mxu0 %v3941
    %5689 = vmatpush.bf16.msra.mxu0 %v3929
    %5690 = vmatpush.bf16.msra.mxu0 %v3917
    %5691 = vmatpush.bf16.msra.mxu0 %v3905
    %5692 = vmatmul.bf16.gmra.mxu0 %v912
    %v5693 = vpop.f32.mrf.mxu0
    %v5694 = vadd.f32 %v5681, %v5693
    %v5695 = vpop.f32.mrf.mxu0
    %5696 = vdwg.mxu0
    %5697 = vmatpush.bf16.msra.mxu0 %v3318
    %5698 = vmatpush.bf16.msra.mxu0 %v3306
    %5699 = vmatpush.bf16.msra.mxu0 %v3294
    %5700 = vmatpush.bf16.msra.mxu0 %v3282
    %5701 = vmatpush.bf16.msra.mxu0 %v3270
    %5702 = vmatpush.bf16.msra.mxu0 %v3258
    %5703 = vmatpush.bf16.msra.mxu0 %v3246
    %5704 = vmatpush.bf16.msra.mxu0 %v3234
    %5705 = vmatmul.bf16.gmra.mxu0 %v905
    %v5706 = vpop.f32.mrf.mxu0
    %v5707 = vadd.f32 0.0, %v5706
    %v5708 = vpop.f32.mrf.mxu0
    %5709 = vdwg.mxu0
    %5710 = vmatpush.bf16.msra.mxu0 %v3414
    %5711 = vmatpush.bf16.msra.mxu0 %v3402
    %5712 = vmatpush.bf16.msra.mxu0 %v3390
    %5713 = vmatpush.bf16.msra.mxu0 %v3378
    %5714 = vmatpush.bf16.msra.mxu0 %v3366
    %5715 = vmatpush.bf16.msra.mxu0 %v3354
    %5716 = vmatpush.bf16.msra.mxu0 %v3342
    %5717 = vmatpush.bf16.msra.mxu0 %v3330
    %5718 = vmatmul.bf16.gmra.mxu0 %v906
    %v5719 = vpop.f32.mrf.mxu0
    %v5720 = vadd.f32 %v5707, %v5719
    %v5721 = vpop.f32.mrf.mxu0
    %5722 = vdwg.mxu0
    %5723 = vmatpush.bf16.msra.mxu0 %v3510
    %5724 = vmatpush.bf16.msra.mxu0 %v3498
    %5725 = vmatpush.bf16.msra.mxu0 %v3486
    %5726 = vmatpush.bf16.msra.mxu0 %v3474
    %5727 = vmatpush.bf16.msra.mxu0 %v3462
    %5728 = vmatpush.bf16.msra.mxu0 %v3450
    %5729 = vmatpush.bf16.msra.mxu0 %v3438
    %5730 = vmatpush.bf16.msra.mxu0 %v3426
    %5731 = vmatmul.bf16.gmra.mxu0 %v907
    %v5732 = vpop.f32.mrf.mxu0
    %v5733 = vadd.f32 %v5720, %v5732
    %v5734 = vpop.f32.mrf.mxu0
    %5735 = vdwg.mxu0
    %5736 = vmatpush.bf16.msra.mxu0 %v3606
    %5737 = vmatpush.bf16.msra.mxu0 %v3594
    %5738 = vmatpush.bf16.msra.mxu0 %v3582
    %5739 = vmatpush.bf16.msra.mxu0 %v3570
    %5740 = vmatpush.bf16.msra.mxu0 %v3558
    %5741 = vmatpush.bf16.msra.mxu0 %v3546
    %5742 = vmatpush.bf16.msra.mxu0 %v3534
    %5743 = vmatpush.bf16.msra.mxu0 %v3522
    %5744 = vmatmul.bf16.gmra.mxu0 %v908
    %v5745 = vpop.f32.mrf.mxu0
    %v5746 = vadd.f32 %v5733, %v5745
    %v5747 = vpop.f32.mrf.mxu0
    %5748 = vdwg.mxu0
    %5749 = vmatpush.bf16.msra.mxu0 %v3702
    %5750 = vmatpush.bf16.msra.mxu0 %v3690
    %5751 = vmatpush.bf16.msra.mxu0 %v3678
    %5752 = vmatpush.bf16.msra.mxu0 %v3666
    %5753 = vmatpush.bf16.msra.mxu0 %v3654
    %5754 = vmatpush.bf16.msra.mxu0 %v3642
    %5755 = vmatpush.bf16.msra.mxu0 %v3630
    %5756 = vmatpush.bf16.msra.mxu0 %v3618
    %5757 = vmatmul.bf16.gmra.mxu0 %v909
    %v5758 = vpop.f32.mrf.mxu0
    %v5759 = vadd.f32 %v5746, %v5758
    %v5760 = vpop.f32.mrf.mxu0
    %5761 = vdwg.mxu0
    %5762 = vmatpush.bf16.msra.mxu0 %v3798
    %5763 = vmatpush.bf16.msra.mxu0 %v3786
    %5764 = vmatpush.bf16.msra.mxu0 %v3774
    %5765 = vmatpush.bf16.msra.mxu0 %v3762
    %5766 = vmatpush.bf16.msra.mxu0 %v3750
    %5767 = vmatpush.bf16.msra.mxu0 %v3738
    %5768 = vmatpush.bf16.msra.mxu0 %v3726
    %5769 = vmatpush.bf16.msra.mxu0 %v3714
    %5770 = vmatmul.bf16.gmra.mxu0 %v910
    %v5771 = vpop.f32.mrf.mxu0
    %v5772 = vadd.f32 %v5759, %v5771
    %v5773 = vpop.f32.mrf.mxu0
    %5774 = vdwg.mxu0
    %5775 = vmatpush.bf16.msra.mxu0 %v3894
    %5776 = vmatpush.bf16.msra.mxu0 %v3882
    %5777 = vmatpush.bf16.msra.mxu0 %v3870
    %5778 = vmatpush.bf16.msra.mxu0 %v3858
    %5779 = vmatpush.bf16.msra.mxu0 %v3846
    %5780 = vmatpush.bf16.msra.mxu0 %v3834
    %5781 = vmatpush.bf16.msra.mxu0 %v3822
    %5782 = vmatpush.bf16.msra.mxu0 %v3810
    %5783 = vmatmul.bf16.gmra.mxu0 %v911
    %v5784 = vpop.f32.mrf.mxu0
    %v5785 = vadd.f32 %v5772, %v5784
    %v5786 = vpop.f32.mrf.mxu0
    %5787 = vdwg.mxu0
    %5788 = vmatpush.bf16.msra.mxu0 %v3990
    %5789 = vmatpush.bf16.msra.mxu0 %v3978
    %5790 = vmatpush.bf16.msra.mxu0 %v3966
    %5791 = vmatpush.bf16.msra.mxu0 %v3954
    %5792 = vmatpush.bf16.msra.mxu0 %v3942
    %5793 = vmatpush.bf16.msra.mxu0 %v3930
    %5794 = vmatpush.bf16.msra.mxu0 %v3918
    %5795 = vmatpush.bf16.msra.mxu0 %v3906
    %5796 = vmatmul.bf16.gmra.mxu0 %v912
    %v5797 = vpop.f32.mrf.mxu0
    %v5798 = vadd.f32 %v5785, %v5797
    %v5799 = vpop.f32.mrf.mxu0
    %5800 = vdwg.mxu0
    %5801 = vmatpush.bf16.msra.mxu0 %v3319
    %5802 = vmatpush.bf16.msra.mxu0 %v3307
    %5803 = vmatpush.bf16.msra.mxu0 %v3295
    %5804 = vmatpush.bf16.msra.mxu0 %v3283
    %5805 = vmatpush.bf16.msra.mxu0 %v3271
    %5806 = vmatpush.bf16.msra.mxu0 %v3259
    %5807 = vmatpush.bf16.msra.mxu0 %v3247
    %5808 = vmatpush.bf16.msra.mxu0 %v3235
    %5809 = vmatmul.bf16.gmra.mxu0 %v905
    %v5810 = vpop.f32.mrf.mxu0
    %v5811 = vadd.f32 0.0, %v5810
    %v5812 = vpop.f32.mrf.mxu0
    %5813 = vdwg.mxu0
    %5814 = vmatpush.bf16.msra.mxu0 %v3415
    %5815 = vmatpush.bf16.msra.mxu0 %v3403
    %5816 = vmatpush.bf16.msra.mxu0 %v3391
    %5817 = vmatpush.bf16.msra.mxu0 %v3379
    %5818 = vmatpush.bf16.msra.mxu0 %v3367
    %5819 = vmatpush.bf16.msra.mxu0 %v3355
    %5820 = vmatpush.bf16.msra.mxu0 %v3343
    %5821 = vmatpush.bf16.msra.mxu0 %v3331
    %5822 = vmatmul.bf16.gmra.mxu0 %v906
    %v5823 = vpop.f32.mrf.mxu0
    %v5824 = vadd.f32 %v5811, %v5823
    %v5825 = vpop.f32.mrf.mxu0
    %5826 = vdwg.mxu0
    %5827 = vmatpush.bf16.msra.mxu0 %v3511
    %5828 = vmatpush.bf16.msra.mxu0 %v3499
    %5829 = vmatpush.bf16.msra.mxu0 %v3487
    %5830 = vmatpush.bf16.msra.mxu0 %v3475
    %5831 = vmatpush.bf16.msra.mxu0 %v3463
    %5832 = vmatpush.bf16.msra.mxu0 %v3451
    %5833 = vmatpush.bf16.msra.mxu0 %v3439
    %5834 = vmatpush.bf16.msra.mxu0 %v3427
    %5835 = vmatmul.bf16.gmra.mxu0 %v907
    %v5836 = vpop.f32.mrf.mxu0
    %v5837 = vadd.f32 %v5824, %v5836
    %v5838 = vpop.f32.mrf.mxu0
    %5839 = vdwg.mxu0
    %5840 = vmatpush.bf16.msra.mxu0 %v3607
    %5841 = vmatpush.bf16.msra.mxu0 %v3595
    %5842 = vmatpush.bf16.msra.mxu0 %v3583
    %5843 = vmatpush.bf16.msra.mxu0 %v3571
    %5844 = vmatpush.bf16.msra.mxu0 %v3559
    %5845 = vmatpush.bf16.msra.mxu0 %v3547
    %5846 = vmatpush.bf16.msra.mxu0 %v3535
    %5847 = vmatpush.bf16.msra.mxu0 %v3523
    %5848 = vmatmul.bf16.gmra.mxu0 %v908
    %v5849 = vpop.f32.mrf.mxu0
    %v5850 = vadd.f32 %v5837, %v5849
    %v5851 = vpop.f32.mrf.mxu0
    %5852 = vdwg.mxu0
    %5853 = vmatpush.bf16.msra.mxu0 %v3703
    %5854 = vmatpush.bf16.msra.mxu0 %v3691
    %5855 = vmatpush.bf16.msra.mxu0 %v3679
    %5856 = vmatpush.bf16.msra.mxu0 %v3667
    %5857 = vmatpush.bf16.msra.mxu0 %v3655
    %5858 = vmatpush.bf16.msra.mxu0 %v3643
    %5859 = vmatpush.bf16.msra.mxu0 %v3631
    %5860 = vmatpush.bf16.msra.mxu0 %v3619
    %5861 = vmatmul.bf16.gmra.mxu0 %v909
    %v5862 = vpop.f32.mrf.mxu0
    %v5863 = vadd.f32 %v5850, %v5862
    %v5864 = vpop.f32.mrf.mxu0
    %5865 = vdwg.mxu0
    %5866 = vmatpush.bf16.msra.mxu0 %v3799
    %5867 = vmatpush.bf16.msra.mxu0 %v3787
    %5868 = vmatpush.bf16.msra.mxu0 %v3775
    %5869 = vmatpush.bf16.msra.mxu0 %v3763
    %5870 = vmatpush.bf16.msra.mxu0 %v3751
    %5871 = vmatpush.bf16.msra.mxu0 %v3739
    %5872 = vmatpush.bf16.msra.mxu0 %v3727
    %5873 = vmatpush.bf16.msra.mxu0 %v3715
    %5874 = vmatmul.bf16.gmra.mxu0 %v910
    %v5875 = vpop.f32.mrf.mxu0
    %v5876 = vadd.f32 %v5863, %v5875
    %v5877 = vpop.f32.mrf.mxu0
    %5878 = vdwg.mxu0
    %5879 = vmatpush.bf16.msra.mxu0 %v3895
    %5880 = vmatpush.bf16.msra.mxu0 %v3883
    %5881 = vmatpush.bf16.msra.mxu0 %v3871
    %5882 = vmatpush.bf16.msra.mxu0 %v3859
    %5883 = vmatpush.bf16.msra.mxu0 %v3847
    %5884 = vmatpush.bf16.msra.mxu0 %v3835
    %5885 = vmatpush.bf16.msra.mxu0 %v3823
    %5886 = vmatpush.bf16.msra.mxu0 %v3811
    %5887 = vmatmul.bf16.gmra.mxu0 %v911
    %v5888 = vpop.f32.mrf.mxu0
    %v5889 = vadd.f32 %v5876, %v5888
    %v5890 = vpop.f32.mrf.mxu0
    %5891 = vdwg.mxu0
    %5892 = vmatpush.bf16.msra.mxu0 %v3991
    %5893 = vmatpush.bf16.msra.mxu0 %v3979
    %5894 = vmatpush.bf16.msra.mxu0 %v3967
    %5895 = vmatpush.bf16.msra.mxu0 %v3955
    %5896 = vmatpush.bf16.msra.mxu0 %v3943
    %5897 = vmatpush.bf16.msra.mxu0 %v3931
    %5898 = vmatpush.bf16.msra.mxu0 %v3919
    %5899 = vmatpush.bf16.msra.mxu0 %v3907
    %5900 = vmatmul.bf16.gmra.mxu0 %v912
    %v5901 = vpop.f32.mrf.mxu0
    %v5902 = vadd.f32 %v5889, %v5901
    %v5903 = vpop.f32.mrf.mxu0
    %5904 = vdwg.mxu0
    %5905 = vmatpush.bf16.msra.mxu0 %v3320
    %5906 = vmatpush.bf16.msra.mxu0 %v3308
    %5907 = vmatpush.bf16.msra.mxu0 %v3296
    %5908 = vmatpush.bf16.msra.mxu0 %v3284
    %5909 = vmatpush.bf16.msra.mxu0 %v3272
    %5910 = vmatpush.bf16.msra.mxu0 %v3260
    %5911 = vmatpush.bf16.msra.mxu0 %v3248
    %5912 = vmatpush.bf16.msra.mxu0 %v3236
    %5913 = vmatmul.bf16.gmra.mxu0 %v905
    %v5914 = vpop.f32.mrf.mxu0
    %v5915 = vadd.f32 0.0, %v5914
    %v5916 = vpop.f32.mrf.mxu0
    %5917 = vdwg.mxu0
    %5918 = vmatpush.bf16.msra.mxu0 %v3416
    %5919 = vmatpush.bf16.msra.mxu0 %v3404
    %5920 = vmatpush.bf16.msra.mxu0 %v3392
    %5921 = vmatpush.bf16.msra.mxu0 %v3380
    %5922 = vmatpush.bf16.msra.mxu0 %v3368
    %5923 = vmatpush.bf16.msra.mxu0 %v3356
    %5924 = vmatpush.bf16.msra.mxu0 %v3344
    %5925 = vmatpush.bf16.msra.mxu0 %v3332
    %5926 = vmatmul.bf16.gmra.mxu0 %v906
    %v5927 = vpop.f32.mrf.mxu0
    %v5928 = vadd.f32 %v5915, %v5927
    %v5929 = vpop.f32.mrf.mxu0
    %5930 = vdwg.mxu0
    %5931 = vmatpush.bf16.msra.mxu0 %v3512
    %5932 = vmatpush.bf16.msra.mxu0 %v3500
    %5933 = vmatpush.bf16.msra.mxu0 %v3488
    %5934 = vmatpush.bf16.msra.mxu0 %v3476
    %5935 = vmatpush.bf16.msra.mxu0 %v3464
    %5936 = vmatpush.bf16.msra.mxu0 %v3452
    %5937 = vmatpush.bf16.msra.mxu0 %v3440
    %5938 = vmatpush.bf16.msra.mxu0 %v3428
    %5939 = vmatmul.bf16.gmra.mxu0 %v907
    %v5940 = vpop.f32.mrf.mxu0
    %v5941 = vadd.f32 %v5928, %v5940
    %v5942 = vpop.f32.mrf.mxu0
    %5943 = vdwg.mxu0
    %5944 = vmatpush.bf16.msra.mxu0 %v3608
    %5945 = vmatpush.bf16.msra.mxu0 %v3596
    %5946 = vmatpush.bf16.msra.mxu0 %v3584
    %5947 = vmatpush.bf16.msra.mxu0 %v3572
    %5948 = vmatpush.bf16.msra.mxu0 %v3560
    %5949 = vmatpush.bf16.msra.mxu0 %v3548
    %5950 = vmatpush.bf16.msra.mxu0 %v3536
    %5951 = vmatpush.bf16.msra.mxu0 %v3524
    %5952 = vmatmul.bf16.gmra.mxu0 %v908
    %v5953 = vpop.f32.mrf.mxu0
    %v5954 = vadd.f32 %v5941, %v5953
    %v5955 = vpop.f32.mrf.mxu0
    %5956 = vdwg.mxu0
    %5957 = vmatpush.bf16.msra.mxu0 %v3704
    %5958 = vmatpush.bf16.msra.mxu0 %v3692
    %5959 = vmatpush.bf16.msra.mxu0 %v3680
    %5960 = vmatpush.bf16.msra.mxu0 %v3668
    %5961 = vmatpush.bf16.msra.mxu0 %v3656
    %5962 = vmatpush.bf16.msra.mxu0 %v3644
    %5963 = vmatpush.bf16.msra.mxu0 %v3632
    %5964 = vmatpush.bf16.msra.mxu0 %v3620
    %5965 = vmatmul.bf16.gmra.mxu0 %v909
    %v5966 = vpop.f32.mrf.mxu0
    %v5967 = vadd.f32 %v5954, %v5966
    %v5968 = vpop.f32.mrf.mxu0
    %5969 = vdwg.mxu0
    %5970 = vmatpush.bf16.msra.mxu0 %v3800
    %5971 = vmatpush.bf16.msra.mxu0 %v3788
    %5972 = vmatpush.bf16.msra.mxu0 %v3776
    %5973 = vmatpush.bf16.msra.mxu0 %v3764
    %5974 = vmatpush.bf16.msra.mxu0 %v3752
    %5975 = vmatpush.bf16.msra.mxu0 %v3740
    %5976 = vmatpush.bf16.msra.mxu0 %v3728
    %5977 = vmatpush.bf16.msra.mxu0 %v3716
    %5978 = vmatmul.bf16.gmra.mxu0 %v910
    %v5979 = vpop.f32.mrf.mxu0
    %v5980 = vadd.f32 %v5967, %v5979
    %v5981 = vpop.f32.mrf.mxu0
    %5982 = vdwg.mxu0
    %5983 = vmatpush.bf16.msra.mxu0 %v3896
    %5984 = vmatpush.bf16.msra.mxu0 %v3884
    %5985 = vmatpush.bf16.msra.mxu0 %v3872
    %5986 = vmatpush.bf16.msra.mxu0 %v3860
    %5987 = vmatpush.bf16.msra.mxu0 %v3848
    %5988 = vmatpush.bf16.msra.mxu0 %v3836
    %5989 = vmatpush.bf16.msra.mxu0 %v3824
    %5990 = vmatpush.bf16.msra.mxu0 %v3812
    %5991 = vmatmul.bf16.gmra.mxu0 %v911
    %v5992 = vpop.f32.mrf.mxu0
    %v5993 = vadd.f32 %v5980, %v5992
    %v5994 = vpop.f32.mrf.mxu0
    %5995 = vdwg.mxu0
    %5996 = vmatpush.bf16.msra.mxu0 %v3992
    %5997 = vmatpush.bf16.msra.mxu0 %v3980
    %5998 = vmatpush.bf16.msra.mxu0 %v3968
    %5999 = vmatpush.bf16.msra.mxu0 %v3956
    %6000 = vmatpush.bf16.msra.mxu0 %v3944
    %6001 = vmatpush.bf16.msra.mxu0 %v3932
    %6002 = vmatpush.bf16.msra.mxu0 %v3920
    %6003 = vmatpush.bf16.msra.mxu0 %v3908
    %6004 = vmatmul.bf16.gmra.mxu0 %v912
    %v6005 = vpop.f32.mrf.mxu0
    %v6006 = vadd.f32 %v5993, %v6005
    %v6007 = vpop.f32.mrf.mxu0
    %6008 = vdwg.mxu0
    %v6009 = vadd.f32 %v109, %v4862
    %v6010 = vadd.f32 %v110, %v4966
    %v6011 = vadd.f32 %v111, %v5070
    %v6012 = vadd.f32 %v112, %v5174
    %v6013 = vadd.f32 %v113, %v5278
    %v6014 = vadd.f32 %v114, %v5382
    %v6015 = vadd.f32 %v115, %v5486
    %v6016 = vadd.f32 %v116, %v5590
    %v6017 = vadd.f32 %v117, %v5694
    %v6018 = vadd.f32 %v118, %v5798
    %v6019 = vadd.f32 %v119, %v5902
    %v6020 = vadd.f32 %v120, %v6006
    %6021 = vst [vmem:[#allocation2] sm:$0xff] %v6009
    %6022 = vst [vmem:[#allocation2 + $0x8] sm:$0xff] %v6010
    %6023 = vst [vmem:[#allocation2 + $0x10] sm:$0xff] %v6011
    %6024 = vst [vmem:[#allocation2 + $0x18] sm:$0xff] %v6012
    %6025 = vst [vmem:[#allocation2 + $0x20] sm:$0xff] %v6013
    %6026 = vst [vmem:[#allocation2 + $0x28] sm:$0xff] %v6014
    %6027 = vst [vmem:[#allocation2 + $0x30] sm:$0xff] %v6015
    %6028 = vst [vmem:[#allocation2 + $0x38] sm:$0xff] %v6016
    %6029 = vst [vmem:[#allocation2 + $0x40] sm:$0xff] %v6017
    %6030 = vst [vmem:[#allocation2 + $0x48] sm:$0xff] %v6018
    %6031 = vst [vmem:[#allocation2 + $0x50] sm:$0xff] %v6019
    %6032 = vst [vmem:[#allocation2 + $0x58] sm:$0xff] %v6020
    // Predicated region
    $region46: #{tpu_custom_call.1} parent=1 // pred_check
      %p6033 = pneg %p93
    $region47: #{tpu_custom_call.1} parent=1 // pred_check_branch
      %6035 = sbr.rel (%p6033) target = $region49
    $region48: #{tpu_custom_call.1} parent=1 // pred_region
      %v6036 = vld [vmem:[#allocation2] sm:$0xff]
      %v6037 = vld [vmem:[#allocation2 + $0x8] sm:$0xff]
      %v6038 = vld [vmem:[#allocation2 + $0x10] sm:$0xff]
      %v6039 = vld [vmem:[#allocation2 + $0x18] sm:$0xff]
      %v6040 = vld [vmem:[#allocation2 + $0x20] sm:$0xff]
      %v6041 = vld [vmem:[#allocation2 + $0x28] sm:$0xff]
      %v6042 = vld [vmem:[#allocation2 + $0x30] sm:$0xff]
      %v6043 = vld [vmem:[#allocation2 + $0x38] sm:$0xff]
      %v6044 = vld [vmem:[#allocation2 + $0x40] sm:$0xff]
      %v6045 = vld [vmem:[#allocation2 + $0x48] sm:$0xff]
      %v6046 = vld [vmem:[#allocation2 + $0x50] sm:$0xff]
      %v6047 = vld [vmem:[#allocation2 + $0x58] sm:$0xff]
      %v6048 = vld [vmem:[#allocation8] sm:$0xff]
      %v6049 = vld [vmem:[#allocation8 + $0x8] sm:$0xf]
      %v6052 = vperm.slane %v6048, 0
      %v6053 = vperm.slane %v6048, 1
      %v6054 = vperm.slane %v6048, 2
      %v6055 = vperm.slane %v6048, 3
      %v6056 = vperm.slane %v6048, 4
      %v6057 = vperm.slane %v6048, 5
      %v6058 = vperm.slane %v6048, 6
      %v6059 = vperm.slane %v6048, 7
      %v6060 = vperm.slane %v6049, 0
      %v6061 = vperm.slane %v6049, 1
      %v6062 = vperm.slane %v6049, 2
      %v6063 = vperm.slane %v6049, 3
      %v6076 = vadd.f32 %v6036, %v6052
      %v6077 = vadd.f32 %v6037, %v6053
      %v6078 = vadd.f32 %v6038, %v6054
      %v6079 = vadd.f32 %v6039, %v6055
      %v6080 = vadd.f32 %v6040, %v6056
      %v6081 = vadd.f32 %v6041, %v6057
      %v6082 = vadd.f32 %v6042, %v6058
      %v6083 = vadd.f32 %v6043, %v6059
      %v6084 = vadd.f32 %v6044, %v6060
      %v6085 = vadd.f32 %v6045, %v6061
      %v6086 = vadd.f32 %v6046, %v6062
      %v6087 = vadd.f32 %v6047, %v6063
      %v6088 = vmax.f32 %v6076, 0.0
      %v6089 = vmax.f32 %v6077, 0.0
      %v6090 = vmax.f32 %v6078, 0.0
      %v6091 = vmax.f32 %v6079, 0.0
      %v6092 = vmax.f32 %v6080, 0.0
      %v6093 = vmax.f32 %v6081, 0.0
      %v6094 = vmax.f32 %v6082, 0.0
      %v6095 = vmax.f32 %v6083, 0.0
      %v6096 = vmax.f32 %v6084, 0.0
      %v6097 = vmax.f32 %v6085, 0.0
      %v6098 = vmax.f32 %v6086, 0.0
      %v6099 = vpack.c.bf16 %v6088, %v6088
      %v6100 = vpack.c.bf16 %v6089, %v6089
      %v6101 = vpack.c.bf16 %v6090, %v6090
      %v6102 = vpack.c.bf16 %v6091, %v6091
      %v6103 = vpack.c.bf16 %v6092, %v6092
      %v6104 = vpack.c.bf16 %v6093, %v6093
      %v6105 = vpack.c.bf16 %v6094, %v6094
      %v6106 = vpack.c.bf16 %v6095, %v6095
      %v6107 = vpack.c.bf16 %v6096, %v6096
      %v6108 = vpack.c.bf16 %v6097, %v6097
      %v6109 = vpack.c.bf16 %v6098, %v6098
      %v6110 = vld [vmem:[#allocation9] sm:$0xf]
      %v6111 = vld [vmem:[#allocation9 + $0x4] sm:$0xf]
      %v6112 = vld [vmem:[#allocation9 + $0x8] sm:$0xf]
      %v6113 = vld [vmem:[#allocation9 + $0xc] sm:$0xf]
      %v6114 = vld [vmem:[#allocation9 + $0x10] sm:$0xf]
      %v6115 = vld [vmem:[#allocation9 + $0x14] sm:$0xf]
      %v6116 = vld [vmem:[#allocation9 + $0x18] sm:$0xf]
      %v6117 = vld [vmem:[#allocation9 + $0x1c] sm:$0xf]
      %v6118 = vld [vmem:[#allocation9 + $0x20] sm:$0xf]
      %v6119 = vld [vmem:[#allocation9 + $0x24] sm:$0xf]
      %v6120 = vld [vmem:[#allocation9 + $0x28] sm:$0xf]
      %v6121 = vld [vmem:[#allocation9 + $0x2c] sm:$0xf]
      %v6122 = vld [vmem:[#allocation9 + $0x30] sm:$0xf]
      %v6123 = vld [vmem:[#allocation9 + $0x34] sm:$0xf]
      %v6124 = vld [vmem:[#allocation9 + $0x38] sm:$0xf]
      %v6125 = vld [vmem:[#allocation9 + $0x3c] sm:$0xf]
      %v6126 = vld [vmem:[#allocation9 + $0x40] sm:$0xf]
      %v6127 = vld [vmem:[#allocation9 + $0x44] sm:$0xf]
      %v6128 = vld [vmem:[#allocation9 + $0x48] sm:$0xf]
      %v6129 = vld [vmem:[#allocation9 + $0x4c] sm:$0xf]
      %v6130 = vld [vmem:[#allocation9 + $0x50] sm:$0xf]
      %v6131 = vld [vmem:[#allocation9 + $0x54] sm:$0xf]
      %v6132 = vld [vmem:[#allocation9 + $0x58] sm:$0xf]
      %v6133 = vld [vmem:[#allocation9 + $0x5c] sm:$0xf]
      %v6134 = vld [vmem:[#allocation9 + $0x60] sm:$0xf]
      %v6135 = vld [vmem:[#allocation9 + $0x64] sm:$0xf]
      %v6136 = vld [vmem:[#allocation9 + $0x68] sm:$0xf]
      %v6137 = vld [vmem:[#allocation9 + $0x6c] sm:$0xf]
      %v6138 = vld [vmem:[#allocation9 + $0x70] sm:$0xf]
      %v6139 = vld [vmem:[#allocation9 + $0x74] sm:$0xf]
      %v6140 = vld [vmem:[#allocation9 + $0x78] sm:$0xf]
      %v6141 = vld [vmem:[#allocation9 + $0x7c] sm:$0xf]
      %v6142 = vld [vmem:[#allocation9 + $0x80] sm:$0xf]
      %v6143 = vld [vmem:[#allocation9 + $0x84] sm:$0xf]
      %v6144 = vld [vmem:[#allocation9 + $0x88] sm:$0xf]
      %v6145 = vld [vmem:[#allocation9 + $0x8c] sm:$0xf]
      %v6146 = vld [vmem:[#allocation9 + $0x90] sm:$0xf]
      %v6147 = vld [vmem:[#allocation9 + $0x94] sm:$0xf]
      %v6148 = vld [vmem:[#allocation9 + $0x98] sm:$0xf]
      %v6149 = vld [vmem:[#allocation9 + $0x9c] sm:$0xf]
      %v6150 = vld [vmem:[#allocation9 + $0xa0] sm:$0xf]
      %v6151 = vld [vmem:[#allocation9 + $0xa4] sm:$0xf]
      %v6152 = vld [vmem:[#allocation9 + $0xa8] sm:$0xf]
      %v6153 = vld [vmem:[#allocation9 + $0xac] sm:$0xf]
      %v6154 = vld [vmem:[#allocation9 + $0xb0] sm:$0xf]
      %v6155 = vld [vmem:[#allocation9 + $0xb4] sm:$0xf]
      %v6156 = vld [vmem:[#allocation9 + $0xb8] sm:$0xf]
      %v6157 = vld [vmem:[#allocation9 + $0xbc] sm:$0xf]
      %v6158 = vld [vmem:[#allocation9 + $0xc0] sm:$0xf]
      %v6159 = vld [vmem:[#allocation9 + $0xc4] sm:$0xf]
      %v6160 = vld [vmem:[#allocation9 + $0xc8] sm:$0xf]
      %v6161 = vld [vmem:[#allocation9 + $0xcc] sm:$0xf]
      %v6162 = vld [vmem:[#allocation9 + $0xd0] sm:$0xf]
      %v6163 = vld [vmem:[#allocation9 + $0xd4] sm:$0xf]
      %v6164 = vld [vmem:[#allocation9 + $0xd8] sm:$0xf]
      %v6165 = vld [vmem:[#allocation9 + $0xdc] sm:$0xf]
      %v6166 = vld [vmem:[#allocation9 + $0xe0] sm:$0xf]
      %v6167 = vld [vmem:[#allocation9 + $0xe4] sm:$0xf]
      %v6168 = vld [vmem:[#allocation9 + $0xe8] sm:$0xf]
      %v6169 = vld [vmem:[#allocation9 + $0xec] sm:$0xf]
      %v6170 = vld [vmem:[#allocation9 + $0xf0] sm:$0xf]
      %v6171 = vld [vmem:[#allocation9 + $0xf4] sm:$0xf]
      %v6172 = vld [vmem:[#allocation9 + $0xf8] sm:$0xf]
      %v6173 = vld [vmem:[#allocation9 + $0xfc] sm:$0xf]
      %v6174 = vld [vmem:[#allocation9 + $0x100] sm:$0xf]
      %v6175 = vld [vmem:[#allocation9 + $0x104] sm:$0xf]
      %v6176 = vld [vmem:[#allocation9 + $0x108] sm:$0xf]
      %v6177 = vld [vmem:[#allocation9 + $0x10c] sm:$0xf]
      %v6178 = vld [vmem:[#allocation9 + $0x110] sm:$0xf]
      %v6179 = vld [vmem:[#allocation9 + $0x114] sm:$0xf]
      %v6180 = vld [vmem:[#allocation9 + $0x118] sm:$0xf]
      %v6181 = vld [vmem:[#allocation9 + $0x11c] sm:$0xf]
      %v6182 = vld [vmem:[#allocation9 + $0x120] sm:$0xf]
      %v6183 = vld [vmem:[#allocation9 + $0x124] sm:$0xf]
      %v6184 = vld [vmem:[#allocation9 + $0x128] sm:$0xf]
      %v6185 = vld [vmem:[#allocation9 + $0x12c] sm:$0xf]
      %v6186 = vld [vmem:[#allocation9 + $0x130] sm:$0xf]
      %v6187 = vld [vmem:[#allocation9 + $0x134] sm:$0xf]
      %v6188 = vld [vmem:[#allocation9 + $0x138] sm:$0xf]
      %v6189 = vld [vmem:[#allocation9 + $0x13c] sm:$0xf]
      %v6190 = vld [vmem:[#allocation9 + $0x140] sm:$0xf]
      %v6191 = vld [vmem:[#allocation9 + $0x144] sm:$0xf]
      %v6192 = vld [vmem:[#allocation9 + $0x148] sm:$0xf]
      %v6193 = vld [vmem:[#allocation9 + $0x14c] sm:$0xf]
      %v6194 = vld [vmem:[#allocation9 + $0x150] sm:$0xf]
      %v6195 = vld [vmem:[#allocation9 + $0x154] sm:$0xf]
      %v6196 = vld [vmem:[#allocation9 + $0x158] sm:$0xf]
      %v6197 = vld [vmem:[#allocation9 + $0x15c] sm:$0xf]
      %v6198 = vld [vmem:[#allocation9 + $0x160] sm:$0xf]
      %v6199 = vld [vmem:[#allocation9 + $0x164] sm:$0xf]
      %v6200 = vld [vmem:[#allocation9 + $0x168] sm:$0xf]
      %v6201 = vld [vmem:[#allocation9 + $0x16c] sm:$0xf]
      %v6202 = vld [vmem:[#allocation9 + $0x170] sm:$0xf]
      %v6203 = vld [vmem:[#allocation9 + $0x174] sm:$0xf]
      %v6204 = vld [vmem:[#allocation9 + $0x178] sm:$0xf]
      %v6205 = vld [vmem:[#allocation9 + $0x17c] sm:$0xf]
      %v6206 = vld [vmem:[#allocation9 + $0x180] sm:$0xf]
      %v6207 = vld [vmem:[#allocation9 + $0x184] sm:$0xf]
      %v6208 = vld [vmem:[#allocation9 + $0x188] sm:$0xf]
      %v6209 = vld [vmem:[#allocation9 + $0x18c] sm:$0xf]
      %v6210 = vld [vmem:[#allocation9 + $0x190] sm:$0xf]
      %v6211 = vld [vmem:[#allocation9 + $0x194] sm:$0xf]
      %v6212 = vld [vmem:[#allocation9 + $0x198] sm:$0xf]
      %v6213 = vld [vmem:[#allocation9 + $0x19c] sm:$0xf]
      %v6214 = vld [vmem:[#allocation9 + $0x1a0] sm:$0xf]
      %v6215 = vld [vmem:[#allocation9 + $0x1a4] sm:$0xf]
      %v6216 = vld [vmem:[#allocation9 + $0x1a8] sm:$0xf]
      %v6217 = vld [vmem:[#allocation9 + $0x1ac] sm:$0xf]
      %v6218 = vld [vmem:[#allocation9 + $0x1b0] sm:$0xf]
      %v6219 = vld [vmem:[#allocation9 + $0x1b4] sm:$0xf]
      %v6220 = vld [vmem:[#allocation9 + $0x1b8] sm:$0xf]
      %v6221 = vld [vmem:[#allocation9 + $0x1bc] sm:$0xf]
      %v6222 = vld [vmem:[#allocation9 + $0x1c0] sm:$0xf]
      %v6223 = vld [vmem:[#allocation9 + $0x1c4] sm:$0xf]
      %v6224 = vld [vmem:[#allocation9 + $0x1c8] sm:$0xf]
      %v6225 = vld [vmem:[#allocation9 + $0x1cc] sm:$0xf]
      %v6226 = vld [vmem:[#allocation9 + $0x1d0] sm:$0xf]
      %v6227 = vld [vmem:[#allocation9 + $0x1d4] sm:$0xf]
      %v6228 = vld [vmem:[#allocation9 + $0x1d8] sm:$0xf]
      %v6229 = vld [vmem:[#allocation9 + $0x1dc] sm:$0xf]
      %v6230 = vld [vmem:[#allocation9 + $0x1e0] sm:$0xf]
      %v6231 = vld [vmem:[#allocation9 + $0x1e4] sm:$0xf]
      %v6232 = vld [vmem:[#allocation9 + $0x1e8] sm:$0xf]
      %v6233 = vld [vmem:[#allocation9 + $0x1ec] sm:$0xf]
      %v6234 = vld [vmem:[#allocation9 + $0x1f0] sm:$0xf]
      %v6235 = vld [vmem:[#allocation9 + $0x1f4] sm:$0xf]
      %v6236 = vld [vmem:[#allocation9 + $0x1f8] sm:$0xf]
      %v6237 = vld [vmem:[#allocation9 + $0x1fc] sm:$0xf]
      %v6238 = vld [vmem:[#allocation9 + $0x200] sm:$0xf]
      %v6239 = vld [vmem:[#allocation9 + $0x204] sm:$0xf]
      %v6240 = vld [vmem:[#allocation9 + $0x208] sm:$0xf]
      %v6241 = vld [vmem:[#allocation9 + $0x20c] sm:$0xf]
      %v6242 = vld [vmem:[#allocation9 + $0x210] sm:$0xf]
      %v6243 = vld [vmem:[#allocation9 + $0x214] sm:$0xf]
      %v6244 = vld [vmem:[#allocation9 + $0x218] sm:$0xf]
      %v6245 = vld [vmem:[#allocation9 + $0x21c] sm:$0xf]
      %v6246 = vld [vmem:[#allocation9 + $0x220] sm:$0xf]
      %v6247 = vld [vmem:[#allocation9 + $0x224] sm:$0xf]
      %v6248 = vld [vmem:[#allocation9 + $0x228] sm:$0xf]
      %v6249 = vld [vmem:[#allocation9 + $0x22c] sm:$0xf]
      %v6250 = vld [vmem:[#allocation9 + $0x230] sm:$0xf]
      %v6251 = vld [vmem:[#allocation9 + $0x234] sm:$0xf]
      %v6252 = vld [vmem:[#allocation9 + $0x238] sm:$0xf]
      %v6253 = vld [vmem:[#allocation9 + $0x23c] sm:$0xf]
      %v6254 = vld [vmem:[#allocation9 + $0x240] sm:$0xf]
      %v6255 = vld [vmem:[#allocation9 + $0x244] sm:$0xf]
      %v6256 = vld [vmem:[#allocation9 + $0x248] sm:$0xf]
      %v6257 = vld [vmem:[#allocation9 + $0x24c] sm:$0xf]
      %v6258 = vld [vmem:[#allocation9 + $0x250] sm:$0xf]
      %v6259 = vld [vmem:[#allocation9 + $0x254] sm:$0xf]
      %v6260 = vld [vmem:[#allocation9 + $0x258] sm:$0xf]
      %v6261 = vld [vmem:[#allocation9 + $0x25c] sm:$0xf]
      %v6262 = vld [vmem:[#allocation9 + $0x260] sm:$0xf]
      %v6263 = vld [vmem:[#allocation9 + $0x264] sm:$0xf]
      %v6264 = vld [vmem:[#allocation9 + $0x268] sm:$0xf]
      %v6265 = vld [vmem:[#allocation9 + $0x26c] sm:$0xf]
      %v6266 = vld [vmem:[#allocation9 + $0x270] sm:$0xf]
      %v6267 = vld [vmem:[#allocation9 + $0x274] sm:$0xf]
      %v6268 = vld [vmem:[#allocation9 + $0x278] sm:$0xf]
      %v6269 = vld [vmem:[#allocation9 + $0x27c] sm:$0xf]
      %v6270 = vld [vmem:[#allocation9 + $0x280] sm:$0xf]
      %v6271 = vld [vmem:[#allocation9 + $0x284] sm:$0xf]
      %v6272 = vld [vmem:[#allocation9 + $0x288] sm:$0xf]
      %v6273 = vld [vmem:[#allocation9 + $0x28c] sm:$0xf]
      %v6274 = vld [vmem:[#allocation9 + $0x290] sm:$0xf]
      %v6275 = vld [vmem:[#allocation9 + $0x294] sm:$0xf]
      %v6276 = vld [vmem:[#allocation9 + $0x298] sm:$0xf]
      %v6277 = vld [vmem:[#allocation9 + $0x29c] sm:$0xf]
      %v6278 = vld [vmem:[#allocation9 + $0x2a0] sm:$0xf]
      %v6279 = vld [vmem:[#allocation9 + $0x2a4] sm:$0xf]
      %v6280 = vld [vmem:[#allocation9 + $0x2a8] sm:$0xf]
      %v6281 = vld [vmem:[#allocation9 + $0x2ac] sm:$0xf]
      %v6282 = vld [vmem:[#allocation9 + $0x2b0] sm:$0xf]
      %v6283 = vld [vmem:[#allocation9 + $0x2b4] sm:$0xf]
      %v6284 = vld [vmem:[#allocation9 + $0x2b8] sm:$0xf]
      %v6285 = vld [vmem:[#allocation9 + $0x2bc] sm:$0xf]
      %v6286 = vld [vmem:[#allocation11] sm:$0x1]
      %v6288 = vperm.slane %v6286, 0
      %v6466 = vunpack.c.l.b16 %v6110
      %v6467 = vunpack.c.l.b16 %v6111
      %v6468 = vunpack.c.l.b16 %v6112
      %v6469 = vunpack.c.l.b16 %v6113
      %v6470 = vunpack.c.l.b16 %v6114
      %v6471 = vunpack.c.l.b16 %v6115
      %v6472 = vunpack.c.l.b16 %v6116
      %v6473 = vunpack.c.l.b16 %v6117
      %v6474 = vunpack.c.l.b16 %v6118
      %v6475 = vunpack.c.l.b16 %v6119
      %v6476 = vunpack.c.l.b16 %v6120
      %v6477 = vunpack.c.l.b16 %v6121
      %v6478 = vunpack.c.l.b16 %v6122
      %v6479 = vunpack.c.l.b16 %v6123
      %v6480 = vunpack.c.l.b16 %v6124
      %v6481 = vunpack.c.l.b16 %v6125
      %v6482 = vunpack.c.l.b16 %v6126
      %v6483 = vunpack.c.l.b16 %v6127
      %v6484 = vunpack.c.l.b16 %v6128
      %v6485 = vunpack.c.l.b16 %v6129
      %v6486 = vunpack.c.l.b16 %v6130
      %v6487 = vunpack.c.l.b16 %v6131
      %v6488 = vunpack.c.l.b16 %v6132
      %v6489 = vunpack.c.l.b16 %v6133
      %v6490 = vunpack.c.l.b16 %v6134
      %v6491 = vunpack.c.l.b16 %v6135
      %v6492 = vunpack.c.l.b16 %v6136
      %v6493 = vunpack.c.l.b16 %v6137
      %v6494 = vunpack.c.l.b16 %v6138
      %v6495 = vunpack.c.l.b16 %v6139
      %v6496 = vunpack.c.l.b16 %v6140
      %v6497 = vunpack.c.l.b16 %v6141
      %v6498 = vunpack.c.l.b16 %v6142
      %v6499 = vunpack.c.l.b16 %v6143
      %v6500 = vunpack.c.l.b16 %v6144
      %v6501 = vunpack.c.l.b16 %v6145
      %v6502 = vunpack.c.l.b16 %v6146
      %v6503 = vunpack.c.l.b16 %v6147
      %v6504 = vunpack.c.l.b16 %v6148
      %v6505 = vunpack.c.l.b16 %v6149
      %v6506 = vunpack.c.l.b16 %v6150
      %v6507 = vunpack.c.l.b16 %v6151
      %v6508 = vunpack.c.l.b16 %v6152
      %v6509 = vunpack.c.l.b16 %v6153
      %v6510 = vunpack.c.l.b16 %v6154
      %v6511 = vunpack.c.l.b16 %v6155
      %v6512 = vunpack.c.l.b16 %v6156
      %v6513 = vunpack.c.l.b16 %v6157
      %v6514 = vunpack.c.l.b16 %v6158
      %v6515 = vunpack.c.l.b16 %v6159
      %v6516 = vunpack.c.l.b16 %v6160
      %v6517 = vunpack.c.l.b16 %v6161
      %v6518 = vunpack.c.l.b16 %v6162
      %v6519 = vunpack.c.l.b16 %v6163
      %v6520 = vunpack.c.l.b16 %v6164
      %v6521 = vunpack.c.l.b16 %v6165
      %v6522 = vunpack.c.l.b16 %v6166
      %v6523 = vunpack.c.l.b16 %v6167
      %v6524 = vunpack.c.l.b16 %v6168
      %v6525 = vunpack.c.l.b16 %v6169
      %v6526 = vunpack.c.l.b16 %v6170
      %v6527 = vunpack.c.l.b16 %v6171
      %v6528 = vunpack.c.l.b16 %v6172
      %v6529 = vunpack.c.l.b16 %v6173
      %v6530 = vunpack.c.l.b16 %v6174
      %v6531 = vunpack.c.l.b16 %v6175
      %v6532 = vunpack.c.l.b16 %v6176
      %v6533 = vunpack.c.l.b16 %v6177
      %v6534 = vunpack.c.l.b16 %v6178
      %v6535 = vunpack.c.l.b16 %v6179
      %v6536 = vunpack.c.l.b16 %v6180
      %v6537 = vunpack.c.l.b16 %v6181
      %v6538 = vunpack.c.l.b16 %v6182
      %v6539 = vunpack.c.l.b16 %v6183
      %v6540 = vunpack.c.l.b16 %v6184
      %v6541 = vunpack.c.l.b16 %v6185
      %v6542 = vunpack.c.l.b16 %v6186
      %v6543 = vunpack.c.l.b16 %v6187
      %v6544 = vunpack.c.l.b16 %v6188
      %v6545 = vunpack.c.l.b16 %v6189
      %v6546 = vunpack.c.l.b16 %v6190
      %v6547 = vunpack.c.l.b16 %v6191
      %v6548 = vunpack.c.l.b16 %v6192
      %v6549 = vunpack.c.l.b16 %v6193
      %v6550 = vunpack.c.l.b16 %v6194
      %v6551 = vunpack.c.l.b16 %v6195
      %v6552 = vunpack.c.l.b16 %v6196
      %v6553 = vunpack.c.l.b16 %v6197
      %v6554 = vunpack.c.l.b16 %v6198
      %v6555 = vunpack.c.l.b16 %v6199
      %v6556 = vunpack.c.l.b16 %v6200
      %v6557 = vunpack.c.l.b16 %v6201
      %v6558 = vunpack.c.l.b16 %v6202
      %v6559 = vunpack.c.l.b16 %v6203
      %v6560 = vunpack.c.l.b16 %v6204
      %v6561 = vunpack.c.l.b16 %v6205
      %v6562 = vunpack.c.l.b16 %v6206
      %v6563 = vunpack.c.l.b16 %v6207
      %v6564 = vunpack.c.l.b16 %v6208
      %v6565 = vunpack.c.l.b16 %v6209
      %v6566 = vunpack.c.l.b16 %v6210
      %v6567 = vunpack.c.l.b16 %v6211
      %v6568 = vunpack.c.l.b16 %v6212
      %v6569 = vunpack.c.l.b16 %v6213
      %v6570 = vunpack.c.l.b16 %v6214
      %v6571 = vunpack.c.l.b16 %v6215
      %v6572 = vunpack.c.l.b16 %v6216
      %v6573 = vunpack.c.l.b16 %v6217
      %v6574 = vunpack.c.l.b16 %v6218
      %v6575 = vunpack.c.l.b16 %v6219
      %v6576 = vunpack.c.l.b16 %v6220
      %v6577 = vunpack.c.l.b16 %v6221
      %v6578 = vunpack.c.l.b16 %v6222
      %v6579 = vunpack.c.l.b16 %v6223
      %v6580 = vunpack.c.l.b16 %v6224
      %v6581 = vunpack.c.l.b16 %v6225
      %v6582 = vunpack.c.l.b16 %v6226
      %v6583 = vunpack.c.l.b16 %v6227
      %v6584 = vunpack.c.l.b16 %v6228
      %v6585 = vunpack.c.l.b16 %v6229
      %v6586 = vunpack.c.l.b16 %v6230
      %v6587 = vunpack.c.l.b16 %v6231
      %v6588 = vunpack.c.l.b16 %v6232
      %v6589 = vunpack.c.l.b16 %v6233
      %v6590 = vunpack.c.l.b16 %v6234
      %v6591 = vunpack.c.l.b16 %v6235
      %v6592 = vunpack.c.l.b16 %v6236
      %v6593 = vunpack.c.l.b16 %v6237
      %v6594 = vunpack.c.l.b16 %v6238
      %v6595 = vunpack.c.l.b16 %v6239
      %v6596 = vunpack.c.l.b16 %v6240
      %v6597 = vunpack.c.l.b16 %v6241
      %v6598 = vunpack.c.l.b16 %v6242
      %v6599 = vunpack.c.l.b16 %v6243
      %v6600 = vunpack.c.l.b16 %v6244
      %v6601 = vunpack.c.l.b16 %v6245
      %v6602 = vunpack.c.l.b16 %v6246
      %v6603 = vunpack.c.l.b16 %v6247
      %v6604 = vunpack.c.l.b16 %v6248
      %v6605 = vunpack.c.l.b16 %v6249
      %v6606 = vunpack.c.l.b16 %v6250
      %v6607 = vunpack.c.l.b16 %v6251
      %v6608 = vunpack.c.l.b16 %v6252
      %v6609 = vunpack.c.l.b16 %v6253
      %v6610 = vunpack.c.l.b16 %v6254
      %v6611 = vunpack.c.l.b16 %v6255
      %v6612 = vunpack.c.l.b16 %v6256
      %v6613 = vunpack.c.l.b16 %v6257
      %v6614 = vunpack.c.l.b16 %v6258
      %v6615 = vunpack.c.l.b16 %v6259
      %v6616 = vunpack.c.l.b16 %v6260
      %v6617 = vunpack.c.l.b16 %v6261
      %v6618 = vunpack.c.l.b16 %v6262
      %v6619 = vunpack.c.l.b16 %v6263
      %v6620 = vunpack.c.l.b16 %v6264
      %v6621 = vunpack.c.l.b16 %v6265
      %v6622 = vunpack.c.l.b16 %v6266
      %v6623 = vunpack.c.l.b16 %v6267
      %v6624 = vunpack.c.l.b16 %v6268
      %v6625 = vunpack.c.l.b16 %v6269
      %v6626 = vunpack.c.l.b16 %v6270
      %v6627 = vunpack.c.l.b16 %v6271
      %v6628 = vunpack.c.l.b16 %v6272
      %v6629 = vunpack.c.l.b16 %v6273
      %v6630 = vunpack.c.l.b16 %v6274
      %v6631 = vunpack.c.l.b16 %v6275
      %v6632 = vunpack.c.l.b16 %v6276
      %v6633 = vunpack.c.l.b16 %v6277
      %v6634 = vunpack.c.l.b16 %v6278
      %v6635 = vunpack.c.l.b16 %v6279
      %v6636 = vunpack.c.l.b16 %v6280
      %v6637 = vunpack.c.l.b16 %v6281
      %v6638 = vunpack.c.l.b16 %v6282
      %v6639 = vunpack.c.l.b16 %v6283
      %v6640 = vunpack.c.l.b16 %v6284
      %v6641 = vunpack.c.l.b16 %v6285
      %v6642 = vpack.c.b16 %v6467, %v6466
      %v6643 = vpack.c.b16 %v6469, %v6468
      %v6644 = vpack.c.b16 %v6471, %v6470
      %v6645 = vpack.c.b16 %v6473, %v6472
      %v6646 = vpack.c.b16 %v6475, %v6474
      %v6647 = vpack.c.b16 %v6477, %v6476
      %v6648 = vpack.c.b16 %v6479, %v6478
      %v6649 = vpack.c.b16 %v6481, %v6480
      %v6650 = vpack.c.b16 %v6483, %v6482
      %v6651 = vpack.c.b16 %v6485, %v6484
      %v6652 = vpack.c.b16 %v6487, %v6486
      %v6653 = vpack.c.b16 %v6489, %v6488
      %v6654 = vpack.c.b16 %v6491, %v6490
      %v6655 = vpack.c.b16 %v6493, %v6492
      %v6656 = vpack.c.b16 %v6495, %v6494
      %v6657 = vpack.c.b16 %v6497, %v6496
      %v6658 = vpack.c.b16 %v6499, %v6498
      %v6659 = vpack.c.b16 %v6501, %v6500
      %v6660 = vpack.c.b16 %v6503, %v6502
      %v6661 = vpack.c.b16 %v6505, %v6504
      %v6662 = vpack.c.b16 %v6507, %v6506
      %v6663 = vpack.c.b16 %v6509, %v6508
      %v6664 = vpack.c.b16 %v6511, %v6510
      %v6665 = vpack.c.b16 %v6513, %v6512
      %v6666 = vpack.c.b16 %v6515, %v6514
      %v6667 = vpack.c.b16 %v6517, %v6516
      %v6668 = vpack.c.b16 %v6519, %v6518
      %v6669 = vpack.c.b16 %v6521, %v6520
      %v6670 = vpack.c.b16 %v6523, %v6522
      %v6671 = vpack.c.b16 %v6525, %v6524
      %v6672 = vpack.c.b16 %v6527, %v6526
      %v6673 = vpack.c.b16 %v6529, %v6528
      %v6674 = vpack.c.b16 %v6531, %v6530
      %v6675 = vpack.c.b16 %v6533, %v6532
      %v6676 = vpack.c.b16 %v6535, %v6534
      %v6677 = vpack.c.b16 %v6537, %v6536
      %v6678 = vpack.c.b16 %v6539, %v6538
      %v6679 = vpack.c.b16 %v6541, %v6540
      %v6680 = vpack.c.b16 %v6543, %v6542
      %v6681 = vpack.c.b16 %v6545, %v6544
      %v6682 = vpack.c.b16 %v6547, %v6546
      %v6683 = vpack.c.b16 %v6549, %v6548
      %v6684 = vpack.c.b16 %v6551, %v6550
      %v6685 = vpack.c.b16 %v6553, %v6552
      %v6686 = vpack.c.b16 %v6555, %v6554
      %v6687 = vpack.c.b16 %v6557, %v6556
      %v6688 = vpack.c.b16 %v6559, %v6558
      %v6689 = vpack.c.b16 %v6561, %v6560
      %v6690 = vpack.c.b16 %v6563, %v6562
      %v6691 = vpack.c.b16 %v6565, %v6564
      %v6692 = vpack.c.b16 %v6567, %v6566
      %v6693 = vpack.c.b16 %v6569, %v6568
      %v6694 = vpack.c.b16 %v6571, %v6570
      %v6695 = vpack.c.b16 %v6573, %v6572
      %v6696 = vpack.c.b16 %v6575, %v6574
      %v6697 = vpack.c.b16 %v6577, %v6576
      %v6698 = vpack.c.b16 %v6579, %v6578
      %v6699 = vpack.c.b16 %v6581, %v6580
      %v6700 = vpack.c.b16 %v6583, %v6582
      %v6701 = vpack.c.b16 %v6585, %v6584
      %v6702 = vpack.c.b16 %v6587, %v6586
      %v6703 = vpack.c.b16 %v6589, %v6588
      %v6704 = vpack.c.b16 %v6591, %v6590
      %v6705 = vpack.c.b16 %v6593, %v6592
      %v6706 = vpack.c.b16 %v6595, %v6594
      %v6707 = vpack.c.b16 %v6597, %v6596
      %v6708 = vpack.c.b16 %v6599, %v6598
      %v6709 = vpack.c.b16 %v6601, %v6600
      %v6710 = vpack.c.b16 %v6603, %v6602
      %v6711 = vpack.c.b16 %v6605, %v6604
      %v6712 = vpack.c.b16 %v6607, %v6606
      %v6713 = vpack.c.b16 %v6609, %v6608
      %v6714 = vpack.c.b16 %v6611, %v6610
      %v6715 = vpack.c.b16 %v6613, %v6612
      %v6716 = vpack.c.b16 %v6615, %v6614
      %v6717 = vpack.c.b16 %v6617, %v6616
      %v6718 = vpack.c.b16 %v6619, %v6618
      %v6719 = vpack.c.b16 %v6621, %v6620
      %v6720 = vpack.c.b16 %v6623, %v6622
      %v6721 = vpack.c.b16 %v6625, %v6624
      %v6722 = vpack.c.b16 %v6627, %v6626
      %v6723 = vpack.c.b16 %v6629, %v6628
      %v6724 = vpack.c.b16 %v6631, %v6630
      %v6725 = vpack.c.b16 %v6633, %v6632
      %v6726 = vpack.c.b16 %v6635, %v6634
      %v6727 = vpack.c.b16 %v6637, %v6636
      %v6728 = vpack.c.b16 %v6639, %v6638
      %v6729 = vpack.c.b16 %v6641, %v6640
      %6818 = vmatpush.bf16.msra.mxu0 %v6649
      %6819 = vmatpush.bf16.msra.mxu0 %v6648
      %6820 = vmatpush.bf16.msra.mxu0 %v6647
      %6821 = vmatpush.bf16.msra.mxu0 %v6646
      %6822 = vmatpush.bf16.msra.mxu0 %v6645
      %6823 = vmatpush.bf16.msra.mxu0 %v6644
      %6824 = vmatpush.bf16.msra.mxu0 %v6643
      %6825 = vmatpush.bf16.msra.mxu0 %v6642
      %6826 = vmatmul.bf16.gmra.mxu0 %v6099
      %v6827 = vpop.f32.mrf.mxu0
      %v6828 = vadd.f32 %v6288, %v6827
      %v6829 = vpop.f32.mrf.mxu0
      %6830 = vdwg.mxu0
      %6831 = vmatpush.bf16.msra.mxu0 %v6657
      %6832 = vmatpush.bf16.msra.mxu0 %v6656
      %6833 = vmatpush.bf16.msra.mxu0 %v6655
      %6834 = vmatpush.bf16.msra.mxu0 %v6654
      %6835 = vmatpush.bf16.msra.mxu0 %v6653
      %6836 = vmatpush.bf16.msra.mxu0 %v6652
      %6837 = vmatpush.bf16.msra.mxu0 %v6651
      %6838 = vmatpush.bf16.msra.mxu0 %v6650
      %6839 = vmatmul.bf16.gmra.mxu0 %v6100
      %v6840 = vpop.f32.mrf.mxu0
      %v6841 = vadd.f32 %v6828, %v6840
      %v6842 = vpop.f32.mrf.mxu0
      %6843 = vdwg.mxu0
      %6844 = vmatpush.bf16.msra.mxu0 %v6665
      %6845 = vmatpush.bf16.msra.mxu0 %v6664
      %6846 = vmatpush.bf16.msra.mxu0 %v6663
      %6847 = vmatpush.bf16.msra.mxu0 %v6662
      %6848 = vmatpush.bf16.msra.mxu0 %v6661
      %6849 = vmatpush.bf16.msra.mxu0 %v6660
      %6850 = vmatpush.bf16.msra.mxu0 %v6659
      %6851 = vmatpush.bf16.msra.mxu0 %v6658
      %6852 = vmatmul.bf16.gmra.mxu0 %v6101
      %v6853 = vpop.f32.mrf.mxu0
      %v6854 = vadd.f32 %v6841, %v6853
      %v6855 = vpop.f32.mrf.mxu0
      %6856 = vdwg.mxu0
      %6857 = vmatpush.bf16.msra.mxu0 %v6673
      %6858 = vmatpush.bf16.msra.mxu0 %v6672
      %6859 = vmatpush.bf16.msra.mxu0 %v6671
      %6860 = vmatpush.bf16.msra.mxu0 %v6670
      %6861 = vmatpush.bf16.msra.mxu0 %v6669
      %6862 = vmatpush.bf16.msra.mxu0 %v6668
      %6863 = vmatpush.bf16.msra.mxu0 %v6667
      %6864 = vmatpush.bf16.msra.mxu0 %v6666
      %6865 = vmatmul.bf16.gmra.mxu0 %v6102
      %v6866 = vpop.f32.mrf.mxu0
      %v6867 = vadd.f32 %v6854, %v6866
      %v6868 = vpop.f32.mrf.mxu0
      %6869 = vdwg.mxu0
      %6870 = vmatpush.bf16.msra.mxu0 %v6681
      %6871 = vmatpush.bf16.msra.mxu0 %v6680
      %6872 = vmatpush.bf16.msra.mxu0 %v6679
      %6873 = vmatpush.bf16.msra.mxu0 %v6678
      %6874 = vmatpush.bf16.msra.mxu0 %v6677
      %6875 = vmatpush.bf16.msra.mxu0 %v6676
      %6876 = vmatpush.bf16.msra.mxu0 %v6675
      %6877 = vmatpush.bf16.msra.mxu0 %v6674
      %6878 = vmatmul.bf16.gmra.mxu0 %v6103
      %v6879 = vpop.f32.mrf.mxu0
      %v6880 = vadd.f32 %v6867, %v6879
      %v6881 = vpop.f32.mrf.mxu0
      %6882 = vdwg.mxu0
      %6883 = vmatpush.bf16.msra.mxu0 %v6689
      %6884 = vmatpush.bf16.msra.mxu0 %v6688
      %6885 = vmatpush.bf16.msra.mxu0 %v6687
      %6886 = vmatpush.bf16.msra.mxu0 %v6686
      %6887 = vmatpush.bf16.msra.mxu0 %v6685
      %6888 = vmatpush.bf16.msra.mxu0 %v6684
      %6889 = vmatpush.bf16.msra.mxu0 %v6683
      %6890 = vmatpush.bf16.msra.mxu0 %v6682
      %6891 = vmatmul.bf16.gmra.mxu0 %v6104
      %v6892 = vpop.f32.mrf.mxu0
      %v6893 = vadd.f32 %v6880, %v6892
      %v6894 = vpop.f32.mrf.mxu0
      %6895 = vdwg.mxu0
      %6896 = vmatpush.bf16.msra.mxu0 %v6697
      %6897 = vmatpush.bf16.msra.mxu0 %v6696
      %6898 = vmatpush.bf16.msra.mxu0 %v6695
      %6899 = vmatpush.bf16.msra.mxu0 %v6694
      %6900 = vmatpush.bf16.msra.mxu0 %v6693
      %6901 = vmatpush.bf16.msra.mxu0 %v6692
      %6902 = vmatpush.bf16.msra.mxu0 %v6691
      %6903 = vmatpush.bf16.msra.mxu0 %v6690
      %6904 = vmatmul.bf16.gmra.mxu0 %v6105
      %v6905 = vpop.f32.mrf.mxu0
      %v6906 = vadd.f32 %v6893, %v6905
      %v6907 = vpop.f32.mrf.mxu0
      %6908 = vdwg.mxu0
      %6909 = vmatpush.bf16.msra.mxu0 %v6705
      %6910 = vmatpush.bf16.msra.mxu0 %v6704
      %6911 = vmatpush.bf16.msra.mxu0 %v6703
      %6912 = vmatpush.bf16.msra.mxu0 %v6702
      %6913 = vmatpush.bf16.msra.mxu0 %v6701
      %6914 = vmatpush.bf16.msra.mxu0 %v6700
      %6915 = vmatpush.bf16.msra.mxu0 %v6699
      %6916 = vmatpush.bf16.msra.mxu0 %v6698
      %6917 = vmatmul.bf16.gmra.mxu0 %v6106
      %v6918 = vpop.f32.mrf.mxu0
      %v6919 = vadd.f32 %v6906, %v6918
      %v6920 = vpop.f32.mrf.mxu0
      %6921 = vdwg.mxu0
      %6922 = vmatpush.bf16.msra.mxu0 %v6713
      %6923 = vmatpush.bf16.msra.mxu0 %v6712
      %6924 = vmatpush.bf16.msra.mxu0 %v6711
      %6925 = vmatpush.bf16.msra.mxu0 %v6710
      %6926 = vmatpush.bf16.msra.mxu0 %v6709
      %6927 = vmatpush.bf16.msra.mxu0 %v6708
      %6928 = vmatpush.bf16.msra.mxu0 %v6707
      %6929 = vmatpush.bf16.msra.mxu0 %v6706
      %6930 = vmatmul.bf16.gmra.mxu0 %v6107
      %v6931 = vpop.f32.mrf.mxu0
      %v6932 = vadd.f32 %v6919, %v6931
      %v6933 = vpop.f32.mrf.mxu0
      %6934 = vdwg.mxu0
      %6935 = vmatpush.bf16.msra.mxu0 %v6721
      %6936 = vmatpush.bf16.msra.mxu0 %v6720
      %6937 = vmatpush.bf16.msra.mxu0 %v6719
      %6938 = vmatpush.bf16.msra.mxu0 %v6718
      %6939 = vmatpush.bf16.msra.mxu0 %v6717
      %6940 = vmatpush.bf16.msra.mxu0 %v6716
      %6941 = vmatpush.bf16.msra.mxu0 %v6715
      %6942 = vmatpush.bf16.msra.mxu0 %v6714
      %6943 = vmatmul.bf16.gmra.mxu0 %v6108
      %v6944 = vpop.f32.mrf.mxu0
      %v6945 = vadd.f32 %v6932, %v6944
      %v6946 = vpop.f32.mrf.mxu0
      %6947 = vdwg.mxu0
      %6948 = vmatpush.bf16.msra.mxu0 %v6729
      %6949 = vmatpush.bf16.msra.mxu0 %v6728
      %6950 = vmatpush.bf16.msra.mxu0 %v6727
      %6951 = vmatpush.bf16.msra.mxu0 %v6726
      %6952 = vmatpush.bf16.msra.mxu0 %v6725
      %6953 = vmatpush.bf16.msra.mxu0 %v6724
      %6954 = vmatpush.bf16.msra.mxu0 %v6723
      %6955 = vmatpush.bf16.msra.mxu0 %v6722
      %6956 = vmatmul.bf16.gmra.mxu0 %v6109
      %v6957 = vpop.f32.mrf.mxu0
      %v6958 = vadd.f32 %v6945, %v6957
      %v6959 = vpop.f32.mrf.mxu0
      %6960 = vdwg.mxu0
      %v6961 = vlaneseq
      %v6962 = vand.u32 %v6961, 127
      %6963 = vmax.xlane.f32.xlu0 %v6958
      %v6964 = vpop.xlane.xlu0 %6963
      %v6965 = vsub.f32 %v6958, %v6964
      %v6966 = vmul.f32 %v6965, 1.442695
      %v6967 = vpow.pop %v6966
      %v6968 = vcvt.s32.f32 %v6962
      %v6969 = vmul.f32 %v6968, 3.0
      %v6970 = vmul.f32 %v6967, %v6969
      %6971 = vadd.xlane.f32.xlu0 %v6970
      %v6972 = vpop.xlane.xlu0 %6971
      %6973 = vadd.xlane.f32.xlu0 %v6967
      %v6974 = vpop.xlane.xlu0 %6973
      %v6975 = vrcp.pop %v6974
      %v6976 = vmul.f32 %v6974, %v6975
      %v6977 = vsub.f32 1.0, %v6976
      %v6978 = vmul.f32 %v6975, %v6977
      %v6979 = vadd.f32 %v6975, %v6978
      %vm6980 = vweird.f32 %v6974
      %vm6981 = vweird.f32 %v6975
      %vm6982 = vmor %vm6980, %vm6981
      %v6983 = vsel %vm6982, %v6975, %v6979
      %v6984 = vand.u32 2147483647, %v6974
      %vm6985 = vcmp.eq.f32.partialorder %v6984, 8.507059e+37
      %v6986 = vand.u32 %v6974, 2147483648
      %v6987 = vor.u32 1.1754944e-38, %v6986
      %v6988 = vsel %vm6985, %v6987, %v6983
      %v6989 = vmul.f32 %v6972, %v6988
      %vm6990 = vcmp.lt.s32.totalorder %v6962, 31
      %v6991 = vsel %vm6990, %v6958, %v6087
      %vm6992 = vcmp.eq.s32.totalorder %v6962, 31
      %v6993 = vsel %vm6992, %v6989, %v6991
      %6994 = vst [vmem:[#allocation12] sm:$0xff] %v6993
    $region49: #{tpu_custom_call.1} parent=1 // pred_fallthru
      _
    // Predicated region
    $region50: #{tpu_custom_call.1} parent=1 // pred_check
      _
    $region51: #{tpu_custom_call.1} parent=1 // pred_check_branch
      %6996 = sbr.rel (0) target = $region53
    $region52: #{tpu_custom_call.1} parent=1 // pred_region
      %6998 = vsyncadd [#allocation5], 0
      %s7000 = sshll.u32 [#allocation12], 4
      %s7001 = int_to_ptr.vmem [resolvable:$true] %s7000
      %s7002 = sshll.u32 %s5, 4
      %s7003 = int_to_ptr.hbm [resolvable:$true] %s7002
      %7005 = dma.vmem_to_hbm [thread:$0]  %s7001, 128, %s7003, [#allocation5]
    $region53: #{tpu_custom_call.1} parent=1 // pred_fallthru
      _
    // Predicated region
    $region54: #{tpu_custom_call.1} parent=1 // pred_check
      _
    $region55: #{tpu_custom_call.1} parent=1 // pred_check_branch
      %7007 = sbr.rel (0) target = $region57
    $region56: #{tpu_custom_call.1} parent=1 // pred_region
      %7009 = dma.done [#allocation5], 128
    $region57: #{tpu_custom_call.1} parent=1 // pred_fallthru
      _
    %7010 = vsyncpa [#allocation4], 1
    %7011 = vsyncpa [#allocation7], 1
    %7012 = vsyncpa [#allocation10], 1
    %7013 = vsyncpa [#allocation5], 1

</llo_original>
